<compile_context>
chip_gen: v7x
topology: tpu7x:2x2x1
jax: 0.10.0
libtpu: 0.0.40
codegen_flags: <defaults>
</compile_context>

<pallas_src>
import jax
import jax.numpy as jnp
from jax import lax
from jax.experimental import pallas as pl
from jax.experimental.pallas import tpu as pltpu

EMB = 64
EPS = 1e-5            # torch.nn.LayerNorm default eps
ROW_TILE = 1024       # node-row tile for the embedding MLPs


def _round_up(x, m):
    return (x + m - 1) // m * m


# ---------------------------------------------------------------------------
# Generation-aware VMEM budget / edge-tile size
# ---------------------------------------------------------------------------
_TPU_VMEM_CAP = None


def _vmem_capacity():
    global _TPU_VMEM_CAP
    if _TPU_VMEM_CAP is None:
        try:
            _TPU_VMEM_CAP = int(pltpu.get_tpu_info().vmem_capacity_bytes)
        except Exception:
            _TPU_VMEM_CAP = 64 * 1024 * 1024   # conservative fallback (v7x-sized)
    return _TPU_VMEM_CAP


def _vmem_limit():
    # ~96 MiB on v5e/v6e (128 MiB physical), ~48 MiB on v7x (64 MiB physical).
    return min(100 * 1024 * 1024, _vmem_capacity() * 3 // 4)


def _edge_tile():
    # Bigger edge tile amortizes per-step overhead and the accumulator RMW on
    # chips with 128 MiB VMEM; keep 256 where VMEM is tight (v7x).
    return 512 if _vmem_capacity() >= 96 * 1024 * 1024 else 256


# ---------------------------------------------------------------------------
# In-kernel helpers (pure jnp, traced inside the Pallas kernels)
# ---------------------------------------------------------------------------
def _layernorm(x, g, b):
    mu = jnp.mean(x, axis=-1, keepdims=True)
    var = jnp.mean((x - mu) ** 2, axis=-1, keepdims=True)
    return (x - mu) * lax.rsqrt(var + EPS) * g + b


def _f32dot(a, b):
    return jnp.dot(a, b, preferred_element_type=jnp.float32)


# ---------------------------------------------------------------------------
# Embedding kernel: LayerNorm -> Linear -> ReLU -> Linear -> ReLU (row-tiled)
# ---------------------------------------------------------------------------
def embed_kernel(x_ref, g_ref, b_ref, w1_ref, b1_ref, w2_ref, b2_ref, o_ref):
    x = _layernorm(x_ref[...], g_ref[...], b_ref[...])
    h = jnp.maximum(_f32dot(x, w1_ref[...]) + b1_ref[...], 0.0)
    o_ref[...] = jnp.maximum(_f32dot(h, w2_ref[...]) + b2_ref[...], 0.0)


def _embed(x_pad, p, tile_r):
    n, f = x_pad.shape
    weights = (p["g"], p["b"], p["W1"], p["b1"], p["W2"], p["b2"])
    in_specs = [pl.BlockSpec((tile_r, f), lambda i: (i, 0))] + \
               [pl.BlockSpec(w.shape, lambda i: (0, 0)) for w in weights]
    return pl.pallas_call(
        embed_kernel,
        out_shape=jax.ShapeDtypeStruct((n, EMB), jnp.float32),
        grid=(n // tile_r,),
        in_specs=in_specs,
        out_specs=pl.BlockSpec((tile_r, EMB), lambda i: (i, 0)),
        compiler_params=pltpu.CompilerParams(
            dimension_semantics=("parallel",),
            vmem_limit_bytes=_vmem_limit()),
    )(x_pad, *weights)


# ---------------------------------------------------------------------------
# Fused BipartiteGraphConvolution kernel
#   grid = (num_edge_tiles,)   -- "arbitrary" reduction axis
#   inputs : (1, te) index rows + VMEM-resident node tables + weights
#   scratch: bf16 transformed node tables A, B; the output block itself is the
#            f32 'add' accumulator (resident across the edge axis).
# ---------------------------------------------------------------------------
N_CONV_IN = 18  # src_row, tgt_row, left, right + 14 weight tensors


def _conv_step(refs, a_scr, b_scr, acc_ref):
    (src_r_ref, tgt_r_ref, left_ref, right_ref,
     wl_ref, blfe_ref, wr_ref, lnf_g_ref, lnf_b_ref, wfin_ref, bfin_ref,
     _lnpg, _lnpb, _wo1p, _wo1r, _bo1, _wo2, _bo2) = refs

    @pl.when(pl.program_id(0) == 0)
    def _init():
        # A = feature_module_left(right) + (bl + const folded edge term)
        # B = feature_module_right(left)
        a_scr[...] = (_f32dot(right_ref[...], wl_ref[...]) + blfe_ref[...]
                      ).astype(jnp.bfloat16)
        b_scr[...] = _f32dot(left_ref[...], wr_ref[...]).astype(jnp.bfloat16)
        acc_ref[...] = jnp.zeros_like(acc_ref)

    te = src_r_ref.shape[1]
    nl = b_scr.shape[0]
    nr = a_scr.shape[0]

    # Transposed (N, te) one-hot incidence blocks built on the fly from the
    # lane-dense (1, te) int32 index rows.  Padded edges carry index -1 and
    # never match the iota -> all-zero columns -> contribute nothing.
    # bool -> bf16 cast (no f32 select intermediate); 0/1 are exact in bf16.
    ohT_src = (lax.broadcasted_iota(jnp.int32, (nl, te), 0)
               == src_r_ref[...]).astype(jnp.bfloat16)
    ohT_tgt = (lax.broadcasted_iota(jnp.int32, (nr, te), 0)
               == tgt_r_ref[...]).astype(jnp.bfloat16)

    # Gathers as lhs-transposed matmuls (contract dim 0): A[tgt], B[src].
    dn = (((0,), (0,)), ((), ()))
    f_i = lax.dot_general(ohT_tgt, a_scr[...], dn,
                          preferred_element_type=jnp.float32)   # (te, 64)
    f_j = lax.dot_general(ohT_src, b_scr[...], dn,
                          preferred_element_type=jnp.float32)   # (te, 64)
    z = jnp.maximum(_layernorm(f_i + f_j, lnf_g_ref[...], lnf_b_ref[...]), 0.0)
    msg = _f32dot(z, wfin_ref[...]) + bfin_ref[...]
    # 'add' scatter reuses the same target one-hot block (no extra operand).
    acc_ref[...] += _f32dot(ohT_tgt, msg.astype(jnp.bfloat16))


def _conv_finalize(refs, acc_ref):
    (_sr, _tr, _left, right_ref,
     _wl, _blfe, _wr, _lnfg, _lnfb, _wfin, _bfin,
     lnp_g_ref, lnp_b_ref, wo1p_ref, wo1r_ref, bo1_ref, wo2_ref, bo2_ref) = refs
    # NOTE: padded node rows are all-zero -> LayerNorm gives bias-only rows;
    # they are trimmed by the caller.  Do not "optimize" the trim away.
    post = _layernorm(acc_ref[...], lnp_g_ref[...], lnp_b_ref[...])
    # concat([post, right]) @ Wo1 == post @ Wo1[:64] + right @ Wo1[64:]
    h = jnp.maximum(_f32dot(post, wo1p_ref[...])
                    + _f32dot(right_ref[...], wo1r_ref[...])
                    + bo1_ref[...], 0.0)
    return _f32dot(h, wo2_ref[...]) + bo2_ref[...]


def conv_kernel(*args):
    refs = args[:N_CONV_IN]
    out_ref = args[N_CONV_IN]
    a_scr, b_scr = args[N_CONV_IN + 1:]
    _conv_step(refs, a_scr, b_scr, out_ref)

    @pl.when(pl.program_id(0) == pl.num_programs(0) - 1)
    def _fin():
        out_ref[...] = _conv_finalize(refs, out_ref)


def conv_head_kernel(*args):
    refs = args[:N_CONV_IN]
    wh1_ref, bh1_ref, wh2_ref = args[N_CONV_IN:N_CONV_IN + 3]
    out_ref, logits_ref = args[N_CONV_IN + 3:N_CONV_IN + 5]
    a_scr, b_scr = args[N_CONV_IN + 5:]
    _conv_step(refs, a_scr, b_scr, out_ref)

    @pl.when(pl.program_id(0) == pl.num_programs(0) - 1)
    def _fin():
        v = _conv_finalize(refs, out_ref)
        out_ref[...] = v
        # fused output_module head, written lane-dense as (1, Nv)
        hh = jnp.maximum(_f32dot(v, wh1_ref[...]) + bh1_ref[...], 0.0)
        logits_ref[...] = lax.dot_general(
            wh2_ref[...], hh, (((1,), (1,)), ((), ())),
            preferred_element_type=jnp.float32)


def _bgc(left, right, src_row, tgt_row, cp, te, head=None):
    nl, nr = left.shape[0], right.shape[0]
    n_tiles = src_row.shape[1] // te

    weights = (cp["Wl"], cp["bl_fe"], cp["Wr"], cp["lnf_g"], cp["lnf_b"],
               cp["Wfin"], cp["bfin"], cp["lnp_g"], cp["lnp_b"],
               cp["Wo1p"], cp["Wo1r"], cp["bo1"], cp["Wo2"], cp["bo2"])
    if head is not None:
        weights = weights + (head["W1"], head["b1"], head["W2t"])

    in_specs = [
        pl.BlockSpec((1, te), lambda e: (0, e)),      # src indices (lane-dense row)
        pl.BlockSpec((1, te), lambda e: (0, e)),      # tgt indices (lane-dense row)
        pl.BlockSpec((nl, EMB), lambda e: (0, 0)),    # left node table (resident)
        pl.BlockSpec((nr, EMB), lambda e: (0, 0)),    # right node table (resident)
    ] + [pl.BlockSpec(w.shape, lambda e: (0, 0)) for w in weights]

    scratch = [pltpu.VMEM((nr, EMB), jnp.bfloat16),   # A = right@Wl + bl_fe
               pltpu.VMEM((nl, EMB), jnp.bfloat16)]   # B = left@Wr

    if head is None:
        kernel = conv_kernel
        out_shape = jax.ShapeDtypeStruct((nr, EMB), jnp.float32)
        out_specs = pl.BlockSpec((nr, EMB), lambda e: (0, 0))
    else:
        kernel = conv_head_kernel
        out_shape = (jax.ShapeDtypeStruct((nr, EMB), jnp.float32),
                     jax.ShapeDtypeStruct((1, nr), jnp.float32))
        out_specs = (pl.BlockSpec((nr, EMB), lambda e: (0, 0)),
                     pl.BlockSpec((1, nr), lambda e: (0, 0)))

    return pl.pallas_call(
        kernel,
        out_shape=out_shape,
        grid=(n_tiles,),
        in_specs=in_specs,
        out_specs=out_specs,
        scratch_shapes=scratch,
        compiler_params=pltpu.CompilerParams(
            dimension_semantics=("arbitrary",),       # edge axis is a reduction
            vmem_limit_bytes=_vmem_limit()),
    )(src_row, tgt_row, left, right, *weights)


# ---------------------------------------------------------------------------
# Parameter preparation (folds the degenerate edge-LayerNorm, splits Wo1)
# ---------------------------------------------------------------------------
def _prep_conv(p, edge_ln_b):
    # LayerNorm over a single feature returns exactly its bias, so
    # feature_module_edge(edge_embedding(e)) == edge_ln_b * We for every edge.
    fe = edge_ln_b[0, 0] * p["We"]                    # constant (1, EMB) row
    return dict(
        Wl=p["Wl"], bl_fe=p["bl"] + fe, Wr=p["Wr"],
        lnf_g=p["lnf_g"], lnf_b=p["lnf_b"], Wfin=p["Wfin"], bfin=p["bfin"],
        lnp_g=p["lnp_g"], lnp_b=p["lnp_b"],
        Wo1p=p["Wo1"][:EMB], Wo1r=p["Wo1"][EMB:], bo1=p["bo1"],
        Wo2=p["Wo2"], bo2=p["bo2"])


# ---------------------------------------------------------------------------
# Full forward pass
# ---------------------------------------------------------------------------
def gnn_policy_forward(params, constraint_features, edge_indices, edge_features,
                       variable_features):
    # edge_features only pass through LayerNorm(1) -> Linear(1,64,bias=False);
    # that path is the constant row folded into bl_fe (see _prep_conv), so the
    # raw values never influence the output (same as the PyTorch model).
    del edge_features

    nc, nv = constraint_features.shape[0], variable_features.shape[0]
    ne = edge_indices.shape[1]

    # Node counts padded to a multiple of 128 (lane-/K-aligned one-hot blocks,
    # unmasked lane-dense logits store).
    tile_c = min(ROW_TILE, _round_up(nc, 128))
    tile_v = min(ROW_TILE, _round_up(nv, 128))
    te = min(_edge_tile(), _round_up(ne, 128))
    nc_p, nv_p, ne_p = _round_up(nc, tile_c), _round_up(nv, tile_v), _round_up(ne, te)

    cons = jnp.pad(constraint_features.astype(jnp.float32), ((0, nc_p - nc), (0, 0)))
    var = jnp.pad(variable_features.astype(jnp.float32), ((0, nv_p - nv), (0, 0)))

    # padded edges get index -1 -> never match any node -> contribute nothing
    cidx = jnp.pad(edge_indices[0].astype(jnp.int32), (0, ne_p - ne), constant_values=-1)
    vidx = jnp.pad(edge_indices[1].astype(jnp.int32), (0, ne_p - ne), constant_values=-1)
    c_row = cidx.reshape(1, ne_p)
    v_row = vidx.reshape(1, ne_p)

    c = _embed(cons, params["cons_emb"], tile_c)
    v = _embed(var, params["var_emb"], tile_v)

    eb = params["edge_ln"]["b"]
    p1 = _prep_conv(params["conv_v_to_c"], eb)
    p2 = _prep_conv(params["conv_c_to_v"], eb)
    p3 = _prep_conv(params["conv_v_to_c2"], eb)
    p4 = _prep_conv(params["conv_c_to_v2"], eb)

    c = _bgc(v, c, v_row, c_row, p1, te)                 # v -> c
    v = _bgc(c, v, c_row, v_row, p2, te)                 # c -> v
    c = _bgc(v, c, v_row, c_row, p3, te)                 # v -> c
    v, logits = _bgc(c, v, c_row, v_row, p4, te,
                     head=params["head"])                # c -> v, fused head

    return logits[0, :nv], v[:nv], c[:nc]


# ---------------------------------------------------------------------------
# Pure-JAX reference (real gather / segment_sum), mimicking the deliberate
# bf16 MXU-input casts of the kernel at the same three points.
# ---------------------------------------------------------------------------
def _mm(a, b):
    return jnp.dot(a, b, precision=lax.Precision.HIGHEST)


def _ref_embed(x, p):
    h = _layernorm(x, p["g"], p["b"])
    h = jnp.maximum(_mm(h, p["W1"]) + p["b1"], 0.0)
    return jnp.maximum(_mm(h, p["W2"]) + p["b2"], 0.0)


def _ref_bgc(left, right, src, tgt, p):
    A = (_mm(right, p["Wl"]) + p["bl_fe"]).astype(jnp.bfloat16).astype(jnp.float32)
    B = _mm(left, p["Wr"]).astype(jnp.bfloat16).astype(jnp.float32)
    pre = A[tgt] + B[src]
    z = jnp.maximum(_layernorm(pre, p["lnf_g"], p["lnf_b"]), 0.0)
    msg = (_mm(z, p["Wfin"]) + p["bfin"]).astype(jnp.bfloat16).astype(jnp.float32)
    agg = jax.ops.segment_sum(msg, tgt, num_segments=right.shape[0])
    post = _layernorm(agg, p["lnp_g"], p["lnp_b"])
    h = jnp.maximum(_mm(post, p["Wo1p"]) + _mm(right, p["Wo1r"]) + p["bo1"], 0.0)
    return _mm(h, p["Wo2"]) + p["bo2"]


def _ref_forward(params, cons, ei, ef, var):
    del ef
    cidx, vidx = ei[0], ei[1]
    eb = params["edge_ln"]["b"]
    c = _ref_embed(cons, params["cons_emb"])
    v = _ref_embed(var, params["var_emb"])
    c = _ref_bgc(v, c, vidx, cidx, _prep_conv(params["conv_v_to_c"], eb))
    v = _ref_bgc(c, v, cidx, vidx, _prep_conv(params["conv_c_to_v"], eb))
    c = _ref_bgc(v, c, vidx, cidx, _prep_conv(params["conv_v_to_c2"], eb))
    v = _ref_bgc(c, v, cidx, vidx, _prep_conv(params["conv_c_to_v2"], eb))
    h = jnp.maximum(_mm(v, params["head"]["W1"]) + params["head"]["b1"], 0.0)
    out = jnp.sum(h * params["head"]["W2t"], axis=-1)
    return out, v, c


# ---------------------------------------------------------------------------
# Deterministic synthetic parameters (shapes follow the PyTorch __init__)
# ---------------------------------------------------------------------------
def _nrm(key, shape, scale=0.1):
    return jax.random.normal(key, shape, jnp.float32) * scale


def init_embed_params(key, nfeat):
    ks = jax.random.split(key, 6)
    return dict(
        g=1.0 + _nrm(ks[0], (1, nfeat)), b=_nrm(ks[1], (1, nfeat)),
        W1=_nrm(ks[2], (nfeat, EMB)), b1=_nrm(ks[3], (1, EMB)),
        W2=_nrm(ks[4], (EMB, EMB)), b2=_nrm(ks[5], (1, EMB)),
    )


def init_bgc_params(key):
    ks = jax.random.split(key, 14)
    return dict(
        Wl=_nrm(ks[0], (EMB, EMB)), bl=_nrm(ks[1], (1, EMB)),      # feature_module_left
        We=_nrm(ks[2], (1, EMB)),                                   # feature_module_edge (no bias)
        Wr=_nrm(ks[3], (EMB, EMB)),                                 # feature_module_right (no bias)
        lnf_g=1.0 + _nrm(ks[4], (1, EMB)), lnf_b=_nrm(ks[5], (1, EMB)),
        Wfin=_nrm(ks[6], (EMB, EMB)), bfin=_nrm(ks[7], (1, EMB)),   # feature_module_final linear
        lnp_g=1.0 + _nrm(ks[8], (1, EMB)), lnp_b=_nrm(ks[9], (1, EMB)),
        Wo1=_nrm(ks[10], (2 * EMB, EMB)), bo1=_nrm(ks[11], (1, EMB)),
        Wo2=_nrm(ks[12], (EMB, EMB)), bo2=_nrm(ks[13], (1, EMB)),
    )


def init_params(key):
    ks = jax.random.split(key, 8)
    return dict(
        cons_emb=init_embed_params(ks[0], 4),
        edge_ln=dict(g=1.0 + _nrm(ks[1], (1, 1)),
                     b=_nrm(jax.random.fold_in(ks[1], 1), (1, 1))),
        var_emb=init_embed_params(ks[2], 6),
        conv_v_to_c=init_bgc_params(ks[3]),
        conv_c_to_v=init_bgc_params(ks[4]),
        conv_v_to_c2=init_bgc_params(ks[5]),
        conv_c_to_v2=init_bgc_params(ks[6]),
        head=dict(W1=_nrm(jax.random.fold_in(ks[7], 0), (EMB, EMB)),
                  b1=_nrm(jax.random.fold_in(ks[7], 1), (1, EMB)),
                  W2t=_nrm(jax.random.fold_in(ks[7], 2), (1, EMB))),  # (64->1) weight, transposed
    )


# ---------------------------------------------------------------------------
if __name__ == "__main__":
    key = jax.random.PRNGKey(0)
    k_p, k_c, k_v, k_e, k_i0, k_i1 = jax.random.split(key, 6)

    # small but non-trivial: exercises node-row padding and multiple edge tiles
    n_cons, n_vars, n_edges = 20, 50, 600
    cons_feat = jax.random.normal(k_c, (n_cons, 4), jnp.float32)
    var_feat = jax.random.normal(k_v, (n_vars, 6), jnp.float32)
    edge_feat = jax.random.normal(k_e, (n_edges, 1), jnp.float32)
    edge_indices = jnp.stack([
        jax.random.randint(k_i0, (n_edges,), 0, n_cons),   # row 0: constraint index
        jax.random.randint(k_i1, (n_edges,), 0, n_vars),   # row 1: variable index
    ], axis=0)

    params = init_params(k_p)

    fwd = jax.jit(gnn_policy_forward)
    out, vfeat, cfeat = fwd(params, cons_feat, edge_indices, edge_feat, var_feat)
    jax.block_until_ready((out, vfeat, cfeat))

    ro, rv, rc = _ref_forward(params, cons_feat, edge_indices, edge_feat, var_feat)
    assert out.shape == (n_vars,)
    assert vfeat.shape == (n_vars, EMB) and cfeat.shape == (n_cons, EMB)
    # tolerance reflects the deliberate bf16 MXU-input mixed precision (f32 accumulation)
    assert jnp.allclose(out, ro, atol=2e-2, rtol=2e-2), float(jnp.max(jnp.abs(out - ro)))
    assert jnp.allclose(vfeat, rv, atol=2e-2, rtol=2e-2), float(jnp.max(jnp.abs(vfeat - rv)))
    assert jnp.allclose(cfeat, rc, atol=2e-2, rtol=2e-2), float(jnp.max(jnp.abs(cfeat - rc)))

    print("KERNEL_OK")
</pallas_src>

<mosaic_0001>
module attributes {stable_mosaic.version = 11 : i64} {
  func.func @embed_kernel(%arg0: i32, %arg1: memref<128x6xf32, #tpu.memory_space<vmem>>, %arg2: memref<1x6xf32, #tpu.memory_space<vmem>>, %arg3: memref<1x6xf32, #tpu.memory_space<vmem>>, %arg4: memref<6x64xf32, #tpu.memory_space<vmem>>, %arg5: memref<1x64xf32, #tpu.memory_space<vmem>>, %arg6: memref<64x64xf32, #tpu.memory_space<vmem>>, %arg7: memref<1x64xf32, #tpu.memory_space<vmem>>, %arg8: memref<128x64xf32, #tpu.memory_space<vmem>>) attributes {dimension_semantics = [#tpu.dimension_semantics<parallel>], iteration_bounds = array<i64: 1>, scalar_prefetch = 0 : i64, scratch_operands = 0 : i64, tpu.core_type = #tpu.core_type<tc>, window_params = [{transform_indices = @transform_0, window_bounds = array<i64: 128, 6>}, {pipeline_mode = #tpu.pipeline_mode<synchronous>, transform_indices = @transform_1, window_bounds = array<i64: 1, 6>}, {pipeline_mode = #tpu.pipeline_mode<synchronous>, transform_indices = @transform_2, window_bounds = array<i64: 1, 6>}, {pipeline_mode = #tpu.pipeline_mode<synchronous>, transform_indices = @transform_3, window_bounds = array<i64: 6, 64>}, {pipeline_mode = #tpu.pipeline_mode<synchronous>, transform_indices = @transform_4, window_bounds = array<i64: 1, 64>}, {pipeline_mode = #tpu.pipeline_mode<synchronous>, transform_indices = @transform_5, window_bounds = array<i64: 64, 64>}, {pipeline_mode = #tpu.pipeline_mode<synchronous>, transform_indices = @transform_6, window_bounds = array<i64: 1, 64>}, {transform_indices = @transform_7, window_bounds = array<i64: 128, 64>}]} {
    %c0 = arith.constant 0 : index
    %c0_0 = arith.constant 0 : index
    %0 = vector.load %arg1[%c0, %c0_0] : memref<128x6xf32, #tpu.memory_space<vmem>>, vector<128x6xf32>
    %c0_1 = arith.constant 0 : index
    %c0_2 = arith.constant 0 : index
    %1 = vector.load %arg2[%c0_1, %c0_2] : memref<1x6xf32, #tpu.memory_space<vmem>>, vector<1x6xf32>
    %c0_3 = arith.constant 0 : index
    %c0_4 = arith.constant 0 : index
    %2 = vector.load %arg3[%c0_3, %c0_4] : memref<1x6xf32, #tpu.memory_space<vmem>>, vector<1x6xf32>
    %cst = arith.constant dense<0.000000e+00> : vector<128xf32>
    %3 = vector.multi_reduction <add>, %0, %cst [1] : vector<128x6xf32> to vector<128xf32>
    %4 = vector.shape_cast %3 : vector<128xf32> to vector<128x1xf32>
    %cst_5 = arith.constant 6.000000e+00 : f32
    %5 = vector.broadcast %cst_5 : f32 to vector<128x1xf32>
    %6 = arith.divf %4, %5 : vector<128x1xf32>
    %7 = vector.broadcast %6 : vector<128x1xf32> to vector<128x6xf32>
    %8 = arith.subf %0, %7 : vector<128x6xf32>
    %9 = arith.mulf %8, %8 : vector<128x6xf32>
    %cst_6 = arith.constant dense<0.000000e+00> : vector<128xf32>
    %10 = vector.multi_reduction <add>, %9, %cst_6 [1] : vector<128x6xf32> to vector<128xf32>
    %11 = vector.shape_cast %10 : vector<128xf32> to vector<128x1xf32>
    %cst_7 = arith.constant 6.000000e+00 : f32
    %12 = vector.broadcast %cst_7 : f32 to vector<128x1xf32>
    %13 = arith.divf %11, %12 : vector<128x1xf32>
    %14 = vector.broadcast %6 : vector<128x1xf32> to vector<128x6xf32>
    %15 = arith.subf %0, %14 : vector<128x6xf32>
    %cst_8 = arith.constant 9.99999974E-6 : f32
    %16 = vector.broadcast %cst_8 : f32 to vector<128x1xf32>
    %17 = arith.addf %13, %16 : vector<128x1xf32>
    %18 = math.rsqrt %17 : vector<128x1xf32>
    %19 = vector.broadcast %18 : vector<128x1xf32> to vector<128x6xf32>
    %20 = arith.mulf %15, %19 : vector<128x6xf32>
    %21 = vector.broadcast %1 : vector<1x6xf32> to vector<128x6xf32>
    %22 = arith.mulf %20, %21 : vector<128x6xf32>
    %23 = vector.broadcast %2 : vector<1x6xf32> to vector<128x6xf32>
    %24 = arith.addf %22, %23 : vector<128x6xf32>
    %c0_9 = arith.constant 0 : index
    %c0_10 = arith.constant 0 : index
    %25 = vector.load %arg4[%c0_9, %c0_10] : memref<6x64xf32, #tpu.memory_space<vmem>>, vector<6x64xf32>
    %cst_11 = arith.constant dense<0.000000e+00> : vector<128x64xf32>
    %26 = tpu.matmul %24, %25, %cst_11 {dimension_numbers = #tpu.dot_dimension_numbers<[1], [0], [0], [1], [0, 0, 1, 1], [], []>} : vector<128x6xf32>, vector<6x64xf32>, vector<128x64xf32> -> vector<128x64xf32>
    %c0_12 = arith.constant 0 : index
    %c0_13 = arith.constant 0 : index
    %27 = vector.load %arg5[%c0_12, %c0_13] : memref<1x64xf32, #tpu.memory_space<vmem>>, vector<1x64xf32>
    %28 = vector.broadcast %27 : vector<1x64xf32> to vector<128x64xf32>
    %29 = arith.addf %26, %28 : vector<128x64xf32>
    %cst_14 = arith.constant 0.000000e+00 : f32
    %30 = vector.broadcast %cst_14 : f32 to vector<128x64xf32>
    %31 = arith.maximumf %29, %30 : vector<128x64xf32>
    %c0_15 = arith.constant 0 : index
    %c0_16 = arith.constant 0 : index
    %32 = vector.load %arg6[%c0_15, %c0_16] : memref<64x64xf32, #tpu.memory_space<vmem>>, vector<64x64xf32>
    %cst_17 = arith.constant dense<0.000000e+00> : vector<128x64xf32>
    %33 = tpu.matmul %31, %32, %cst_17 {dimension_numbers = #tpu.dot_dimension_numbers<[1], [0], [0], [1], [0, 0, 1, 1], [], []>} : vector<128x64xf32>, vector<64x64xf32>, vector<128x64xf32> -> vector<128x64xf32>
    %c0_18 = arith.constant 0 : index
    %c0_19 = arith.constant 0 : index
    %34 = vector.load %arg7[%c0_18, %c0_19] : memref<1x64xf32, #tpu.memory_space<vmem>>, vector<1x64xf32>
    %35 = vector.broadcast %34 : vector<1x64xf32> to vector<128x64xf32>
    %36 = arith.addf %33, %35 : vector<128x64xf32>
    %cst_20 = arith.constant 0.000000e+00 : f32
    %37 = vector.broadcast %cst_20 : f32 to vector<128x64xf32>
    %38 = arith.maximumf %36, %37 : vector<128x64xf32>
    %c0_21 = arith.constant 0 : index
    %c0_22 = arith.constant 0 : index
    %39 = vector.load %arg8[%c0_21, %c0_22] : memref<128x64xf32, #tpu.memory_space<vmem>>, vector<128x64xf32>
    tpu.vector_store %arg8[%c0_21, %c0_22], %38 {strides = array<i32>} : memref<128x64xf32, #tpu.memory_space<vmem>>, vector<128x64xf32>,
    return
  }
  func.func @transform_0(%arg0: i32) -> (i32, i32) {
    %c0_i32 = arith.constant 0 : i32
    %c0_i32_0 = arith.constant 0 : i32
    return %arg0, %c0_i32 : i32, i32
  }
  func.func @transform_1(%arg0: i32) -> (i32, i32) {
    %c0_i32 = arith.constant 0 : i32
    %c0_i32_0 = arith.constant 0 : i32
    %c0_i32_1 = arith.constant 0 : i32
    return %c0_i32, %c0_i32_0 : i32, i32
  }
  func.func @transform_2(%arg0: i32) -> (i32, i32) {
    %c0_i32 = arith.constant 0 : i32
    %c0_i32_0 = arith.constant 0 : i32
    %c0_i32_1 = arith.constant 0 : i32
    return %c0_i32, %c0_i32_0 : i32, i32
  }
  func.func @transform_3(%arg0: i32) -> (i32, i32) {
    %c0_i32 = arith.constant 0 : i32
    %c0_i32_0 = arith.constant 0 : i32
    %c0_i32_1 = arith.constant 0 : i32
    return %c0_i32, %c0_i32_0 : i32, i32
  }
  func.func @transform_4(%arg0: i32) -> (i32, i32) {
    %c0_i32 = arith.constant 0 : i32
    %c0_i32_0 = arith.constant 0 : i32
    %c0_i32_1 = arith.constant 0 : i32
    return %c0_i32, %c0_i32_0 : i32, i32
  }
  func.func @transform_5(%arg0: i32) -> (i32, i32) {
    %c0_i32 = arith.constant 0 : i32
    %c0_i32_0 = arith.constant 0 : i32
    %c0_i32_1 = arith.constant 0 : i32
    return %c0_i32, %c0_i32_0 : i32, i32
  }
  func.func @transform_6(%arg0: i32) -> (i32, i32) {
    %c0_i32 = arith.constant 0 : i32
    %c0_i32_0 = arith.constant 0 : i32
    %c0_i32_1 = arith.constant 0 : i32
    return %c0_i32, %c0_i32_0 : i32, i32
  }
  func.func @transform_7(%arg0: i32) -> (i32, i32) {
    %c0_i32 = arith.constant 0 : i32
    %c0_i32_0 = arith.constant 0 : i32
    return %arg0, %c0_i32 : i32, i32
  }
}

module attributes {stable_mosaic.version = 11 : i64} {
  func.func @embed_kernel(%arg0: i32, %arg1: memref<128x4xf32, #tpu.memory_space<vmem>>, %arg2: memref<1x4xf32, #tpu.memory_space<vmem>>, %arg3: memref<1x4xf32, #tpu.memory_space<vmem>>, %arg4: memref<4x64xf32, #tpu.memory_space<vmem>>, %arg5: memref<1x64xf32, #tpu.memory_space<vmem>>, %arg6: memref<64x64xf32, #tpu.memory_space<vmem>>, %arg7: memref<1x64xf32, #tpu.memory_space<vmem>>, %arg8: memref<128x64xf32, #tpu.memory_space<vmem>>) attributes {dimension_semantics = [#tpu.dimension_semantics<parallel>], iteration_bounds = array<i64: 1>, scalar_prefetch = 0 : i64, scratch_operands = 0 : i64, tpu.core_type = #tpu.core_type<tc>, window_params = [{transform_indices = @transform_0, window_bounds = array<i64: 128, 4>}, {pipeline_mode = #tpu.pipeline_mode<synchronous>, transform_indices = @transform_1, window_bounds = array<i64: 1, 4>}, {pipeline_mode = #tpu.pipeline_mode<synchronous>, transform_indices = @transform_2, window_bounds = array<i64: 1, 4>}, {pipeline_mode = #tpu.pipeline_mode<synchronous>, transform_indices = @transform_3, window_bounds = array<i64: 4, 64>}, {pipeline_mode = #tpu.pipeline_mode<synchronous>, transform_indices = @transform_4, window_bounds = array<i64: 1, 64>}, {pipeline_mode = #tpu.pipeline_mode<synchronous>, transform_indices = @transform_5, window_bounds = array<i64: 64, 64>}, {pipeline_mode = #tpu.pipeline_mode<synchronous>, transform_indices = @transform_6, window_bounds = array<i64: 1, 64>}, {transform_indices = @transform_7, window_bounds = array<i64: 128, 64>}]} {
    %c0 = arith.constant 0 : index
    %c0_0 = arith.constant 0 : index
    %0 = vector.load %arg1[%c0, %c0_0] : memref<128x4xf32, #tpu.memory_space<vmem>>, vector<128x4xf32>
    %c0_1 = arith.constant 0 : index
    %c0_2 = arith.constant 0 : index
    %1 = vector.load %arg2[%c0_1, %c0_2] : memref<1x4xf32, #tpu.memory_space<vmem>>, vector<1x4xf32>
    %c0_3 = arith.constant 0 : index
    %c0_4 = arith.constant 0 : index
    %2 = vector.load %arg3[%c0_3, %c0_4] : memref<1x4xf32, #tpu.memory_space<vmem>>, vector<1x4xf32>
    %cst = arith.constant dense<0.000000e+00> : vector<128xf32>
    %3 = vector.multi_reduction <add>, %0, %cst [1] : vector<128x4xf32> to vector<128xf32>
    %4 = vector.shape_cast %3 : vector<128xf32> to vector<128x1xf32>
    %cst_5 = arith.constant 4.000000e+00 : f32
    %5 = vector.broadcast %cst_5 : f32 to vector<128x1xf32>
    %6 = arith.divf %4, %5 : vector<128x1xf32>
    %7 = vector.broadcast %6 : vector<128x1xf32> to vector<128x4xf32>
    %8 = arith.subf %0, %7 : vector<128x4xf32>
    %9 = arith.mulf %8, %8 : vector<128x4xf32>
    %cst_6 = arith.constant dense<0.000000e+00> : vector<128xf32>
    %10 = vector.multi_reduction <add>, %9, %cst_6 [1] : vector<128x4xf32> to vector<128xf32>
    %11 = vector.shape_cast %10 : vector<128xf32> to vector<128x1xf32>
    %cst_7 = arith.constant 4.000000e+00 : f32
    %12 = vector.broadcast %cst_7 : f32 to vector<128x1xf32>
    %13 = arith.divf %11, %12 : vector<128x1xf32>
    %14 = vector.broadcast %6 : vector<128x1xf32> to vector<128x4xf32>
    %15 = arith.subf %0, %14 : vector<128x4xf32>
    %cst_8 = arith.constant 9.99999974E-6 : f32
    %16 = vector.broadcast %cst_8 : f32 to vector<128x1xf32>
    %17 = arith.addf %13, %16 : vector<128x1xf32>
    %18 = math.rsqrt %17 : vector<128x1xf32>
    %19 = vector.broadcast %18 : vector<128x1xf32> to vector<128x4xf32>
    %20 = arith.mulf %15, %19 : vector<128x4xf32>
    %21 = vector.broadcast %1 : vector<1x4xf32> to vector<128x4xf32>
    %22 = arith.mulf %20, %21 : vector<128x4xf32>
    %23 = vector.broadcast %2 : vector<1x4xf32> to vector<128x4xf32>
    %24 = arith.addf %22, %23 : vector<128x4xf32>
    %c0_9 = arith.constant 0 : index
    %c0_10 = arith.constant 0 : index
    %25 = vector.load %arg4[%c0_9, %c0_10] : memref<4x64xf32, #tpu.memory_space<vmem>>, vector<4x64xf32>
    %cst_11 = arith.constant dense<0.000000e+00> : vector<128x64xf32>
    %26 = tpu.matmul %24, %25, %cst_11 {dimension_numbers = #tpu.dot_dimension_numbers<[1], [0], [0], [1], [0, 0, 1, 1], [], []>} : vector<128x4xf32>, vector<4x64xf32>, vector<128x64xf32> -> vector<128x64xf32>
    %c0_12 = arith.constant 0 : index
    %c0_13 = arith.constant 0 : index
    %27 = vector.load %arg5[%c0_12, %c0_13] : memref<1x64xf32, #tpu.memory_space<vmem>>, vector<1x64xf32>
    %28 = vector.broadcast %27 : vector<1x64xf32> to vector<128x64xf32>
    %29 = arith.addf %26, %28 : vector<128x64xf32>
    %cst_14 = arith.constant 0.000000e+00 : f32
    %30 = vector.broadcast %cst_14 : f32 to vector<128x64xf32>
    %31 = arith.maximumf %29, %30 : vector<128x64xf32>
    %c0_15 = arith.constant 0 : index
    %c0_16 = arith.constant 0 : index
    %32 = vector.load %arg6[%c0_15, %c0_16] : memref<64x64xf32, #tpu.memory_space<vmem>>, vector<64x64xf32>
    %cst_17 = arith.constant dense<0.000000e+00> : vector<128x64xf32>
    %33 = tpu.matmul %31, %32, %cst_17 {dimension_numbers = #tpu.dot_dimension_numbers<[1], [0], [0], [1], [0, 0, 1, 1], [], []>} : vector<128x64xf32>, vector<64x64xf32>, vector<128x64xf32> -> vector<128x64xf32>
    %c0_18 = arith.constant 0 : index
    %c0_19 = arith.constant 0 : index
    %34 = vector.load %arg7[%c0_18, %c0_19] : memref<1x64xf32, #tpu.memory_space<vmem>>, vector<1x64xf32>
    %35 = vector.broadcast %34 : vector<1x64xf32> to vector<128x64xf32>
    %36 = arith.addf %33, %35 : vector<128x64xf32>
    %cst_20 = arith.constant 0.000000e+00 : f32
    %37 = vector.broadcast %cst_20 : f32 to vector<128x64xf32>
    %38 = arith.maximumf %36, %37 : vector<128x64xf32>
    %c0_21 = arith.constant 0 : index
    %c0_22 = arith.constant 0 : index
    %39 = vector.load %arg8[%c0_21, %c0_22] : memref<128x64xf32, #tpu.memory_space<vmem>>, vector<128x64xf32>
    tpu.vector_store %arg8[%c0_21, %c0_22], %38 {strides = array<i32>} : memref<128x64xf32, #tpu.memory_space<vmem>>, vector<128x64xf32>,
    return
  }
  func.func @transform_0(%arg0: i32) -> (i32, i32) {
    %c0_i32 = arith.constant 0 : i32
    %c0_i32_0 = arith.constant 0 : i32
    return %arg0, %c0_i32 : i32, i32
  }
  func.func @transform_1(%arg0: i32) -> (i32, i32) {
    %c0_i32 = arith.constant 0 : i32
    %c0_i32_0 = arith.constant 0 : i32
    %c0_i32_1 = arith.constant 0 : i32
    return %c0_i32, %c0_i32_0 : i32, i32
  }
  func.func @transform_2(%arg0: i32) -> (i32, i32) {
    %c0_i32 = arith.constant 0 : i32
    %c0_i32_0 = arith.constant 0 : i32
    %c0_i32_1 = arith.constant 0 : i32
    return %c0_i32, %c0_i32_0 : i32, i32
  }
  func.func @transform_3(%arg0: i32) -> (i32, i32) {
    %c0_i32 = arith.constant 0 : i32
    %c0_i32_0 = arith.constant 0 : i32
    %c0_i32_1 = arith.constant 0 : i32
    return %c0_i32, %c0_i32_0 : i32, i32
  }
  func.func @transform_4(%arg0: i32) -> (i32, i32) {
    %c0_i32 = arith.constant 0 : i32
    %c0_i32_0 = arith.constant 0 : i32
    %c0_i32_1 = arith.constant 0 : i32
    return %c0_i32, %c0_i32_0 : i32, i32
  }
  func.func @transform_5(%arg0: i32) -> (i32, i32) {
    %c0_i32 = arith.constant 0 : i32
    %c0_i32_0 = arith.constant 0 : i32
    %c0_i32_1 = arith.constant 0 : i32
    return %c0_i32, %c0_i32_0 : i32, i32
  }
  func.func @transform_6(%arg0: i32) -> (i32, i32) {
    %c0_i32 = arith.constant 0 : i32
    %c0_i32_0 = arith.constant 0 : i32
    %c0_i32_1 = arith.constant 0 : i32
    return %c0_i32, %c0_i32_0 : i32, i32
  }
  func.func @transform_7(%arg0: i32) -> (i32, i32) {
    %c0_i32 = arith.constant 0 : i32
    %c0_i32_0 = arith.constant 0 : i32
    return %arg0, %c0_i32 : i32, i32
  }
}

module attributes {stable_mosaic.version = 11 : i64} {
  func.func @conv_kernel(%arg0: i32, %arg1: memref<1x256xi32, #tpu.memory_space<vmem>>, %arg2: memref<1x256xi32, #tpu.memory_space<vmem>>, %arg3: memref<128x64xf32, #tpu.memory_space<vmem>>, %arg4: memref<128x64xf32, #tpu.memory_space<vmem>>, %arg5: memref<64x64xf32, #tpu.memory_space<vmem>>, %arg6: memref<1x64xf32, #tpu.memory_space<vmem>>, %arg7: memref<64x64xf32, #tpu.memory_space<vmem>>, %arg8: memref<1x64xf32, #tpu.memory_space<vmem>>, %arg9: memref<1x64xf32, #tpu.memory_space<vmem>>, %arg10: memref<64x64xf32, #tpu.memory_space<vmem>>, %arg11: memref<1x64xf32, #tpu.memory_space<vmem>>, %arg12: memref<1x64xf32, #tpu.memory_space<vmem>>, %arg13: memref<1x64xf32, #tpu.memory_space<vmem>>, %arg14: memref<64x64xf32, #tpu.memory_space<vmem>>, %arg15: memref<64x64xf32, #tpu.memory_space<vmem>>, %arg16: memref<1x64xf32, #tpu.memory_space<vmem>>, %arg17: memref<64x64xf32, #tpu.memory_space<vmem>>, %arg18: memref<1x64xf32, #tpu.memory_space<vmem>>, %arg19: memref<128x64xf32, #tpu.memory_space<vmem>>, %arg20: memref<128x64xbf16, #tpu.memory_space<vmem>>, %arg21: memref<128x64xbf16, #tpu.memory_space<vmem>>) attributes {dimension_semantics = [#tpu.dimension_semantics<arbitrary>], iteration_bounds = array<i64: 3>, scalar_prefetch = 0 : i64, scratch_operands = 2 : i64, tpu.core_type = #tpu.core_type<tc>, window_params = [{transform_indices = @transform_0, window_bounds = array<i64: 1, 256>}, {transform_indices = @transform_1, window_bounds = array<i64: 1, 256>}, {pipeline_mode = #tpu.pipeline_mode<synchronous>, transform_indices = @transform_2, window_bounds = array<i64: 128, 64>}, {pipeline_mode = #tpu.pipeline_mode<synchronous>, transform_indices = @transform_3, window_bounds = array<i64: 128, 64>}, {pipeline_mode = #tpu.pipeline_mode<synchronous>, transform_indices = @transform_4, window_bounds = array<i64: 64, 64>}, {pipeline_mode = #tpu.pipeline_mode<synchronous>, transform_indices = @transform_5, window_bounds = array<i64: 1, 64>}, {pipeline_mode = #tpu.pipeline_mode<synchronous>, transform_indices = @transform_6, window_bounds = array<i64: 64, 64>}, {pipeline_mode = #tpu.pipeline_mode<synchronous>, transform_indices = @transform_7, window_bounds = array<i64: 1, 64>}, {pipeline_mode = #tpu.pipeline_mode<synchronous>, transform_indices = @transform_8, window_bounds = array<i64: 1, 64>}, {pipeline_mode = #tpu.pipeline_mode<synchronous>, transform_indices = @transform_9, window_bounds = array<i64: 64, 64>}, {pipeline_mode = #tpu.pipeline_mode<synchronous>, transform_indices = @transform_10, window_bounds = array<i64: 1, 64>}, {pipeline_mode = #tpu.pipeline_mode<synchronous>, transform_indices = @transform_11, window_bounds = array<i64: 1, 64>}, {pipeline_mode = #tpu.pipeline_mode<synchronous>, transform_indices = @transform_12, window_bounds = array<i64: 1, 64>}, {pipeline_mode = #tpu.pipeline_mode<synchronous>, transform_indices = @transform_13, window_bounds = array<i64: 64, 64>}, {pipeline_mode = #tpu.pipeline_mode<synchronous>, transform_indices = @transform_14, window_bounds = array<i64: 64, 64>}, {pipeline_mode = #tpu.pipeline_mode<synchronous>, transform_indices = @transform_15, window_bounds = array<i64: 1, 64>}, {pipeline_mode = #tpu.pipeline_mode<synchronous>, transform_indices = @transform_16, window_bounds = array<i64: 64, 64>}, {pipeline_mode = #tpu.pipeline_mode<synchronous>, transform_indices = @transform_17, window_bounds = array<i64: 1, 64>}, {pipeline_mode = #tpu.pipeline_mode<synchronous>, transform_indices = @transform_18, window_bounds = array<i64: 128, 64>}]} {
    %c0_i32 = arith.constant 0 : i32
    %0 = arith.cmpi eq, %arg0, %c0_i32 : i32
    %1 = arith.extui %0 : i1 to i32
    %c0_i32_0 = arith.constant 0 : i32
    %2 = arith.cmpi ne, %1, %c0_i32_0 : i32
    scf.if %2 {
      %c0_30 = arith.constant 0 : index
      %c0_31 = arith.constant 0 : index
      %61 = vector.load %arg4[%c0_30, %c0_31] : memref<128x64xf32, #tpu.memory_space<vmem>>, vector<128x64xf32>
      %c0_32 = arith.constant 0 : index
      %c0_33 = arith.constant 0 : index
      %62 = vector.load %arg5[%c0_32, %c0_33] : memref<64x64xf32, #tpu.memory_space<vmem>>, vector<64x64xf32>
      %cst_34 = arith.constant dense<0.000000e+00> : vector<128x64xf32>
      %63 = tpu.matmul %61, %62, %cst_34 {dimension_numbers = #tpu.dot_dimension_numbers<[1], [0], [0], [1], [0, 0, 1, 1], [], []>} : vector<128x64xf32>, vector<64x64xf32>, vector<128x64xf32> -> vector<128x64xf32>
      %c0_35 = arith.constant 0 : index
      %c0_36 = arith.constant 0 : index
      %64 = vector.load %arg6[%c0_35, %c0_36] : memref<1x64xf32, #tpu.memory_space<vmem>>, vector<1x64xf32>
      %65 = vector.broadcast %64 : vector<1x64xf32> to vector<128x64xf32>
      %66 = arith.addf %63, %65 : vector<128x64xf32>
      %67 = arith.truncf %66 : vector<128x64xf32> to vector<128x64xbf16>
      %c0_37 = arith.constant 0 : index
      %c0_38 = arith.constant 0 : index
      %68 = vector.load %arg20[%c0_37, %c0_38] : memref<128x64xbf16, #tpu.memory_space<vmem>>, vector<128x64xbf16>
      tpu.vector_store %arg20[%c0_37, %c0_38], %67 {strides = array<i32>} : memref<128x64xbf16, #tpu.memory_space<vmem>>, vector<128x64xbf16>,
      %c0_39 = arith.constant 0 : index
      %c0_40 = arith.constant 0 : index
      %69 = vector.load %arg3[%c0_39, %c0_40] : memref<128x64xf32, #tpu.memory_space<vmem>>, vector<128x64xf32>
      %c0_41 = arith.constant 0 : index
      %c0_42 = arith.constant 0 : index
      %70 = vector.load %arg7[%c0_41, %c0_42] : memref<64x64xf32, #tpu.memory_space<vmem>>, vector<64x64xf32>
      %cst_43 = arith.constant dense<0.000000e+00> : vector<128x64xf32>
      %71 = tpu.matmul %69, %70, %cst_43 {dimension_numbers = #tpu.dot_dimension_numbers<[1], [0], [0], [1], [0, 0, 1, 1], [], []>} : vector<128x64xf32>, vector<64x64xf32>, vector<128x64xf32> -> vector<128x64xf32>
      %72 = arith.truncf %71 : vector<128x64xf32> to vector<128x64xbf16>
      %c0_44 = arith.constant 0 : index
      %c0_45 = arith.constant 0 : index
      %73 = vector.load %arg21[%c0_44, %c0_45] : memref<128x64xbf16, #tpu.memory_space<vmem>>, vector<128x64xbf16>
      tpu.vector_store %arg21[%c0_44, %c0_45], %72 {strides = array<i32>} : memref<128x64xbf16, #tpu.memory_space<vmem>>, vector<128x64xbf16>,
      %cst_46 = arith.constant 0.000000e+00 : f32
      %74 = vector.broadcast %cst_46 : f32 to vector<128x64xf32>
      %c0_47 = arith.constant 0 : index
      %c0_48 = arith.constant 0 : index
      %75 = vector.load %arg19[%c0_47, %c0_48] : memref<128x64xf32, #tpu.memory_space<vmem>>, vector<128x64xf32>
      tpu.vector_store %arg19[%c0_47, %c0_48], %74 {strides = array<i32>} : memref<128x64xf32, #tpu.memory_space<vmem>>, vector<128x64xf32>,
    } else {
    }
    %3 = tpu.iota {dimensions = array<i32: 0>} : vector<128x256xi32>
    %c0 = arith.constant 0 : index
    %c0_1 = arith.constant 0 : index
    %4 = vector.load %arg1[%c0, %c0_1] : memref<1x256xi32, #tpu.memory_space<vmem>>, vector<1x256xi32>
    %5 = vector.broadcast %4 : vector<1x256xi32> to vector<128x256xi32>
    %6 = arith.cmpi eq, %3, %5 : vector<128x256xi32>
    %7 = arith.extui %6 : vector<128x256xi1> to vector<128x256xi32>
    %8 = arith.sitofp %7 : vector<128x256xi32> to vector<128x256xf32>
    %9 = arith.truncf %8 : vector<128x256xf32> to vector<128x256xbf16>
    %10 = tpu.iota {dimensions = array<i32: 0>} : vector<128x256xi32>
    %c0_2 = arith.constant 0 : index
    %c0_3 = arith.constant 0 : index
    %11 = vector.load %arg2[%c0_2, %c0_3] : memref<1x256xi32, #tpu.memory_space<vmem>>, vector<1x256xi32>
    %12 = vector.broadcast %11 : vector<1x256xi32> to vector<128x256xi32>
    %13 = arith.cmpi eq, %10, %12 : vector<128x256xi32>
    %14 = arith.extui %13 : vector<128x256xi1> to vector<128x256xi32>
    %15 = arith.sitofp %14 : vector<128x256xi32> to vector<128x256xf32>
    %16 = arith.truncf %15 : vector<128x256xf32> to vector<128x256xbf16>
    %c0_4 = arith.constant 0 : index
    %c0_5 = arith.constant 0 : index
    %17 = vector.load %arg20[%c0_4, %c0_5] : memref<128x64xbf16, #tpu.memory_space<vmem>>, vector<128x64xbf16>
    %cst = arith.constant dense<0.000000e+00> : vector<256x64xf32>
    %18 = tpu.matmul %16, %17, %cst {dimension_numbers = #tpu.dot_dimension_numbers<[0], [0], [1], [1], [0, 1, 1, 1], [], []>} : vector<128x256xbf16>, vector<128x64xbf16>, vector<256x64xf32> -> vector<256x64xf32>
    %c0_6 = arith.constant 0 : index
    %c0_7 = arith.constant 0 : index
    %19 = vector.load %arg21[%c0_6, %c0_7] : memref<128x64xbf16, #tpu.memory_space<vmem>>, vector<128x64xbf16>
    %cst_8 = arith.constant dense<0.000000e+00> : vector<256x64xf32>
    %20 = tpu.matmul %9, %19, %cst_8 {dimension_numbers = #tpu.dot_dimension_numbers<[0], [0], [1], [1], [0, 1, 1, 1], [], []>} : vector<128x256xbf16>, vector<128x64xbf16>, vector<256x64xf32> -> vector<256x64xf32>
    %21 = arith.addf %18, %20 : vector<256x64xf32>
    %c0_9 = arith.constant 0 : index
    %c0_10 = arith.constant 0 : index
    %22 = vector.load %arg8[%c0_9, %c0_10] : memref<1x64xf32, #tpu.memory_space<vmem>>, vector<1x64xf32>
    %c0_11 = arith.constant 0 : index
    %c0_12 = arith.constant 0 : index
    %23 = vector.load %arg9[%c0_11, %c0_12] : memref<1x64xf32, #tpu.memory_space<vmem>>, vector<1x64xf32>
    %cst_13 = arith.constant dense<0.000000e+00> : vector<256xf32>
    %24 = vector.multi_reduction <add>, %21, %cst_13 [1] : vector<256x64xf32> to vector<256xf32>
    %25 = vector.shape_cast %24 : vector<256xf32> to vector<256x1xf32>
    %cst_14 = arith.constant 6.400000e+01 : f32
    %26 = vector.broadcast %cst_14 : f32 to vector<256x1xf32>
    %27 = arith.divf %25, %26 : vector<256x1xf32>
    %28 = vector.broadcast %27 : vector<256x1xf32> to vector<256x64xf32>
    %29 = arith.subf %21, %28 : vector<256x64xf32>
    %30 = arith.mulf %29, %29 : vector<256x64xf32>
    %cst_15 = arith.constant dense<0.000000e+00> : vector<256xf32>
    %31 = vector.multi_reduction <add>, %30, %cst_15 [1] : vector<256x64xf32> to vector<256xf32>
    %32 = vector.shape_cast %31 : vector<256xf32> to vector<256x1xf32>
    %cst_16 = arith.constant 6.400000e+01 : f32
    %33 = vector.broadcast %cst_16 : f32 to vector<256x1xf32>
    %34 = arith.divf %32, %33 : vector<256x1xf32>
    %35 = vector.broadcast %27 : vector<256x1xf32> to vector<256x64xf32>
    %36 = arith.subf %21, %35 : vector<256x64xf32>
    %cst_17 = arith.constant 9.99999974E-6 : f32
    %37 = vector.broadcast %cst_17 : f32 to vector<256x1xf32>
    %38 = arith.addf %34, %37 : vector<256x1xf32>
    %39 = math.rsqrt %38 : vector<256x1xf32>
    %40 = vector.broadcast %39 : vector<256x1xf32> to vector<256x64xf32>
    %41 = arith.mulf %36, %40 : vector<256x64xf32>
    %42 = vector.broadcast %22 : vector<1x64xf32> to vector<256x64xf32>
    %43 = arith.mulf %41, %42 : vector<256x64xf32>
    %44 = vector.broadcast %23 : vector<1x64xf32> to vector<256x64xf32>
    %45 = arith.addf %43, %44 : vector<256x64xf32>
    %cst_18 = arith.constant 0.000000e+00 : f32
    %46 = vector.broadcast %cst_18 : f32 to vector<256x64xf32>
    %47 = arith.maximumf %45, %46 : vector<256x64xf32>
    %c0_19 = arith.constant 0 : index
    %c0_20 = arith.constant 0 : index
    %48 = vector.load %arg10[%c0_19, %c0_20] : memref<64x64xf32, #tpu.memory_space<vmem>>, vector<64x64xf32>
    %cst_21 = arith.constant dense<0.000000e+00> : vector<256x64xf32>
    %49 = tpu.matmul %47, %48, %cst_21 {dimension_numbers = #tpu.dot_dimension_numbers<[1], [0], [0], [1], [0, 0, 1, 1], [], []>} : vector<256x64xf32>, vector<64x64xf32>, vector<256x64xf32> -> vector<256x64xf32>
    %c0_22 = arith.constant 0 : index
    %c0_23 = arith.constant 0 : index
    %50 = vector.load %arg11[%c0_22, %c0_23] : memref<1x64xf32, #tpu.memory_space<vmem>>, vector<1x64xf32>
    %51 = vector.broadcast %50 : vector<1x64xf32> to vector<256x64xf32>
    %52 = arith.addf %49, %51 : vector<256x64xf32>
    %c0_24 = arith.constant 0 : index
    %c0_25 = arith.constant 0 : index
    %53 = vector.load %arg19[%c0_24, %c0_25] : memref<128x64xf32, #tpu.memory_space<vmem>>, vector<128x64xf32>
    %54 = arith.truncf %52 : vector<256x64xf32> to vector<256x64xbf16>
    %cst_26 = arith.constant dense<0.000000e+00> : vector<128x64xf32>
    %55 = tpu.matmul %16, %54, %cst_26 {dimension_numbers = #tpu.dot_dimension_numbers<[1], [0], [0], [1], [0, 0, 1, 1], [], []>} : vector<128x256xbf16>, vector<256x64xbf16>, vector<128x64xf32> -> vector<128x64xf32>
    %56 = arith.addf %53, %55 : vector<128x64xf32>
    %c0_27 = arith.constant 0 : index
    %c0_28 = arith.constant 0 : index
    %57 = vector.load %arg19[%c0_27, %c0_28] : memref<128x64xf32, #tpu.memory_space<vmem>>, vector<128x64xf32>
    tpu.vector_store %arg19[%c0_27, %c0_28], %56 {strides = array<i32>} : memref<128x64xf32, #tpu.memory_space<vmem>>, vector<128x64xf32>,
    %c2_i32 = arith.constant 2 : i32
    %58 = arith.cmpi eq, %arg0, %c2_i32 : i32
    %59 = arith.extui %58 : i1 to i32
    %c0_i32_29 = arith.constant 0 : i32
    %60 = arith.cmpi ne, %59, %c0_i32_29 : i32
    scf.if %60 {
      %c0_30 = arith.constant 0 : index
      %c0_31 = arith.constant 0 : index
      %61 = vector.load %arg19[%c0_30, %c0_31] : memref<128x64xf32, #tpu.memory_space<vmem>>, vector<128x64xf32>
      %c0_32 = arith.constant 0 : index
      %c0_33 = arith.constant 0 : index
      %62 = vector.load %arg12[%c0_32, %c0_33] : memref<1x64xf32, #tpu.memory_space<vmem>>, vector<1x64xf32>
      %c0_34 = arith.constant 0 : index
      %c0_35 = arith.constant 0 : index
      %63 = vector.load %arg13[%c0_34, %c0_35] : memref<1x64xf32, #tpu.memory_space<vmem>>, vector<1x64xf32>
      %cst_36 = arith.constant dense<0.000000e+00> : vector<128xf32>
      %64 = vector.multi_reduction <add>, %61, %cst_36 [1] : vector<128x64xf32> to vector<128xf32>
      %65 = vector.shape_cast %64 : vector<128xf32> to vector<128x1xf32>
      %cst_37 = arith.constant 6.400000e+01 : f32
      %66 = vector.broadcast %cst_37 : f32 to vector<128x1xf32>
      %67 = arith.divf %65, %66 : vector<128x1xf32>
      %68 = vector.broadcast %67 : vector<128x1xf32> to vector<128x64xf32>
      %69 = arith.subf %61, %68 : vector<128x64xf32>
      %70 = arith.mulf %69, %69 : vector<128x64xf32>
      %cst_38 = arith.constant dense<0.000000e+00> : vector<128xf32>
      %71 = vector.multi_reduction <add>, %70, %cst_38 [1] : vector<128x64xf32> to vector<128xf32>
      %72 = vector.shape_cast %71 : vector<128xf32> to vector<128x1xf32>
      %cst_39 = arith.constant 6.400000e+01 : f32
      %73 = vector.broadcast %cst_39 : f32 to vector<128x1xf32>
      %74 = arith.divf %72, %73 : vector<128x1xf32>
      %75 = vector.broadcast %67 : vector<128x1xf32> to vector<128x64xf32>
      %76 = arith.subf %61, %75 : vector<128x64xf32>
      %cst_40 = arith.constant 9.99999974E-6 : f32
      %77 = vector.broadcast %cst_40 : f32 to vector<128x1xf32>
      %78 = arith.addf %74, %77 : vector<128x1xf32>
      %79 = math.rsqrt %78 : vector<128x1xf32>
      %80 = vector.broadcast %79 : vector<128x1xf32> to vector<128x64xf32>
      %81 = arith.mulf %76, %80 : vector<128x64xf32>
      %82 = vector.broadcast %62 : vector<1x64xf32> to vector<128x64xf32>
      %83 = arith.mulf %81, %82 : vector<128x64xf32>
      %84 = vector.broadcast %63 : vector<1x64xf32> to vector<128x64xf32>
      %85 = arith.addf %83, %84 : vector<128x64xf32>
      %c0_41 = arith.constant 0 : index
      %c0_42 = arith.constant 0 : index
      %86 = vector.load %arg14[%c0_41, %c0_42] : memref<64x64xf32, #tpu.memory_space<vmem>>, vector<64x64xf32>
      %cst_43 = arith.constant dense<0.000000e+00> : vector<128x64xf32>
      %87 = tpu.matmul %85, %86, %cst_43 {dimension_numbers = #tpu.dot_dimension_numbers<[1], [0], [0], [1], [0, 0, 1, 1], [], []>} : vector<128x64xf32>, vector<64x64xf32>, vector<128x64xf32> -> vector<128x64xf32>
      %c0_44 = arith.constant 0 : index
      %c0_45 = arith.constant 0 : index
      %88 = vector.load %arg4[%c0_44, %c0_45] : memref<128x64xf32, #tpu.memory_space<vmem>>, vector<128x64xf32>
      %c0_46 = arith.constant 0 : index
      %c0_47 = arith.constant 0 : index
      %89 = vector.load %arg15[%c0_46, %c0_47] : memref<64x64xf32, #tpu.memory_space<vmem>>, vector<64x64xf32>
      %cst_48 = arith.constant dense<0.000000e+00> : vector<128x64xf32>
      %90 = tpu.matmul %88, %89, %cst_48 {dimension_numbers = #tpu.dot_dimension_numbers<[1], [0], [0], [1], [0, 0, 1, 1], [], []>} : vector<128x64xf32>, vector<64x64xf32>, vector<128x64xf32> -> vector<128x64xf32>
      %91 = arith.addf %87, %90 : vector<128x64xf32>
      %c0_49 = arith.constant 0 : index
      %c0_50 = arith.constant 0 : index
      %92 = vector.load %arg16[%c0_49, %c0_50] : memref<1x64xf32, #tpu.memory_space<vmem>>, vector<1x64xf32>
      %93 = vector.broadcast %92 : vector<1x64xf32> to vector<128x64xf32>
      %94 = arith.addf %91, %93 : vector<128x64xf32>
      %cst_51 = arith.constant 0.000000e+00 : f32
      %95 = vector.broadcast %cst_51 : f32 to vector<128x64xf32>
      %96 = arith.maximumf %94, %95 : vector<128x64xf32>
      %c0_52 = arith.constant 0 : index
      %c0_53 = arith.constant 0 : index
      %97 = vector.load %arg17[%c0_52, %c0_53] : memref<64x64xf32, #tpu.memory_space<vmem>>, vector<64x64xf32>
      %cst_54 = arith.constant dense<0.000000e+00> : vector<128x64xf32>
      %98 = tpu.matmul %96, %97, %cst_54 {dimension_numbers = #tpu.dot_dimension_numbers<[1], [0], [0], [1], [0, 0, 1, 1], [], []>} : vector<128x64xf32>, vector<64x64xf32>, vector<128x64xf32> -> vector<128x64xf32>
      %c0_55 = arith.constant 0 : index
      %c0_56 = arith.constant 0 : index
      %99 = vector.load %arg18[%c0_55, %c0_56] : memref<1x64xf32, #tpu.memory_space<vmem>>, vector<1x64xf32>
      %100 = vector.broadcast %99 : vector<1x64xf32> to vector<128x64xf32>
      %101 = arith.addf %98, %100 : vector<128x64xf32>
      %c0_57 = arith.constant 0 : index
      %c0_58 = arith.constant 0 : index
      %102 = vector.load %arg19[%c0_57, %c0_58] : memref<128x64xf32, #tpu.memory_space<vmem>>, vector<128x64xf32>
      tpu.vector_store %arg19[%c0_57, %c0_58], %101 {strides = array<i32>} : memref<128x64xf32, #tpu.memory_space<vmem>>, vector<128x64xf32>,
    } else {
    }
    return
  }
  func.func @transform_0(%arg0: i32) -> (i32, i32) {
    %c0_i32 = arith.constant 0 : i32
    %c0_i32_0 = arith.constant 0 : i32
    return %c0_i32, %arg0 : i32, i32
  }
  func.func @transform_1(%arg0: i32) -> (i32, i32) {
    %c0_i32 = arith.constant 0 : i32
    %c0_i32_0 = arith.constant 0 : i32
    return %c0_i32, %arg0 : i32, i32
  }
  func.func @transform_2(%arg0: i32) -> (i32, i32) {
    %c0_i32 = arith.constant 0 : i32
    %c0_i32_0 = arith.constant 0 : i32
    %c0_i32_1 = arith.constant 0 : i32
    return %c0_i32, %c0_i32_0 : i32, i32
  }
  func.func @transform_3(%arg0: i32) -> (i32, i32) {
    %c0_i32 = arith.constant 0 : i32
    %c0_i32_0 = arith.constant 0 : i32
    %c0_i32_1 = arith.constant 0 : i32
    return %c0_i32, %c0_i32_0 : i32, i32
  }
  func.func @transform_4(%arg0: i32) -> (i32, i32) {
    %c0_i32 = arith.constant 0 : i32
    %c0_i32_0 = arith.constant 0 : i32
    %c0_i32_1 = arith.constant 0 : i32
    return %c0_i32, %c0_i32_0 : i32, i32
  }
  func.func @transform_5(%arg0: i32) -> (i32, i32) {
    %c0_i32 = arith.constant 0 : i32
    %c0_i32_0 = arith.constant 0 : i32
    %c0_i32_1 = arith.constant 0 : i32
    return %c0_i32, %c0_i32_0 : i32, i32
  }
  func.func @transform_6(%arg0: i32) -> (i32, i32) {
    %c0_i32 = arith.constant 0 : i32
    %c0_i32_0 = arith.constant 0 : i32
    %c0_i32_1 = arith.constant 0 : i32
    return %c0_i32, %c0_i32_0 : i32, i32
  }
  func.func @transform_7(%arg0: i32) -> (i32, i32) {
    %c0_i32 = arith.constant 0 : i32
    %c0_i32_0 = arith.constant 0 : i32
    %c0_i32_1 = arith.constant 0 : i32
    return %c0_i32, %c0_i32_0 : i32, i32
  }
  func.func @transform_8(%arg0: i32) -> (i32, i32) {
    %c0_i32 = arith.constant 0 : i32
    %c0_i32_0 = arith.constant 0 : i32
    %c0_i32_1 = arith.constant 0 : i32
    return %c0_i32, %c0_i32_0 : i32, i32
  }
  func.func @transform_9(%arg0: i32) -> (i32, i32) {
    %c0_i32 = arith.constant 0 : i32
    %c0_i32_0 = arith.constant 0 : i32
    %c0_i32_1 = arith.constant 0 : i32
    return %c0_i32, %c0_i32_0 : i32, i32
  }
  func.func @transform_10(%arg0: i32) -> (i32, i32) {
    %c0_i32 = arith.constant 0 : i32
    %c0_i32_0 = arith.constant 0 : i32
    %c0_i32_1 = arith.constant 0 : i32
    return %c0_i32, %c0_i32_0 : i32, i32
  }
  func.func @transform_11(%arg0: i32) -> (i32, i32) {
    %c0_i32 = arith.constant 0 : i32
    %c0_i32_0 = arith.constant 0 : i32
    %c0_i32_1 = arith.constant 0 : i32
    return %c0_i32, %c0_i32_0 : i32, i32
  }
  func.func @transform_12(%arg0: i32) -> (i32, i32) {
    %c0_i32 = arith.constant 0 : i32
    %c0_i32_0 = arith.constant 0 : i32
    %c0_i32_1 = arith.constant 0 : i32
    return %c0_i32, %c0_i32_0 : i32, i32
  }
  func.func @transform_13(%arg0: i32) -> (i32, i32) {
    %c0_i32 = arith.constant 0 : i32
    %c0_i32_0 = arith.constant 0 : i32
    %c0_i32_1 = arith.constant 0 : i32
    return %c0_i32, %c0_i32_0 : i32, i32
  }
  func.func @transform_14(%arg0: i32) -> (i32, i32) {
    %c0_i32 = arith.constant 0 : i32
    %c0_i32_0 = arith.constant 0 : i32
    %c0_i32_1 = arith.constant 0 : i32
    return %c0_i32, %c0_i32_0 : i32, i32
  }
  func.func @transform_15(%arg0: i32) -> (i32, i32) {
    %c0_i32 = arith.constant 0 : i32
    %c0_i32_0 = arith.constant 0 : i32
    %c0_i32_1 = arith.constant 0 : i32
    return %c0_i32, %c0_i32_0 : i32, i32
  }
  func.func @transform_16(%arg0: i32) -> (i32, i32) {
    %c0_i32 = arith.constant 0 : i32
    %c0_i32_0 = arith.constant 0 : i32
    %c0_i32_1 = arith.constant 0 : i32
    return %c0_i32, %c0_i32_0 : i32, i32
  }
  func.func @transform_17(%arg0: i32) -> (i32, i32) {
    %c0_i32 = arith.constant 0 : i32
    %c0_i32_0 = arith.constant 0 : i32
    %c0_i32_1 = arith.constant 0 : i32
    return %c0_i32, %c0_i32_0 : i32, i32
  }
  func.func @transform_18(%arg0: i32) -> (i32, i32) {
    %c0_i32 = arith.constant 0 : i32
    %c0_i32_0 = arith.constant 0 : i32
    %c0_i32_1 = arith.constant 0 : i32
    return %c0_i32, %c0_i32_0 : i32, i32
  }
}

module attributes {stable_mosaic.version = 11 : i64} {
  func.func @conv_head_kernel(%arg0: i32, %arg1: memref<1x256xi32, #tpu.memory_space<vmem>>, %arg2: memref<1x256xi32, #tpu.memory_space<vmem>>, %arg3: memref<128x64xf32, #tpu.memory_space<vmem>>, %arg4: memref<128x64xf32, #tpu.memory_space<vmem>>, %arg5: memref<64x64xf32, #tpu.memory_space<vmem>>, %arg6: memref<1x64xf32, #tpu.memory_space<vmem>>, %arg7: memref<64x64xf32, #tpu.memory_space<vmem>>, %arg8: memref<1x64xf32, #tpu.memory_space<vmem>>, %arg9: memref<1x64xf32, #tpu.memory_space<vmem>>, %arg10: memref<64x64xf32, #tpu.memory_space<vmem>>, %arg11: memref<1x64xf32, #tpu.memory_space<vmem>>, %arg12: memref<1x64xf32, #tpu.memory_space<vmem>>, %arg13: memref<1x64xf32, #tpu.memory_space<vmem>>, %arg14: memref<64x64xf32, #tpu.memory_space<vmem>>, %arg15: memref<64x64xf32, #tpu.memory_space<vmem>>, %arg16: memref<1x64xf32, #tpu.memory_space<vmem>>, %arg17: memref<64x64xf32, #tpu.memory_space<vmem>>, %arg18: memref<1x64xf32, #tpu.memory_space<vmem>>, %arg19: memref<64x64xf32, #tpu.memory_space<vmem>>, %arg20: memref<1x64xf32, #tpu.memory_space<vmem>>, %arg21: memref<1x64xf32, #tpu.memory_space<vmem>>, %arg22: memref<128x64xf32, #tpu.memory_space<vmem>>, %arg23: memref<1x128xf32, #tpu.memory_space<vmem>>, %arg24: memref<128x64xbf16, #tpu.memory_space<vmem>>, %arg25: memref<128x64xbf16, #tpu.memory_space<vmem>>) attributes {dimension_semantics = [#tpu.dimension_semantics<arbitrary>], iteration_bounds = array<i64: 3>, scalar_prefetch = 0 : i64, scratch_operands = 2 : i64, tpu.core_type = #tpu.core_type<tc>, window_params = [{transform_indices = @transform_0, window_bounds = array<i64: 1, 256>}, {transform_indices = @transform_1, window_bounds = array<i64: 1, 256>}, {pipeline_mode = #tpu.pipeline_mode<synchronous>, transform_indices = @transform_2, window_bounds = array<i64: 128, 64>}, {pipeline_mode = #tpu.pipeline_mode<synchronous>, transform_indices = @transform_3, window_bounds = array<i64: 128, 64>}, {pipeline_mode = #tpu.pipeline_mode<synchronous>, transform_indices = @transform_4, window_bounds = array<i64: 64, 64>}, {pipeline_mode = #tpu.pipeline_mode<synchronous>, transform_indices = @transform_5, window_bounds = array<i64: 1, 64>}, {pipeline_mode = #tpu.pipeline_mode<synchronous>, transform_indices = @transform_6, window_bounds = array<i64: 64, 64>}, {pipeline_mode = #tpu.pipeline_mode<synchronous>, transform_indices = @transform_7, window_bounds = array<i64: 1, 64>}, {pipeline_mode = #tpu.pipeline_mode<synchronous>, transform_indices = @transform_8, window_bounds = array<i64: 1, 64>}, {pipeline_mode = #tpu.pipeline_mode<synchronous>, transform_indices = @transform_9, window_bounds = array<i64: 64, 64>}, {pipeline_mode = #tpu.pipeline_mode<synchronous>, transform_indices = @transform_10, window_bounds = array<i64: 1, 64>}, {pipeline_mode = #tpu.pipeline_mode<synchronous>, transform_indices = @transform_11, window_bounds = array<i64: 1, 64>}, {pipeline_mode = #tpu.pipeline_mode<synchronous>, transform_indices = @transform_12, window_bounds = array<i64: 1, 64>}, {pipeline_mode = #tpu.pipeline_mode<synchronous>, transform_indices = @transform_13, window_bounds = array<i64: 64, 64>}, {pipeline_mode = #tpu.pipeline_mode<synchronous>, transform_indices = @transform_14, window_bounds = array<i64: 64, 64>}, {pipeline_mode = #tpu.pipeline_mode<synchronous>, transform_indices = @transform_15, window_bounds = array<i64: 1, 64>}, {pipeline_mode = #tpu.pipeline_mode<synchronous>, transform_indices = @transform_16, window_bounds = array<i64: 64, 64>}, {pipeline_mode = #tpu.pipeline_mode<synchronous>, transform_indices = @transform_17, window_bounds = array<i64: 1, 64>}, {pipeline_mode = #tpu.pipeline_mode<synchronous>, transform_indices = @transform_18, window_bounds = array<i64: 64, 64>}, {pipeline_mode = #tpu.pipeline_mode<synchronous>, transform_indices = @transform_19, window_bounds = array<i64: 1, 64>}, {pipeline_mode = #tpu.pipeline_mode<synchronous>, transform_indices = @transform_20, window_bounds = array<i64: 1, 64>}, {pipeline_mode = #tpu.pipeline_mode<synchronous>, transform_indices = @transform_21, window_bounds = array<i64: 128, 64>}, {pipeline_mode = #tpu.pipeline_mode<synchronous>, transform_indices = @transform_22, window_bounds = array<i64: 1, 128>}]} {
    %c0_i32 = arith.constant 0 : i32
    %0 = arith.cmpi eq, %arg0, %c0_i32 : i32
    %1 = arith.extui %0 : i1 to i32
    %c0_i32_0 = arith.constant 0 : i32
    %2 = arith.cmpi ne, %1, %c0_i32_0 : i32
    scf.if %2 {
      %c0_30 = arith.constant 0 : index
      %c0_31 = arith.constant 0 : index
      %61 = vector.load %arg4[%c0_30, %c0_31] : memref<128x64xf32, #tpu.memory_space<vmem>>, vector<128x64xf32>
      %c0_32 = arith.constant 0 : index
      %c0_33 = arith.constant 0 : index
      %62 = vector.load %arg5[%c0_32, %c0_33] : memref<64x64xf32, #tpu.memory_space<vmem>>, vector<64x64xf32>
      %cst_34 = arith.constant dense<0.000000e+00> : vector<128x64xf32>
      %63 = tpu.matmul %61, %62, %cst_34 {dimension_numbers = #tpu.dot_dimension_numbers<[1], [0], [0], [1], [0, 0, 1, 1], [], []>} : vector<128x64xf32>, vector<64x64xf32>, vector<128x64xf32> -> vector<128x64xf32>
      %c0_35 = arith.constant 0 : index
      %c0_36 = arith.constant 0 : index
      %64 = vector.load %arg6[%c0_35, %c0_36] : memref<1x64xf32, #tpu.memory_space<vmem>>, vector<1x64xf32>
      %65 = vector.broadcast %64 : vector<1x64xf32> to vector<128x64xf32>
      %66 = arith.addf %63, %65 : vector<128x64xf32>
      %67 = arith.truncf %66 : vector<128x64xf32> to vector<128x64xbf16>
      %c0_37 = arith.constant 0 : index
      %c0_38 = arith.constant 0 : index
      %68 = vector.load %arg24[%c0_37, %c0_38] : memref<128x64xbf16, #tpu.memory_space<vmem>>, vector<128x64xbf16>
      tpu.vector_store %arg24[%c0_37, %c0_38], %67 {strides = array<i32>} : memref<128x64xbf16, #tpu.memory_space<vmem>>, vector<128x64xbf16>,
      %c0_39 = arith.constant 0 : index
      %c0_40 = arith.constant 0 : index
      %69 = vector.load %arg3[%c0_39, %c0_40] : memref<128x64xf32, #tpu.memory_space<vmem>>, vector<128x64xf32>
      %c0_41 = arith.constant 0 : index
      %c0_42 = arith.constant 0 : index
      %70 = vector.load %arg7[%c0_41, %c0_42] : memref<64x64xf32, #tpu.memory_space<vmem>>, vector<64x64xf32>
      %cst_43 = arith.constant dense<0.000000e+00> : vector<128x64xf32>
      %71 = tpu.matmul %69, %70, %cst_43 {dimension_numbers = #tpu.dot_dimension_numbers<[1], [0], [0], [1], [0, 0, 1, 1], [], []>} : vector<128x64xf32>, vector<64x64xf32>, vector<128x64xf32> -> vector<128x64xf32>
      %72 = arith.truncf %71 : vector<128x64xf32> to vector<128x64xbf16>
      %c0_44 = arith.constant 0 : index
      %c0_45 = arith.constant 0 : index
      %73 = vector.load %arg25[%c0_44, %c0_45] : memref<128x64xbf16, #tpu.memory_space<vmem>>, vector<128x64xbf16>
      tpu.vector_store %arg25[%c0_44, %c0_45], %72 {strides = array<i32>} : memref<128x64xbf16, #tpu.memory_space<vmem>>, vector<128x64xbf16>,
      %cst_46 = arith.constant 0.000000e+00 : f32
      %74 = vector.broadcast %cst_46 : f32 to vector<128x64xf32>
      %c0_47 = arith.constant 0 : index
      %c0_48 = arith.constant 0 : index
      %75 = vector.load %arg22[%c0_47, %c0_48] : memref<128x64xf32, #tpu.memory_space<vmem>>, vector<128x64xf32>
      tpu.vector_store %arg22[%c0_47, %c0_48], %74 {strides = array<i32>} : memref<128x64xf32, #tpu.memory_space<vmem>>, vector<128x64xf32>,
    } else {
    }
    %3 = tpu.iota {dimensions = array<i32: 0>} : vector<128x256xi32>
    %c0 = arith.constant 0 : index
    %c0_1 = arith.constant 0 : index
    %4 = vector.load %arg1[%c0, %c0_1] : memref<1x256xi32, #tpu.memory_space<vmem>>, vector<1x256xi32>
    %5 = vector.broadcast %4 : vector<1x256xi32> to vector<128x256xi32>
    %6 = arith.cmpi eq, %3, %5 : vector<128x256xi32>
    %7 = arith.extui %6 : vector<128x256xi1> to vector<128x256xi32>
    %8 = arith.sitofp %7 : vector<128x256xi32> to vector<128x256xf32>
    %9 = arith.truncf %8 : vector<128x256xf32> to vector<128x256xbf16>
    %10 = tpu.iota {dimensions = array<i32: 0>} : vector<128x256xi32>
    %c0_2 = arith.constant 0 : index
    %c0_3 = arith.constant 0 : index
    %11 = vector.load %arg2[%c0_2, %c0_3] : memref<1x256xi32, #tpu.memory_space<vmem>>, vector<1x256xi32>
    %12 = vector.broadcast %11 : vector<1x256xi32> to vector<128x256xi32>
    %13 = arith.cmpi eq, %10, %12 : vector<128x256xi32>
    %14 = arith.extui %13 : vector<128x256xi1> to vector<128x256xi32>
    %15 = arith.sitofp %14 : vector<128x256xi32> to vector<128x256xf32>
    %16 = arith.truncf %15 : vector<128x256xf32> to vector<128x256xbf16>
    %c0_4 = arith.constant 0 : index
    %c0_5 = arith.constant 0 : index
    %17 = vector.load %arg24[%c0_4, %c0_5] : memref<128x64xbf16, #tpu.memory_space<vmem>>, vector<128x64xbf16>
    %cst = arith.constant dense<0.000000e+00> : vector<256x64xf32>
    %18 = tpu.matmul %16, %17, %cst {dimension_numbers = #tpu.dot_dimension_numbers<[0], [0], [1], [1], [0, 1, 1, 1], [], []>} : vector<128x256xbf16>, vector<128x64xbf16>, vector<256x64xf32> -> vector<256x64xf32>
    %c0_6 = arith.constant 0 : index
    %c0_7 = arith.constant 0 : index
    %19 = vector.load %arg25[%c0_6, %c0_7] : memref<128x64xbf16, #tpu.memory_space<vmem>>, vector<128x64xbf16>
    %cst_8 = arith.constant dense<0.000000e+00> : vector<256x64xf32>
    %20 = tpu.matmul %9, %19, %cst_8 {dimension_numbers = #tpu.dot_dimension_numbers<[0], [0], [1], [1], [0, 1, 1, 1], [], []>} : vector<128x256xbf16>, vector<128x64xbf16>, vector<256x64xf32> -> vector<256x64xf32>
    %21 = arith.addf %18, %20 : vector<256x64xf32>
    %c0_9 = arith.constant 0 : index
    %c0_10 = arith.constant 0 : index
    %22 = vector.load %arg8[%c0_9, %c0_10] : memref<1x64xf32, #tpu.memory_space<vmem>>, vector<1x64xf32>
    %c0_11 = arith.constant 0 : index
    %c0_12 = arith.constant 0 : index
    %23 = vector.load %arg9[%c0_11, %c0_12] : memref<1x64xf32, #tpu.memory_space<vmem>>, vector<1x64xf32>
    %cst_13 = arith.constant dense<0.000000e+00> : vector<256xf32>
    %24 = vector.multi_reduction <add>, %21, %cst_13 [1] : vector<256x64xf32> to vector<256xf32>
    %25 = vector.shape_cast %24 : vector<256xf32> to vector<256x1xf32>
    %cst_14 = arith.constant 6.400000e+01 : f32
    %26 = vector.broadcast %cst_14 : f32 to vector<256x1xf32>
    %27 = arith.divf %25, %26 : vector<256x1xf32>
    %28 = vector.broadcast %27 : vector<256x1xf32> to vector<256x64xf32>
    %29 = arith.subf %21, %28 : vector<256x64xf32>
    %30 = arith.mulf %29, %29 : vector<256x64xf32>
    %cst_15 = arith.constant dense<0.000000e+00> : vector<256xf32>
    %31 = vector.multi_reduction <add>, %30, %cst_15 [1] : vector<256x64xf32> to vector<256xf32>
    %32 = vector.shape_cast %31 : vector<256xf32> to vector<256x1xf32>
    %cst_16 = arith.constant 6.400000e+01 : f32
    %33 = vector.broadcast %cst_16 : f32 to vector<256x1xf32>
    %34 = arith.divf %32, %33 : vector<256x1xf32>
    %35 = vector.broadcast %27 : vector<256x1xf32> to vector<256x64xf32>
    %36 = arith.subf %21, %35 : vector<256x64xf32>
    %cst_17 = arith.constant 9.99999974E-6 : f32
    %37 = vector.broadcast %cst_17 : f32 to vector<256x1xf32>
    %38 = arith.addf %34, %37 : vector<256x1xf32>
    %39 = math.rsqrt %38 : vector<256x1xf32>
    %40 = vector.broadcast %39 : vector<256x1xf32> to vector<256x64xf32>
    %41 = arith.mulf %36, %40 : vector<256x64xf32>
    %42 = vector.broadcast %22 : vector<1x64xf32> to vector<256x64xf32>
    %43 = arith.mulf %41, %42 : vector<256x64xf32>
    %44 = vector.broadcast %23 : vector<1x64xf32> to vector<256x64xf32>
    %45 = arith.addf %43, %44 : vector<256x64xf32>
    %cst_18 = arith.constant 0.000000e+00 : f32
    %46 = vector.broadcast %cst_18 : f32 to vector<256x64xf32>
    %47 = arith.maximumf %45, %46 : vector<256x64xf32>
    %c0_19 = arith.constant 0 : index
    %c0_20 = arith.constant 0 : index
    %48 = vector.load %arg10[%c0_19, %c0_20] : memref<64x64xf32, #tpu.memory_space<vmem>>, vector<64x64xf32>
    %cst_21 = arith.constant dense<0.000000e+00> : vector<256x64xf32>
    %49 = tpu.matmul %47, %48, %cst_21 {dimension_numbers = #tpu.dot_dimension_numbers<[1], [0], [0], [1], [0, 0, 1, 1], [], []>} : vector<256x64xf32>, vector<64x64xf32>, vector<256x64xf32> -> vector<256x64xf32>
    %c0_22 = arith.constant 0 : index
    %c0_23 = arith.constant 0 : index
    %50 = vector.load %arg11[%c0_22, %c0_23] : memref<1x64xf32, #tpu.memory_space<vmem>>, vector<1x64xf32>
    %51 = vector.broadcast %50 : vector<1x64xf32> to vector<256x64xf32>
    %52 = arith.addf %49, %51 : vector<256x64xf32>
    %c0_24 = arith.constant 0 : index
    %c0_25 = arith.constant 0 : index
    %53 = vector.load %arg22[%c0_24, %c0_25] : memref<128x64xf32, #tpu.memory_space<vmem>>, vector<128x64xf32>
    %54 = arith.truncf %52 : vector<256x64xf32> to vector<256x64xbf16>
    %cst_26 = arith.constant dense<0.000000e+00> : vector<128x64xf32>
    %55 = tpu.matmul %16, %54, %cst_26 {dimension_numbers = #tpu.dot_dimension_numbers<[1], [0], [0], [1], [0, 0, 1, 1], [], []>} : vector<128x256xbf16>, vector<256x64xbf16>, vector<128x64xf32> -> vector<128x64xf32>
    %56 = arith.addf %53, %55 : vector<128x64xf32>
    %c0_27 = arith.constant 0 : index
    %c0_28 = arith.constant 0 : index
    %57 = vector.load %arg22[%c0_27, %c0_28] : memref<128x64xf32, #tpu.memory_space<vmem>>, vector<128x64xf32>
    tpu.vector_store %arg22[%c0_27, %c0_28], %56 {strides = array<i32>} : memref<128x64xf32, #tpu.memory_space<vmem>>, vector<128x64xf32>,
    %c2_i32 = arith.constant 2 : i32
    %58 = arith.cmpi eq, %arg0, %c2_i32 : i32
    %59 = arith.extui %58 : i1 to i32
    %c0_i32_29 = arith.constant 0 : i32
    %60 = arith.cmpi ne, %59, %c0_i32_29 : i32
    scf.if %60 {
      %c0_30 = arith.constant 0 : index
      %c0_31 = arith.constant 0 : index
      %61 = vector.load %arg22[%c0_30, %c0_31] : memref<128x64xf32, #tpu.memory_space<vmem>>, vector<128x64xf32>
      %c0_32 = arith.constant 0 : index
      %c0_33 = arith.constant 0 : index
      %62 = vector.load %arg12[%c0_32, %c0_33] : memref<1x64xf32, #tpu.memory_space<vmem>>, vector<1x64xf32>
      %c0_34 = arith.constant 0 : index
      %c0_35 = arith.constant 0 : index
      %63 = vector.load %arg13[%c0_34, %c0_35] : memref<1x64xf32, #tpu.memory_space<vmem>>, vector<1x64xf32>
      %cst_36 = arith.constant dense<0.000000e+00> : vector<128xf32>
      %64 = vector.multi_reduction <add>, %61, %cst_36 [1] : vector<128x64xf32> to vector<128xf32>
      %65 = vector.shape_cast %64 : vector<128xf32> to vector<128x1xf32>
      %cst_37 = arith.constant 6.400000e+01 : f32
      %66 = vector.broadcast %cst_37 : f32 to vector<128x1xf32>
      %67 = arith.divf %65, %66 : vector<128x1xf32>
      %68 = vector.broadcast %67 : vector<128x1xf32> to vector<128x64xf32>
      %69 = arith.subf %61, %68 : vector<128x64xf32>
      %70 = arith.mulf %69, %69 : vector<128x64xf32>
      %cst_38 = arith.constant dense<0.000000e+00> : vector<128xf32>
      %71 = vector.multi_reduction <add>, %70, %cst_38 [1] : vector<128x64xf32> to vector<128xf32>
      %72 = vector.shape_cast %71 : vector<128xf32> to vector<128x1xf32>
      %cst_39 = arith.constant 6.400000e+01 : f32
      %73 = vector.broadcast %cst_39 : f32 to vector<128x1xf32>
      %74 = arith.divf %72, %73 : vector<128x1xf32>
      %75 = vector.broadcast %67 : vector<128x1xf32> to vector<128x64xf32>
      %76 = arith.subf %61, %75 : vector<128x64xf32>
      %cst_40 = arith.constant 9.99999974E-6 : f32
      %77 = vector.broadcast %cst_40 : f32 to vector<128x1xf32>
      %78 = arith.addf %74, %77 : vector<128x1xf32>
      %79 = math.rsqrt %78 : vector<128x1xf32>
      %80 = vector.broadcast %79 : vector<128x1xf32> to vector<128x64xf32>
      %81 = arith.mulf %76, %80 : vector<128x64xf32>
      %82 = vector.broadcast %62 : vector<1x64xf32> to vector<128x64xf32>
      %83 = arith.mulf %81, %82 : vector<128x64xf32>
      %84 = vector.broadcast %63 : vector<1x64xf32> to vector<128x64xf32>
      %85 = arith.addf %83, %84 : vector<128x64xf32>
      %c0_41 = arith.constant 0 : index
      %c0_42 = arith.constant 0 : index
      %86 = vector.load %arg14[%c0_41, %c0_42] : memref<64x64xf32, #tpu.memory_space<vmem>>, vector<64x64xf32>
      %cst_43 = arith.constant dense<0.000000e+00> : vector<128x64xf32>
      %87 = tpu.matmul %85, %86, %cst_43 {dimension_numbers = #tpu.dot_dimension_numbers<[1], [0], [0], [1], [0, 0, 1, 1], [], []>} : vector<128x64xf32>, vector<64x64xf32>, vector<128x64xf32> -> vector<128x64xf32>
      %c0_44 = arith.constant 0 : index
      %c0_45 = arith.constant 0 : index
      %88 = vector.load %arg4[%c0_44, %c0_45] : memref<128x64xf32, #tpu.memory_space<vmem>>, vector<128x64xf32>
      %c0_46 = arith.constant 0 : index
      %c0_47 = arith.constant 0 : index
      %89 = vector.load %arg15[%c0_46, %c0_47] : memref<64x64xf32, #tpu.memory_space<vmem>>, vector<64x64xf32>
      %cst_48 = arith.constant dense<0.000000e+00> : vector<128x64xf32>
      %90 = tpu.matmul %88, %89, %cst_48 {dimension_numbers = #tpu.dot_dimension_numbers<[1], [0], [0], [1], [0, 0, 1, 1], [], []>} : vector<128x64xf32>, vector<64x64xf32>, vector<128x64xf32> -> vector<128x64xf32>
      %91 = arith.addf %87, %90 : vector<128x64xf32>
      %c0_49 = arith.constant 0 : index
      %c0_50 = arith.constant 0 : index
      %92 = vector.load %arg16[%c0_49, %c0_50] : memref<1x64xf32, #tpu.memory_space<vmem>>, vector<1x64xf32>
      %93 = vector.broadcast %92 : vector<1x64xf32> to vector<128x64xf32>
      %94 = arith.addf %91, %93 : vector<128x64xf32>
      %cst_51 = arith.constant 0.000000e+00 : f32
      %95 = vector.broadcast %cst_51 : f32 to vector<128x64xf32>
      %96 = arith.maximumf %94, %95 : vector<128x64xf32>
      %c0_52 = arith.constant 0 : index
      %c0_53 = arith.constant 0 : index
      %97 = vector.load %arg17[%c0_52, %c0_53] : memref<64x64xf32, #tpu.memory_space<vmem>>, vector<64x64xf32>
      %cst_54 = arith.constant dense<0.000000e+00> : vector<128x64xf32>
      %98 = tpu.matmul %96, %97, %cst_54 {dimension_numbers = #tpu.dot_dimension_numbers<[1], [0], [0], [1], [0, 0, 1, 1], [], []>} : vector<128x64xf32>, vector<64x64xf32>, vector<128x64xf32> -> vector<128x64xf32>
      %c0_55 = arith.constant 0 : index
      %c0_56 = arith.constant 0 : index
      %99 = vector.load %arg18[%c0_55, %c0_56] : memref<1x64xf32, #tpu.memory_space<vmem>>, vector<1x64xf32>
      %100 = vector.broadcast %99 : vector<1x64xf32> to vector<128x64xf32>
      %101 = arith.addf %98, %100 : vector<128x64xf32>
      %c0_57 = arith.constant 0 : index
      %c0_58 = arith.constant 0 : index
      %102 = vector.load %arg22[%c0_57, %c0_58] : memref<128x64xf32, #tpu.memory_space<vmem>>, vector<128x64xf32>
      tpu.vector_store %arg22[%c0_57, %c0_58], %101 {strides = array<i32>} : memref<128x64xf32, #tpu.memory_space<vmem>>, vector<128x64xf32>,
      %c0_59 = arith.constant 0 : index
      %c0_60 = arith.constant 0 : index
      %103 = vector.load %arg19[%c0_59, %c0_60] : memref<64x64xf32, #tpu.memory_space<vmem>>, vector<64x64xf32>
      %cst_61 = arith.constant dense<0.000000e+00> : vector<128x64xf32>
      %104 = tpu.matmul %101, %103, %cst_61 {dimension_numbers = #tpu.dot_dimension_numbers<[1], [0], [0], [1], [0, 0, 1, 1], [], []>} : vector<128x64xf32>, vector<64x64xf32>, vector<128x64xf32> -> vector<128x64xf32>
      %c0_62 = arith.constant 0 : index
      %c0_63 = arith.constant 0 : index
      %105 = vector.load %arg20[%c0_62, %c0_63] : memref<1x64xf32, #tpu.memory_space<vmem>>, vector<1x64xf32>
      %106 = vector.broadcast %105 : vector<1x64xf32> to vector<128x64xf32>
      %107 = arith.addf %104, %106 : vector<128x64xf32>
      %cst_64 = arith.constant 0.000000e+00 : f32
      %108 = vector.broadcast %cst_64 : f32 to vector<128x64xf32>
      %109 = arith.maximumf %107, %108 : vector<128x64xf32>
      %c0_65 = arith.constant 0 : index
      %c0_66 = arith.constant 0 : index
      %110 = vector.load %arg21[%c0_65, %c0_66] : memref<1x64xf32, #tpu.memory_space<vmem>>, vector<1x64xf32>
      %cst_67 = arith.constant dense<0.000000e+00> : vector<1x128xf32>
      %111 = tpu.matmul %110, %109, %cst_67 {dimension_numbers = #tpu.dot_dimension_numbers<[1], [1], [0], [0], [0, 0, 1, 0], [], []>} : vector<1x64xf32>, vector<128x64xf32>, vector<1x128xf32> -> vector<1x128xf32>
      %c0_68 = arith.constant 0 : index
      %c0_69 = arith.constant 0 : index
      %112 = vector.load %arg23[%c0_68, %c0_69] : memref<1x128xf32, #tpu.memory_space<vmem>>, vector<1x128xf32>
      tpu.vector_store %arg23[%c0_68, %c0_69], %111 {strides = array<i32>} : memref<1x128xf32, #tpu.memory_space<vmem>>, vector<1x128xf32>,
    } else {
    }
    return
  }
  func.func @transform_0(%arg0: i32) -> (i32, i32) {
    %c0_i32 = arith.constant 0 : i32
    %c0_i32_0 = arith.constant 0 : i32
    return %c0_i32, %arg0 : i32, i32
  }
  func.func @transform_1(%arg0: i32) -> (i32, i32) {
    %c0_i32 = arith.constant 0 : i32
    %c0_i32_0 = arith.constant 0 : i32
    return %c0_i32, %arg0 : i32, i32
  }
  func.func @transform_2(%arg0: i32) -> (i32, i32) {
    %c0_i32 = arith.constant 0 : i32
    %c0_i32_0 = arith.constant 0 : i32
    %c0_i32_1 = arith.constant 0 : i32
    return %c0_i32, %c0_i32_0 : i32, i32
  }
  func.func @transform_3(%arg0: i32) -> (i32, i32) {
    %c0_i32 = arith.constant 0 : i32
    %c0_i32_0 = arith.constant 0 : i32
    %c0_i32_1 = arith.constant 0 : i32
    return %c0_i32, %c0_i32_0 : i32, i32
  }
  func.func @transform_4(%arg0: i32) -> (i32, i32) {
    %c0_i32 = arith.constant 0 : i32
    %c0_i32_0 = arith.constant 0 : i32
    %c0_i32_1 = arith.constant 0 : i32
    return %c0_i32, %c0_i32_0 : i32, i32
  }
  func.func @transform_5(%arg0: i32) -> (i32, i32) {
    %c0_i32 = arith.constant 0 : i32
    %c0_i32_0 = arith.constant 0 : i32
    %c0_i32_1 = arith.constant 0 : i32
    return %c0_i32, %c0_i32_0 : i32, i32
  }
  func.func @transform_6(%arg0: i32) -> (i32, i32) {
    %c0_i32 = arith.constant 0 : i32
    %c0_i32_0 = arith.constant 0 : i32
    %c0_i32_1 = arith.constant 0 : i32
    return %c0_i32, %c0_i32_0 : i32, i32
  }
  func.func @transform_7(%arg0: i32) -> (i32, i32) {
    %c0_i32 = arith.constant 0 : i32
    %c0_i32_0 = arith.constant 0 : i32
    %c0_i32_1 = arith.constant 0 : i32
    return %c0_i32, %c0_i32_0 : i32, i32
  }
  func.func @transform_8(%arg0: i32) -> (i32, i32) {
    %c0_i32 = arith.constant 0 : i32
    %c0_i32_0 = arith.constant 0 : i32
    %c0_i32_1 = arith.constant 0 : i32
    return %c0_i32, %c0_i32_0 : i32, i32
  }
  func.func @transform_9(%arg0: i32) -> (i32, i32) {
    %c0_i32 = arith.constant 0 : i32
    %c0_i32_0 = arith.constant 0 : i32
    %c0_i32_1 = arith.constant 0 : i32
    return %c0_i32, %c0_i32_0 : i32, i32
  }
  func.func @transform_10(%arg0: i32) -> (i32, i32) {
    %c0_i32 = arith.constant 0 : i32
    %c0_i32_0 = arith.constant 0 : i32
    %c0_i32_1 = arith.constant 0 : i32
    return %c0_i32, %c0_i32_0 : i32, i32
  }
  func.func @transform_11(%arg0: i32) -> (i32, i32) {
    %c0_i32 = arith.constant 0 : i32
    %c0_i32_0 = arith.constant 0 : i32
    %c0_i32_1 = arith.constant 0 : i32
    return %c0_i32, %c0_i32_0 : i32, i32
  }
  func.func @transform_12(%arg0: i32) -> (i32, i32) {
    %c0_i32 = arith.constant 0 : i32
    %c0_i32_0 = arith.constant 0 : i32
    %c0_i32_1 = arith.constant 0 : i32
    return %c0_i32, %c0_i32_0 : i32, i32
  }
  func.func @transform_13(%arg0: i32) -> (i32, i32) {
    %c0_i32 = arith.constant 0 : i32
    %c0_i32_0 = arith.constant 0 : i32
    %c0_i32_1 = arith.constant 0 : i32
    return %c0_i32, %c0_i32_0 : i32, i32
  }
  func.func @transform_14(%arg0: i32) -> (i32, i32) {
    %c0_i32 = arith.constant 0 : i32
    %c0_i32_0 = arith.constant 0 : i32
    %c0_i32_1 = arith.constant 0 : i32
    return %c0_i32, %c0_i32_0 : i32, i32
  }
  func.func @transform_15(%arg0: i32) -> (i32, i32) {
    %c0_i32 = arith.constant 0 : i32
    %c0_i32_0 = arith.constant 0 : i32
    %c0_i32_1 = arith.constant 0 : i32
    return %c0_i32, %c0_i32_0 : i32, i32
  }
  func.func @transform_16(%arg0: i32) -> (i32, i32) {
    %c0_i32 = arith.constant 0 : i32
    %c0_i32_0 = arith.constant 0 : i32
    %c0_i32_1 = arith.constant 0 : i32
    return %c0_i32, %c0_i32_0 : i32, i32
  }
  func.func @transform_17(%arg0: i32) -> (i32, i32) {
    %c0_i32 = arith.constant 0 : i32
    %c0_i32_0 = arith.constant 0 : i32
    %c0_i32_1 = arith.constant 0 : i32
    return %c0_i32, %c0_i32_0 : i32, i32
  }
  func.func @transform_18(%arg0: i32) -> (i32, i32) {
    %c0_i32 = arith.constant 0 : i32
    %c0_i32_0 = arith.constant 0 : i32
    %c0_i32_1 = arith.constant 0 : i32
    return %c0_i32, %c0_i32_0 : i32, i32
  }
  func.func @transform_19(%arg0: i32) -> (i32, i32) {
    %c0_i32 = arith.constant 0 : i32
    %c0_i32_0 = arith.constant 0 : i32
    %c0_i32_1 = arith.constant 0 : i32
    return %c0_i32, %c0_i32_0 : i32, i32
  }
  func.func @transform_20(%arg0: i32) -> (i32, i32) {
    %c0_i32 = arith.constant 0 : i32
    %c0_i32_0 = arith.constant 0 : i32
    %c0_i32_1 = arith.constant 0 : i32
    return %c0_i32, %c0_i32_0 : i32, i32
  }
  func.func @transform_21(%arg0: i32) -> (i32, i32) {
    %c0_i32 = arith.constant 0 : i32
    %c0_i32_0 = arith.constant 0 : i32
    %c0_i32_1 = arith.constant 0 : i32
    return %c0_i32, %c0_i32_0 : i32, i32
  }
  func.func @transform_22(%arg0: i32) -> (i32, i32) {
    %c0_i32 = arith.constant 0 : i32
    %c0_i32_0 = arith.constant 0 : i32
    %c0_i32_1 = arith.constant 0 : i32
    return %c0_i32, %c0_i32_0 : i32, i32
  }
}

</mosaic_0001>

<llo_original>
// kernel: gnn_policy_forward.6
$region0: #{gnn_policy_forward.6}
  #allocation0 [shape = 'u32[]', space=smem, size = 0x4, offset = 0x4, fixed_abs, tag = 'smem constant byte address 0x4 - core index']
  #allocation1 [shape = 'u32[144,128]{1,0:T(1,128)}', space=vmem, size = 0x12000, scoped, tag = 'internal scratch']
  %s0 = inlined_call_operand.vmem [shape: f32[128,4], index: 0, kind: input, shape index: {}]
  %s1 = inlined_call_operand.vmem [shape: f32[1,4], index: 1, kind: input, shape index: {}]
  %s2 = inlined_call_operand.vmem [shape: f32[1,4], index: 2, kind: input, shape index: {}]
  %s3 = inlined_call_operand.vmem [shape: f32[4,64], index: 3, kind: input, shape index: {}]
  %s4 = inlined_call_operand.vmem [shape: f32[1,64], index: 4, kind: input, shape index: {}]
  %s5 = inlined_call_operand.vmem [shape: f32[64,64], index: 5, kind: input, shape index: {}]
  %s6 = inlined_call_operand.vmem [shape: f32[1,64], index: 6, kind: input, shape index: {}]
  %s7 = inlined_call_operand.vmem [shape: f32[128,64], index: 7, kind: output, shape index: {}]
  %s8 = sld [smem:[#allocation0]]
  $region38: #{gnn_policy_forward.6} parent=0
    _
  %s10 = ssub.s32 1, %s8
  %s11 = scalar_select 0, %s10, %s8
  // Predicated region
  $region2: #{gnn_policy_forward.6} parent=0 // pred_check
    _
  $region3: #{gnn_policy_forward.6} parent=0 // pred_check_branch
    %13 = sbr.rel (0) target = $region5
  $region4: #{gnn_policy_forward.6} parent=0 // pred_region
    _
  $region5: #{gnn_policy_forward.6} parent=0 // pred_fallthru
    _
  // Predicated region
  $region6: #{gnn_policy_forward.6} parent=0 // pred_check
    _
  $region7: #{gnn_policy_forward.6} parent=0 // pred_check_branch
    %15 = sbr.rel (0) target = $region9
  $region8: #{gnn_policy_forward.6} parent=0 // pred_region
    _
  $region9: #{gnn_policy_forward.6} parent=0 // pred_fallthru
    _
  // Predicated region
  $region10: #{gnn_policy_forward.6} parent=0 // pred_check
    _
  $region11: #{gnn_policy_forward.6} parent=0 // pred_check_branch
    %17 = sbr.rel (0) target = $region13
  $region12: #{gnn_policy_forward.6} parent=0 // pred_region
    _
  $region13: #{gnn_policy_forward.6} parent=0 // pred_fallthru
    _
  // Predicated region
  $region14: #{gnn_policy_forward.6} parent=0 // pred_check
    _
  $region15: #{gnn_policy_forward.6} parent=0 // pred_check_branch
    %19 = sbr.rel (0) target = $region17
  $region16: #{gnn_policy_forward.6} parent=0 // pred_region
    _
  $region17: #{gnn_policy_forward.6} parent=0 // pred_fallthru
    _
  // Predicated region
  $region18: #{gnn_policy_forward.6} parent=0 // pred_check
    _
  $region19: #{gnn_policy_forward.6} parent=0 // pred_check_branch
    %21 = sbr.rel (0) target = $region21
  $region20: #{gnn_policy_forward.6} parent=0 // pred_region
    _
  $region21: #{gnn_policy_forward.6} parent=0 // pred_fallthru
    _
  // Predicated region
  $region22: #{gnn_policy_forward.6} parent=0 // pred_check
    _
  $region23: #{gnn_policy_forward.6} parent=0 // pred_check_branch
    %23 = sbr.rel (0) target = $region25
  $region24: #{gnn_policy_forward.6} parent=0 // pred_region
    _
  $region25: #{gnn_policy_forward.6} parent=0 // pred_fallthru
    _
  // Predicated region
  $region26: #{gnn_policy_forward.6} parent=0 // pred_check
    _
  $region27: #{gnn_policy_forward.6} parent=0 // pred_check_branch
    %25 = sbr.rel (0) target = $region29
  $region28: #{gnn_policy_forward.6} parent=0 // pred_region
    _
  $region29: #{gnn_policy_forward.6} parent=0 // pred_fallthru
    _
  %v26 = vld [vmem:[%s0] sm:$0xff]
  %v27 = vld [vmem:[%s0 + $0x8] sm:$0xff]
  %v28 = vld [vmem:[%s0 + $0x10] sm:$0xff]
  %v29 = vld [vmem:[%s0 + $0x18] sm:$0xff]
  %v30 = vld [vmem:[%s0 + $0x20] sm:$0xff]
  %v31 = vld [vmem:[%s0 + $0x28] sm:$0xff]
  %v32 = vld [vmem:[%s0 + $0x30] sm:$0xff]
  %v33 = vld [vmem:[%s0 + $0x38] sm:$0xff]
  %v34 = vld [vmem:[%s0 + $0x40] sm:$0xff]
  %v35 = vld [vmem:[%s0 + $0x48] sm:$0xff]
  %v36 = vld [vmem:[%s0 + $0x50] sm:$0xff]
  %v37 = vld [vmem:[%s0 + $0x58] sm:$0xff]
  %v38 = vld [vmem:[%s0 + $0x60] sm:$0xff]
  %v39 = vld [vmem:[%s0 + $0x68] sm:$0xff]
  %v40 = vld [vmem:[%s0 + $0x70] sm:$0xff]
  %v41 = vld [vmem:[%s0 + $0x78] sm:$0xff]
  %v42 = vld [vmem:[%s1] sm:$0x1]
  %v43 = vld [vmem:[%s2] sm:$0x1]
  %vm44 = vcmask 31744
  %v45 = vsel %vm44, %v26, 0.0
  %46 = vadd.xlane.f32.xlu0 %v45
  %v47 = vpop.xlane.xlu0 %46
  %v48 = vsel %vm44, %v27, 0.0
  %49 = vadd.xlane.f32.xlu0 %v48
  %v50 = vpop.xlane.xlu0 %49
  %v51 = vsel %vm44, %v28, 0.0
  %52 = vadd.xlane.f32.xlu0 %v51
  %v53 = vpop.xlane.xlu0 %52
  %v54 = vsel %vm44, %v29, 0.0
  %55 = vadd.xlane.f32.xlu0 %v54
  %v56 = vpop.xlane.xlu0 %55
  %v57 = vsel %vm44, %v30, 0.0
  %58 = vadd.xlane.f32.xlu0 %v57
  %v59 = vpop.xlane.xlu0 %58
  %v60 = vsel %vm44, %v31, 0.0
  %61 = vadd.xlane.f32.xlu0 %v60
  %v62 = vpop.xlane.xlu0 %61
  %v63 = vsel %vm44, %v32, 0.0
  %64 = vadd.xlane.f32.xlu0 %v63
  %v65 = vpop.xlane.xlu0 %64
  %v66 = vsel %vm44, %v33, 0.0
  %67 = vadd.xlane.f32.xlu0 %v66
  %v68 = vpop.xlane.xlu0 %67
  %v69 = vsel %vm44, %v34, 0.0
  %70 = vadd.xlane.f32.xlu0 %v69
  %v71 = vpop.xlane.xlu0 %70
  %v72 = vsel %vm44, %v35, 0.0
  %73 = vadd.xlane.f32.xlu0 %v72
  %v74 = vpop.xlane.xlu0 %73
  %v75 = vsel %vm44, %v36, 0.0
  %76 = vadd.xlane.f32.xlu0 %v75
  %v77 = vpop.xlane.xlu0 %76
  %v78 = vsel %vm44, %v37, 0.0
  %79 = vadd.xlane.f32.xlu0 %v78
  %v80 = vpop.xlane.xlu0 %79
  %v81 = vsel %vm44, %v38, 0.0
  %82 = vadd.xlane.f32.xlu0 %v81
  %v83 = vpop.xlane.xlu0 %82
  %v84 = vsel %vm44, %v39, 0.0
  %85 = vadd.xlane.f32.xlu0 %v84
  %v86 = vpop.xlane.xlu0 %85
  %v87 = vsel %vm44, %v40, 0.0
  %88 = vadd.xlane.f32.xlu0 %v87
  %v89 = vpop.xlane.xlu0 %88
  %v90 = vsel %vm44, %v41, 0.0
  %91 = vadd.xlane.f32.xlu0 %v90
  %v92 = vpop.xlane.xlu0 %91
  %v93 = vrcp.pop 4.0
  %v94 = vmul.f32 %v47, %v93
  %v95 = vmul.f32 %v50, %v93
  %v96 = vmul.f32 %v53, %v93
  %v97 = vmul.f32 %v56, %v93
  %v98 = vmul.f32 %v59, %v93
  %v99 = vmul.f32 %v62, %v93
  %v100 = vmul.f32 %v65, %v93
  %v101 = vmul.f32 %v68, %v93
  %v102 = vmul.f32 %v71, %v93
  %v103 = vmul.f32 %v74, %v93
  %v104 = vmul.f32 %v77, %v93
  %v105 = vmul.f32 %v80, %v93
  %v106 = vmul.f32 %v83, %v93
  %v107 = vmul.f32 %v86, %v93
  %v108 = vmul.f32 %v89, %v93
  %v109 = vmul.f32 %v92, %v93
  %v110 = vsub.f32 %v26, %v94
  %v111 = vsub.f32 %v27, %v95
  %v112 = vsub.f32 %v28, %v96
  %v113 = vsub.f32 %v29, %v97
  %v114 = vsub.f32 %v30, %v98
  %v115 = vsub.f32 %v31, %v99
  %v116 = vsub.f32 %v32, %v100
  %v117 = vsub.f32 %v33, %v101
  %v118 = vsub.f32 %v34, %v102
  %v119 = vsub.f32 %v35, %v103
  %v120 = vsub.f32 %v36, %v104
  %v121 = vsub.f32 %v37, %v105
  %v122 = vsub.f32 %v38, %v106
  %v123 = vsub.f32 %v39, %v107
  %v124 = vsub.f32 %v40, %v108
  %v125 = vsub.f32 %v41, %v109
  %v126 = vmul.f32 %v110, %v110
  %v127 = vmul.f32 %v111, %v111
  %v128 = vmul.f32 %v112, %v112
  %v129 = vmul.f32 %v113, %v113
  %v130 = vmul.f32 %v114, %v114
  %v131 = vmul.f32 %v115, %v115
  %v132 = vmul.f32 %v116, %v116
  %v133 = vmul.f32 %v117, %v117
  %v134 = vmul.f32 %v118, %v118
  %v135 = vmul.f32 %v119, %v119
  %v136 = vmul.f32 %v120, %v120
  %v137 = vmul.f32 %v121, %v121
  %v138 = vmul.f32 %v122, %v122
  %v139 = vmul.f32 %v123, %v123
  %v140 = vmul.f32 %v124, %v124
  %v141 = vmul.f32 %v125, %v125
  %v142 = vsel %vm44, %v126, 0.0
  %143 = vadd.xlane.f32.xlu0 %v142
  %v144 = vpop.xlane.xlu0 %143
  %v145 = vsel %vm44, %v127, 0.0
  %146 = vadd.xlane.f32.xlu0 %v145
  %v147 = vpop.xlane.xlu0 %146
  %v148 = vsel %vm44, %v128, 0.0
  %149 = vadd.xlane.f32.xlu0 %v148
  %v150 = vpop.xlane.xlu0 %149
  %v151 = vsel %vm44, %v129, 0.0
  %152 = vadd.xlane.f32.xlu0 %v151
  %v153 = vpop.xlane.xlu0 %152
  %v154 = vsel %vm44, %v130, 0.0
  %155 = vadd.xlane.f32.xlu0 %v154
  %v156 = vpop.xlane.xlu0 %155
  %v157 = vsel %vm44, %v131, 0.0
  %158 = vadd.xlane.f32.xlu0 %v157
  %v159 = vpop.xlane.xlu0 %158
  %v160 = vsel %vm44, %v132, 0.0
  %161 = vadd.xlane.f32.xlu0 %v160
  %v162 = vpop.xlane.xlu0 %161
  %v163 = vsel %vm44, %v133, 0.0
  %164 = vadd.xlane.f32.xlu0 %v163
  %v165 = vpop.xlane.xlu0 %164
  %v166 = vsel %vm44, %v134, 0.0
  %167 = vadd.xlane.f32.xlu0 %v166
  %v168 = vpop.xlane.xlu0 %167
  %v169 = vsel %vm44, %v135, 0.0
  %170 = vadd.xlane.f32.xlu0 %v169
  %v171 = vpop.xlane.xlu0 %170
  %v172 = vsel %vm44, %v136, 0.0
  %173 = vadd.xlane.f32.xlu0 %v172
  %v174 = vpop.xlane.xlu0 %173
  %v175 = vsel %vm44, %v137, 0.0
  %176 = vadd.xlane.f32.xlu0 %v175
  %v177 = vpop.xlane.xlu0 %176
  %v178 = vsel %vm44, %v138, 0.0
  %179 = vadd.xlane.f32.xlu0 %v178
  %v180 = vpop.xlane.xlu0 %179
  %v181 = vsel %vm44, %v139, 0.0
  %182 = vadd.xlane.f32.xlu0 %v181
  %v183 = vpop.xlane.xlu0 %182
  %v184 = vsel %vm44, %v140, 0.0
  %185 = vadd.xlane.f32.xlu0 %v184
  %v186 = vpop.xlane.xlu0 %185
  %v187 = vsel %vm44, %v141, 0.0
  %188 = vadd.xlane.f32.xlu0 %v187
  %v189 = vpop.xlane.xlu0 %188
  %v190 = vmul.f32 %v144, %v93
  %v191 = vmul.f32 %v147, %v93
  %v192 = vmul.f32 %v150, %v93
  %v193 = vmul.f32 %v153, %v93
  %v194 = vmul.f32 %v156, %v93
  %v195 = vmul.f32 %v159, %v93
  %v196 = vmul.f32 %v162, %v93
  %v197 = vmul.f32 %v165, %v93
  %v198 = vmul.f32 %v168, %v93
  %v199 = vmul.f32 %v171, %v93
  %v200 = vmul.f32 %v174, %v93
  %v201 = vmul.f32 %v177, %v93
  %v202 = vmul.f32 %v180, %v93
  %v203 = vmul.f32 %v183, %v93
  %v204 = vmul.f32 %v186, %v93
  %v205 = vmul.f32 %v189, %v93
  %v206 = vadd.f32 %v190, 1e-05
  %v207 = vadd.f32 %v191, 1e-05
  %v208 = vadd.f32 %v192, 1e-05
  %v209 = vadd.f32 %v193, 1e-05
  %v210 = vadd.f32 %v194, 1e-05
  %v211 = vadd.f32 %v195, 1e-05
  %v212 = vadd.f32 %v196, 1e-05
  %v213 = vadd.f32 %v197, 1e-05
  %v214 = vadd.f32 %v198, 1e-05
  %v215 = vadd.f32 %v199, 1e-05
  %v216 = vadd.f32 %v200, 1e-05
  %v217 = vadd.f32 %v201, 1e-05
  %v218 = vadd.f32 %v202, 1e-05
  %v219 = vadd.f32 %v203, 1e-05
  %v220 = vadd.f32 %v204, 1e-05
  %v221 = vadd.f32 %v205, 1e-05
  %v222 = vrsqrt.pop %v206
  %v223 = vrsqrt.pop %v207
  %v224 = vrsqrt.pop %v208
  %v225 = vrsqrt.pop %v209
  %v226 = vrsqrt.pop %v210
  %v227 = vrsqrt.pop %v211
  %v228 = vrsqrt.pop %v212
  %v229 = vrsqrt.pop %v213
  %v230 = vrsqrt.pop %v214
  %v231 = vrsqrt.pop %v215
  %v232 = vrsqrt.pop %v216
  %v233 = vrsqrt.pop %v217
  %v234 = vrsqrt.pop %v218
  %v235 = vrsqrt.pop %v219
  %v236 = vrsqrt.pop %v220
  %v237 = vrsqrt.pop %v221
  %v238 = vmul.f32 %v110, %v222
  %v239 = vmul.f32 %v111, %v223
  %v240 = vmul.f32 %v112, %v224
  %v241 = vmul.f32 %v113, %v225
  %v242 = vmul.f32 %v114, %v226
  %v243 = vmul.f32 %v115, %v227
  %v244 = vmul.f32 %v116, %v228
  %v245 = vmul.f32 %v117, %v229
  %v246 = vmul.f32 %v118, %v230
  %v247 = vmul.f32 %v119, %v231
  %v248 = vmul.f32 %v120, %v232
  %v249 = vmul.f32 %v121, %v233
  %v250 = vmul.f32 %v122, %v234
  %v251 = vmul.f32 %v123, %v235
  %v252 = vmul.f32 %v124, %v236
  %v253 = vmul.f32 %v125, %v237
  %v255 = vlaneseq
  %v256 = vshrl.u32 %v255, 7
  %v257 = vsub.s32 0, %v256
  %v258 = vrot.slane %v42, %v257
  %v260 = vmul.f32 %v238, %v258
  %v261 = vmul.f32 %v239, %v258
  %v262 = vmul.f32 %v240, %v258
  %v263 = vmul.f32 %v241, %v258
  %v264 = vmul.f32 %v242, %v258
  %v265 = vmul.f32 %v243, %v258
  %v266 = vmul.f32 %v244, %v258
  %v267 = vmul.f32 %v245, %v258
  %v268 = vmul.f32 %v246, %v258
  %v269 = vmul.f32 %v247, %v258
  %v270 = vmul.f32 %v248, %v258
  %v271 = vmul.f32 %v249, %v258
  %v272 = vmul.f32 %v250, %v258
  %v273 = vmul.f32 %v251, %v258
  %v274 = vmul.f32 %v252, %v258
  %v275 = vmul.f32 %v253, %v258
  %v277 = vlaneseq
  %v278 = vshrl.u32 %v277, 7
  %v279 = vsub.s32 0, %v278
  %v280 = vrot.slane %v43, %v279
  %v282 = vadd.f32 %v260, %v280
  %v283 = vadd.f32 %v261, %v280
  %v284 = vadd.f32 %v262, %v280
  %v285 = vadd.f32 %v263, %v280
  %v286 = vadd.f32 %v264, %v280
  %v287 = vadd.f32 %v265, %v280
  %v288 = vadd.f32 %v266, %v280
  %v289 = vadd.f32 %v267, %v280
  %v290 = vadd.f32 %v268, %v280
  %v291 = vadd.f32 %v269, %v280
  %v292 = vadd.f32 %v270, %v280
  %v293 = vadd.f32 %v271, %v280
  %v294 = vadd.f32 %v272, %v280
  %v295 = vadd.f32 %v273, %v280
  %v296 = vadd.f32 %v274, %v280
  %v297 = vadd.f32 %v275, %v280
  %v298 = vld [vmem:[%s3] sm:$0xf]
  %v299 = vld [vmem:[%s4] sm:$0x1]
  %v301 = vlaneseq
  %v302 = vshrl.u32 %v301, 7
  %v303 = vsub.s32 0, %v302
  %v304 = vrot.slane %v299, %v303
  %v307 = vsel %vm44, %v282, 0
  %v310 = vsel %vm44, %v283, 0
  %v313 = vsel %vm44, %v284, 0
  %v316 = vsel %vm44, %v285, 0
  %v319 = vsel %vm44, %v286, 0
  %v322 = vsel %vm44, %v287, 0
  %v325 = vsel %vm44, %v288, 0
  %v328 = vsel %vm44, %v289, 0
  %v331 = vsel %vm44, %v290, 0
  %v334 = vsel %vm44, %v291, 0
  %v337 = vsel %vm44, %v292, 0
  %v340 = vsel %vm44, %v293, 0
  %v343 = vsel %vm44, %v294, 0
  %v346 = vsel %vm44, %v295, 0
  %v349 = vsel %vm44, %v296, 0
  %v352 = vsel %vm44, %v297, 0
  %vm354 = vcmask 1043456
  %v356 = vsel %vm354, %v298, 0
  %358 = vmatprep.subr.mxu0 0.0
  %359 = vmatpush1.msra.mxu0 %v356
  %360 = vmatprep.subr.mxu0 0.0
  %361 = vmatpush1.msra.mxu0 0.0
  %362 = vmatprep.subr.mxu0 0.0
  %363 = vmatpush1.msra.mxu0 0.0
  %364 = vmatprep.subr.mxu0 0.0
  %365 = vmatpush1.msra.mxu0 0.0
  %366 = vmatprep.subr.mxu0 0.0
  %367 = vmatpush1.msra.mxu0 0.0
  %368 = vmatprep.subr.mxu0 0.0
  %369 = vmatpush1.msra.mxu0 0.0
  %370 = vmatprep.subr.mxu0 0.0
  %371 = vmatpush1.msra.mxu0 0.0
  %372 = vmatprep.subr.mxu0 0.0
  %373 = vmatpush1.msra.mxu0 0.0
  %374 = vmatprep.subr.mxu0 0.0
  %375 = vmatpush1.msra.mxu0 0.0
  %376 = vmatprep.subr.mxu0 0.0
  %377 = vmatpush1.msra.mxu0 0.0
  %378 = vmatprep.subr.mxu0 0.0
  %379 = vmatpush1.msra.mxu0 0.0
  %380 = vmatprep.subr.mxu0 0.0
  %381 = vmatpush1.msra.mxu0 0.0
  %382 = vmatprep.subr.mxu0 0.0
  %383 = vmatpush1.msra.mxu0 0.0
  %384 = vmatprep.subr.mxu0 0.0
  %385 = vmatpush1.msra.mxu0 0.0
  %386 = vmatprep.subr.mxu0 0.0
  %387 = vmatpush1.msra.mxu0 0.0
  %388 = vmatprep.subr.mxu0 0.0
  %389 = vmatpush1.msra.mxu0 0.0
  %390 = vmatprep.subr.mxu0 0.0
  %391 = vmatpush1.msra.mxu0 0.0
  %392 = vmatprep.subr.mxu0 0.0
  %393 = vmatpush1.msra.mxu0 0.0
  %394 = vmatprep.subr.mxu0 0.0
  %395 = vmatpush1.msra.mxu0 0.0
  %396 = vmatprep.subr.mxu0 0.0
  %397 = vmatpush1.msra.mxu0 0.0
  %398 = vmatprep.subr.mxu0 0.0
  %399 = vmatpush1.msra.mxu0 0.0
  %400 = vmatprep.subr.mxu0 0.0
  %401 = vmatpush1.msra.mxu0 0.0
  %402 = vmatprep.subr.mxu0 0.0
  %403 = vmatpush1.msra.mxu0 0.0
  %404 = vmatprep.subr.mxu0 0.0
  %405 = vmatpush1.msra.mxu0 0.0
  %406 = vmatprep.subr.mxu0 0.0
  %407 = vmatpush1.msra.mxu0 0.0
  %408 = vmatprep.subr.mxu0 0.0
  %409 = vmatpush1.msra.mxu0 0.0
  %410 = vmatprep.subr.mxu0 0.0
  %411 = vmatpush1.msra.mxu0 0.0
  %412 = vmatprep.subr.mxu0 0.0
  %413 = vmatpush1.msra.mxu0 0.0
  %414 = vmatprep.subr.mxu0 0.0
  %415 = vmatpush1.msra.mxu0 0.0
  %416 = vmatprep.subr.mxu0 0.0
  %417 = vmatpush1.msra.mxu0 0.0
  %418 = vmatprep.subr.mxu0 0.0
  %419 = vmatpush1.msra.mxu0 0.0
  %420 = vmatprep.subr.mxu0 0.0
  %421 = vmatpush1.msra.mxu0 0.0
  %422 = vmatprep.mubr.f32.mxu0 0.0
  %423 = vmatmul.mubr.f32.gmra.mrb[0].mxu0 %v307
  %v424 = vpop.f32.mrb[0].mxu0
  %v425 = vadd.f32 %v304, %v424
  %v426 = vpop.f32.mrb[0].mxu0
  %427 = vmatprep.mubr.f32.mxu0 0.0
  %428 = vmatmul.mubr.f32.gmra.mrb[0].mxu0 %v310
  %v429 = vpop.f32.mrb[0].mxu0
  %v430 = vadd.f32 %v304, %v429
  %v431 = vpop.f32.mrb[0].mxu0
  %432 = vmatprep.mubr.f32.mxu0 0.0
  %433 = vmatmul.mubr.f32.gmra.mrb[0].mxu0 %v313
  %v434 = vpop.f32.mrb[0].mxu0
  %v435 = vadd.f32 %v304, %v434
  %v436 = vpop.f32.mrb[0].mxu0
  %437 = vmatprep.mubr.f32.mxu0 0.0
  %438 = vmatmul.mubr.f32.gmra.mrb[0].mxu0 %v316
  %v439 = vpop.f32.mrb[0].mxu0
  %v440 = vadd.f32 %v304, %v439
  %v441 = vpop.f32.mrb[0].mxu0
  %442 = vmatprep.mubr.f32.mxu0 0.0
  %443 = vmatmul.mubr.f32.gmra.mrb[0].mxu0 %v319
  %v444 = vpop.f32.mrb[0].mxu0
  %v445 = vadd.f32 %v304, %v444
  %v446 = vpop.f32.mrb[0].mxu0
  %447 = vmatprep.mubr.f32.mxu0 0.0
  %448 = vmatmul.mubr.f32.gmra.mrb[0].mxu0 %v322
  %v449 = vpop.f32.mrb[0].mxu0
  %v450 = vadd.f32 %v304, %v449
  %v451 = vpop.f32.mrb[0].mxu0
  %452 = vmatprep.mubr.f32.mxu0 0.0
  %453 = vmatmul.mubr.f32.gmra.mrb[0].mxu0 %v325
  %v454 = vpop.f32.mrb[0].mxu0
  %v455 = vadd.f32 %v304, %v454
  %v456 = vpop.f32.mrb[0].mxu0
  %457 = vmatprep.mubr.f32.mxu0 0.0
  %458 = vmatmul.mubr.f32.gmra.mrb[0].mxu0 %v328
  %v459 = vpop.f32.mrb[0].mxu0
  %v460 = vadd.f32 %v304, %v459
  %v461 = vpop.f32.mrb[0].mxu0
  %462 = vmatprep.mubr.f32.mxu0 0.0
  %463 = vmatmul.mubr.f32.gmra.mrb[0].mxu0 %v331
  %v464 = vpop.f32.mrb[0].mxu0
  %v465 = vadd.f32 %v304, %v464
  %v466 = vpop.f32.mrb[0].mxu0
  %467 = vmatprep.mubr.f32.mxu0 0.0
  %468 = vmatmul.mubr.f32.gmra.mrb[0].mxu0 %v334
  %v469 = vpop.f32.mrb[0].mxu0
  %v470 = vadd.f32 %v304, %v469
  %v471 = vpop.f32.mrb[0].mxu0
  %472 = vmatprep.mubr.f32.mxu0 0.0
  %473 = vmatmul.mubr.f32.gmra.mrb[0].mxu0 %v337
  %v474 = vpop.f32.mrb[0].mxu0
  %v475 = vadd.f32 %v304, %v474
  %v476 = vpop.f32.mrb[0].mxu0
  %477 = vmatprep.mubr.f32.mxu0 0.0
  %478 = vmatmul.mubr.f32.gmra.mrb[0].mxu0 %v340
  %v479 = vpop.f32.mrb[0].mxu0
  %v480 = vadd.f32 %v304, %v479
  %v481 = vpop.f32.mrb[0].mxu0
  %482 = vmatprep.mubr.f32.mxu0 0.0
  %483 = vmatmul.mubr.f32.gmra.mrb[0].mxu0 %v343
  %v484 = vpop.f32.mrb[0].mxu0
  %v485 = vadd.f32 %v304, %v484
  %v486 = vpop.f32.mrb[0].mxu0
  %487 = vmatprep.mubr.f32.mxu0 0.0
  %488 = vmatmul.mubr.f32.gmra.mrb[0].mxu0 %v346
  %v489 = vpop.f32.mrb[0].mxu0
  %v490 = vadd.f32 %v304, %v489
  %v491 = vpop.f32.mrb[0].mxu0
  %492 = vmatprep.mubr.f32.mxu0 0.0
  %493 = vmatmul.mubr.f32.gmra.mrb[0].mxu0 %v349
  %v494 = vpop.f32.mrb[0].mxu0
  %v495 = vadd.f32 %v304, %v494
  %v496 = vpop.f32.mrb[0].mxu0
  %497 = vmatprep.mubr.f32.mxu0 0.0
  %498 = vmatmul.mubr.f32.gmra.mrb[0].mxu0 %v352
  %v499 = vpop.f32.mrb[0].mxu0
  %v500 = vadd.f32 %v304, %v499
  %v501 = vpop.f32.mrb[0].mxu0
  %502 = vdwg.mxu0
  %v503 = vmax.f32 %v425, 0.0
  %v504 = vmax.f32 %v430, 0.0
  %v505 = vmax.f32 %v435, 0.0
  %v506 = vmax.f32 %v440, 0.0
  %v507 = vmax.f32 %v445, 0.0
  %v508 = vmax.f32 %v450, 0.0
  %v509 = vmax.f32 %v455, 0.0
  %v510 = vmax.f32 %v460, 0.0
  %v511 = vmax.f32 %v465, 0.0
  %v512 = vmax.f32 %v470, 0.0
  %v513 = vmax.f32 %v475, 0.0
  %v514 = vmax.f32 %v480, 0.0
  %v515 = vmax.f32 %v485, 0.0
  %v516 = vmax.f32 %v490, 0.0
  %v517 = vmax.f32 %v495, 0.0
  %v518 = vmax.f32 %v500, 0.0
  %v519 = vld [vmem:[%s5] sm:$0xff]
  %v520 = vld [vmem:[%s5 + $0x8] sm:$0xff]
  %v521 = vld [vmem:[%s5 + $0x10] sm:$0xff]
  %v522 = vld [vmem:[%s5 + $0x18] sm:$0xff]
  %v523 = vld [vmem:[%s5 + $0x20] sm:$0xff]
  %v524 = vld [vmem:[%s5 + $0x28] sm:$0xff]
  %v525 = vld [vmem:[%s5 + $0x30] sm:$0xff]
  %v526 = vld [vmem:[%s5 + $0x38] sm:$0xff]
  %v527 = vld [vmem:[%s6] sm:$0x1]
  %v529 = vlaneseq
  %v530 = vshrl.u32 %v529, 7
  %v531 = vsub.s32 0, %v530
  %v532 = vrot.slane %v527, %v531
  %vm534 = vcmask 523264
  %v536 = vsel %vm534, %v503, 0
  %v539 = vsel %vm534, %v504, 0
  %v542 = vsel %vm534, %v505, 0
  %v545 = vsel %vm534, %v506, 0
  %v548 = vsel %vm534, %v507, 0
  %v551 = vsel %vm534, %v508, 0
  %v554 = vsel %vm534, %v509, 0
  %v557 = vsel %vm534, %v510, 0
  %v560 = vsel %vm534, %v511, 0
  %v563 = vsel %vm534, %v512, 0
  %v566 = vsel %vm534, %v513, 0
  %v569 = vsel %vm534, %v514, 0
  %v572 = vsel %vm534, %v515, 0
  %v575 = vsel %vm534, %v516, 0
  %v578 = vsel %vm534, %v517, 0
  %v581 = vsel %vm534, %v518, 0
  %583 = vmatprep.subr.mxu0 0.0
  %584 = vmatpush1.msra.mxu0 %v519
  %585 = vmatprep.subr.mxu0 0.0
  %586 = vmatpush1.msra.mxu0 %v520
  %587 = vmatprep.subr.mxu0 0.0
  %588 = vmatpush1.msra.mxu0 %v521
  %589 = vmatprep.subr.mxu0 0.0
  %590 = vmatpush1.msra.mxu0 %v522
  %591 = vmatprep.subr.mxu0 0.0
  %592 = vmatpush1.msra.mxu0 %v523
  %593 = vmatprep.subr.mxu0 0.0
  %594 = vmatpush1.msra.mxu0 %v524
  %595 = vmatprep.subr.mxu0 0.0
  %596 = vmatpush1.msra.mxu0 %v525
  %597 = vmatprep.subr.mxu0 0.0
  %598 = vmatpush1.msra.mxu0 %v526
  %599 = vmatprep.subr.mxu0 0.0
  %600 = vmatpush1.msra.mxu0 0.0
  %601 = vmatprep.subr.mxu0 0.0
  %602 = vmatpush1.msra.mxu0 0.0
  %603 = vmatprep.subr.mxu0 0.0
  %604 = vmatpush1.msra.mxu0 0.0
  %605 = vmatprep.subr.mxu0 0.0
  %606 = vmatpush1.msra.mxu0 0.0
  %607 = vmatprep.subr.mxu0 0.0
  %608 = vmatpush1.msra.mxu0 0.0
  %609 = vmatprep.subr.mxu0 0.0
  %610 = vmatpush1.msra.mxu0 0.0
  %611 = vmatprep.subr.mxu0 0.0
  %612 = vmatpush1.msra.mxu0 0.0
  %613 = vmatprep.subr.mxu0 0.0
  %614 = vmatpush1.msra.mxu0 0.0
  %615 = vmatprep.subr.mxu0 0.0
  %616 = vmatpush1.msra.mxu0 0.0
  %617 = vmatprep.subr.mxu0 0.0
  %618 = vmatpush1.msra.mxu0 0.0
  %619 = vmatprep.subr.mxu0 0.0
  %620 = vmatpush1.msra.mxu0 0.0
  %621 = vmatprep.subr.mxu0 0.0
  %622 = vmatpush1.msra.mxu0 0.0
  %623 = vmatprep.subr.mxu0 0.0
  %624 = vmatpush1.msra.mxu0 0.0
  %625 = vmatprep.subr.mxu0 0.0
  %626 = vmatpush1.msra.mxu0 0.0
  %627 = vmatprep.subr.mxu0 0.0
  %628 = vmatpush1.msra.mxu0 0.0
  %629 = vmatprep.subr.mxu0 0.0
  %630 = vmatpush1.msra.mxu0 0.0
  %631 = vmatprep.subr.mxu0 0.0
  %632 = vmatpush1.msra.mxu0 0.0
  %633 = vmatprep.subr.mxu0 0.0
  %634 = vmatpush1.msra.mxu0 0.0
  %635 = vmatprep.subr.mxu0 0.0
  %636 = vmatpush1.msra.mxu0 0.0
  %637 = vmatprep.subr.mxu0 0.0
  %638 = vmatpush1.msra.mxu0 0.0
  %639 = vmatprep.subr.mxu0 0.0
  %640 = vmatpush1.msra.mxu0 0.0
  %641 = vmatprep.subr.mxu0 0.0
  %642 = vmatpush1.msra.mxu0 0.0
  %643 = vmatprep.subr.mxu0 0.0
  %644 = vmatpush1.msra.mxu0 0.0
  %645 = vmatprep.subr.mxu0 0.0
  %646 = vmatpush1.msra.mxu0 0.0
  %647 = vmatprep.mubr.f32.mxu0 0.0
  %648 = vmatmul.mubr.f32.gmra.mrb[0].mxu0 %v536
  %v649 = vpop.f32.mrb[0].mxu0
  %v650 = vadd.f32 %v532, %v649
  %v651 = vpop.f32.mrb[0].mxu0
  %652 = vmatprep.mubr.f32.mxu0 0.0
  %653 = vmatmul.mubr.f32.gmra.mrb[0].mxu0 %v539
  %v654 = vpop.f32.mrb[0].mxu0
  %v655 = vadd.f32 %v532, %v654
  %v656 = vpop.f32.mrb[0].mxu0
  %657 = vmatprep.mubr.f32.mxu0 0.0
  %658 = vmatmul.mubr.f32.gmra.mrb[0].mxu0 %v542
  %v659 = vpop.f32.mrb[0].mxu0
  %v660 = vadd.f32 %v532, %v659
  %v661 = vpop.f32.mrb[0].mxu0
  %662 = vmatprep.mubr.f32.mxu0 0.0
  %663 = vmatmul.mubr.f32.gmra.mrb[0].mxu0 %v545
  %v664 = vpop.f32.mrb[0].mxu0
  %v665 = vadd.f32 %v532, %v664
  %v666 = vpop.f32.mrb[0].mxu0
  %667 = vmatprep.mubr.f32.mxu0 0.0
  %668 = vmatmul.mubr.f32.gmra.mrb[0].mxu0 %v548
  %v669 = vpop.f32.mrb[0].mxu0
  %v670 = vadd.f32 %v532, %v669
  %v671 = vpop.f32.mrb[0].mxu0
  %672 = vmatprep.mubr.f32.mxu0 0.0
  %673 = vmatmul.mubr.f32.gmra.mrb[0].mxu0 %v551
  %v674 = vpop.f32.mrb[0].mxu0
  %v675 = vadd.f32 %v532, %v674
  %v676 = vpop.f32.mrb[0].mxu0
  %677 = vmatprep.mubr.f32.mxu0 0.0
  %678 = vmatmul.mubr.f32.gmra.mrb[0].mxu0 %v554
  %v679 = vpop.f32.mrb[0].mxu0
  %v680 = vadd.f32 %v532, %v679
  %v681 = vpop.f32.mrb[0].mxu0
  %682 = vmatprep.mubr.f32.mxu0 0.0
  %683 = vmatmul.mubr.f32.gmra.mrb[0].mxu0 %v557
  %v684 = vpop.f32.mrb[0].mxu0
  %v685 = vadd.f32 %v532, %v684
  %v686 = vpop.f32.mrb[0].mxu0
  %687 = vmatprep.mubr.f32.mxu0 0.0
  %688 = vmatmul.mubr.f32.gmra.mrb[0].mxu0 %v560
  %v689 = vpop.f32.mrb[0].mxu0
  %v690 = vadd.f32 %v532, %v689
  %v691 = vpop.f32.mrb[0].mxu0
  %692 = vmatprep.mubr.f32.mxu0 0.0
  %693 = vmatmul.mubr.f32.gmra.mrb[0].mxu0 %v563
  %v694 = vpop.f32.mrb[0].mxu0
  %v695 = vadd.f32 %v532, %v694
  %v696 = vpop.f32.mrb[0].mxu0
  %697 = vmatprep.mubr.f32.mxu0 0.0
  %698 = vmatmul.mubr.f32.gmra.mrb[0].mxu0 %v566
  %v699 = vpop.f32.mrb[0].mxu0
  %v700 = vadd.f32 %v532, %v699
  %v701 = vpop.f32.mrb[0].mxu0
  %702 = vmatprep.mubr.f32.mxu0 0.0
  %703 = vmatmul.mubr.f32.gmra.mrb[0].mxu0 %v569
  %v704 = vpop.f32.mrb[0].mxu0
  %v705 = vadd.f32 %v532, %v704
  %v706 = vpop.f32.mrb[0].mxu0
  %707 = vmatprep.mubr.f32.mxu0 0.0
  %708 = vmatmul.mubr.f32.gmra.mrb[0].mxu0 %v572
  %v709 = vpop.f32.mrb[0].mxu0
  %v710 = vadd.f32 %v532, %v709
  %v711 = vpop.f32.mrb[0].mxu0
  %712 = vmatprep.mubr.f32.mxu0 0.0
  %713 = vmatmul.mubr.f32.gmra.mrb[0].mxu0 %v575
  %v714 = vpop.f32.mrb[0].mxu0
  %v715 = vadd.f32 %v532, %v714
  %v716 = vpop.f32.mrb[0].mxu0
  %717 = vmatprep.mubr.f32.mxu0 0.0
  %718 = vmatmul.mubr.f32.gmra.mrb[0].mxu0 %v578
  %v719 = vpop.f32.mrb[0].mxu0
  %v720 = vadd.f32 %v532, %v719
  %v721 = vpop.f32.mrb[0].mxu0
  %722 = vmatprep.mubr.f32.mxu0 0.0
  %723 = vmatmul.mubr.f32.gmra.mrb[0].mxu0 %v581
  %v724 = vpop.f32.mrb[0].mxu0
  %v725 = vadd.f32 %v532, %v724
  %v726 = vpop.f32.mrb[0].mxu0
  %727 = vdwg.mxu0
  %v728 = vmax.f32 %v650, 0.0
  %v729 = vmax.f32 %v655, 0.0
  %v730 = vmax.f32 %v660, 0.0
  %v731 = vmax.f32 %v665, 0.0
  %v732 = vmax.f32 %v670, 0.0
  %v733 = vmax.f32 %v675, 0.0
  %v734 = vmax.f32 %v680, 0.0
  %v735 = vmax.f32 %v685, 0.0
  %v736 = vmax.f32 %v690, 0.0
  %v737 = vmax.f32 %v695, 0.0
  %v738 = vmax.f32 %v700, 0.0
  %v739 = vmax.f32 %v705, 0.0
  %v740 = vmax.f32 %v710, 0.0
  %v741 = vmax.f32 %v715, 0.0
  %v742 = vmax.f32 %v720, 0.0
  %v743 = vmax.f32 %v725, 0.0
  %744 = vst.msk [vmem:[%s7] sm:$0xff] %vm534, %v728
  %745 = vst.msk [vmem:[%s7 + $0x8] sm:$0xff] %vm534, %v729
  %746 = vst.msk [vmem:[%s7 + $0x10] sm:$0xff] %vm534, %v730
  %747 = vst.msk [vmem:[%s7 + $0x18] sm:$0xff] %vm534, %v731
  %748 = vst.msk [vmem:[%s7 + $0x20] sm:$0xff] %vm534, %v732
  %749 = vst.msk [vmem:[%s7 + $0x28] sm:$0xff] %vm534, %v733
  %750 = vst.msk [vmem:[%s7 + $0x30] sm:$0xff] %vm534, %v734
  %751 = vst.msk [vmem:[%s7 + $0x38] sm:$0xff] %vm534, %v735
  %752 = vst.msk [vmem:[%s7 + $0x40] sm:$0xff] %vm534, %v736
  %753 = vst.msk [vmem:[%s7 + $0x48] sm:$0xff] %vm534, %v737
  %754 = vst.msk [vmem:[%s7 + $0x50] sm:$0xff] %vm534, %v738
  %755 = vst.msk [vmem:[%s7 + $0x58] sm:$0xff] %vm534, %v739
  %756 = vst.msk [vmem:[%s7 + $0x60] sm:$0xff] %vm534, %v740
  %757 = vst.msk [vmem:[%s7 + $0x68] sm:$0xff] %vm534, %v741
  %758 = vst.msk [vmem:[%s7 + $0x70] sm:$0xff] %vm534, %v742
  %759 = vst.msk [vmem:[%s7 + $0x78] sm:$0xff] %vm534, %v743
  // Predicated region
  $region30: #{gnn_policy_forward.6} parent=0 // pred_check
    _
  $region31: #{gnn_policy_forward.6} parent=0 // pred_check_branch
    %761 = sbr.rel (0) target = $region33
  $region32: #{gnn_policy_forward.6} parent=0 // pred_region
    _
  $region33: #{gnn_policy_forward.6} parent=0 // pred_fallthru
    _
  // Predicated region
  $region34: #{gnn_policy_forward.6} parent=0 // pred_check
    _
  $region35: #{gnn_policy_forward.6} parent=0 // pred_check_branch
    %763 = sbr.rel (0) target = $region37
  $region36: #{gnn_policy_forward.6} parent=0 // pred_region
    _
  $region37: #{gnn_policy_forward.6} parent=0 // pred_fallthru
    _

// kernel: gnn_policy_forward.7
$region0: #{gnn_policy_forward.7}
  #allocation0 [shape = 'u32[]', space=smem, size = 0x4, offset = 0x4, fixed_abs, tag = 'smem constant byte address 0x4 - core index']
  #allocation1 [shape = 'u32[144,128]{1,0:T(1,128)}', space=vmem, size = 0x12000, scoped, tag = 'internal scratch']
  %s0 = inlined_call_operand.vmem [shape: f32[128,6], index: 0, kind: input, shape index: {}]
  %s1 = inlined_call_operand.vmem [shape: f32[1,6], index: 1, kind: input, shape index: {}]
  %s2 = inlined_call_operand.vmem [shape: f32[1,6], index: 2, kind: input, shape index: {}]
  %s3 = inlined_call_operand.vmem [shape: f32[6,64], index: 3, kind: input, shape index: {}]
  %s4 = inlined_call_operand.vmem [shape: f32[1,64], index: 4, kind: input, shape index: {}]
  %s5 = inlined_call_operand.vmem [shape: f32[64,64], index: 5, kind: input, shape index: {}]
  %s6 = inlined_call_operand.vmem [shape: f32[1,64], index: 6, kind: input, shape index: {}]
  %s7 = inlined_call_operand.vmem [shape: f32[128,64], index: 7, kind: output, shape index: {}]
  %s8 = sld [smem:[#allocation0]]
  $region38: #{gnn_policy_forward.7} parent=0
    _
  %s10 = ssub.s32 1, %s8
  %s11 = scalar_select 0, %s10, %s8
  // Predicated region
  $region2: #{gnn_policy_forward.7} parent=0 // pred_check
    _
  $region3: #{gnn_policy_forward.7} parent=0 // pred_check_branch
    %13 = sbr.rel (0) target = $region5
  $region4: #{gnn_policy_forward.7} parent=0 // pred_region
    _
  $region5: #{gnn_policy_forward.7} parent=0 // pred_fallthru
    _
  // Predicated region
  $region6: #{gnn_policy_forward.7} parent=0 // pred_check
    _
  $region7: #{gnn_policy_forward.7} parent=0 // pred_check_branch
    %15 = sbr.rel (0) target = $region9
  $region8: #{gnn_policy_forward.7} parent=0 // pred_region
    _
  $region9: #{gnn_policy_forward.7} parent=0 // pred_fallthru
    _
  // Predicated region
  $region10: #{gnn_policy_forward.7} parent=0 // pred_check
    _
  $region11: #{gnn_policy_forward.7} parent=0 // pred_check_branch
    %17 = sbr.rel (0) target = $region13
  $region12: #{gnn_policy_forward.7} parent=0 // pred_region
    _
  $region13: #{gnn_policy_forward.7} parent=0 // pred_fallthru
    _
  // Predicated region
  $region14: #{gnn_policy_forward.7} parent=0 // pred_check
    _
  $region15: #{gnn_policy_forward.7} parent=0 // pred_check_branch
    %19 = sbr.rel (0) target = $region17
  $region16: #{gnn_policy_forward.7} parent=0 // pred_region
    _
  $region17: #{gnn_policy_forward.7} parent=0 // pred_fallthru
    _
  // Predicated region
  $region18: #{gnn_policy_forward.7} parent=0 // pred_check
    _
  $region19: #{gnn_policy_forward.7} parent=0 // pred_check_branch
    %21 = sbr.rel (0) target = $region21
  $region20: #{gnn_policy_forward.7} parent=0 // pred_region
    _
  $region21: #{gnn_policy_forward.7} parent=0 // pred_fallthru
    _
  // Predicated region
  $region22: #{gnn_policy_forward.7} parent=0 // pred_check
    _
  $region23: #{gnn_policy_forward.7} parent=0 // pred_check_branch
    %23 = sbr.rel (0) target = $region25
  $region24: #{gnn_policy_forward.7} parent=0 // pred_region
    _
  $region25: #{gnn_policy_forward.7} parent=0 // pred_fallthru
    _
  // Predicated region
  $region26: #{gnn_policy_forward.7} parent=0 // pred_check
    _
  $region27: #{gnn_policy_forward.7} parent=0 // pred_check_branch
    %25 = sbr.rel (0) target = $region29
  $region28: #{gnn_policy_forward.7} parent=0 // pred_region
    _
  $region29: #{gnn_policy_forward.7} parent=0 // pred_fallthru
    _
  %v26 = vld [vmem:[%s0] sm:$0xff]
  %v27 = vld [vmem:[%s0 + $0x8] sm:$0xff]
  %v28 = vld [vmem:[%s0 + $0x10] sm:$0xff]
  %v29 = vld [vmem:[%s0 + $0x18] sm:$0xff]
  %v30 = vld [vmem:[%s0 + $0x20] sm:$0xff]
  %v31 = vld [vmem:[%s0 + $0x28] sm:$0xff]
  %v32 = vld [vmem:[%s0 + $0x30] sm:$0xff]
  %v33 = vld [vmem:[%s0 + $0x38] sm:$0xff]
  %v34 = vld [vmem:[%s0 + $0x40] sm:$0xff]
  %v35 = vld [vmem:[%s0 + $0x48] sm:$0xff]
  %v36 = vld [vmem:[%s0 + $0x50] sm:$0xff]
  %v37 = vld [vmem:[%s0 + $0x58] sm:$0xff]
  %v38 = vld [vmem:[%s0 + $0x60] sm:$0xff]
  %v39 = vld [vmem:[%s0 + $0x68] sm:$0xff]
  %v40 = vld [vmem:[%s0 + $0x70] sm:$0xff]
  %v41 = vld [vmem:[%s0 + $0x78] sm:$0xff]
  %v42 = vld [vmem:[%s1] sm:$0x1]
  %v43 = vld [vmem:[%s2] sm:$0x1]
  %vm44 = vcmask 48128
  %v45 = vsel %vm44, %v26, 0.0
  %46 = vadd.xlane.f32.xlu0 %v45
  %v47 = vpop.xlane.xlu0 %46
  %v48 = vsel %vm44, %v27, 0.0
  %49 = vadd.xlane.f32.xlu0 %v48
  %v50 = vpop.xlane.xlu0 %49
  %v51 = vsel %vm44, %v28, 0.0
  %52 = vadd.xlane.f32.xlu0 %v51
  %v53 = vpop.xlane.xlu0 %52
  %v54 = vsel %vm44, %v29, 0.0
  %55 = vadd.xlane.f32.xlu0 %v54
  %v56 = vpop.xlane.xlu0 %55
  %v57 = vsel %vm44, %v30, 0.0
  %58 = vadd.xlane.f32.xlu0 %v57
  %v59 = vpop.xlane.xlu0 %58
  %v60 = vsel %vm44, %v31, 0.0
  %61 = vadd.xlane.f32.xlu0 %v60
  %v62 = vpop.xlane.xlu0 %61
  %v63 = vsel %vm44, %v32, 0.0
  %64 = vadd.xlane.f32.xlu0 %v63
  %v65 = vpop.xlane.xlu0 %64
  %v66 = vsel %vm44, %v33, 0.0
  %67 = vadd.xlane.f32.xlu0 %v66
  %v68 = vpop.xlane.xlu0 %67
  %v69 = vsel %vm44, %v34, 0.0
  %70 = vadd.xlane.f32.xlu0 %v69
  %v71 = vpop.xlane.xlu0 %70
  %v72 = vsel %vm44, %v35, 0.0
  %73 = vadd.xlane.f32.xlu0 %v72
  %v74 = vpop.xlane.xlu0 %73
  %v75 = vsel %vm44, %v36, 0.0
  %76 = vadd.xlane.f32.xlu0 %v75
  %v77 = vpop.xlane.xlu0 %76
  %v78 = vsel %vm44, %v37, 0.0
  %79 = vadd.xlane.f32.xlu0 %v78
  %v80 = vpop.xlane.xlu0 %79
  %v81 = vsel %vm44, %v38, 0.0
  %82 = vadd.xlane.f32.xlu0 %v81
  %v83 = vpop.xlane.xlu0 %82
  %v84 = vsel %vm44, %v39, 0.0
  %85 = vadd.xlane.f32.xlu0 %v84
  %v86 = vpop.xlane.xlu0 %85
  %v87 = vsel %vm44, %v40, 0.0
  %88 = vadd.xlane.f32.xlu0 %v87
  %v89 = vpop.xlane.xlu0 %88
  %v90 = vsel %vm44, %v41, 0.0
  %91 = vadd.xlane.f32.xlu0 %v90
  %v92 = vpop.xlane.xlu0 %91
  %v93 = vrcp.pop 6.0
  %v94 = vmul.f32 %v47, %v93
  %v95 = vmul.f32 %v50, %v93
  %v96 = vmul.f32 %v53, %v93
  %v97 = vmul.f32 %v56, %v93
  %v98 = vmul.f32 %v59, %v93
  %v99 = vmul.f32 %v62, %v93
  %v100 = vmul.f32 %v65, %v93
  %v101 = vmul.f32 %v68, %v93
  %v102 = vmul.f32 %v71, %v93
  %v103 = vmul.f32 %v74, %v93
  %v104 = vmul.f32 %v77, %v93
  %v105 = vmul.f32 %v80, %v93
  %v106 = vmul.f32 %v83, %v93
  %v107 = vmul.f32 %v86, %v93
  %v108 = vmul.f32 %v89, %v93
  %v109 = vmul.f32 %v92, %v93
  %v110 = vsub.f32 %v26, %v94
  %v111 = vsub.f32 %v27, %v95
  %v112 = vsub.f32 %v28, %v96
  %v113 = vsub.f32 %v29, %v97
  %v114 = vsub.f32 %v30, %v98
  %v115 = vsub.f32 %v31, %v99
  %v116 = vsub.f32 %v32, %v100
  %v117 = vsub.f32 %v33, %v101
  %v118 = vsub.f32 %v34, %v102
  %v119 = vsub.f32 %v35, %v103
  %v120 = vsub.f32 %v36, %v104
  %v121 = vsub.f32 %v37, %v105
  %v122 = vsub.f32 %v38, %v106
  %v123 = vsub.f32 %v39, %v107
  %v124 = vsub.f32 %v40, %v108
  %v125 = vsub.f32 %v41, %v109
  %v126 = vmul.f32 %v110, %v110
  %v127 = vmul.f32 %v111, %v111
  %v128 = vmul.f32 %v112, %v112
  %v129 = vmul.f32 %v113, %v113
  %v130 = vmul.f32 %v114, %v114
  %v131 = vmul.f32 %v115, %v115
  %v132 = vmul.f32 %v116, %v116
  %v133 = vmul.f32 %v117, %v117
  %v134 = vmul.f32 %v118, %v118
  %v135 = vmul.f32 %v119, %v119
  %v136 = vmul.f32 %v120, %v120
  %v137 = vmul.f32 %v121, %v121
  %v138 = vmul.f32 %v122, %v122
  %v139 = vmul.f32 %v123, %v123
  %v140 = vmul.f32 %v124, %v124
  %v141 = vmul.f32 %v125, %v125
  %v142 = vsel %vm44, %v126, 0.0
  %143 = vadd.xlane.f32.xlu0 %v142
  %v144 = vpop.xlane.xlu0 %143
  %v145 = vsel %vm44, %v127, 0.0
  %146 = vadd.xlane.f32.xlu0 %v145
  %v147 = vpop.xlane.xlu0 %146
  %v148 = vsel %vm44, %v128, 0.0
  %149 = vadd.xlane.f32.xlu0 %v148
  %v150 = vpop.xlane.xlu0 %149
  %v151 = vsel %vm44, %v129, 0.0
  %152 = vadd.xlane.f32.xlu0 %v151
  %v153 = vpop.xlane.xlu0 %152
  %v154 = vsel %vm44, %v130, 0.0
  %155 = vadd.xlane.f32.xlu0 %v154
  %v156 = vpop.xlane.xlu0 %155
  %v157 = vsel %vm44, %v131, 0.0
  %158 = vadd.xlane.f32.xlu0 %v157
  %v159 = vpop.xlane.xlu0 %158
  %v160 = vsel %vm44, %v132, 0.0
  %161 = vadd.xlane.f32.xlu0 %v160
  %v162 = vpop.xlane.xlu0 %161
  %v163 = vsel %vm44, %v133, 0.0
  %164 = vadd.xlane.f32.xlu0 %v163
  %v165 = vpop.xlane.xlu0 %164
  %v166 = vsel %vm44, %v134, 0.0
  %167 = vadd.xlane.f32.xlu0 %v166
  %v168 = vpop.xlane.xlu0 %167
  %v169 = vsel %vm44, %v135, 0.0
  %170 = vadd.xlane.f32.xlu0 %v169
  %v171 = vpop.xlane.xlu0 %170
  %v172 = vsel %vm44, %v136, 0.0
  %173 = vadd.xlane.f32.xlu0 %v172
  %v174 = vpop.xlane.xlu0 %173
  %v175 = vsel %vm44, %v137, 0.0
  %176 = vadd.xlane.f32.xlu0 %v175
  %v177 = vpop.xlane.xlu0 %176
  %v178 = vsel %vm44, %v138, 0.0
  %179 = vadd.xlane.f32.xlu0 %v178
  %v180 = vpop.xlane.xlu0 %179
  %v181 = vsel %vm44, %v139, 0.0
  %182 = vadd.xlane.f32.xlu0 %v181
  %v183 = vpop.xlane.xlu0 %182
  %v184 = vsel %vm44, %v140, 0.0
  %185 = vadd.xlane.f32.xlu0 %v184
  %v186 = vpop.xlane.xlu0 %185
  %v187 = vsel %vm44, %v141, 0.0
  %188 = vadd.xlane.f32.xlu0 %v187
  %v189 = vpop.xlane.xlu0 %188
  %v190 = vmul.f32 %v144, %v93
  %v191 = vmul.f32 %v147, %v93
  %v192 = vmul.f32 %v150, %v93
  %v193 = vmul.f32 %v153, %v93
  %v194 = vmul.f32 %v156, %v93
  %v195 = vmul.f32 %v159, %v93
  %v196 = vmul.f32 %v162, %v93
  %v197 = vmul.f32 %v165, %v93
  %v198 = vmul.f32 %v168, %v93
  %v199 = vmul.f32 %v171, %v93
  %v200 = vmul.f32 %v174, %v93
  %v201 = vmul.f32 %v177, %v93
  %v202 = vmul.f32 %v180, %v93
  %v203 = vmul.f32 %v183, %v93
  %v204 = vmul.f32 %v186, %v93
  %v205 = vmul.f32 %v189, %v93
  %v206 = vadd.f32 %v190, 1e-05
  %v207 = vadd.f32 %v191, 1e-05
  %v208 = vadd.f32 %v192, 1e-05
  %v209 = vadd.f32 %v193, 1e-05
  %v210 = vadd.f32 %v194, 1e-05
  %v211 = vadd.f32 %v195, 1e-05
  %v212 = vadd.f32 %v196, 1e-05
  %v213 = vadd.f32 %v197, 1e-05
  %v214 = vadd.f32 %v198, 1e-05
  %v215 = vadd.f32 %v199, 1e-05
  %v216 = vadd.f32 %v200, 1e-05
  %v217 = vadd.f32 %v201, 1e-05
  %v218 = vadd.f32 %v202, 1e-05
  %v219 = vadd.f32 %v203, 1e-05
  %v220 = vadd.f32 %v204, 1e-05
  %v221 = vadd.f32 %v205, 1e-05
  %v222 = vrsqrt.pop %v206
  %v223 = vrsqrt.pop %v207
  %v224 = vrsqrt.pop %v208
  %v225 = vrsqrt.pop %v209
  %v226 = vrsqrt.pop %v210
  %v227 = vrsqrt.pop %v211
  %v228 = vrsqrt.pop %v212
  %v229 = vrsqrt.pop %v213
  %v230 = vrsqrt.pop %v214
  %v231 = vrsqrt.pop %v215
  %v232 = vrsqrt.pop %v216
  %v233 = vrsqrt.pop %v217
  %v234 = vrsqrt.pop %v218
  %v235 = vrsqrt.pop %v219
  %v236 = vrsqrt.pop %v220
  %v237 = vrsqrt.pop %v221
  %v238 = vmul.f32 %v110, %v222
  %v239 = vmul.f32 %v111, %v223
  %v240 = vmul.f32 %v112, %v224
  %v241 = vmul.f32 %v113, %v225
  %v242 = vmul.f32 %v114, %v226
  %v243 = vmul.f32 %v115, %v227
  %v244 = vmul.f32 %v116, %v228
  %v245 = vmul.f32 %v117, %v229
  %v246 = vmul.f32 %v118, %v230
  %v247 = vmul.f32 %v119, %v231
  %v248 = vmul.f32 %v120, %v232
  %v249 = vmul.f32 %v121, %v233
  %v250 = vmul.f32 %v122, %v234
  %v251 = vmul.f32 %v123, %v235
  %v252 = vmul.f32 %v124, %v236
  %v253 = vmul.f32 %v125, %v237
  %v255 = vlaneseq
  %v256 = vshrl.u32 %v255, 7
  %v257 = vsub.s32 0, %v256
  %v258 = vrot.slane %v42, %v257
  %v260 = vmul.f32 %v238, %v258
  %v261 = vmul.f32 %v239, %v258
  %v262 = vmul.f32 %v240, %v258
  %v263 = vmul.f32 %v241, %v258
  %v264 = vmul.f32 %v242, %v258
  %v265 = vmul.f32 %v243, %v258
  %v266 = vmul.f32 %v244, %v258
  %v267 = vmul.f32 %v245, %v258
  %v268 = vmul.f32 %v246, %v258
  %v269 = vmul.f32 %v247, %v258
  %v270 = vmul.f32 %v248, %v258
  %v271 = vmul.f32 %v249, %v258
  %v272 = vmul.f32 %v250, %v258
  %v273 = vmul.f32 %v251, %v258
  %v274 = vmul.f32 %v252, %v258
  %v275 = vmul.f32 %v253, %v258
  %v277 = vlaneseq
  %v278 = vshrl.u32 %v277, 7
  %v279 = vsub.s32 0, %v278
  %v280 = vrot.slane %v43, %v279
  %v282 = vadd.f32 %v260, %v280
  %v283 = vadd.f32 %v261, %v280
  %v284 = vadd.f32 %v262, %v280
  %v285 = vadd.f32 %v263, %v280
  %v286 = vadd.f32 %v264, %v280
  %v287 = vadd.f32 %v265, %v280
  %v288 = vadd.f32 %v266, %v280
  %v289 = vadd.f32 %v267, %v280
  %v290 = vadd.f32 %v268, %v280
  %v291 = vadd.f32 %v269, %v280
  %v292 = vadd.f32 %v270, %v280
  %v293 = vadd.f32 %v271, %v280
  %v294 = vadd.f32 %v272, %v280
  %v295 = vadd.f32 %v273, %v280
  %v296 = vadd.f32 %v274, %v280
  %v297 = vadd.f32 %v275, %v280
  %v298 = vld [vmem:[%s3] sm:$0x3f]
  %v299 = vld [vmem:[%s4] sm:$0x1]
  %v301 = vlaneseq
  %v302 = vshrl.u32 %v301, 7
  %v303 = vsub.s32 0, %v302
  %v304 = vrot.slane %v299, %v303
  %v307 = vsel %vm44, %v282, 0
  %v310 = vsel %vm44, %v283, 0
  %v313 = vsel %vm44, %v284, 0
  %v316 = vsel %vm44, %v285, 0
  %v319 = vsel %vm44, %v286, 0
  %v322 = vsel %vm44, %v287, 0
  %v325 = vsel %vm44, %v288, 0
  %v328 = vsel %vm44, %v289, 0
  %v331 = vsel %vm44, %v290, 0
  %v334 = vsel %vm44, %v291, 0
  %v337 = vsel %vm44, %v292, 0
  %v340 = vsel %vm44, %v293, 0
  %v343 = vsel %vm44, %v294, 0
  %v346 = vsel %vm44, %v295, 0
  %v349 = vsel %vm44, %v296, 0
  %v352 = vsel %vm44, %v297, 0
  %vm354 = vcmask 1045504
  %v356 = vsel %vm354, %v298, 0
  %358 = vmatprep.subr.mxu0 0.0
  %359 = vmatpush1.msra.mxu0 %v356
  %360 = vmatprep.subr.mxu0 0.0
  %361 = vmatpush1.msra.mxu0 0.0
  %362 = vmatprep.subr.mxu0 0.0
  %363 = vmatpush1.msra.mxu0 0.0
  %364 = vmatprep.subr.mxu0 0.0
  %365 = vmatpush1.msra.mxu0 0.0
  %366 = vmatprep.subr.mxu0 0.0
  %367 = vmatpush1.msra.mxu0 0.0
  %368 = vmatprep.subr.mxu0 0.0
  %369 = vmatpush1.msra.mxu0 0.0
  %370 = vmatprep.subr.mxu0 0.0
  %371 = vmatpush1.msra.mxu0 0.0
  %372 = vmatprep.subr.mxu0 0.0
  %373 = vmatpush1.msra.mxu0 0.0
  %374 = vmatprep.subr.mxu0 0.0
  %375 = vmatpush1.msra.mxu0 0.0
  %376 = vmatprep.subr.mxu0 0.0
  %377 = vmatpush1.msra.mxu0 0.0
  %378 = vmatprep.subr.mxu0 0.0
  %379 = vmatpush1.msra.mxu0 0.0
  %380 = vmatprep.subr.mxu0 0.0
  %381 = vmatpush1.msra.mxu0 0.0
  %382 = vmatprep.subr.mxu0 0.0
  %383 = vmatpush1.msra.mxu0 0.0
  %384 = vmatprep.subr.mxu0 0.0
  %385 = vmatpush1.msra.mxu0 0.0
  %386 = vmatprep.subr.mxu0 0.0
  %387 = vmatpush1.msra.mxu0 0.0
  %388 = vmatprep.subr.mxu0 0.0
  %389 = vmatpush1.msra.mxu0 0.0
  %390 = vmatprep.subr.mxu0 0.0
  %391 = vmatpush1.msra.mxu0 0.0
  %392 = vmatprep.subr.mxu0 0.0
  %393 = vmatpush1.msra.mxu0 0.0
  %394 = vmatprep.subr.mxu0 0.0
  %395 = vmatpush1.msra.mxu0 0.0
  %396 = vmatprep.subr.mxu0 0.0
  %397 = vmatpush1.msra.mxu0 0.0
  %398 = vmatprep.subr.mxu0 0.0
  %399 = vmatpush1.msra.mxu0 0.0
  %400 = vmatprep.subr.mxu0 0.0
  %401 = vmatpush1.msra.mxu0 0.0
  %402 = vmatprep.subr.mxu0 0.0
  %403 = vmatpush1.msra.mxu0 0.0
  %404 = vmatprep.subr.mxu0 0.0
  %405 = vmatpush1.msra.mxu0 0.0
  %406 = vmatprep.subr.mxu0 0.0
  %407 = vmatpush1.msra.mxu0 0.0
  %408 = vmatprep.subr.mxu0 0.0
  %409 = vmatpush1.msra.mxu0 0.0
  %410 = vmatprep.subr.mxu0 0.0
  %411 = vmatpush1.msra.mxu0 0.0
  %412 = vmatprep.subr.mxu0 0.0
  %413 = vmatpush1.msra.mxu0 0.0
  %414 = vmatprep.subr.mxu0 0.0
  %415 = vmatpush1.msra.mxu0 0.0
  %416 = vmatprep.subr.mxu0 0.0
  %417 = vmatpush1.msra.mxu0 0.0
  %418 = vmatprep.subr.mxu0 0.0
  %419 = vmatpush1.msra.mxu0 0.0
  %420 = vmatprep.subr.mxu0 0.0
  %421 = vmatpush1.msra.mxu0 0.0
  %422 = vmatprep.mubr.f32.mxu0 0.0
  %423 = vmatmul.mubr.f32.gmra.mrb[0].mxu0 %v307
  %v424 = vpop.f32.mrb[0].mxu0
  %v425 = vadd.f32 %v304, %v424
  %v426 = vpop.f32.mrb[0].mxu0
  %427 = vmatprep.mubr.f32.mxu0 0.0
  %428 = vmatmul.mubr.f32.gmra.mrb[0].mxu0 %v310
  %v429 = vpop.f32.mrb[0].mxu0
  %v430 = vadd.f32 %v304, %v429
  %v431 = vpop.f32.mrb[0].mxu0
  %432 = vmatprep.mubr.f32.mxu0 0.0
  %433 = vmatmul.mubr.f32.gmra.mrb[0].mxu0 %v313
  %v434 = vpop.f32.mrb[0].mxu0
  %v435 = vadd.f32 %v304, %v434
  %v436 = vpop.f32.mrb[0].mxu0
  %437 = vmatprep.mubr.f32.mxu0 0.0
  %438 = vmatmul.mubr.f32.gmra.mrb[0].mxu0 %v316
  %v439 = vpop.f32.mrb[0].mxu0
  %v440 = vadd.f32 %v304, %v439
  %v441 = vpop.f32.mrb[0].mxu0
  %442 = vmatprep.mubr.f32.mxu0 0.0
  %443 = vmatmul.mubr.f32.gmra.mrb[0].mxu0 %v319
  %v444 = vpop.f32.mrb[0].mxu0
  %v445 = vadd.f32 %v304, %v444
  %v446 = vpop.f32.mrb[0].mxu0
  %447 = vmatprep.mubr.f32.mxu0 0.0
  %448 = vmatmul.mubr.f32.gmra.mrb[0].mxu0 %v322
  %v449 = vpop.f32.mrb[0].mxu0
  %v450 = vadd.f32 %v304, %v449
  %v451 = vpop.f32.mrb[0].mxu0
  %452 = vmatprep.mubr.f32.mxu0 0.0
  %453 = vmatmul.mubr.f32.gmra.mrb[0].mxu0 %v325
  %v454 = vpop.f32.mrb[0].mxu0
  %v455 = vadd.f32 %v304, %v454
  %v456 = vpop.f32.mrb[0].mxu0
  %457 = vmatprep.mubr.f32.mxu0 0.0
  %458 = vmatmul.mubr.f32.gmra.mrb[0].mxu0 %v328
  %v459 = vpop.f32.mrb[0].mxu0
  %v460 = vadd.f32 %v304, %v459
  %v461 = vpop.f32.mrb[0].mxu0
  %462 = vmatprep.mubr.f32.mxu0 0.0
  %463 = vmatmul.mubr.f32.gmra.mrb[0].mxu0 %v331
  %v464 = vpop.f32.mrb[0].mxu0
  %v465 = vadd.f32 %v304, %v464
  %v466 = vpop.f32.mrb[0].mxu0
  %467 = vmatprep.mubr.f32.mxu0 0.0
  %468 = vmatmul.mubr.f32.gmra.mrb[0].mxu0 %v334
  %v469 = vpop.f32.mrb[0].mxu0
  %v470 = vadd.f32 %v304, %v469
  %v471 = vpop.f32.mrb[0].mxu0
  %472 = vmatprep.mubr.f32.mxu0 0.0
  %473 = vmatmul.mubr.f32.gmra.mrb[0].mxu0 %v337
  %v474 = vpop.f32.mrb[0].mxu0
  %v475 = vadd.f32 %v304, %v474
  %v476 = vpop.f32.mrb[0].mxu0
  %477 = vmatprep.mubr.f32.mxu0 0.0
  %478 = vmatmul.mubr.f32.gmra.mrb[0].mxu0 %v340
  %v479 = vpop.f32.mrb[0].mxu0
  %v480 = vadd.f32 %v304, %v479
  %v481 = vpop.f32.mrb[0].mxu0
  %482 = vmatprep.mubr.f32.mxu0 0.0
  %483 = vmatmul.mubr.f32.gmra.mrb[0].mxu0 %v343
  %v484 = vpop.f32.mrb[0].mxu0
  %v485 = vadd.f32 %v304, %v484
  %v486 = vpop.f32.mrb[0].mxu0
  %487 = vmatprep.mubr.f32.mxu0 0.0
  %488 = vmatmul.mubr.f32.gmra.mrb[0].mxu0 %v346
  %v489 = vpop.f32.mrb[0].mxu0
  %v490 = vadd.f32 %v304, %v489
  %v491 = vpop.f32.mrb[0].mxu0
  %492 = vmatprep.mubr.f32.mxu0 0.0
  %493 = vmatmul.mubr.f32.gmra.mrb[0].mxu0 %v349
  %v494 = vpop.f32.mrb[0].mxu0
  %v495 = vadd.f32 %v304, %v494
  %v496 = vpop.f32.mrb[0].mxu0
  %497 = vmatprep.mubr.f32.mxu0 0.0
  %498 = vmatmul.mubr.f32.gmra.mrb[0].mxu0 %v352
  %v499 = vpop.f32.mrb[0].mxu0
  %v500 = vadd.f32 %v304, %v499
  %v501 = vpop.f32.mrb[0].mxu0
  %502 = vdwg.mxu0
  %v503 = vmax.f32 %v425, 0.0
  %v504 = vmax.f32 %v430, 0.0
  %v505 = vmax.f32 %v435, 0.0
  %v506 = vmax.f32 %v440, 0.0
  %v507 = vmax.f32 %v445, 0.0
  %v508 = vmax.f32 %v450, 0.0
  %v509 = vmax.f32 %v455, 0.0
  %v510 = vmax.f32 %v460, 0.0
  %v511 = vmax.f32 %v465, 0.0
  %v512 = vmax.f32 %v470, 0.0
  %v513 = vmax.f32 %v475, 0.0
  %v514 = vmax.f32 %v480, 0.0
  %v515 = vmax.f32 %v485, 0.0
  %v516 = vmax.f32 %v490, 0.0
  %v517 = vmax.f32 %v495, 0.0
  %v518 = vmax.f32 %v500, 0.0
  %v519 = vld [vmem:[%s5] sm:$0xff]
  %v520 = vld [vmem:[%s5 + $0x8] sm:$0xff]
  %v521 = vld [vmem:[%s5 + $0x10] sm:$0xff]
  %v522 = vld [vmem:[%s5 + $0x18] sm:$0xff]
  %v523 = vld [vmem:[%s5 + $0x20] sm:$0xff]
  %v524 = vld [vmem:[%s5 + $0x28] sm:$0xff]
  %v525 = vld [vmem:[%s5 + $0x30] sm:$0xff]
  %v526 = vld [vmem:[%s5 + $0x38] sm:$0xff]
  %v527 = vld [vmem:[%s6] sm:$0x1]
  %v529 = vlaneseq
  %v530 = vshrl.u32 %v529, 7
  %v531 = vsub.s32 0, %v530
  %v532 = vrot.slane %v527, %v531
  %vm534 = vcmask 523264
  %v536 = vsel %vm534, %v503, 0
  %v539 = vsel %vm534, %v504, 0
  %v542 = vsel %vm534, %v505, 0
  %v545 = vsel %vm534, %v506, 0
  %v548 = vsel %vm534, %v507, 0
  %v551 = vsel %vm534, %v508, 0
  %v554 = vsel %vm534, %v509, 0
  %v557 = vsel %vm534, %v510, 0
  %v560 = vsel %vm534, %v511, 0
  %v563 = vsel %vm534, %v512, 0
  %v566 = vsel %vm534, %v513, 0
  %v569 = vsel %vm534, %v514, 0
  %v572 = vsel %vm534, %v515, 0
  %v575 = vsel %vm534, %v516, 0
  %v578 = vsel %vm534, %v517, 0
  %v581 = vsel %vm534, %v518, 0
  %583 = vmatprep.subr.mxu0 0.0
  %584 = vmatpush1.msra.mxu0 %v519
  %585 = vmatprep.subr.mxu0 0.0
  %586 = vmatpush1.msra.mxu0 %v520
  %587 = vmatprep.subr.mxu0 0.0
  %588 = vmatpush1.msra.mxu0 %v521
  %589 = vmatprep.subr.mxu0 0.0
  %590 = vmatpush1.msra.mxu0 %v522
  %591 = vmatprep.subr.mxu0 0.0
  %592 = vmatpush1.msra.mxu0 %v523
  %593 = vmatprep.subr.mxu0 0.0
  %594 = vmatpush1.msra.mxu0 %v524
  %595 = vmatprep.subr.mxu0 0.0
  %596 = vmatpush1.msra.mxu0 %v525
  %597 = vmatprep.subr.mxu0 0.0
  %598 = vmatpush1.msra.mxu0 %v526
  %599 = vmatprep.subr.mxu0 0.0
  %600 = vmatpush1.msra.mxu0 0.0
  %601 = vmatprep.subr.mxu0 0.0
  %602 = vmatpush1.msra.mxu0 0.0
  %603 = vmatprep.subr.mxu0 0.0
  %604 = vmatpush1.msra.mxu0 0.0
  %605 = vmatprep.subr.mxu0 0.0
  %606 = vmatpush1.msra.mxu0 0.0
  %607 = vmatprep.subr.mxu0 0.0
  %608 = vmatpush1.msra.mxu0 0.0
  %609 = vmatprep.subr.mxu0 0.0
  %610 = vmatpush1.msra.mxu0 0.0
  %611 = vmatprep.subr.mxu0 0.0
  %612 = vmatpush1.msra.mxu0 0.0
  %613 = vmatprep.subr.mxu0 0.0
  %614 = vmatpush1.msra.mxu0 0.0
  %615 = vmatprep.subr.mxu0 0.0
  %616 = vmatpush1.msra.mxu0 0.0
  %617 = vmatprep.subr.mxu0 0.0
  %618 = vmatpush1.msra.mxu0 0.0
  %619 = vmatprep.subr.mxu0 0.0
  %620 = vmatpush1.msra.mxu0 0.0
  %621 = vmatprep.subr.mxu0 0.0
  %622 = vmatpush1.msra.mxu0 0.0
  %623 = vmatprep.subr.mxu0 0.0
  %624 = vmatpush1.msra.mxu0 0.0
  %625 = vmatprep.subr.mxu0 0.0
  %626 = vmatpush1.msra.mxu0 0.0
  %627 = vmatprep.subr.mxu0 0.0
  %628 = vmatpush1.msra.mxu0 0.0
  %629 = vmatprep.subr.mxu0 0.0
  %630 = vmatpush1.msra.mxu0 0.0
  %631 = vmatprep.subr.mxu0 0.0
  %632 = vmatpush1.msra.mxu0 0.0
  %633 = vmatprep.subr.mxu0 0.0
  %634 = vmatpush1.msra.mxu0 0.0
  %635 = vmatprep.subr.mxu0 0.0
  %636 = vmatpush1.msra.mxu0 0.0
  %637 = vmatprep.subr.mxu0 0.0
  %638 = vmatpush1.msra.mxu0 0.0
  %639 = vmatprep.subr.mxu0 0.0
  %640 = vmatpush1.msra.mxu0 0.0
  %641 = vmatprep.subr.mxu0 0.0
  %642 = vmatpush1.msra.mxu0 0.0
  %643 = vmatprep.subr.mxu0 0.0
  %644 = vmatpush1.msra.mxu0 0.0
  %645 = vmatprep.subr.mxu0 0.0
  %646 = vmatpush1.msra.mxu0 0.0
  %647 = vmatprep.mubr.f32.mxu0 0.0
  %648 = vmatmul.mubr.f32.gmra.mrb[0].mxu0 %v536
  %v649 = vpop.f32.mrb[0].mxu0
  %v650 = vadd.f32 %v532, %v649
  %v651 = vpop.f32.mrb[0].mxu0
  %652 = vmatprep.mubr.f32.mxu0 0.0
  %653 = vmatmul.mubr.f32.gmra.mrb[0].mxu0 %v539
  %v654 = vpop.f32.mrb[0].mxu0
  %v655 = vadd.f32 %v532, %v654
  %v656 = vpop.f32.mrb[0].mxu0
  %657 = vmatprep.mubr.f32.mxu0 0.0
  %658 = vmatmul.mubr.f32.gmra.mrb[0].mxu0 %v542
  %v659 = vpop.f32.mrb[0].mxu0
  %v660 = vadd.f32 %v532, %v659
  %v661 = vpop.f32.mrb[0].mxu0
  %662 = vmatprep.mubr.f32.mxu0 0.0
  %663 = vmatmul.mubr.f32.gmra.mrb[0].mxu0 %v545
  %v664 = vpop.f32.mrb[0].mxu0
  %v665 = vadd.f32 %v532, %v664
  %v666 = vpop.f32.mrb[0].mxu0
  %667 = vmatprep.mubr.f32.mxu0 0.0
  %668 = vmatmul.mubr.f32.gmra.mrb[0].mxu0 %v548
  %v669 = vpop.f32.mrb[0].mxu0
  %v670 = vadd.f32 %v532, %v669
  %v671 = vpop.f32.mrb[0].mxu0
  %672 = vmatprep.mubr.f32.mxu0 0.0
  %673 = vmatmul.mubr.f32.gmra.mrb[0].mxu0 %v551
  %v674 = vpop.f32.mrb[0].mxu0
  %v675 = vadd.f32 %v532, %v674
  %v676 = vpop.f32.mrb[0].mxu0
  %677 = vmatprep.mubr.f32.mxu0 0.0
  %678 = vmatmul.mubr.f32.gmra.mrb[0].mxu0 %v554
  %v679 = vpop.f32.mrb[0].mxu0
  %v680 = vadd.f32 %v532, %v679
  %v681 = vpop.f32.mrb[0].mxu0
  %682 = vmatprep.mubr.f32.mxu0 0.0
  %683 = vmatmul.mubr.f32.gmra.mrb[0].mxu0 %v557
  %v684 = vpop.f32.mrb[0].mxu0
  %v685 = vadd.f32 %v532, %v684
  %v686 = vpop.f32.mrb[0].mxu0
  %687 = vmatprep.mubr.f32.mxu0 0.0
  %688 = vmatmul.mubr.f32.gmra.mrb[0].mxu0 %v560
  %v689 = vpop.f32.mrb[0].mxu0
  %v690 = vadd.f32 %v532, %v689
  %v691 = vpop.f32.mrb[0].mxu0
  %692 = vmatprep.mubr.f32.mxu0 0.0
  %693 = vmatmul.mubr.f32.gmra.mrb[0].mxu0 %v563
  %v694 = vpop.f32.mrb[0].mxu0
  %v695 = vadd.f32 %v532, %v694
  %v696 = vpop.f32.mrb[0].mxu0
  %697 = vmatprep.mubr.f32.mxu0 0.0
  %698 = vmatmul.mubr.f32.gmra.mrb[0].mxu0 %v566
  %v699 = vpop.f32.mrb[0].mxu0
  %v700 = vadd.f32 %v532, %v699
  %v701 = vpop.f32.mrb[0].mxu0
  %702 = vmatprep.mubr.f32.mxu0 0.0
  %703 = vmatmul.mubr.f32.gmra.mrb[0].mxu0 %v569
  %v704 = vpop.f32.mrb[0].mxu0
  %v705 = vadd.f32 %v532, %v704
  %v706 = vpop.f32.mrb[0].mxu0
  %707 = vmatprep.mubr.f32.mxu0 0.0
  %708 = vmatmul.mubr.f32.gmra.mrb[0].mxu0 %v572
  %v709 = vpop.f32.mrb[0].mxu0
  %v710 = vadd.f32 %v532, %v709
  %v711 = vpop.f32.mrb[0].mxu0
  %712 = vmatprep.mubr.f32.mxu0 0.0
  %713 = vmatmul.mubr.f32.gmra.mrb[0].mxu0 %v575
  %v714 = vpop.f32.mrb[0].mxu0
  %v715 = vadd.f32 %v532, %v714
  %v716 = vpop.f32.mrb[0].mxu0
  %717 = vmatprep.mubr.f32.mxu0 0.0
  %718 = vmatmul.mubr.f32.gmra.mrb[0].mxu0 %v578
  %v719 = vpop.f32.mrb[0].mxu0
  %v720 = vadd.f32 %v532, %v719
  %v721 = vpop.f32.mrb[0].mxu0
  %722 = vmatprep.mubr.f32.mxu0 0.0
  %723 = vmatmul.mubr.f32.gmra.mrb[0].mxu0 %v581
  %v724 = vpop.f32.mrb[0].mxu0
  %v725 = vadd.f32 %v532, %v724
  %v726 = vpop.f32.mrb[0].mxu0
  %727 = vdwg.mxu0
  %v728 = vmax.f32 %v650, 0.0
  %v729 = vmax.f32 %v655, 0.0
  %v730 = vmax.f32 %v660, 0.0
  %v731 = vmax.f32 %v665, 0.0
  %v732 = vmax.f32 %v670, 0.0
  %v733 = vmax.f32 %v675, 0.0
  %v734 = vmax.f32 %v680, 0.0
  %v735 = vmax.f32 %v685, 0.0
  %v736 = vmax.f32 %v690, 0.0
  %v737 = vmax.f32 %v695, 0.0
  %v738 = vmax.f32 %v700, 0.0
  %v739 = vmax.f32 %v705, 0.0
  %v740 = vmax.f32 %v710, 0.0
  %v741 = vmax.f32 %v715, 0.0
  %v742 = vmax.f32 %v720, 0.0
  %v743 = vmax.f32 %v725, 0.0
  %744 = vst.msk [vmem:[%s7] sm:$0xff] %vm534, %v728
  %745 = vst.msk [vmem:[%s7 + $0x8] sm:$0xff] %vm534, %v729
  %746 = vst.msk [vmem:[%s7 + $0x10] sm:$0xff] %vm534, %v730
  %747 = vst.msk [vmem:[%s7 + $0x18] sm:$0xff] %vm534, %v731
  %748 = vst.msk [vmem:[%s7 + $0x20] sm:$0xff] %vm534, %v732
  %749 = vst.msk [vmem:[%s7 + $0x28] sm:$0xff] %vm534, %v733
  %750 = vst.msk [vmem:[%s7 + $0x30] sm:$0xff] %vm534, %v734
  %751 = vst.msk [vmem:[%s7 + $0x38] sm:$0xff] %vm534, %v735
  %752 = vst.msk [vmem:[%s7 + $0x40] sm:$0xff] %vm534, %v736
  %753 = vst.msk [vmem:[%s7 + $0x48] sm:$0xff] %vm534, %v737
  %754 = vst.msk [vmem:[%s7 + $0x50] sm:$0xff] %vm534, %v738
  %755 = vst.msk [vmem:[%s7 + $0x58] sm:$0xff] %vm534, %v739
  %756 = vst.msk [vmem:[%s7 + $0x60] sm:$0xff] %vm534, %v740
  %757 = vst.msk [vmem:[%s7 + $0x68] sm:$0xff] %vm534, %v741
  %758 = vst.msk [vmem:[%s7 + $0x70] sm:$0xff] %vm534, %v742
  %759 = vst.msk [vmem:[%s7 + $0x78] sm:$0xff] %vm534, %v743
  // Predicated region
  $region30: #{gnn_policy_forward.7} parent=0 // pred_check
    _
  $region31: #{gnn_policy_forward.7} parent=0 // pred_check_branch
    %761 = sbr.rel (0) target = $region33
  $region32: #{gnn_policy_forward.7} parent=0 // pred_region
    _
  $region33: #{gnn_policy_forward.7} parent=0 // pred_fallthru
    _
  // Predicated region
  $region34: #{gnn_policy_forward.7} parent=0 // pred_check
    _
  $region35: #{gnn_policy_forward.7} parent=0 // pred_check_branch
    %763 = sbr.rel (0) target = $region37
  $region36: #{gnn_policy_forward.7} parent=0 // pred_region
    _
  $region37: #{gnn_policy_forward.7} parent=0 // pred_fallthru
    _

// kernel: gnn_policy_forward.8
$region0: #{gnn_policy_forward.8}
  #allocation0 [shape = 'u32[]', space=smem, size = 0x4, offset = 0x4, fixed_abs, tag = 'smem constant byte address 0x4 - core index']
  #allocation1 [shape = 'u32[144,128]{1,0:T(1,128)}', space=vmem, size = 0x12000, scoped, tag = 'internal scratch']
  #allocation2 [shape = 'bf16[128,64]{1,0:T(16,128)(2,1)}', space=vmem, size = 0x8000, scoped, tag = 'scratch operand']
  #allocation3 [shape = 'bf16[128,64]{1,0:T(16,128)(2,1)}', space=vmem, size = 0x8000, scoped, tag = 'scratch operand']
  %s0 = inlined_call_operand.vmem [shape: s32[1,768], index: 0, kind: input, shape index: {}]
  %s1 = inlined_call_operand.vmem [shape: s32[1,768], index: 1, kind: input, shape index: {}]
  %s2 = inlined_call_operand.vmem [shape: f32[128,64], index: 2, kind: input, shape index: {}]
  %s3 = inlined_call_operand.vmem [shape: f32[128,64], index: 3, kind: input, shape index: {}]
  %s4 = inlined_call_operand.vmem [shape: f32[64,64], index: 4, kind: input, shape index: {}]
  %s5 = inlined_call_operand.vmem [shape: f32[1,64], index: 5, kind: input, shape index: {}]
  %s6 = inlined_call_operand.vmem [shape: f32[64,64], index: 6, kind: input, shape index: {}]
  %s7 = inlined_call_operand.vmem [shape: f32[1,64], index: 7, kind: input, shape index: {}]
  %s8 = inlined_call_operand.vmem [shape: f32[1,64], index: 8, kind: input, shape index: {}]
  %s9 = inlined_call_operand.vmem [shape: f32[64,64], index: 9, kind: input, shape index: {}]
  %s10 = inlined_call_operand.vmem [shape: f32[1,64], index: 10, kind: input, shape index: {}]
  %s11 = inlined_call_operand.vmem [shape: f32[1,64], index: 11, kind: input, shape index: {}]
  %s12 = inlined_call_operand.vmem [shape: f32[1,64], index: 12, kind: input, shape index: {}]
  %s13 = inlined_call_operand.vmem [shape: f32[64,64], index: 13, kind: input, shape index: {}]
  %s14 = inlined_call_operand.vmem [shape: f32[64,64], index: 14, kind: input, shape index: {}]
  %s15 = inlined_call_operand.vmem [shape: f32[1,64], index: 15, kind: input, shape index: {}]
  %s16 = inlined_call_operand.vmem [shape: f32[64,64], index: 16, kind: input, shape index: {}]
  %s17 = inlined_call_operand.vmem [shape: f32[1,64], index: 17, kind: input, shape index: {}]
  %s18 = inlined_call_operand.vmem [shape: f32[128,64], index: 18, kind: output, shape index: {}]
  %s19 = sld [smem:[#allocation0]]
  $region113: #{gnn_policy_forward.8} parent=0
    _
  %s21 = ssub.s32 1, %s19
  %s22 = scalar_select 0, %s21, %s19
  loop: start=0, step=1, limit=5
  $region2: #{gnn_policy_forward.8} parent=0 // loop_pre_header
    _
  $region3: #{gnn_policy_forward.8} parent=0 // loop_header
    %s24 = sphi 0, %s28
    %p25 = scmp.ge.s32.totalorder %s24, 5
    %s34 = sphi 0, %s36
    %s37 = sphi 0, %s34
    %s38 = sphi 0, %s37
    %s54 = sphi 0, %s38
    %s60 = sphi 0, %s62
    %s63 = sphi 0, %s60
    %s64 = sphi 0, %s63
    %s80 = sphi 0, %s64
    %s84 = sphi 0, %s84
    %s86 = sphi 0, %s84
    %s87 = sphi 0, %s86
    %s101 = sphi 0, %s87
    %s105 = sphi 0, %s105
    %s107 = sphi 0, %s105
    %s108 = sphi 0, %s107
    %s122 = sphi 0, %s108
    %s126 = sphi 0, %s126
    %s128 = sphi 0, %s126
    %s129 = sphi 0, %s128
    %s143 = sphi 0, %s129
    %s147 = sphi 0, %s147
    %s149 = sphi 0, %s147
    %s150 = sphi 0, %s149
    %s164 = sphi 0, %s150
    %s168 = sphi 0, %s168
    %s170 = sphi 0, %s168
    %s171 = sphi 0, %s170
    %s185 = sphi 0, %s171
    %s189 = sphi 0, %s189
    %s191 = sphi 0, %s189
    %s192 = sphi 0, %s191
    %s206 = sphi 0, %s192
    %s210 = sphi 0, %s210
    %s212 = sphi 0, %s210
    %s213 = sphi 0, %s212
    %s227 = sphi 0, %s213
    %s231 = sphi 0, %s231
    %s233 = sphi 0, %s231
    %s234 = sphi 0, %s233
    %s248 = sphi 0, %s234
    %s252 = sphi 0, %s252
    %s254 = sphi 0, %s252
    %s255 = sphi 0, %s254
    %s269 = sphi 0, %s255
    %s273 = sphi 0, %s273
    %s275 = sphi 0, %s273
    %s276 = sphi 0, %s275
    %s290 = sphi 0, %s276
    %s294 = sphi 0, %s294
    %s296 = sphi 0, %s294
    %s297 = sphi 0, %s296
    %s311 = sphi 0, %s297
    %s315 = sphi 0, %s315
    %s317 = sphi 0, %s315
    %s318 = sphi 0, %s317
    %s332 = sphi 0, %s318
    %s336 = sphi 0, %s336
    %s338 = sphi 0, %s336
    %s339 = sphi 0, %s338
    %s353 = sphi 0, %s339
    %s357 = sphi 0, %s357
    %s359 = sphi 0, %s357
    %s360 = sphi 0, %s359
    %s374 = sphi 0, %s360
    %s378 = sphi 0, %s378
    %s380 = sphi 0, %s378
    %s381 = sphi 0, %s380
    %s395 = sphi 0, %s381
    %s399 = sphi 0, %s399
    %s401 = sphi 0, %s399
    %s402 = sphi 0, %s401
    %s416 = sphi 0, %s402
    %s420 = sphi 0, %s420
    %s422 = sphi 0, %s420
    %s423 = sphi 0, %s422
    %s437 = sphi 0, %s423
  $region4: #{gnn_policy_forward.8} parent=0 // loop_header_branch
    %27 = sbr.rel (%p25) target = $region8
  $region5: #{gnn_policy_forward.8} parent=0 // loop_body
    %s29 = ssub.s32 %s24, 1
    %s30 = ssub.s32 %s24, 2
    %s31 = sadd.s32 %s24, 1
    %s32 = ssub.s32 %s24, %s31
    %p33 = scmp.eq.s32.totalorder %s32, 0
    %s35 = sadd.s32 %s34, 1
    %s36 = scalar_select %p33, %s34, %s35
    %p39 = pneg %p33
    %p40 = scmp.eq.s32.totalorder %s24, 2
    %p41 = por %p39, %p40
    %p42 = scmp.ne.s32.totalorder %s34, %s37
    %p43 = scmp.eq.s32.totalorder %s24, 0
    %p44 = por %p42, %p43
    %p45 = scmp.ne.s32.totalorder %s34, %s37
    %p46 = scmp.eq.s32.totalorder %s29, 2
    %p47 = por %p45, %p46
    %p48 = scmp.ne.s32.totalorder %s37, %s38
    %p49 = scmp.eq.s32.totalorder %s29, 0
    %p50 = por %p48, %p49
    %p51 = scmp.ne.s32.totalorder %s37, %s38
    %p52 = scmp.eq.s32.totalorder %s30, 2
    %p53 = por %p51, %p52
    %p55 = scmp.ne.s32.totalorder %s38, %s54
    %p56 = scmp.eq.s32.totalorder %s30, 0
    %p57 = por %p55, %p56
    %s58 = ssub.s32 %s24, %s31
    %p59 = scmp.eq.s32.totalorder %s58, 0
    %s61 = sadd.s32 %s60, 1
    %s62 = scalar_select %p59, %s60, %s61
    %p65 = pneg %p59
    %p66 = scmp.eq.s32.totalorder %s24, 2
    %p67 = por %p65, %p66
    %p68 = scmp.ne.s32.totalorder %s60, %s63
    %p69 = scmp.eq.s32.totalorder %s24, 0
    %p70 = por %p68, %p69
    %p71 = scmp.ne.s32.totalorder %s60, %s63
    %p72 = scmp.eq.s32.totalorder %s29, 2
    %p73 = por %p71, %p72
    %p74 = scmp.ne.s32.totalorder %s63, %s64
    %p75 = scmp.eq.s32.totalorder %s29, 0
    %p76 = por %p74, %p75
    %p77 = scmp.ne.s32.totalorder %s63, %s64
    %p78 = scmp.eq.s32.totalorder %s30, 2
    %p79 = por %p77, %p78
    %p81 = scmp.ne.s32.totalorder %s64, %s80
    %p82 = scmp.eq.s32.totalorder %s30, 0
    %p83 = por %p81, %p82
    %s85 = sadd.s32 %s84, 1
    %p88 = scmp.eq.s32.totalorder %s24, 2
    %p89 = scmp.ne.s32.totalorder %s84, %s86
    %p90 = scmp.eq.s32.totalorder %s24, 0
    %p91 = por %p89, %p90
    %p92 = scmp.ne.s32.totalorder %s84, %s86
    %p93 = scmp.eq.s32.totalorder %s29, 2
    %p94 = por %p92, %p93
    %p95 = scmp.ne.s32.totalorder %s86, %s87
    %p96 = scmp.eq.s32.totalorder %s29, 0
    %p97 = por %p95, %p96
    %p98 = scmp.ne.s32.totalorder %s86, %s87
    %p99 = scmp.eq.s32.totalorder %s30, 2
    %p100 = por %p98, %p99
    %p102 = scmp.ne.s32.totalorder %s87, %s101
    %p103 = scmp.eq.s32.totalorder %s30, 0
    %p104 = por %p102, %p103
    %s106 = sadd.s32 %s105, 1
    %p109 = scmp.eq.s32.totalorder %s24, 2
    %p110 = scmp.ne.s32.totalorder %s105, %s107
    %p111 = scmp.eq.s32.totalorder %s24, 0
    %p112 = por %p110, %p111
    %p113 = scmp.ne.s32.totalorder %s105, %s107
    %p114 = scmp.eq.s32.totalorder %s29, 2
    %p115 = por %p113, %p114
    %p116 = scmp.ne.s32.totalorder %s107, %s108
    %p117 = scmp.eq.s32.totalorder %s29, 0
    %p118 = por %p116, %p117
    %p119 = scmp.ne.s32.totalorder %s107, %s108
    %p120 = scmp.eq.s32.totalorder %s30, 2
    %p121 = por %p119, %p120
    %p123 = scmp.ne.s32.totalorder %s108, %s122
    %p124 = scmp.eq.s32.totalorder %s30, 0
    %p125 = por %p123, %p124
    %s127 = sadd.s32 %s126, 1
    %p130 = scmp.eq.s32.totalorder %s24, 2
    %p131 = scmp.ne.s32.totalorder %s126, %s128
    %p132 = scmp.eq.s32.totalorder %s24, 0
    %p133 = por %p131, %p132
    %p134 = scmp.ne.s32.totalorder %s126, %s128
    %p135 = scmp.eq.s32.totalorder %s29, 2
    %p136 = por %p134, %p135
    %p137 = scmp.ne.s32.totalorder %s128, %s129
    %p138 = scmp.eq.s32.totalorder %s29, 0
    %p139 = por %p137, %p138
    %p140 = scmp.ne.s32.totalorder %s128, %s129
    %p141 = scmp.eq.s32.totalorder %s30, 2
    %p142 = por %p140, %p141
    %p144 = scmp.ne.s32.totalorder %s129, %s143
    %p145 = scmp.eq.s32.totalorder %s30, 0
    %p146 = por %p144, %p145
    %s148 = sadd.s32 %s147, 1
    %p151 = scmp.eq.s32.totalorder %s24, 2
    %p152 = scmp.ne.s32.totalorder %s147, %s149
    %p153 = scmp.eq.s32.totalorder %s24, 0
    %p154 = por %p152, %p153
    %p155 = scmp.ne.s32.totalorder %s147, %s149
    %p156 = scmp.eq.s32.totalorder %s29, 2
    %p157 = por %p155, %p156
    %p158 = scmp.ne.s32.totalorder %s149, %s150
    %p159 = scmp.eq.s32.totalorder %s29, 0
    %p160 = por %p158, %p159
    %p161 = scmp.ne.s32.totalorder %s149, %s150
    %p162 = scmp.eq.s32.totalorder %s30, 2
    %p163 = por %p161, %p162
    %p165 = scmp.ne.s32.totalorder %s150, %s164
    %p166 = scmp.eq.s32.totalorder %s30, 0
    %p167 = por %p165, %p166
    %s169 = sadd.s32 %s168, 1
    %p172 = scmp.eq.s32.totalorder %s24, 2
    %p173 = scmp.ne.s32.totalorder %s168, %s170
    %p174 = scmp.eq.s32.totalorder %s24, 0
    %p175 = por %p173, %p174
    %p176 = scmp.ne.s32.totalorder %s168, %s170
    %p177 = scmp.eq.s32.totalorder %s29, 2
    %p178 = por %p176, %p177
    %p179 = scmp.ne.s32.totalorder %s170, %s171
    %p180 = scmp.eq.s32.totalorder %s29, 0
    %p181 = por %p179, %p180
    %p182 = scmp.ne.s32.totalorder %s170, %s171
    %p183 = scmp.eq.s32.totalorder %s30, 2
    %p184 = por %p182, %p183
    %p186 = scmp.ne.s32.totalorder %s171, %s185
    %p187 = scmp.eq.s32.totalorder %s30, 0
    %p188 = por %p186, %p187
    %s190 = sadd.s32 %s189, 1
    %p193 = scmp.eq.s32.totalorder %s24, 2
    %p194 = scmp.ne.s32.totalorder %s189, %s191
    %p195 = scmp.eq.s32.totalorder %s24, 0
    %p196 = por %p194, %p195
    %p197 = scmp.ne.s32.totalorder %s189, %s191
    %p198 = scmp.eq.s32.totalorder %s29, 2
    %p199 = por %p197, %p198
    %p200 = scmp.ne.s32.totalorder %s191, %s192
    %p201 = scmp.eq.s32.totalorder %s29, 0
    %p202 = por %p200, %p201
    %p203 = scmp.ne.s32.totalorder %s191, %s192
    %p204 = scmp.eq.s32.totalorder %s30, 2
    %p205 = por %p203, %p204
    %p207 = scmp.ne.s32.totalorder %s192, %s206
    %p208 = scmp.eq.s32.totalorder %s30, 0
    %p209 = por %p207, %p208
    %s211 = sadd.s32 %s210, 1
    %p214 = scmp.eq.s32.totalorder %s24, 2
    %p215 = scmp.ne.s32.totalorder %s210, %s212
    %p216 = scmp.eq.s32.totalorder %s24, 0
    %p217 = por %p215, %p216
    %p218 = scmp.ne.s32.totalorder %s210, %s212
    %p219 = scmp.eq.s32.totalorder %s29, 2
    %p220 = por %p218, %p219
    %p221 = scmp.ne.s32.totalorder %s212, %s213
    %p222 = scmp.eq.s32.totalorder %s29, 0
    %p223 = por %p221, %p222
    %p224 = scmp.ne.s32.totalorder %s212, %s213
    %p225 = scmp.eq.s32.totalorder %s30, 2
    %p226 = por %p224, %p225
    %p228 = scmp.ne.s32.totalorder %s213, %s227
    %p229 = scmp.eq.s32.totalorder %s30, 0
    %p230 = por %p228, %p229
    %s232 = sadd.s32 %s231, 1
    %p235 = scmp.eq.s32.totalorder %s24, 2
    %p236 = scmp.ne.s32.totalorder %s231, %s233
    %p237 = scmp.eq.s32.totalorder %s24, 0
    %p238 = por %p236, %p237
    %p239 = scmp.ne.s32.totalorder %s231, %s233
    %p240 = scmp.eq.s32.totalorder %s29, 2
    %p241 = por %p239, %p240
    %p242 = scmp.ne.s32.totalorder %s233, %s234
    %p243 = scmp.eq.s32.totalorder %s29, 0
    %p244 = por %p242, %p243
    %p245 = scmp.ne.s32.totalorder %s233, %s234
    %p246 = scmp.eq.s32.totalorder %s30, 2
    %p247 = por %p245, %p246
    %p249 = scmp.ne.s32.totalorder %s234, %s248
    %p250 = scmp.eq.s32.totalorder %s30, 0
    %p251 = por %p249, %p250
    %s253 = sadd.s32 %s252, 1
    %p256 = scmp.eq.s32.totalorder %s24, 2
    %p257 = scmp.ne.s32.totalorder %s252, %s254
    %p258 = scmp.eq.s32.totalorder %s24, 0
    %p259 = por %p257, %p258
    %p260 = scmp.ne.s32.totalorder %s252, %s254
    %p261 = scmp.eq.s32.totalorder %s29, 2
    %p262 = por %p260, %p261
    %p263 = scmp.ne.s32.totalorder %s254, %s255
    %p264 = scmp.eq.s32.totalorder %s29, 0
    %p265 = por %p263, %p264
    %p266 = scmp.ne.s32.totalorder %s254, %s255
    %p267 = scmp.eq.s32.totalorder %s30, 2
    %p268 = por %p266, %p267
    %p270 = scmp.ne.s32.totalorder %s255, %s269
    %p271 = scmp.eq.s32.totalorder %s30, 0
    %p272 = por %p270, %p271
    %s274 = sadd.s32 %s273, 1
    %p277 = scmp.eq.s32.totalorder %s24, 2
    %p278 = scmp.ne.s32.totalorder %s273, %s275
    %p279 = scmp.eq.s32.totalorder %s24, 0
    %p280 = por %p278, %p279
    %p281 = scmp.ne.s32.totalorder %s273, %s275
    %p282 = scmp.eq.s32.totalorder %s29, 2
    %p283 = por %p281, %p282
    %p284 = scmp.ne.s32.totalorder %s275, %s276
    %p285 = scmp.eq.s32.totalorder %s29, 0
    %p286 = por %p284, %p285
    %p287 = scmp.ne.s32.totalorder %s275, %s276
    %p288 = scmp.eq.s32.totalorder %s30, 2
    %p289 = por %p287, %p288
    %p291 = scmp.ne.s32.totalorder %s276, %s290
    %p292 = scmp.eq.s32.totalorder %s30, 0
    %p293 = por %p291, %p292
    %s295 = sadd.s32 %s294, 1
    %p298 = scmp.eq.s32.totalorder %s24, 2
    %p299 = scmp.ne.s32.totalorder %s294, %s296
    %p300 = scmp.eq.s32.totalorder %s24, 0
    %p301 = por %p299, %p300
    %p302 = scmp.ne.s32.totalorder %s294, %s296
    %p303 = scmp.eq.s32.totalorder %s29, 2
    %p304 = por %p302, %p303
    %p305 = scmp.ne.s32.totalorder %s296, %s297
    %p306 = scmp.eq.s32.totalorder %s29, 0
    %p307 = por %p305, %p306
    %p308 = scmp.ne.s32.totalorder %s296, %s297
    %p309 = scmp.eq.s32.totalorder %s30, 2
    %p310 = por %p308, %p309
    %p312 = scmp.ne.s32.totalorder %s297, %s311
    %p313 = scmp.eq.s32.totalorder %s30, 0
    %p314 = por %p312, %p313
    %s316 = sadd.s32 %s315, 1
    %p319 = scmp.eq.s32.totalorder %s24, 2
    %p320 = scmp.ne.s32.totalorder %s315, %s317
    %p321 = scmp.eq.s32.totalorder %s24, 0
    %p322 = por %p320, %p321
    %p323 = scmp.ne.s32.totalorder %s315, %s317
    %p324 = scmp.eq.s32.totalorder %s29, 2
    %p325 = por %p323, %p324
    %p326 = scmp.ne.s32.totalorder %s317, %s318
    %p327 = scmp.eq.s32.totalorder %s29, 0
    %p328 = por %p326, %p327
    %p329 = scmp.ne.s32.totalorder %s317, %s318
    %p330 = scmp.eq.s32.totalorder %s30, 2
    %p331 = por %p329, %p330
    %p333 = scmp.ne.s32.totalorder %s318, %s332
    %p334 = scmp.eq.s32.totalorder %s30, 0
    %p335 = por %p333, %p334
    %s337 = sadd.s32 %s336, 1
    %p340 = scmp.eq.s32.totalorder %s24, 2
    %p341 = scmp.ne.s32.totalorder %s336, %s338
    %p342 = scmp.eq.s32.totalorder %s24, 0
    %p343 = por %p341, %p342
    %p344 = scmp.ne.s32.totalorder %s336, %s338
    %p345 = scmp.eq.s32.totalorder %s29, 2
    %p346 = por %p344, %p345
    %p347 = scmp.ne.s32.totalorder %s338, %s339
    %p348 = scmp.eq.s32.totalorder %s29, 0
    %p349 = por %p347, %p348
    %p350 = scmp.ne.s32.totalorder %s338, %s339
    %p351 = scmp.eq.s32.totalorder %s30, 2
    %p352 = por %p350, %p351
    %p354 = scmp.ne.s32.totalorder %s339, %s353
    %p355 = scmp.eq.s32.totalorder %s30, 0
    %p356 = por %p354, %p355
    %s358 = sadd.s32 %s357, 1
    %p361 = scmp.eq.s32.totalorder %s24, 2
    %p362 = scmp.ne.s32.totalorder %s357, %s359
    %p363 = scmp.eq.s32.totalorder %s24, 0
    %p364 = por %p362, %p363
    %p365 = scmp.ne.s32.totalorder %s357, %s359
    %p366 = scmp.eq.s32.totalorder %s29, 2
    %p367 = por %p365, %p366
    %p368 = scmp.ne.s32.totalorder %s359, %s360
    %p369 = scmp.eq.s32.totalorder %s29, 0
    %p370 = por %p368, %p369
    %p371 = scmp.ne.s32.totalorder %s359, %s360
    %p372 = scmp.eq.s32.totalorder %s30, 2
    %p373 = por %p371, %p372
    %p375 = scmp.ne.s32.totalorder %s360, %s374
    %p376 = scmp.eq.s32.totalorder %s30, 0
    %p377 = por %p375, %p376
    %s379 = sadd.s32 %s378, 1
    %p382 = scmp.eq.s32.totalorder %s24, 2
    %p383 = scmp.ne.s32.totalorder %s378, %s380
    %p384 = scmp.eq.s32.totalorder %s24, 0
    %p385 = por %p383, %p384
    %p386 = scmp.ne.s32.totalorder %s378, %s380
    %p387 = scmp.eq.s32.totalorder %s29, 2
    %p388 = por %p386, %p387
    %p389 = scmp.ne.s32.totalorder %s380, %s381
    %p390 = scmp.eq.s32.totalorder %s29, 0
    %p391 = por %p389, %p390
    %p392 = scmp.ne.s32.totalorder %s380, %s381
    %p393 = scmp.eq.s32.totalorder %s30, 2
    %p394 = por %p392, %p393
    %p396 = scmp.ne.s32.totalorder %s381, %s395
    %p397 = scmp.eq.s32.totalorder %s30, 0
    %p398 = por %p396, %p397
    %s400 = sadd.s32 %s399, 1
    %p403 = scmp.eq.s32.totalorder %s24, 2
    %p404 = scmp.ne.s32.totalorder %s399, %s401
    %p405 = scmp.eq.s32.totalorder %s24, 0
    %p406 = por %p404, %p405
    %p407 = scmp.ne.s32.totalorder %s399, %s401
    %p408 = scmp.eq.s32.totalorder %s29, 2
    %p409 = por %p407, %p408
    %p410 = scmp.ne.s32.totalorder %s401, %s402
    %p411 = scmp.eq.s32.totalorder %s29, 0
    %p412 = por %p410, %p411
    %p413 = scmp.ne.s32.totalorder %s401, %s402
    %p414 = scmp.eq.s32.totalorder %s30, 2
    %p415 = por %p413, %p414
    %p417 = scmp.ne.s32.totalorder %s402, %s416
    %p418 = scmp.eq.s32.totalorder %s30, 0
    %p419 = por %p417, %p418
    %s421 = sadd.s32 %s420, 1
    %p424 = scmp.eq.s32.totalorder %s24, 2
    %p425 = scmp.ne.s32.totalorder %s420, %s422
    %p426 = scmp.eq.s32.totalorder %s24, 0
    %p427 = por %p425, %p426
    %p428 = scmp.ne.s32.totalorder %s420, %s422
    %p429 = scmp.eq.s32.totalorder %s29, 2
    %p430 = por %p428, %p429
    %p431 = scmp.ne.s32.totalorder %s422, %s423
    %p432 = scmp.eq.s32.totalorder %s29, 0
    %p433 = por %p431, %p432
    %p434 = scmp.ne.s32.totalorder %s422, %s423
    %p435 = scmp.eq.s32.totalorder %s30, 2
    %p436 = por %p434, %p435
    %p438 = scmp.ne.s32.totalorder %s423, %s437
    %p439 = scmp.eq.s32.totalorder %s30, 0
    %p440 = por %p438, %p439
    %p441 = scmp.le.s32.totalorder 1, %s24
    %p442 = scmp.lt.s32.totalorder %s24, 4
    %p443 = pnand %p441, %p442
    %p444 = pneg %p443
    // Predicated region
    $region9: #{gnn_policy_forward.8} parent=5 // pred_check
      _
    $region10: #{gnn_policy_forward.8} parent=5 // pred_check_branch
      %446 = sbr.rel (%p443) target = $region12
    $region11: #{gnn_policy_forward.8} parent=5 // pred_region
      %s447 = ssub.s32 %s24, 1
      // Predicated region
      $region13: #{gnn_policy_forward.8} parent=11 // pred_check
        %p448 = pneg %p97
      $region14: #{gnn_policy_forward.8} parent=11 // pred_check_branch
        %450 = sbr.rel (%p448) target = $region16
      $region15: #{gnn_policy_forward.8} parent=11 // pred_region
        _
      $region16: #{gnn_policy_forward.8} parent=11 // pred_fallthru
        _
      // Predicated region
      $region17: #{gnn_policy_forward.8} parent=11 // pred_check
        %p451 = pneg %p118
      $region18: #{gnn_policy_forward.8} parent=11 // pred_check_branch
        %453 = sbr.rel (%p451) target = $region20
      $region19: #{gnn_policy_forward.8} parent=11 // pred_region
        _
      $region20: #{gnn_policy_forward.8} parent=11 // pred_fallthru
        _
      // Predicated region
      $region21: #{gnn_policy_forward.8} parent=11 // pred_check
        %p454 = pneg %p139
      $region22: #{gnn_policy_forward.8} parent=11 // pred_check_branch
        %456 = sbr.rel (%p454) target = $region24
      $region23: #{gnn_policy_forward.8} parent=11 // pred_region
        _
      $region24: #{gnn_policy_forward.8} parent=11 // pred_fallthru
        _
      // Predicated region
      $region25: #{gnn_policy_forward.8} parent=11 // pred_check
        %p457 = pneg %p160
      $region26: #{gnn_policy_forward.8} parent=11 // pred_check_branch
        %459 = sbr.rel (%p457) target = $region28
      $region27: #{gnn_policy_forward.8} parent=11 // pred_region
        _
      $region28: #{gnn_policy_forward.8} parent=11 // pred_fallthru
        _
      // Predicated region
      $region29: #{gnn_policy_forward.8} parent=11 // pred_check
        %p460 = pneg %p181
      $region30: #{gnn_policy_forward.8} parent=11 // pred_check_branch
        %462 = sbr.rel (%p460) target = $region32
      $region31: #{gnn_policy_forward.8} parent=11 // pred_region
        _
      $region32: #{gnn_policy_forward.8} parent=11 // pred_fallthru
        _
      // Predicated region
      $region33: #{gnn_policy_forward.8} parent=11 // pred_check
        %p463 = pneg %p202
      $region34: #{gnn_policy_forward.8} parent=11 // pred_check_branch
        %465 = sbr.rel (%p463) target = $region36
      $region35: #{gnn_policy_forward.8} parent=11 // pred_region
        _
      $region36: #{gnn_policy_forward.8} parent=11 // pred_fallthru
        _
      // Predicated region
      $region37: #{gnn_policy_forward.8} parent=11 // pred_check
        %p466 = pneg %p223
      $region38: #{gnn_policy_forward.8} parent=11 // pred_check_branch
        %468 = sbr.rel (%p466) target = $region40
      $region39: #{gnn_policy_forward.8} parent=11 // pred_region
        _
      $region40: #{gnn_policy_forward.8} parent=11 // pred_fallthru
        _
      // Predicated region
      $region41: #{gnn_policy_forward.8} parent=11 // pred_check
        %p469 = pneg %p244
      $region42: #{gnn_policy_forward.8} parent=11 // pred_check_branch
        %471 = sbr.rel (%p469) target = $region44
      $region43: #{gnn_policy_forward.8} parent=11 // pred_region
        _
      $region44: #{gnn_policy_forward.8} parent=11 // pred_fallthru
        _
      // Predicated region
      $region45: #{gnn_policy_forward.8} parent=11 // pred_check
        %p472 = pneg %p265
      $region46: #{gnn_policy_forward.8} parent=11 // pred_check_branch
        %474 = sbr.rel (%p472) target = $region48
      $region47: #{gnn_policy_forward.8} parent=11 // pred_region
        _
      $region48: #{gnn_policy_forward.8} parent=11 // pred_fallthru
        _
      // Predicated region
      $region49: #{gnn_policy_forward.8} parent=11 // pred_check
        %p475 = pneg %p286
      $region50: #{gnn_policy_forward.8} parent=11 // pred_check_branch
        %477 = sbr.rel (%p475) target = $region52
      $region51: #{gnn_policy_forward.8} parent=11 // pred_region
        _
      $region52: #{gnn_policy_forward.8} parent=11 // pred_fallthru
        _
      // Predicated region
      $region53: #{gnn_policy_forward.8} parent=11 // pred_check
        %p478 = pneg %p307
      $region54: #{gnn_policy_forward.8} parent=11 // pred_check_branch
        %480 = sbr.rel (%p478) target = $region56
      $region55: #{gnn_policy_forward.8} parent=11 // pred_region
        _
      $region56: #{gnn_policy_forward.8} parent=11 // pred_fallthru
        _
      // Predicated region
      $region57: #{gnn_policy_forward.8} parent=11 // pred_check
        %p481 = pneg %p328
      $region58: #{gnn_policy_forward.8} parent=11 // pred_check_branch
        %483 = sbr.rel (%p481) target = $region60
      $region59: #{gnn_policy_forward.8} parent=11 // pred_region
        _
      $region60: #{gnn_policy_forward.8} parent=11 // pred_fallthru
        _
      // Predicated region
      $region61: #{gnn_policy_forward.8} parent=11 // pred_check
        %p484 = pneg %p349
      $region62: #{gnn_policy_forward.8} parent=11 // pred_check_branch
        %486 = sbr.rel (%p484) target = $region64
      $region63: #{gnn_policy_forward.8} parent=11 // pred_region
        _
      $region64: #{gnn_policy_forward.8} parent=11 // pred_fallthru
        _
      // Predicated region
      $region65: #{gnn_policy_forward.8} parent=11 // pred_check
        %p487 = pneg %p370
      $region66: #{gnn_policy_forward.8} parent=11 // pred_check_branch
        %489 = sbr.rel (%p487) target = $region68
      $region67: #{gnn_policy_forward.8} parent=11 // pred_region
        _
      $region68: #{gnn_policy_forward.8} parent=11 // pred_fallthru
        _
      // Predicated region
      $region69: #{gnn_policy_forward.8} parent=11 // pred_check
        %p490 = pneg %p391
      $region70: #{gnn_policy_forward.8} parent=11 // pred_check_branch
        %492 = sbr.rel (%p490) target = $region72
      $region71: #{gnn_policy_forward.8} parent=11 // pred_region
        _
      $region72: #{gnn_policy_forward.8} parent=11 // pred_fallthru
        _
      // Predicated region
      $region73: #{gnn_policy_forward.8} parent=11 // pred_check
        %p493 = pneg %p412
      $region74: #{gnn_policy_forward.8} parent=11 // pred_check_branch
        %495 = sbr.rel (%p493) target = $region76
      $region75: #{gnn_policy_forward.8} parent=11 // pred_region
        _
      $region76: #{gnn_policy_forward.8} parent=11 // pred_fallthru
        _
    $region12: #{gnn_policy_forward.8} parent=5 // pred_fallthru
      _
    %p496 = scmp.lt.s32.totalorder %s24, 3
    // Predicated region
    $region77: #{gnn_policy_forward.8} parent=5 // pred_check
      %p497 = pneg %p496
    $region78: #{gnn_policy_forward.8} parent=5 // pred_check_branch
      %499 = sbr.rel (%p497) target = $region80
    $region79: #{gnn_policy_forward.8} parent=5 // pred_region
      // Predicated region
      $region81: #{gnn_policy_forward.8} parent=79 // pred_check
        %p500 = pneg %p44
      $region82: #{gnn_policy_forward.8} parent=79 // pred_check_branch
        %502 = sbr.rel (%p500) target = $region84
      $region83: #{gnn_policy_forward.8} parent=79 // pred_region
        %s503 = smul.u32 2, %s24
        %p504 = scmp.lt.s32.totalorder %s503, 5
        %s505 = scalar_select %p504, %s503, 5
        %s506 = scalar_lea.vmem %s0, %s505
        %s507 = smul.u32 2, %s24
      $region84: #{gnn_policy_forward.8} parent=79 // pred_fallthru
        _
      // Predicated region
      $region85: #{gnn_policy_forward.8} parent=79 // pred_check
        %p508 = pneg %p70
      $region86: #{gnn_policy_forward.8} parent=79 // pred_check_branch
        %510 = sbr.rel (%p508) target = $region88
      $region87: #{gnn_policy_forward.8} parent=79 // pred_region
        %s511 = smul.u32 2, %s24
        %p512 = scmp.lt.s32.totalorder %s511, 5
        %s513 = scalar_select %p512, %s511, 5
        %s514 = scalar_lea.vmem %s1, %s513
        %s515 = smul.u32 2, %s24
      $region88: #{gnn_policy_forward.8} parent=79 // pred_fallthru
        _
    $region80: #{gnn_policy_forward.8} parent=5 // pred_fallthru
      _
    %p516 = scmp.le.s32.totalorder 1, %s24
    %p517 = scmp.lt.s32.totalorder %s24, 4
    %p518 = pnand %p516, %p517
    %p519 = pneg %p518
    // Predicated region
    $region89: #{gnn_policy_forward.8} parent=5 // pred_check
      _
    $region90: #{gnn_policy_forward.8} parent=5 // pred_check_branch
      %521 = sbr.rel (%p518) target = $region92
    $region91: #{gnn_policy_forward.8} parent=5 // pred_region
      %s522 = ssub.s32 %s24, 1
      %s523 = smul.u32 2, %s29
      %p524 = scmp.lt.s32.totalorder %s523, 5
      %s525 = scalar_select %p524, %s523, 5
      %s526 = scalar_lea.vmem %s0, %s525
      %p527 = pneg %p50
      %p528 = pneg %p47
      %s529 = smul.u32 2, %s29
      %p530 = scmp.lt.s32.totalorder %s529, 5
      %s531 = scalar_select %p530, %s529, 5
      %s532 = scalar_lea.vmem %s1, %s531
      %p533 = pneg %p76
      %p534 = pneg %p73
      %p535 = pneg %p97
      %p536 = pneg %p94
      %p537 = pneg %p118
      %p538 = pneg %p115
      %p539 = pneg %p139
      %p540 = pneg %p136
      %p541 = pneg %p160
      %p542 = pneg %p157
      %p543 = pneg %p181
      %p544 = pneg %p178
      %p545 = pneg %p202
      %p546 = pneg %p199
      %p547 = pneg %p223
      %p548 = pneg %p220
      %p549 = pneg %p244
      %p550 = pneg %p241
      %p551 = pneg %p265
      %p552 = pneg %p262
      %p553 = pneg %p286
      %p554 = pneg %p283
      %p555 = pneg %p307
      %p556 = pneg %p304
      %p557 = pneg %p328
      %p558 = pneg %p325
      %p559 = pneg %p349
      %p560 = pneg %p346
      %p561 = pneg %p370
      %p562 = pneg %p367
      %p563 = pneg %p391
      %p564 = pneg %p388
      %p565 = pneg %p412
      %p566 = pneg %p409
      %p567 = pneg %p433
      %p568 = pneg %p430
      %s569 = smul.u32 2, %s29
      %p570 = scmp.lt.s32.totalorder %s569, 5
      %s571 = scalar_select %p570, %s569, 5
      %s572 = scalar_lea.vmem %s0, %s571
      %s573 = smul.u32 2, %s29
      %s574 = smul.u32 2, %s29
      %p575 = scmp.lt.s32.totalorder %s574, 5
      %s576 = scalar_select %p575, %s574, 5
      %s577 = scalar_lea.vmem %s1, %s576
      %s578 = smul.u32 2, %s29
      %p580 = scmp.eq.s32.totalorder %s29, 0
      // Predicated region
      $region93: #{gnn_policy_forward.8} parent=91 // pred_check
        %p581 = pneg %p580
      $region94: #{gnn_policy_forward.8} parent=91 // pred_check_branch
        %583 = sbr.rel (%p581) target = $region96
      $region95: #{gnn_policy_forward.8} parent=91 // pred_region
        %v584 = vld [vmem:[%s3] sm:$0xff]
        %v585 = vld [vmem:[%s3 + $0x8] sm:$0xff]
        %v586 = vld [vmem:[%s3 + $0x10] sm:$0xff]
        %v587 = vld [vmem:[%s3 + $0x18] sm:$0xff]
        %v588 = vld [vmem:[%s3 + $0x20] sm:$0xff]
        %v589 = vld [vmem:[%s3 + $0x28] sm:$0xff]
        %v590 = vld [vmem:[%s3 + $0x30] sm:$0xff]
        %v591 = vld [vmem:[%s3 + $0x38] sm:$0xff]
        %v592 = vld [vmem:[%s3 + $0x40] sm:$0xff]
        %v593 = vld [vmem:[%s3 + $0x48] sm:$0xff]
        %v594 = vld [vmem:[%s3 + $0x50] sm:$0xff]
        %v595 = vld [vmem:[%s3 + $0x58] sm:$0xff]
        %v596 = vld [vmem:[%s3 + $0x60] sm:$0xff]
        %v597 = vld [vmem:[%s3 + $0x68] sm:$0xff]
        %v598 = vld [vmem:[%s3 + $0x70] sm:$0xff]
        %v599 = vld [vmem:[%s3 + $0x78] sm:$0xff]
        %v600 = vld [vmem:[%s4] sm:$0xff]
        %v601 = vld [vmem:[%s4 + $0x8] sm:$0xff]
        %v602 = vld [vmem:[%s4 + $0x10] sm:$0xff]
        %v603 = vld [vmem:[%s4 + $0x18] sm:$0xff]
        %v604 = vld [vmem:[%s4 + $0x20] sm:$0xff]
        %v605 = vld [vmem:[%s4 + $0x28] sm:$0xff]
        %v606 = vld [vmem:[%s4 + $0x30] sm:$0xff]
        %v607 = vld [vmem:[%s4 + $0x38] sm:$0xff]
        %v608 = vld [vmem:[%s5] sm:$0x1]
        %v610 = vlaneseq
        %v611 = vshrl.u32 %v610, 7
        %v612 = vsub.s32 0, %v611
        %v613 = vrot.slane %v608, %v612
        %vm615 = vcmask 523264
        %v617 = vsel %vm615, %v584, 0
        %v620 = vsel %vm615, %v585, 0
        %v623 = vsel %vm615, %v586, 0
        %v626 = vsel %vm615, %v587, 0
        %v629 = vsel %vm615, %v588, 0
        %v632 = vsel %vm615, %v589, 0
        %v635 = vsel %vm615, %v590, 0
        %v638 = vsel %vm615, %v591, 0
        %v641 = vsel %vm615, %v592, 0
        %v644 = vsel %vm615, %v593, 0
        %v647 = vsel %vm615, %v594, 0
        %v650 = vsel %vm615, %v595, 0
        %v653 = vsel %vm615, %v596, 0
        %v656 = vsel %vm615, %v597, 0
        %v659 = vsel %vm615, %v598, 0
        %v662 = vsel %vm615, %v599, 0
        %664 = vmatprep.subr.mxu0 0.0
        %665 = vmatpush1.msra.mxu0 %v600
        %666 = vmatprep.subr.mxu0 0.0
        %667 = vmatpush1.msra.mxu0 %v601
        %668 = vmatprep.subr.mxu0 0.0
        %669 = vmatpush1.msra.mxu0 %v602
        %670 = vmatprep.subr.mxu0 0.0
        %671 = vmatpush1.msra.mxu0 %v603
        %672 = vmatprep.subr.mxu0 0.0
        %673 = vmatpush1.msra.mxu0 %v604
        %674 = vmatprep.subr.mxu0 0.0
        %675 = vmatpush1.msra.mxu0 %v605
        %676 = vmatprep.subr.mxu0 0.0
        %677 = vmatpush1.msra.mxu0 %v606
        %678 = vmatprep.subr.mxu0 0.0
        %679 = vmatpush1.msra.mxu0 %v607
        %680 = vmatprep.subr.mxu0 0.0
        %681 = vmatpush1.msra.mxu0 0.0
        %682 = vmatprep.subr.mxu0 0.0
        %683 = vmatpush1.msra.mxu0 0.0
        %684 = vmatprep.subr.mxu0 0.0
        %685 = vmatpush1.msra.mxu0 0.0
        %686 = vmatprep.subr.mxu0 0.0
        %687 = vmatpush1.msra.mxu0 0.0
        %688 = vmatprep.subr.mxu0 0.0
        %689 = vmatpush1.msra.mxu0 0.0
        %690 = vmatprep.subr.mxu0 0.0
        %691 = vmatpush1.msra.mxu0 0.0
        %692 = vmatprep.subr.mxu0 0.0
        %693 = vmatpush1.msra.mxu0 0.0
        %694 = vmatprep.subr.mxu0 0.0
        %695 = vmatpush1.msra.mxu0 0.0
        %696 = vmatprep.subr.mxu0 0.0
        %697 = vmatpush1.msra.mxu0 0.0
        %698 = vmatprep.subr.mxu0 0.0
        %699 = vmatpush1.msra.mxu0 0.0
        %700 = vmatprep.subr.mxu0 0.0
        %701 = vmatpush1.msra.mxu0 0.0
        %702 = vmatprep.subr.mxu0 0.0
        %703 = vmatpush1.msra.mxu0 0.0
        %704 = vmatprep.subr.mxu0 0.0
        %705 = vmatpush1.msra.mxu0 0.0
        %706 = vmatprep.subr.mxu0 0.0
        %707 = vmatpush1.msra.mxu0 0.0
        %708 = vmatprep.subr.mxu0 0.0
        %709 = vmatpush1.msra.mxu0 0.0
        %710 = vmatprep.subr.mxu0 0.0
        %711 = vmatpush1.msra.mxu0 0.0
        %712 = vmatprep.subr.mxu0 0.0
        %713 = vmatpush1.msra.mxu0 0.0
        %714 = vmatprep.subr.mxu0 0.0
        %715 = vmatpush1.msra.mxu0 0.0
        %716 = vmatprep.subr.mxu0 0.0
        %717 = vmatpush1.msra.mxu0 0.0
        %718 = vmatprep.subr.mxu0 0.0
        %719 = vmatpush1.msra.mxu0 0.0
        %720 = vmatprep.subr.mxu0 0.0
        %721 = vmatpush1.msra.mxu0 0.0
        %722 = vmatprep.subr.mxu0 0.0
        %723 = vmatpush1.msra.mxu0 0.0
        %724 = vmatprep.subr.mxu0 0.0
        %725 = vmatpush1.msra.mxu0 0.0
        %726 = vmatprep.subr.mxu0 0.0
        %727 = vmatpush1.msra.mxu0 0.0
        %728 = vmatprep.mubr.f32.mxu0 0.0
        %729 = vmatmul.mubr.f32.gmra.mrb[0].mxu0 %v617
        %v730 = vpop.f32.mrb[0].mxu0
        %v731 = vadd.f32 %v613, %v730
        %v732 = vpop.f32.mrb[0].mxu0
        %733 = vmatprep.mubr.f32.mxu0 0.0
        %734 = vmatmul.mubr.f32.gmra.mrb[0].mxu0 %v620
        %v735 = vpop.f32.mrb[0].mxu0
        %v736 = vadd.f32 %v613, %v735
        %v737 = vpop.f32.mrb[0].mxu0
        %738 = vmatprep.mubr.f32.mxu0 0.0
        %739 = vmatmul.mubr.f32.gmra.mrb[0].mxu0 %v623
        %v740 = vpop.f32.mrb[0].mxu0
        %v741 = vadd.f32 %v613, %v740
        %v742 = vpop.f32.mrb[0].mxu0
        %743 = vmatprep.mubr.f32.mxu0 0.0
        %744 = vmatmul.mubr.f32.gmra.mrb[0].mxu0 %v626
        %v745 = vpop.f32.mrb[0].mxu0
        %v746 = vadd.f32 %v613, %v745
        %v747 = vpop.f32.mrb[0].mxu0
        %748 = vmatprep.mubr.f32.mxu0 0.0
        %749 = vmatmul.mubr.f32.gmra.mrb[0].mxu0 %v629
        %v750 = vpop.f32.mrb[0].mxu0
        %v751 = vadd.f32 %v613, %v750
        %v752 = vpop.f32.mrb[0].mxu0
        %753 = vmatprep.mubr.f32.mxu0 0.0
        %754 = vmatmul.mubr.f32.gmra.mrb[0].mxu0 %v632
        %v755 = vpop.f32.mrb[0].mxu0
        %v756 = vadd.f32 %v613, %v755
        %v757 = vpop.f32.mrb[0].mxu0
        %758 = vmatprep.mubr.f32.mxu0 0.0
        %759 = vmatmul.mubr.f32.gmra.mrb[0].mxu0 %v635
        %v760 = vpop.f32.mrb[0].mxu0
        %v761 = vadd.f32 %v613, %v760
        %v762 = vpop.f32.mrb[0].mxu0
        %763 = vmatprep.mubr.f32.mxu0 0.0
        %764 = vmatmul.mubr.f32.gmra.mrb[0].mxu0 %v638
        %v765 = vpop.f32.mrb[0].mxu0
        %v766 = vadd.f32 %v613, %v765
        %v767 = vpop.f32.mrb[0].mxu0
        %768 = vmatprep.mubr.f32.mxu0 0.0
        %769 = vmatmul.mubr.f32.gmra.mrb[0].mxu0 %v641
        %v770 = vpop.f32.mrb[0].mxu0
        %v771 = vadd.f32 %v613, %v770
        %v772 = vpop.f32.mrb[0].mxu0
        %773 = vmatprep.mubr.f32.mxu0 0.0
        %774 = vmatmul.mubr.f32.gmra.mrb[0].mxu0 %v644
        %v775 = vpop.f32.mrb[0].mxu0
        %v776 = vadd.f32 %v613, %v775
        %v777 = vpop.f32.mrb[0].mxu0
        %778 = vmatprep.mubr.f32.mxu0 0.0
        %779 = vmatmul.mubr.f32.gmra.mrb[0].mxu0 %v647
        %v780 = vpop.f32.mrb[0].mxu0
        %v781 = vadd.f32 %v613, %v780
        %v782 = vpop.f32.mrb[0].mxu0
        %783 = vmatprep.mubr.f32.mxu0 0.0
        %784 = vmatmul.mubr.f32.gmra.mrb[0].mxu0 %v650
        %v785 = vpop.f32.mrb[0].mxu0
        %v786 = vadd.f32 %v613, %v785
        %v787 = vpop.f32.mrb[0].mxu0
        %788 = vmatprep.mubr.f32.mxu0 0.0
        %789 = vmatmul.mubr.f32.gmra.mrb[0].mxu0 %v653
        %v790 = vpop.f32.mrb[0].mxu0
        %v791 = vadd.f32 %v613, %v790
        %v792 = vpop.f32.mrb[0].mxu0
        %793 = vmatprep.mubr.f32.mxu0 0.0
        %794 = vmatmul.mubr.f32.gmra.mrb[0].mxu0 %v656
        %v795 = vpop.f32.mrb[0].mxu0
        %v796 = vadd.f32 %v613, %v795
        %v797 = vpop.f32.mrb[0].mxu0
        %798 = vmatprep.mubr.f32.mxu0 0.0
        %799 = vmatmul.mubr.f32.gmra.mrb[0].mxu0 %v659
        %v800 = vpop.f32.mrb[0].mxu0
        %v801 = vadd.f32 %v613, %v800
        %v802 = vpop.f32.mrb[0].mxu0
        %803 = vmatprep.mubr.f32.mxu0 0.0
        %804 = vmatmul.mubr.f32.gmra.mrb[0].mxu0 %v662
        %v805 = vpop.f32.mrb[0].mxu0
        %v806 = vadd.f32 %v613, %v805
        %v807 = vpop.f32.mrb[0].mxu0
        %808 = vdwg.mxu0
        %v809 = vpack.c.bf16 %v736, %v731
        %v810 = vpack.c.bf16 %v746, %v741
        %v811 = vpack.c.bf16 %v756, %v751
        %v812 = vpack.c.bf16 %v766, %v761
        %v813 = vpack.c.bf16 %v776, %v771
        %v814 = vpack.c.bf16 %v786, %v781
        %v815 = vpack.c.bf16 %v796, %v791
        %v816 = vpack.c.bf16 %v806, %v801
        %817 = vst.msk [vmem:[#allocation2] sm:$0xff] %vm615, %v809
        %818 = vst.msk [vmem:[#allocation2 + $0x8] sm:$0xff] %vm615, %v810
        %819 = vst.msk [vmem:[#allocation2 + $0x10] sm:$0xff] %vm615, %v811
        %820 = vst.msk [vmem:[#allocation2 + $0x18] sm:$0xff] %vm615, %v812
        %821 = vst.msk [vmem:[#allocation2 + $0x20] sm:$0xff] %vm615, %v813
        %822 = vst.msk [vmem:[#allocation2 + $0x28] sm:$0xff] %vm615, %v814
        %823 = vst.msk [vmem:[#allocation2 + $0x30] sm:$0xff] %vm615, %v815
        %824 = vst.msk [vmem:[#allocation2 + $0x38] sm:$0xff] %vm615, %v816
        %v825 = vld [vmem:[%s2] sm:$0xff]
        %v826 = vld [vmem:[%s2 + $0x8] sm:$0xff]
        %v827 = vld [vmem:[%s2 + $0x10] sm:$0xff]
        %v828 = vld [vmem:[%s2 + $0x18] sm:$0xff]
        %v829 = vld [vmem:[%s2 + $0x20] sm:$0xff]
        %v830 = vld [vmem:[%s2 + $0x28] sm:$0xff]
        %v831 = vld [vmem:[%s2 + $0x30] sm:$0xff]
        %v832 = vld [vmem:[%s2 + $0x38] sm:$0xff]
        %v833 = vld [vmem:[%s2 + $0x40] sm:$0xff]
        %v834 = vld [vmem:[%s2 + $0x48] sm:$0xff]
        %v835 = vld [vmem:[%s2 + $0x50] sm:$0xff]
        %v836 = vld [vmem:[%s2 + $0x58] sm:$0xff]
        %v837 = vld [vmem:[%s2 + $0x60] sm:$0xff]
        %v838 = vld [vmem:[%s2 + $0x68] sm:$0xff]
        %v839 = vld [vmem:[%s2 + $0x70] sm:$0xff]
        %v840 = vld [vmem:[%s2 + $0x78] sm:$0xff]
        %v841 = vld [vmem:[%s6] sm:$0xff]
        %v842 = vld [vmem:[%s6 + $0x8] sm:$0xff]
        %v843 = vld [vmem:[%s6 + $0x10] sm:$0xff]
        %v844 = vld [vmem:[%s6 + $0x18] sm:$0xff]
        %v845 = vld [vmem:[%s6 + $0x20] sm:$0xff]
        %v846 = vld [vmem:[%s6 + $0x28] sm:$0xff]
        %v847 = vld [vmem:[%s6 + $0x30] sm:$0xff]
        %v848 = vld [vmem:[%s6 + $0x38] sm:$0xff]
        %v850 = vsel %vm615, %v825, 0
        %v853 = vsel %vm615, %v826, 0
        %v856 = vsel %vm615, %v827, 0
        %v859 = vsel %vm615, %v828, 0
        %v862 = vsel %vm615, %v829, 0
        %v865 = vsel %vm615, %v830, 0
        %v868 = vsel %vm615, %v831, 0
        %v871 = vsel %vm615, %v832, 0
        %v874 = vsel %vm615, %v833, 0
        %v877 = vsel %vm615, %v834, 0
        %v880 = vsel %vm615, %v835, 0
        %v883 = vsel %vm615, %v836, 0
        %v886 = vsel %vm615, %v837, 0
        %v889 = vsel %vm615, %v838, 0
        %v892 = vsel %vm615, %v839, 0
        %v895 = vsel %vm615, %v840, 0
        %897 = vmatprep.subr.mxu0 0.0
        %898 = vmatpush1.msra.mxu0 %v841
        %899 = vmatprep.subr.mxu0 0.0
        %900 = vmatpush1.msra.mxu0 %v842
        %901 = vmatprep.subr.mxu0 0.0
        %902 = vmatpush1.msra.mxu0 %v843
        %903 = vmatprep.subr.mxu0 0.0
        %904 = vmatpush1.msra.mxu0 %v844
        %905 = vmatprep.subr.mxu0 0.0
        %906 = vmatpush1.msra.mxu0 %v845
        %907 = vmatprep.subr.mxu0 0.0
        %908 = vmatpush1.msra.mxu0 %v846
        %909 = vmatprep.subr.mxu0 0.0
        %910 = vmatpush1.msra.mxu0 %v847
        %911 = vmatprep.subr.mxu0 0.0
        %912 = vmatpush1.msra.mxu0 %v848
        %913 = vmatprep.subr.mxu0 0.0
        %914 = vmatpush1.msra.mxu0 0.0
        %915 = vmatprep.subr.mxu0 0.0
        %916 = vmatpush1.msra.mxu0 0.0
        %917 = vmatprep.subr.mxu0 0.0
        %918 = vmatpush1.msra.mxu0 0.0
        %919 = vmatprep.subr.mxu0 0.0
        %920 = vmatpush1.msra.mxu0 0.0
        %921 = vmatprep.subr.mxu0 0.0
        %922 = vmatpush1.msra.mxu0 0.0
        %923 = vmatprep.subr.mxu0 0.0
        %924 = vmatpush1.msra.mxu0 0.0
        %925 = vmatprep.subr.mxu0 0.0
        %926 = vmatpush1.msra.mxu0 0.0
        %927 = vmatprep.subr.mxu0 0.0
        %928 = vmatpush1.msra.mxu0 0.0
        %929 = vmatprep.subr.mxu0 0.0
        %930 = vmatpush1.msra.mxu0 0.0
        %931 = vmatprep.subr.mxu0 0.0
        %932 = vmatpush1.msra.mxu0 0.0
        %933 = vmatprep.subr.mxu0 0.0
        %934 = vmatpush1.msra.mxu0 0.0
        %935 = vmatprep.subr.mxu0 0.0
        %936 = vmatpush1.msra.mxu0 0.0
        %937 = vmatprep.subr.mxu0 0.0
        %938 = vmatpush1.msra.mxu0 0.0
        %939 = vmatprep.subr.mxu0 0.0
        %940 = vmatpush1.msra.mxu0 0.0
        %941 = vmatprep.subr.mxu0 0.0
        %942 = vmatpush1.msra.mxu0 0.0
        %943 = vmatprep.subr.mxu0 0.0
        %944 = vmatpush1.msra.mxu0 0.0
        %945 = vmatprep.subr.mxu0 0.0
        %946 = vmatpush1.msra.mxu0 0.0
        %947 = vmatprep.subr.mxu0 0.0
        %948 = vmatpush1.msra.mxu0 0.0
        %949 = vmatprep.subr.mxu0 0.0
        %950 = vmatpush1.msra.mxu0 0.0
        %951 = vmatprep.subr.mxu0 0.0
        %952 = vmatpush1.msra.mxu0 0.0
        %953 = vmatprep.subr.mxu0 0.0
        %954 = vmatpush1.msra.mxu0 0.0
        %955 = vmatprep.subr.mxu0 0.0
        %956 = vmatpush1.msra.mxu0 0.0
        %957 = vmatprep.subr.mxu0 0.0
        %958 = vmatpush1.msra.mxu0 0.0
        %959 = vmatprep.subr.mxu0 0.0
        %960 = vmatpush1.msra.mxu0 0.0
        %961 = vmatprep.mubr.f32.mxu0 0.0
        %962 = vmatmul.mubr.f32.gmra.mrb[0].mxu0 %v850
        %v963 = vpop.f32.mrb[0].mxu0
        %v964 = vadd.f32 0.0, %v963
        %v965 = vpop.f32.mrb[0].mxu0
        %966 = vmatprep.mubr.f32.mxu0 0.0
        %967 = vmatmul.mubr.f32.gmra.mrb[0].mxu0 %v853
        %v968 = vpop.f32.mrb[0].mxu0
        %v969 = vadd.f32 0.0, %v968
        %v970 = vpop.f32.mrb[0].mxu0
        %971 = vmatprep.mubr.f32.mxu0 0.0
        %972 = vmatmul.mubr.f32.gmra.mrb[0].mxu0 %v856
        %v973 = vpop.f32.mrb[0].mxu0
        %v974 = vadd.f32 0.0, %v973
        %v975 = vpop.f32.mrb[0].mxu0
        %976 = vmatprep.mubr.f32.mxu0 0.0
        %977 = vmatmul.mubr.f32.gmra.mrb[0].mxu0 %v859
        %v978 = vpop.f32.mrb[0].mxu0
        %v979 = vadd.f32 0.0, %v978
        %v980 = vpop.f32.mrb[0].mxu0
        %981 = vmatprep.mubr.f32.mxu0 0.0
        %982 = vmatmul.mubr.f32.gmra.mrb[0].mxu0 %v862
        %v983 = vpop.f32.mrb[0].mxu0
        %v984 = vadd.f32 0.0, %v983
        %v985 = vpop.f32.mrb[0].mxu0
        %986 = vmatprep.mubr.f32.mxu0 0.0
        %987 = vmatmul.mubr.f32.gmra.mrb[0].mxu0 %v865
        %v988 = vpop.f32.mrb[0].mxu0
        %v989 = vadd.f32 0.0, %v988
        %v990 = vpop.f32.mrb[0].mxu0
        %991 = vmatprep.mubr.f32.mxu0 0.0
        %992 = vmatmul.mubr.f32.gmra.mrb[0].mxu0 %v868
        %v993 = vpop.f32.mrb[0].mxu0
        %v994 = vadd.f32 0.0, %v993
        %v995 = vpop.f32.mrb[0].mxu0
        %996 = vmatprep.mubr.f32.mxu0 0.0
        %997 = vmatmul.mubr.f32.gmra.mrb[0].mxu0 %v871
        %v998 = vpop.f32.mrb[0].mxu0
        %v999 = vadd.f32 0.0, %v998
        %v1000 = vpop.f32.mrb[0].mxu0
        %1001 = vmatprep.mubr.f32.mxu0 0.0
        %1002 = vmatmul.mubr.f32.gmra.mrb[0].mxu0 %v874
        %v1003 = vpop.f32.mrb[0].mxu0
        %v1004 = vadd.f32 0.0, %v1003
        %v1005 = vpop.f32.mrb[0].mxu0
        %1006 = vmatprep.mubr.f32.mxu0 0.0
        %1007 = vmatmul.mubr.f32.gmra.mrb[0].mxu0 %v877
        %v1008 = vpop.f32.mrb[0].mxu0
        %v1009 = vadd.f32 0.0, %v1008
        %v1010 = vpop.f32.mrb[0].mxu0
        %1011 = vmatprep.mubr.f32.mxu0 0.0
        %1012 = vmatmul.mubr.f32.gmra.mrb[0].mxu0 %v880
        %v1013 = vpop.f32.mrb[0].mxu0
        %v1014 = vadd.f32 0.0, %v1013
        %v1015 = vpop.f32.mrb[0].mxu0
        %1016 = vmatprep.mubr.f32.mxu0 0.0
        %1017 = vmatmul.mubr.f32.gmra.mrb[0].mxu0 %v883
        %v1018 = vpop.f32.mrb[0].mxu0
        %v1019 = vadd.f32 0.0, %v1018
        %v1020 = vpop.f32.mrb[0].mxu0
        %1021 = vmatprep.mubr.f32.mxu0 0.0
        %1022 = vmatmul.mubr.f32.gmra.mrb[0].mxu0 %v886
        %v1023 = vpop.f32.mrb[0].mxu0
        %v1024 = vadd.f32 0.0, %v1023
        %v1025 = vpop.f32.mrb[0].mxu0
        %1026 = vmatprep.mubr.f32.mxu0 0.0
        %1027 = vmatmul.mubr.f32.gmra.mrb[0].mxu0 %v889
        %v1028 = vpop.f32.mrb[0].mxu0
        %v1029 = vadd.f32 0.0, %v1028
        %v1030 = vpop.f32.mrb[0].mxu0
        %1031 = vmatprep.mubr.f32.mxu0 0.0
        %1032 = vmatmul.mubr.f32.gmra.mrb[0].mxu0 %v892
        %v1033 = vpop.f32.mrb[0].mxu0
        %v1034 = vadd.f32 0.0, %v1033
        %v1035 = vpop.f32.mrb[0].mxu0
        %1036 = vmatprep.mubr.f32.mxu0 0.0
        %1037 = vmatmul.mubr.f32.gmra.mrb[0].mxu0 %v895
        %v1038 = vpop.f32.mrb[0].mxu0
        %v1039 = vadd.f32 0.0, %v1038
        %v1040 = vpop.f32.mrb[0].mxu0
        %1041 = vdwg.mxu0
        %v1042 = vpack.c.bf16 %v969, %v964
        %v1043 = vpack.c.bf16 %v979, %v974
        %v1044 = vpack.c.bf16 %v989, %v984
        %v1045 = vpack.c.bf16 %v999, %v994
        %v1046 = vpack.c.bf16 %v1009, %v1004
        %v1047 = vpack.c.bf16 %v1019, %v1014
        %v1048 = vpack.c.bf16 %v1029, %v1024
        %v1049 = vpack.c.bf16 %v1039, %v1034
        %1050 = vst.msk [vmem:[#allocation3] sm:$0xff] %vm615, %v1042
        %1051 = vst.msk [vmem:[#allocation3 + $0x8] sm:$0xff] %vm615, %v1043
        %1052 = vst.msk [vmem:[#allocation3 + $0x10] sm:$0xff] %vm615, %v1044
        %1053 = vst.msk [vmem:[#allocation3 + $0x18] sm:$0xff] %vm615, %v1045
        %1054 = vst.msk [vmem:[#allocation3 + $0x20] sm:$0xff] %vm615, %v1046
        %1055 = vst.msk [vmem:[#allocation3 + $0x28] sm:$0xff] %vm615, %v1047
        %1056 = vst.msk [vmem:[#allocation3 + $0x30] sm:$0xff] %vm615, %v1048
        %1057 = vst.msk [vmem:[#allocation3 + $0x38] sm:$0xff] %vm615, %v1049
        %1058 = vst.msk [vmem:[%s18] sm:$0xff] %vm615, 0.0
        %1059 = vst.msk [vmem:[%s18 + $0x8] sm:$0xff] %vm615, 0.0
        %1060 = vst.msk [vmem:[%s18 + $0x10] sm:$0xff] %vm615, 0.0
        %1061 = vst.msk [vmem:[%s18 + $0x18] sm:$0xff] %vm615, 0.0
        %1062 = vst.msk [vmem:[%s18 + $0x20] sm:$0xff] %vm615, 0.0
        %1063 = vst.msk [vmem:[%s18 + $0x28] sm:$0xff] %vm615, 0.0
        %1064 = vst.msk [vmem:[%s18 + $0x30] sm:$0xff] %vm615, 0.0
        %1065 = vst.msk [vmem:[%s18 + $0x38] sm:$0xff] %vm615, 0.0
        %1066 = vst.msk [vmem:[%s18 + $0x40] sm:$0xff] %vm615, 0.0
        %1067 = vst.msk [vmem:[%s18 + $0x48] sm:$0xff] %vm615, 0.0
        %1068 = vst.msk [vmem:[%s18 + $0x50] sm:$0xff] %vm615, 0.0
        %1069 = vst.msk [vmem:[%s18 + $0x58] sm:$0xff] %vm615, 0.0
        %1070 = vst.msk [vmem:[%s18 + $0x60] sm:$0xff] %vm615, 0.0
        %1071 = vst.msk [vmem:[%s18 + $0x68] sm:$0xff] %vm615, 0.0
        %1072 = vst.msk [vmem:[%s18 + $0x70] sm:$0xff] %vm615, 0.0
        %1073 = vst.msk [vmem:[%s18 + $0x78] sm:$0xff] %vm615, 0.0
      $region96: #{gnn_policy_forward.8} parent=91 // pred_fallthru
        _
      %v1074 = vlaneseq
      %v1075 = vshrl.u32 %v1074, 7
      %v1076 = vadd.s32 %v1075, 8
      %v1077 = vadd.s32 %v1075, 16
      %v1078 = vadd.s32 %v1075, 24
      %v1079 = vadd.s32 %v1075, 32
      %v1080 = vadd.s32 %v1075, 40
      %v1081 = vadd.s32 %v1075, 48
      %v1082 = vadd.s32 %v1075, 56
      %v1083 = vadd.s32 %v1075, 64
      %v1084 = vadd.s32 %v1075, 72
      %v1085 = vadd.s32 %v1075, 80
      %v1086 = vadd.s32 %v1075, 88
      %v1087 = vadd.s32 %v1075, 96
      %v1088 = vadd.s32 %v1075, 104
      %v1089 = vadd.s32 %v1075, 112
      %v1090 = vadd.s32 %v1075, 120
      %v1091 = vld [vmem:[%s572] sm:$0x3]
      %v1092 = vlaneseq
      %v1093 = vshrl.u32 %v1092, 7
      %v1094 = vsub.s32 0, %v1093
      %v1095 = vrot.slane %v1091, %v1094
      %v1096 = vlaneseq
      %v1097 = vshrl.u32 %v1096, 7
      %v1098 = vsub.s32 1, %v1097
      %v1099 = vrot.slane %v1091, %v1098
      %vm1100 = vcmp.eq.s32.totalorder %v1075, %v1095
      %vm1101 = vcmp.eq.s32.totalorder %v1075, %v1099
      %vm1102 = vcmp.eq.s32.totalorder %v1076, %v1095
      %vm1103 = vcmp.eq.s32.totalorder %v1076, %v1099
      %vm1104 = vcmp.eq.s32.totalorder %v1077, %v1095
      %vm1105 = vcmp.eq.s32.totalorder %v1077, %v1099
      %vm1106 = vcmp.eq.s32.totalorder %v1078, %v1095
      %vm1107 = vcmp.eq.s32.totalorder %v1078, %v1099
      %vm1108 = vcmp.eq.s32.totalorder %v1079, %v1095
      %vm1109 = vcmp.eq.s32.totalorder %v1079, %v1099
      %vm1110 = vcmp.eq.s32.totalorder %v1080, %v1095
      %vm1111 = vcmp.eq.s32.totalorder %v1080, %v1099
      %vm1112 = vcmp.eq.s32.totalorder %v1081, %v1095
      %vm1113 = vcmp.eq.s32.totalorder %v1081, %v1099
      %vm1114 = vcmp.eq.s32.totalorder %v1082, %v1095
      %vm1115 = vcmp.eq.s32.totalorder %v1082, %v1099
      %vm1116 = vcmp.eq.s32.totalorder %v1083, %v1095
      %vm1117 = vcmp.eq.s32.totalorder %v1083, %v1099
      %vm1118 = vcmp.eq.s32.totalorder %v1084, %v1095
      %vm1119 = vcmp.eq.s32.totalorder %v1084, %v1099
      %vm1120 = vcmp.eq.s32.totalorder %v1085, %v1095
      %vm1121 = vcmp.eq.s32.totalorder %v1085, %v1099
      %vm1122 = vcmp.eq.s32.totalorder %v1086, %v1095
      %vm1123 = vcmp.eq.s32.totalorder %v1086, %v1099
      %vm1124 = vcmp.eq.s32.totalorder %v1087, %v1095
      %vm1125 = vcmp.eq.s32.totalorder %v1087, %v1099
      %vm1126 = vcmp.eq.s32.totalorder %v1088, %v1095
      %vm1127 = vcmp.eq.s32.totalorder %v1088, %v1099
      %vm1128 = vcmp.eq.s32.totalorder %v1089, %v1095
      %vm1129 = vcmp.eq.s32.totalorder %v1089, %v1099
      %vm1130 = vcmp.eq.s32.totalorder %v1090, %v1095
      %vm1131 = vcmp.eq.s32.totalorder %v1090, %v1099
      %v1132 = vsel %vm1100, 1, 0
      %v1133 = vsel %vm1101, 1, 0
      %v1134 = vsel %vm1102, 1, 0
      %v1135 = vsel %vm1103, 1, 0
      %v1136 = vsel %vm1104, 1, 0
      %v1137 = vsel %vm1105, 1, 0
      %v1138 = vsel %vm1106, 1, 0
      %v1139 = vsel %vm1107, 1, 0
      %v1140 = vsel %vm1108, 1, 0
      %v1141 = vsel %vm1109, 1, 0
      %v1142 = vsel %vm1110, 1, 0
      %v1143 = vsel %vm1111, 1, 0
      %v1144 = vsel %vm1112, 1, 0
      %v1145 = vsel %vm1113, 1, 0
      %v1146 = vsel %vm1114, 1, 0
      %v1147 = vsel %vm1115, 1, 0
      %v1148 = vsel %vm1116, 1, 0
      %v1149 = vsel %vm1117, 1, 0
      %v1150 = vsel %vm1118, 1, 0
      %v1151 = vsel %vm1119, 1, 0
      %v1152 = vsel %vm1120, 1, 0
      %v1153 = vsel %vm1121, 1, 0
      %v1154 = vsel %vm1122, 1, 0
      %v1155 = vsel %vm1123, 1, 0
      %v1156 = vsel %vm1124, 1, 0
      %v1157 = vsel %vm1125, 1, 0
      %v1158 = vsel %vm1126, 1, 0
      %v1159 = vsel %vm1127, 1, 0
      %v1160 = vsel %vm1128, 1, 0
      %v1161 = vsel %vm1129, 1, 0
      %v1162 = vsel %vm1130, 1, 0
      %v1163 = vsel %vm1131, 1, 0
      %v1164 = vcvt.s32.f32 %v1132
      %v1165 = vcvt.s32.f32 %v1133
      %v1166 = vcvt.s32.f32 %v1134
      %v1167 = vcvt.s32.f32 %v1135
      %v1168 = vcvt.s32.f32 %v1136
      %v1169 = vcvt.s32.f32 %v1137
      %v1170 = vcvt.s32.f32 %v1138
      %v1171 = vcvt.s32.f32 %v1139
      %v1172 = vcvt.s32.f32 %v1140
      %v1173 = vcvt.s32.f32 %v1141
      %v1174 = vcvt.s32.f32 %v1142
      %v1175 = vcvt.s32.f32 %v1143
      %v1176 = vcvt.s32.f32 %v1144
      %v1177 = vcvt.s32.f32 %v1145
      %v1178 = vcvt.s32.f32 %v1146
      %v1179 = vcvt.s32.f32 %v1147
      %v1180 = vcvt.s32.f32 %v1148
      %v1181 = vcvt.s32.f32 %v1149
      %v1182 = vcvt.s32.f32 %v1150
      %v1183 = vcvt.s32.f32 %v1151
      %v1184 = vcvt.s32.f32 %v1152
      %v1185 = vcvt.s32.f32 %v1153
      %v1186 = vcvt.s32.f32 %v1154
      %v1187 = vcvt.s32.f32 %v1155
      %v1188 = vcvt.s32.f32 %v1156
      %v1189 = vcvt.s32.f32 %v1157
      %v1190 = vcvt.s32.f32 %v1158
      %v1191 = vcvt.s32.f32 %v1159
      %v1192 = vcvt.s32.f32 %v1160
      %v1193 = vcvt.s32.f32 %v1161
      %v1194 = vcvt.s32.f32 %v1162
      %v1195 = vcvt.s32.f32 %v1163
      %v1196 = vpack.c.bf16 %v1166, %v1164
      %v1197 = vpack.c.bf16 %v1167, %v1165
      %v1198 = vpack.c.bf16 %v1170, %v1168
      %v1199 = vpack.c.bf16 %v1171, %v1169
      %v1200 = vpack.c.bf16 %v1174, %v1172
      %v1201 = vpack.c.bf16 %v1175, %v1173
      %v1202 = vpack.c.bf16 %v1178, %v1176
      %v1203 = vpack.c.bf16 %v1179, %v1177
      %v1204 = vpack.c.bf16 %v1182, %v1180
      %v1205 = vpack.c.bf16 %v1183, %v1181
      %v1206 = vpack.c.bf16 %v1186, %v1184
      %v1207 = vpack.c.bf16 %v1187, %v1185
      %v1208 = vpack.c.bf16 %v1190, %v1188
      %v1209 = vpack.c.bf16 %v1191, %v1189
      %v1210 = vpack.c.bf16 %v1194, %v1192
      %v1211 = vpack.c.bf16 %v1195, %v1193
      %v1212 = vld [vmem:[%s577] sm:$0x3]
      %v1213 = vlaneseq
      %v1214 = vshrl.u32 %v1213, 7
      %v1215 = vsub.s32 0, %v1214
      %v1216 = vrot.slane %v1212, %v1215
      %v1217 = vlaneseq
      %v1218 = vshrl.u32 %v1217, 7
      %v1219 = vsub.s32 1, %v1218
      %v1220 = vrot.slane %v1212, %v1219
      %vm1221 = vcmp.eq.s32.totalorder %v1075, %v1216
      %vm1222 = vcmp.eq.s32.totalorder %v1075, %v1220
      %vm1223 = vcmp.eq.s32.totalorder %v1076, %v1216
      %vm1224 = vcmp.eq.s32.totalorder %v1076, %v1220
      %vm1225 = vcmp.eq.s32.totalorder %v1077, %v1216
      %vm1226 = vcmp.eq.s32.totalorder %v1077, %v1220
      %vm1227 = vcmp.eq.s32.totalorder %v1078, %v1216
      %vm1228 = vcmp.eq.s32.totalorder %v1078, %v1220
      %vm1229 = vcmp.eq.s32.totalorder %v1079, %v1216
      %vm1230 = vcmp.eq.s32.totalorder %v1079, %v1220
      %vm1231 = vcmp.eq.s32.totalorder %v1080, %v1216
      %vm1232 = vcmp.eq.s32.totalorder %v1080, %v1220
      %vm1233 = vcmp.eq.s32.totalorder %v1081, %v1216
      %vm1234 = vcmp.eq.s32.totalorder %v1081, %v1220
      %vm1235 = vcmp.eq.s32.totalorder %v1082, %v1216
      %vm1236 = vcmp.eq.s32.totalorder %v1082, %v1220
      %vm1237 = vcmp.eq.s32.totalorder %v1083, %v1216
      %vm1238 = vcmp.eq.s32.totalorder %v1083, %v1220
      %vm1239 = vcmp.eq.s32.totalorder %v1084, %v1216
      %vm1240 = vcmp.eq.s32.totalorder %v1084, %v1220
      %vm1241 = vcmp.eq.s32.totalorder %v1085, %v1216
      %vm1242 = vcmp.eq.s32.totalorder %v1085, %v1220
      %vm1243 = vcmp.eq.s32.totalorder %v1086, %v1216
      %vm1244 = vcmp.eq.s32.totalorder %v1086, %v1220
      %vm1245 = vcmp.eq.s32.totalorder %v1087, %v1216
      %vm1246 = vcmp.eq.s32.totalorder %v1087, %v1220
      %vm1247 = vcmp.eq.s32.totalorder %v1088, %v1216
      %vm1248 = vcmp.eq.s32.totalorder %v1088, %v1220
      %vm1249 = vcmp.eq.s32.totalorder %v1089, %v1216
      %vm1250 = vcmp.eq.s32.totalorder %v1089, %v1220
      %vm1251 = vcmp.eq.s32.totalorder %v1090, %v1216
      %vm1252 = vcmp.eq.s32.totalorder %v1090, %v1220
      %v1253 = vsel %vm1221, 1, 0
      %v1254 = vsel %vm1222, 1, 0
      %v1255 = vsel %vm1223, 1, 0
      %v1256 = vsel %vm1224, 1, 0
      %v1257 = vsel %vm1225, 1, 0
      %v1258 = vsel %vm1226, 1, 0
      %v1259 = vsel %vm1227, 1, 0
      %v1260 = vsel %vm1228, 1, 0
      %v1261 = vsel %vm1229, 1, 0
      %v1262 = vsel %vm1230, 1, 0
      %v1263 = vsel %vm1231, 1, 0
      %v1264 = vsel %vm1232, 1, 0
      %v1265 = vsel %vm1233, 1, 0
      %v1266 = vsel %vm1234, 1, 0
      %v1267 = vsel %vm1235, 1, 0
      %v1268 = vsel %vm1236, 1, 0
      %v1269 = vsel %vm1237, 1, 0
      %v1270 = vsel %vm1238, 1, 0
      %v1271 = vsel %vm1239, 1, 0
      %v1272 = vsel %vm1240, 1, 0
      %v1273 = vsel %vm1241, 1, 0
      %v1274 = vsel %vm1242, 1, 0
      %v1275 = vsel %vm1243, 1, 0
      %v1276 = vsel %vm1244, 1, 0
      %v1277 = vsel %vm1245, 1, 0
      %v1278 = vsel %vm1246, 1, 0
      %v1279 = vsel %vm1247, 1, 0
      %v1280 = vsel %vm1248, 1, 0
      %v1281 = vsel %vm1249, 1, 0
      %v1282 = vsel %vm1250, 1, 0
      %v1283 = vsel %vm1251, 1, 0
      %v1284 = vsel %vm1252, 1, 0
      %v1285 = vcvt.s32.f32 %v1253
      %v1286 = vcvt.s32.f32 %v1254
      %v1287 = vcvt.s32.f32 %v1255
      %v1288 = vcvt.s32.f32 %v1256
      %v1289 = vcvt.s32.f32 %v1257
      %v1290 = vcvt.s32.f32 %v1258
      %v1291 = vcvt.s32.f32 %v1259
      %v1292 = vcvt.s32.f32 %v1260
      %v1293 = vcvt.s32.f32 %v1261
      %v1294 = vcvt.s32.f32 %v1262
      %v1295 = vcvt.s32.f32 %v1263
      %v1296 = vcvt.s32.f32 %v1264
      %v1297 = vcvt.s32.f32 %v1265
      %v1298 = vcvt.s32.f32 %v1266
      %v1299 = vcvt.s32.f32 %v1267
      %v1300 = vcvt.s32.f32 %v1268
      %v1301 = vcvt.s32.f32 %v1269
      %v1302 = vcvt.s32.f32 %v1270
      %v1303 = vcvt.s32.f32 %v1271
      %v1304 = vcvt.s32.f32 %v1272
      %v1305 = vcvt.s32.f32 %v1273
      %v1306 = vcvt.s32.f32 %v1274
      %v1307 = vcvt.s32.f32 %v1275
      %v1308 = vcvt.s32.f32 %v1276
      %v1309 = vcvt.s32.f32 %v1277
      %v1310 = vcvt.s32.f32 %v1278
      %v1311 = vcvt.s32.f32 %v1279
      %v1312 = vcvt.s32.f32 %v1280
      %v1313 = vcvt.s32.f32 %v1281
      %v1314 = vcvt.s32.f32 %v1282
      %v1315 = vcvt.s32.f32 %v1283
      %v1316 = vcvt.s32.f32 %v1284
      %v1317 = vpack.c.bf16 %v1287, %v1285
      %v1318 = vpack.c.bf16 %v1288, %v1286
      %v1319 = vpack.c.bf16 %v1291, %v1289
      %v1320 = vpack.c.bf16 %v1292, %v1290
      %v1321 = vpack.c.bf16 %v1295, %v1293
      %v1322 = vpack.c.bf16 %v1296, %v1294
      %v1323 = vpack.c.bf16 %v1299, %v1297
      %v1324 = vpack.c.bf16 %v1300, %v1298
      %v1325 = vpack.c.bf16 %v1303, %v1301
      %v1326 = vpack.c.bf16 %v1304, %v1302
      %v1327 = vpack.c.bf16 %v1307, %v1305
      %v1328 = vpack.c.bf16 %v1308, %v1306
      %v1329 = vpack.c.bf16 %v1311, %v1309
      %v1330 = vpack.c.bf16 %v1312, %v1310
      %v1331 = vpack.c.bf16 %v1315, %v1313
      %v1332 = vpack.c.bf16 %v1316, %v1314
      %v1333 = vld [vmem:[#allocation2] sm:$0xff]
      %v1334 = vld [vmem:[#allocation2 + $0x8] sm:$0xff]
      %v1335 = vld [vmem:[#allocation2 + $0x10] sm:$0xff]
      %v1336 = vld [vmem:[#allocation2 + $0x18] sm:$0xff]
      %v1337 = vld [vmem:[#allocation2 + $0x20] sm:$0xff]
      %v1338 = vld [vmem:[#allocation2 + $0x28] sm:$0xff]
      %v1339 = vld [vmem:[#allocation2 + $0x30] sm:$0xff]
      %v1340 = vld [vmem:[#allocation2 + $0x38] sm:$0xff]
      %v1341 = vld [vmem:[#allocation3] sm:$0xff]
      %v1342 = vld [vmem:[#allocation3 + $0x8] sm:$0xff]
      %v1343 = vld [vmem:[#allocation3 + $0x10] sm:$0xff]
      %v1344 = vld [vmem:[#allocation3 + $0x18] sm:$0xff]
      %v1345 = vld [vmem:[#allocation3 + $0x20] sm:$0xff]
      %v1346 = vld [vmem:[#allocation3 + $0x28] sm:$0xff]
      %v1347 = vld [vmem:[#allocation3 + $0x30] sm:$0xff]
      %v1348 = vld [vmem:[#allocation3 + $0x38] sm:$0xff]
      %1349 = vxpose.xlu0.c.b16.start [1/8] %v1196, 128
      %1350 = vxpose.xlu0.c.b16.cont [2/8] %v1198, 128
      %1351 = vxpose.xlu0.c.b16.cont [3/8] %v1200, 128
      %1352 = vxpose.xlu0.c.b16.cont [4/8] %v1202, 128
      %1353 = vxpose.xlu0.c.b16.cont [5/8] %v1204, 128
      %1354 = vxpose.xlu0.c.b16.cont [6/8] %v1206, 128
      %1355 = vxpose.xlu0.c.b16.cont [7/8] %v1208, 128
      %1356 = vxpose.xlu0.c.b16.end [8/8] %v1210, 128
      %v1357 = vpop.trf.xlu0
      %v1358 = vpop.trf.xlu0
      %v1359 = vpop.trf.xlu0
      %v1360 = vpop.trf.xlu0
      %v1361 = vpop.trf.xlu0
      %v1362 = vpop.trf.xlu0
      %v1363 = vpop.trf.xlu0
      %v1364 = vpop.trf.xlu0
      %1365 = vxpose.xlu0.c.b16.start [1/8] %v1197, 128
      %1366 = vxpose.xlu0.c.b16.cont [2/8] %v1199, 128
      %1367 = vxpose.xlu0.c.b16.cont [3/8] %v1201, 128
      %1368 = vxpose.xlu0.c.b16.cont [4/8] %v1203, 128
      %1369 = vxpose.xlu0.c.b16.cont [5/8] %v1205, 128
      %1370 = vxpose.xlu0.c.b16.cont [6/8] %v1207, 128
      %1371 = vxpose.xlu0.c.b16.cont [7/8] %v1209, 128
      %1372 = vxpose.xlu0.c.b16.end [8/8] %v1211, 128
      %v1373 = vpop.trf.xlu0
      %v1374 = vpop.trf.xlu0
      %v1375 = vpop.trf.xlu0
      %v1376 = vpop.trf.xlu0
      %v1377 = vpop.trf.xlu0
      %v1378 = vpop.trf.xlu0
      %v1379 = vpop.trf.xlu0
      %v1380 = vpop.trf.xlu0
      %1381 = vmatprep.subr.bf16.mxu0 0
      %1382 = vmatpush1.bf16.msra.mxu0 %v1341
      %1383 = vmatprep.subr.bf16.mxu0 0
      %1384 = vmatpush1.bf16.msra.mxu0 %v1342
      %1385 = vmatprep.subr.bf16.mxu0 0
      %1386 = vmatpush1.bf16.msra.mxu0 %v1343
      %1387 = vmatprep.subr.bf16.mxu0 0
      %1388 = vmatpush1.bf16.msra.mxu0 %v1344
      %1389 = vmatprep.subr.bf16.mxu0 0
      %1390 = vmatpush1.bf16.msra.mxu0 %v1345
      %1391 = vmatprep.subr.bf16.mxu0 0
      %1392 = vmatpush1.bf16.msra.mxu0 %v1346
      %1393 = vmatprep.subr.bf16.mxu0 0
      %1394 = vmatpush1.bf16.msra.mxu0 %v1347
      %1395 = vmatprep.subr.bf16.mxu0 0
      %1396 = vmatpush1.bf16.msra.mxu0 %v1348
      %1397 = vmatprep.subr.bf16.mxu0 0
      %1398 = vmatpush1.bf16.msra.mxu0 0
      %1399 = vmatprep.subr.bf16.mxu0 0
      %1400 = vmatpush1.bf16.msra.mxu0 0
      %1401 = vmatprep.subr.bf16.mxu0 0
      %1402 = vmatpush1.bf16.msra.mxu0 0
      %1403 = vmatprep.subr.bf16.mxu0 0
      %1404 = vmatpush1.bf16.msra.mxu0 0
      %1405 = vmatprep.subr.bf16.mxu0 0
      %1406 = vmatpush1.bf16.msra.mxu0 0
      %1407 = vmatprep.subr.bf16.mxu0 0
      %1408 = vmatpush1.bf16.msra.mxu0 0
      %1409 = vmatprep.subr.bf16.mxu0 0
      %1410 = vmatpush1.bf16.msra.mxu0 0
      %1411 = vmatprep.subr.bf16.mxu0 0
      %1412 = vmatpush1.bf16.msra.mxu0 0
      %1413 = vmatprep.mubr.bf16.mxu0 0
      %1414 = vmatmul.mubr.bf16.gmra.mrb[0].mxu0 %v1357
      %v1415 = vpop.f32.mrb[0].mxu0
      %v1416 = vadd.f32 0.0, %v1415
      %v1417 = vpop.f32.mrb[0].mxu0
      %v1418 = vpop.f32.mrb[0].mxu0
      %v1419 = vadd.f32 0.0, %v1418
      %v1420 = vpop.f32.mrb[0].mxu0
      %1421 = vmatprep.mubr.bf16.mxu0 0
      %1422 = vmatmul.mubr.bf16.gmra.mrb[0].mxu0 %v1358
      %v1423 = vpop.f32.mrb[0].mxu0
      %v1424 = vadd.f32 0.0, %v1423
      %v1425 = vpop.f32.mrb[0].mxu0
      %v1426 = vpop.f32.mrb[0].mxu0
      %v1427 = vadd.f32 0.0, %v1426
      %v1428 = vpop.f32.mrb[0].mxu0
      %1429 = vmatprep.mubr.bf16.mxu0 0
      %1430 = vmatmul.mubr.bf16.gmra.mrb[0].mxu0 %v1359
      %v1431 = vpop.f32.mrb[0].mxu0
      %v1432 = vadd.f32 0.0, %v1431
      %v1433 = vpop.f32.mrb[0].mxu0
      %v1434 = vpop.f32.mrb[0].mxu0
      %v1435 = vadd.f32 0.0, %v1434
      %v1436 = vpop.f32.mrb[0].mxu0
      %1437 = vmatprep.mubr.bf16.mxu0 0
      %1438 = vmatmul.mubr.bf16.gmra.mrb[0].mxu0 %v1360
      %v1439 = vpop.f32.mrb[0].mxu0
      %v1440 = vadd.f32 0.0, %v1439
      %v1441 = vpop.f32.mrb[0].mxu0
      %v1442 = vpop.f32.mrb[0].mxu0
      %v1443 = vadd.f32 0.0, %v1442
      %v1444 = vpop.f32.mrb[0].mxu0
      %1445 = vmatprep.mubr.bf16.mxu0 0
      %1446 = vmatmul.mubr.bf16.gmra.mrb[0].mxu0 %v1361
      %v1447 = vpop.f32.mrb[0].mxu0
      %v1448 = vadd.f32 0.0, %v1447
      %v1449 = vpop.f32.mrb[0].mxu0
      %v1450 = vpop.f32.mrb[0].mxu0
      %v1451 = vadd.f32 0.0, %v1450
      %v1452 = vpop.f32.mrb[0].mxu0
      %1453 = vmatprep.mubr.bf16.mxu0 0
      %1454 = vmatmul.mubr.bf16.gmra.mrb[0].mxu0 %v1362
      %v1455 = vpop.f32.mrb[0].mxu0
      %v1456 = vadd.f32 0.0, %v1455
      %v1457 = vpop.f32.mrb[0].mxu0
      %v1458 = vpop.f32.mrb[0].mxu0
      %v1459 = vadd.f32 0.0, %v1458
      %v1460 = vpop.f32.mrb[0].mxu0
      %1461 = vmatprep.mubr.bf16.mxu0 0
      %1462 = vmatmul.mubr.bf16.gmra.mrb[0].mxu0 %v1363
      %v1463 = vpop.f32.mrb[0].mxu0
      %v1464 = vadd.f32 0.0, %v1463
      %v1465 = vpop.f32.mrb[0].mxu0
      %v1466 = vpop.f32.mrb[0].mxu0
      %v1467 = vadd.f32 0.0, %v1466
      %v1468 = vpop.f32.mrb[0].mxu0
      %1469 = vmatprep.mubr.bf16.mxu0 0
      %1470 = vmatmul.mubr.bf16.gmra.mrb[0].mxu0 %v1364
      %v1471 = vpop.f32.mrb[0].mxu0
      %v1472 = vadd.f32 0.0, %v1471
      %v1473 = vpop.f32.mrb[0].mxu0
      %v1474 = vpop.f32.mrb[0].mxu0
      %v1475 = vadd.f32 0.0, %v1474
      %v1476 = vpop.f32.mrb[0].mxu0
      %1477 = vmatprep.mubr.bf16.mxu0 0
      %1478 = vmatmul.mubr.bf16.gmra.mrb[0].mxu0 %v1373
      %v1479 = vpop.f32.mrb[0].mxu0
      %v1480 = vadd.f32 0.0, %v1479
      %v1481 = vpop.f32.mrb[0].mxu0
      %v1482 = vpop.f32.mrb[0].mxu0
      %v1483 = vadd.f32 0.0, %v1482
      %v1484 = vpop.f32.mrb[0].mxu0
      %1485 = vmatprep.mubr.bf16.mxu0 0
      %1486 = vmatmul.mubr.bf16.gmra.mrb[0].mxu0 %v1374
      %v1487 = vpop.f32.mrb[0].mxu0
      %v1488 = vadd.f32 0.0, %v1487
      %v1489 = vpop.f32.mrb[0].mxu0
      %v1490 = vpop.f32.mrb[0].mxu0
      %v1491 = vadd.f32 0.0, %v1490
      %v1492 = vpop.f32.mrb[0].mxu0
      %1493 = vmatprep.mubr.bf16.mxu0 0
      %1494 = vmatmul.mubr.bf16.gmra.mrb[0].mxu0 %v1375
      %v1495 = vpop.f32.mrb[0].mxu0
      %v1496 = vadd.f32 0.0, %v1495
      %v1497 = vpop.f32.mrb[0].mxu0
      %v1498 = vpop.f32.mrb[0].mxu0
      %v1499 = vadd.f32 0.0, %v1498
      %v1500 = vpop.f32.mrb[0].mxu0
      %1501 = vmatprep.mubr.bf16.mxu0 0
      %1502 = vmatmul.mubr.bf16.gmra.mrb[0].mxu0 %v1376
      %v1503 = vpop.f32.mrb[0].mxu0
      %v1504 = vadd.f32 0.0, %v1503
      %v1505 = vpop.f32.mrb[0].mxu0
      %v1506 = vpop.f32.mrb[0].mxu0
      %v1507 = vadd.f32 0.0, %v1506
      %v1508 = vpop.f32.mrb[0].mxu0
      %1509 = vmatprep.mubr.bf16.mxu0 0
      %1510 = vmatmul.mubr.bf16.gmra.mrb[0].mxu0 %v1377
      %v1511 = vpop.f32.mrb[0].mxu0
      %v1512 = vadd.f32 0.0, %v1511
      %v1513 = vpop.f32.mrb[0].mxu0
      %v1514 = vpop.f32.mrb[0].mxu0
      %v1515 = vadd.f32 0.0, %v1514
      %v1516 = vpop.f32.mrb[0].mxu0
      %1517 = vmatprep.mubr.bf16.mxu0 0
      %1518 = vmatmul.mubr.bf16.gmra.mrb[0].mxu0 %v1378
      %v1519 = vpop.f32.mrb[0].mxu0
      %v1520 = vadd.f32 0.0, %v1519
      %v1521 = vpop.f32.mrb[0].mxu0
      %v1522 = vpop.f32.mrb[0].mxu0
      %v1523 = vadd.f32 0.0, %v1522
      %v1524 = vpop.f32.mrb[0].mxu0
      %1525 = vmatprep.mubr.bf16.mxu0 0
      %1526 = vmatmul.mubr.bf16.gmra.mrb[0].mxu0 %v1379
      %v1527 = vpop.f32.mrb[0].mxu0
      %v1528 = vadd.f32 0.0, %v1527
      %v1529 = vpop.f32.mrb[0].mxu0
      %v1530 = vpop.f32.mrb[0].mxu0
      %v1531 = vadd.f32 0.0, %v1530
      %v1532 = vpop.f32.mrb[0].mxu0
      %1533 = vmatprep.mubr.bf16.mxu0 0
      %1534 = vmatmul.mubr.bf16.gmra.mrb[0].mxu0 %v1380
      %v1535 = vpop.f32.mrb[0].mxu0
      %v1536 = vadd.f32 0.0, %v1535
      %v1537 = vpop.f32.mrb[0].mxu0
      %v1538 = vpop.f32.mrb[0].mxu0
      %v1539 = vadd.f32 0.0, %v1538
      %v1540 = vpop.f32.mrb[0].mxu0
      %1541 = vdwg.mxu0
      %1542 = vxpose.xlu0.c.b16.start [1/8] %v1317, 128
      %1543 = vxpose.xlu0.c.b16.cont [2/8] %v1319, 128
      %1544 = vxpose.xlu0.c.b16.cont [3/8] %v1321, 128
      %1545 = vxpose.xlu0.c.b16.cont [4/8] %v1323, 128
      %1546 = vxpose.xlu0.c.b16.cont [5/8] %v1325, 128
      %1547 = vxpose.xlu0.c.b16.cont [6/8] %v1327, 128
      %1548 = vxpose.xlu0.c.b16.cont [7/8] %v1329, 128
      %1549 = vxpose.xlu0.c.b16.end [8/8] %v1331, 128
      %v1550 = vpop.trf.xlu0
      %v1551 = vpop.trf.xlu0
      %v1552 = vpop.trf.xlu0
      %v1553 = vpop.trf.xlu0
      %v1554 = vpop.trf.xlu0
      %v1555 = vpop.trf.xlu0
      %v1556 = vpop.trf.xlu0
      %v1557 = vpop.trf.xlu0
      %1558 = vxpose.xlu0.c.b16.start [1/8] %v1318, 128
      %1559 = vxpose.xlu0.c.b16.cont [2/8] %v1320, 128
      %1560 = vxpose.xlu0.c.b16.cont [3/8] %v1322, 128
      %1561 = vxpose.xlu0.c.b16.cont [4/8] %v1324, 128
      %1562 = vxpose.xlu0.c.b16.cont [5/8] %v1326, 128
      %1563 = vxpose.xlu0.c.b16.cont [6/8] %v1328, 128
      %1564 = vxpose.xlu0.c.b16.cont [7/8] %v1330, 128
      %1565 = vxpose.xlu0.c.b16.end [8/8] %v1332, 128
      %v1566 = vpop.trf.xlu0
      %v1567 = vpop.trf.xlu0
      %v1568 = vpop.trf.xlu0
      %v1569 = vpop.trf.xlu0
      %v1570 = vpop.trf.xlu0
      %v1571 = vpop.trf.xlu0
      %v1572 = vpop.trf.xlu0
      %v1573 = vpop.trf.xlu0
      %1574 = vmatprep.subr.bf16.mxu0 0
      %1575 = vmatpush1.bf16.msra.mxu0 %v1333
      %1576 = vmatprep.subr.bf16.mxu0 0
      %1577 = vmatpush1.bf16.msra.mxu0 %v1334
      %1578 = vmatprep.subr.bf16.mxu0 0
      %1579 = vmatpush1.bf16.msra.mxu0 %v1335
      %1580 = vmatprep.subr.bf16.mxu0 0
      %1581 = vmatpush1.bf16.msra.mxu0 %v1336
      %1582 = vmatprep.subr.bf16.mxu0 0
      %1583 = vmatpush1.bf16.msra.mxu0 %v1337
      %1584 = vmatprep.subr.bf16.mxu0 0
      %1585 = vmatpush1.bf16.msra.mxu0 %v1338
      %1586 = vmatprep.subr.bf16.mxu0 0
      %1587 = vmatpush1.bf16.msra.mxu0 %v1339
      %1588 = vmatprep.subr.bf16.mxu0 0
      %1589 = vmatpush1.bf16.msra.mxu0 %v1340
      %1590 = vmatprep.subr.bf16.mxu0 0
      %1591 = vmatpush1.bf16.msra.mxu0 0
      %1592 = vmatprep.subr.bf16.mxu0 0
      %1593 = vmatpush1.bf16.msra.mxu0 0
      %1594 = vmatprep.subr.bf16.mxu0 0
      %1595 = vmatpush1.bf16.msra.mxu0 0
      %1596 = vmatprep.subr.bf16.mxu0 0
      %1597 = vmatpush1.bf16.msra.mxu0 0
      %1598 = vmatprep.subr.bf16.mxu0 0
      %1599 = vmatpush1.bf16.msra.mxu0 0
      %1600 = vmatprep.subr.bf16.mxu0 0
      %1601 = vmatpush1.bf16.msra.mxu0 0
      %1602 = vmatprep.subr.bf16.mxu0 0
      %1603 = vmatpush1.bf16.msra.mxu0 0
      %1604 = vmatprep.subr.bf16.mxu0 0
      %1605 = vmatpush1.bf16.msra.mxu0 0
      %1606 = vmatprep.mubr.bf16.mxu0 0
      %1607 = vmatmul.mubr.bf16.gmra.mrb[0].mxu0 %v1550
      %v1608 = vpop.f32.mrb[0].mxu0
      %v1609 = vadd.f32 %v1416, %v1608
      %v1610 = vpop.f32.mrb[0].mxu0
      %v1611 = vpop.f32.mrb[0].mxu0
      %v1612 = vadd.f32 %v1419, %v1611
      %v1613 = vpop.f32.mrb[0].mxu0
      %1614 = vmatprep.mubr.bf16.mxu0 0
      %1615 = vmatmul.mubr.bf16.gmra.mrb[0].mxu0 %v1551
      %v1616 = vpop.f32.mrb[0].mxu0
      %v1617 = vadd.f32 %v1424, %v1616
      %v1618 = vpop.f32.mrb[0].mxu0
      %v1619 = vpop.f32.mrb[0].mxu0
      %v1620 = vadd.f32 %v1427, %v1619
      %v1621 = vpop.f32.mrb[0].mxu0
      %1622 = vmatprep.mubr.bf16.mxu0 0
      %1623 = vmatmul.mubr.bf16.gmra.mrb[0].mxu0 %v1552
      %v1624 = vpop.f32.mrb[0].mxu0
      %v1625 = vadd.f32 %v1432, %v1624
      %v1626 = vpop.f32.mrb[0].mxu0
      %v1627 = vpop.f32.mrb[0].mxu0
      %v1628 = vadd.f32 %v1435, %v1627
      %v1629 = vpop.f32.mrb[0].mxu0
      %1630 = vmatprep.mubr.bf16.mxu0 0
      %1631 = vmatmul.mubr.bf16.gmra.mrb[0].mxu0 %v1553
      %v1632 = vpop.f32.mrb[0].mxu0
      %v1633 = vadd.f32 %v1440, %v1632
      %v1634 = vpop.f32.mrb[0].mxu0
      %v1635 = vpop.f32.mrb[0].mxu0
      %v1636 = vadd.f32 %v1443, %v1635
      %v1637 = vpop.f32.mrb[0].mxu0
      %1638 = vmatprep.mubr.bf16.mxu0 0
      %1639 = vmatmul.mubr.bf16.gmra.mrb[0].mxu0 %v1554
      %v1640 = vpop.f32.mrb[0].mxu0
      %v1641 = vadd.f32 %v1448, %v1640
      %v1642 = vpop.f32.mrb[0].mxu0
      %v1643 = vpop.f32.mrb[0].mxu0
      %v1644 = vadd.f32 %v1451, %v1643
      %v1645 = vpop.f32.mrb[0].mxu0
      %1646 = vmatprep.mubr.bf16.mxu0 0
      %1647 = vmatmul.mubr.bf16.gmra.mrb[0].mxu0 %v1555
      %v1648 = vpop.f32.mrb[0].mxu0
      %v1649 = vadd.f32 %v1456, %v1648
      %v1650 = vpop.f32.mrb[0].mxu0
      %v1651 = vpop.f32.mrb[0].mxu0
      %v1652 = vadd.f32 %v1459, %v1651
      %v1653 = vpop.f32.mrb[0].mxu0
      %1654 = vmatprep.mubr.bf16.mxu0 0
      %1655 = vmatmul.mubr.bf16.gmra.mrb[0].mxu0 %v1556
      %v1656 = vpop.f32.mrb[0].mxu0
      %v1657 = vadd.f32 %v1464, %v1656
      %v1658 = vpop.f32.mrb[0].mxu0
      %v1659 = vpop.f32.mrb[0].mxu0
      %v1660 = vadd.f32 %v1467, %v1659
      %v1661 = vpop.f32.mrb[0].mxu0
      %1662 = vmatprep.mubr.bf16.mxu0 0
      %1663 = vmatmul.mubr.bf16.gmra.mrb[0].mxu0 %v1557
      %v1664 = vpop.f32.mrb[0].mxu0
      %v1665 = vadd.f32 %v1472, %v1664
      %v1666 = vpop.f32.mrb[0].mxu0
      %v1667 = vpop.f32.mrb[0].mxu0
      %v1668 = vadd.f32 %v1475, %v1667
      %v1669 = vpop.f32.mrb[0].mxu0
      %1670 = vmatprep.mubr.bf16.mxu0 0
      %1671 = vmatmul.mubr.bf16.gmra.mrb[0].mxu0 %v1566
      %v1672 = vpop.f32.mrb[0].mxu0
      %v1673 = vadd.f32 %v1480, %v1672
      %v1674 = vpop.f32.mrb[0].mxu0
      %v1675 = vpop.f32.mrb[0].mxu0
      %v1676 = vadd.f32 %v1483, %v1675
      %v1677 = vpop.f32.mrb[0].mxu0
      %1678 = vmatprep.mubr.bf16.mxu0 0
      %1679 = vmatmul.mubr.bf16.gmra.mrb[0].mxu0 %v1567
      %v1680 = vpop.f32.mrb[0].mxu0
      %v1681 = vadd.f32 %v1488, %v1680
      %v1682 = vpop.f32.mrb[0].mxu0
      %v1683 = vpop.f32.mrb[0].mxu0
      %v1684 = vadd.f32 %v1491, %v1683
      %v1685 = vpop.f32.mrb[0].mxu0
      %1686 = vmatprep.mubr.bf16.mxu0 0
      %1687 = vmatmul.mubr.bf16.gmra.mrb[0].mxu0 %v1568
      %v1688 = vpop.f32.mrb[0].mxu0
      %v1689 = vadd.f32 %v1496, %v1688
      %v1690 = vpop.f32.mrb[0].mxu0
      %v1691 = vpop.f32.mrb[0].mxu0
      %v1692 = vadd.f32 %v1499, %v1691
      %v1693 = vpop.f32.mrb[0].mxu0
      %1694 = vmatprep.mubr.bf16.mxu0 0
      %1695 = vmatmul.mubr.bf16.gmra.mrb[0].mxu0 %v1569
      %v1696 = vpop.f32.mrb[0].mxu0
      %v1697 = vadd.f32 %v1504, %v1696
      %v1698 = vpop.f32.mrb[0].mxu0
      %v1699 = vpop.f32.mrb[0].mxu0
      %v1700 = vadd.f32 %v1507, %v1699
      %v1701 = vpop.f32.mrb[0].mxu0
      %1702 = vmatprep.mubr.bf16.mxu0 0
      %1703 = vmatmul.mubr.bf16.gmra.mrb[0].mxu0 %v1570
      %v1704 = vpop.f32.mrb[0].mxu0
      %v1705 = vadd.f32 %v1512, %v1704
      %v1706 = vpop.f32.mrb[0].mxu0
      %v1707 = vpop.f32.mrb[0].mxu0
      %v1708 = vadd.f32 %v1515, %v1707
      %v1709 = vpop.f32.mrb[0].mxu0
      %1710 = vmatprep.mubr.bf16.mxu0 0
      %1711 = vmatmul.mubr.bf16.gmra.mrb[0].mxu0 %v1571
      %v1712 = vpop.f32.mrb[0].mxu0
      %v1713 = vadd.f32 %v1520, %v1712
      %v1714 = vpop.f32.mrb[0].mxu0
      %v1715 = vpop.f32.mrb[0].mxu0
      %v1716 = vadd.f32 %v1523, %v1715
      %v1717 = vpop.f32.mrb[0].mxu0
      %1718 = vmatprep.mubr.bf16.mxu0 0
      %1719 = vmatmul.mubr.bf16.gmra.mrb[0].mxu0 %v1572
      %v1720 = vpop.f32.mrb[0].mxu0
      %v1721 = vadd.f32 %v1528, %v1720
      %v1722 = vpop.f32.mrb[0].mxu0
      %v1723 = vpop.f32.mrb[0].mxu0
      %v1724 = vadd.f32 %v1531, %v1723
      %v1725 = vpop.f32.mrb[0].mxu0
      %1726 = vmatprep.mubr.bf16.mxu0 0
      %1727 = vmatmul.mubr.bf16.gmra.mrb[0].mxu0 %v1573
      %v1728 = vpop.f32.mrb[0].mxu0
      %v1729 = vadd.f32 %v1536, %v1728
      %v1730 = vpop.f32.mrb[0].mxu0
      %v1731 = vpop.f32.mrb[0].mxu0
      %v1732 = vadd.f32 %v1539, %v1731
      %v1733 = vpop.f32.mrb[0].mxu0
      %1734 = vdwg.mxu0
      %v1735 = vld [vmem:[%s7] sm:$0x1]
      %v1736 = vld [vmem:[%s8] sm:$0x1]
      %vm1737 = vcmask 523264
      %v1738 = vsel %vm1737, %v1609, 0.0
      %1739 = vadd.xlane.f32.xlu0 %v1738
      %v1740 = vpop.xlane.xlu0 %1739
      %v1741 = vsel %vm1737, %v1612, 0.0
      %1742 = vadd.xlane.f32.xlu0 %v1741
      %v1743 = vpop.xlane.xlu0 %1742
      %v1744 = vsel %vm1737, %v1617, 0.0
      %1745 = vadd.xlane.f32.xlu0 %v1744
      %v1746 = vpop.xlane.xlu0 %1745
      %v1747 = vsel %vm1737, %v1620, 0.0
      %1748 = vadd.xlane.f32.xlu0 %v1747
      %v1749 = vpop.xlane.xlu0 %1748
      %v1750 = vsel %vm1737, %v1625, 0.0
      %1751 = vadd.xlane.f32.xlu0 %v1750
      %v1752 = vpop.xlane.xlu0 %1751
      %v1753 = vsel %vm1737, %v1628, 0.0
      %1754 = vadd.xlane.f32.xlu0 %v1753
      %v1755 = vpop.xlane.xlu0 %1754
      %v1756 = vsel %vm1737, %v1633, 0.0
      %1757 = vadd.xlane.f32.xlu0 %v1756
      %v1758 = vpop.xlane.xlu0 %1757
      %v1759 = vsel %vm1737, %v1636, 0.0
      %1760 = vadd.xlane.f32.xlu0 %v1759
      %v1761 = vpop.xlane.xlu0 %1760
      %v1762 = vsel %vm1737, %v1641, 0.0
      %1763 = vadd.xlane.f32.xlu0 %v1762
      %v1764 = vpop.xlane.xlu0 %1763
      %v1765 = vsel %vm1737, %v1644, 0.0
      %1766 = vadd.xlane.f32.xlu0 %v1765
      %v1767 = vpop.xlane.xlu0 %1766
      %v1768 = vsel %vm1737, %v1649, 0.0
      %1769 = vadd.xlane.f32.xlu0 %v1768
      %v1770 = vpop.xlane.xlu0 %1769
      %v1771 = vsel %vm1737, %v1652, 0.0
      %1772 = vadd.xlane.f32.xlu0 %v1771
      %v1773 = vpop.xlane.xlu0 %1772
      %v1774 = vsel %vm1737, %v1657, 0.0
      %1775 = vadd.xlane.f32.xlu0 %v1774
      %v1776 = vpop.xlane.xlu0 %1775
      %v1777 = vsel %vm1737, %v1660, 0.0
      %1778 = vadd.xlane.f32.xlu0 %v1777
      %v1779 = vpop.xlane.xlu0 %1778
      %v1780 = vsel %vm1737, %v1665, 0.0
      %1781 = vadd.xlane.f32.xlu0 %v1780
      %v1782 = vpop.xlane.xlu0 %1781
      %v1783 = vsel %vm1737, %v1668, 0.0
      %1784 = vadd.xlane.f32.xlu0 %v1783
      %v1785 = vpop.xlane.xlu0 %1784
      %v1786 = vsel %vm1737, %v1673, 0.0
      %1787 = vadd.xlane.f32.xlu0 %v1786
      %v1788 = vpop.xlane.xlu0 %1787
      %v1789 = vsel %vm1737, %v1676, 0.0
      %1790 = vadd.xlane.f32.xlu0 %v1789
      %v1791 = vpop.xlane.xlu0 %1790
      %v1792 = vsel %vm1737, %v1681, 0.0
      %1793 = vadd.xlane.f32.xlu0 %v1792
      %v1794 = vpop.xlane.xlu0 %1793
      %v1795 = vsel %vm1737, %v1684, 0.0
      %1796 = vadd.xlane.f32.xlu0 %v1795
      %v1797 = vpop.xlane.xlu0 %1796
      %v1798 = vsel %vm1737, %v1689, 0.0
      %1799 = vadd.xlane.f32.xlu0 %v1798
      %v1800 = vpop.xlane.xlu0 %1799
      %v1801 = vsel %vm1737, %v1692, 0.0
      %1802 = vadd.xlane.f32.xlu0 %v1801
      %v1803 = vpop.xlane.xlu0 %1802
      %v1804 = vsel %vm1737, %v1697, 0.0
      %1805 = vadd.xlane.f32.xlu0 %v1804
      %v1806 = vpop.xlane.xlu0 %1805
      %v1807 = vsel %vm1737, %v1700, 0.0
      %1808 = vadd.xlane.f32.xlu0 %v1807
      %v1809 = vpop.xlane.xlu0 %1808
      %v1810 = vsel %vm1737, %v1705, 0.0
      %1811 = vadd.xlane.f32.xlu0 %v1810
      %v1812 = vpop.xlane.xlu0 %1811
      %v1813 = vsel %vm1737, %v1708, 0.0
      %1814 = vadd.xlane.f32.xlu0 %v1813
      %v1815 = vpop.xlane.xlu0 %1814
      %v1816 = vsel %vm1737, %v1713, 0.0
      %1817 = vadd.xlane.f32.xlu0 %v1816
      %v1818 = vpop.xlane.xlu0 %1817
      %v1819 = vsel %vm1737, %v1716, 0.0
      %1820 = vadd.xlane.f32.xlu0 %v1819
      %v1821 = vpop.xlane.xlu0 %1820
      %v1822 = vsel %vm1737, %v1721, 0.0
      %1823 = vadd.xlane.f32.xlu0 %v1822
      %v1824 = vpop.xlane.xlu0 %1823
      %v1825 = vsel %vm1737, %v1724, 0.0
      %1826 = vadd.xlane.f32.xlu0 %v1825
      %v1827 = vpop.xlane.xlu0 %1826
      %v1828 = vsel %vm1737, %v1729, 0.0
      %1829 = vadd.xlane.f32.xlu0 %v1828
      %v1830 = vpop.xlane.xlu0 %1829
      %v1831 = vsel %vm1737, %v1732, 0.0
      %1832 = vadd.xlane.f32.xlu0 %v1831
      %v1833 = vpop.xlane.xlu0 %1832
      %v1834 = vrcp.pop 64.0
      %v1835 = vmul.f32 %v1740, %v1834
      %v1836 = vmul.f32 %v1743, %v1834
      %v1837 = vmul.f32 %v1746, %v1834
      %v1838 = vmul.f32 %v1749, %v1834
      %v1839 = vmul.f32 %v1752, %v1834
      %v1840 = vmul.f32 %v1755, %v1834
      %v1841 = vmul.f32 %v1758, %v1834
      %v1842 = vmul.f32 %v1761, %v1834
      %v1843 = vmul.f32 %v1764, %v1834
      %v1844 = vmul.f32 %v1767, %v1834
      %v1845 = vmul.f32 %v1770, %v1834
      %v1846 = vmul.f32 %v1773, %v1834
      %v1847 = vmul.f32 %v1776, %v1834
      %v1848 = vmul.f32 %v1779, %v1834
      %v1849 = vmul.f32 %v1782, %v1834
      %v1850 = vmul.f32 %v1785, %v1834
      %v1851 = vmul.f32 %v1788, %v1834
      %v1852 = vmul.f32 %v1791, %v1834
      %v1853 = vmul.f32 %v1794, %v1834
      %v1854 = vmul.f32 %v1797, %v1834
      %v1855 = vmul.f32 %v1800, %v1834
      %v1856 = vmul.f32 %v1803, %v1834
      %v1857 = vmul.f32 %v1806, %v1834
      %v1858 = vmul.f32 %v1809, %v1834
      %v1859 = vmul.f32 %v1812, %v1834
      %v1860 = vmul.f32 %v1815, %v1834
      %v1861 = vmul.f32 %v1818, %v1834
      %v1862 = vmul.f32 %v1821, %v1834
      %v1863 = vmul.f32 %v1824, %v1834
      %v1864 = vmul.f32 %v1827, %v1834
      %v1865 = vmul.f32 %v1830, %v1834
      %v1866 = vmul.f32 %v1833, %v1834
      %v1867 = vsub.f32 %v1609, %v1835
      %v1868 = vsub.f32 %v1612, %v1836
      %v1869 = vsub.f32 %v1617, %v1837
      %v1870 = vsub.f32 %v1620, %v1838
      %v1871 = vsub.f32 %v1625, %v1839
      %v1872 = vsub.f32 %v1628, %v1840
      %v1873 = vsub.f32 %v1633, %v1841
      %v1874 = vsub.f32 %v1636, %v1842
      %v1875 = vsub.f32 %v1641, %v1843
      %v1876 = vsub.f32 %v1644, %v1844
      %v1877 = vsub.f32 %v1649, %v1845
      %v1878 = vsub.f32 %v1652, %v1846
      %v1879 = vsub.f32 %v1657, %v1847
      %v1880 = vsub.f32 %v1660, %v1848
      %v1881 = vsub.f32 %v1665, %v1849
      %v1882 = vsub.f32 %v1668, %v1850
      %v1883 = vsub.f32 %v1673, %v1851
      %v1884 = vsub.f32 %v1676, %v1852
      %v1885 = vsub.f32 %v1681, %v1853
      %v1886 = vsub.f32 %v1684, %v1854
      %v1887 = vsub.f32 %v1689, %v1855
      %v1888 = vsub.f32 %v1692, %v1856
      %v1889 = vsub.f32 %v1697, %v1857
      %v1890 = vsub.f32 %v1700, %v1858
      %v1891 = vsub.f32 %v1705, %v1859
      %v1892 = vsub.f32 %v1708, %v1860
      %v1893 = vsub.f32 %v1713, %v1861
      %v1894 = vsub.f32 %v1716, %v1862
      %v1895 = vsub.f32 %v1721, %v1863
      %v1896 = vsub.f32 %v1724, %v1864
      %v1897 = vsub.f32 %v1729, %v1865
      %v1898 = vsub.f32 %v1732, %v1866
      %v1899 = vmul.f32 %v1867, %v1867
      %v1900 = vmul.f32 %v1868, %v1868
      %v1901 = vmul.f32 %v1869, %v1869
      %v1902 = vmul.f32 %v1870, %v1870
      %v1903 = vmul.f32 %v1871, %v1871
      %v1904 = vmul.f32 %v1872, %v1872
      %v1905 = vmul.f32 %v1873, %v1873
      %v1906 = vmul.f32 %v1874, %v1874
      %v1907 = vmul.f32 %v1875, %v1875
      %v1908 = vmul.f32 %v1876, %v1876
      %v1909 = vmul.f32 %v1877, %v1877
      %v1910 = vmul.f32 %v1878, %v1878
      %v1911 = vmul.f32 %v1879, %v1879
      %v1912 = vmul.f32 %v1880, %v1880
      %v1913 = vmul.f32 %v1881, %v1881
      %v1914 = vmul.f32 %v1882, %v1882
      %v1915 = vmul.f32 %v1883, %v1883
      %v1916 = vmul.f32 %v1884, %v1884
      %v1917 = vmul.f32 %v1885, %v1885
      %v1918 = vmul.f32 %v1886, %v1886
      %v1919 = vmul.f32 %v1887, %v1887
      %v1920 = vmul.f32 %v1888, %v1888
      %v1921 = vmul.f32 %v1889, %v1889
      %v1922 = vmul.f32 %v1890, %v1890
      %v1923 = vmul.f32 %v1891, %v1891
      %v1924 = vmul.f32 %v1892, %v1892
      %v1925 = vmul.f32 %v1893, %v1893
      %v1926 = vmul.f32 %v1894, %v1894
      %v1927 = vmul.f32 %v1895, %v1895
      %v1928 = vmul.f32 %v1896, %v1896
      %v1929 = vmul.f32 %v1897, %v1897
      %v1930 = vmul.f32 %v1898, %v1898
      %v1931 = vsel %vm1737, %v1899, 0.0
      %1932 = vadd.xlane.f32.xlu0 %v1931
      %v1933 = vpop.xlane.xlu0 %1932
      %v1934 = vsel %vm1737, %v1900, 0.0
      %1935 = vadd.xlane.f32.xlu0 %v1934
      %v1936 = vpop.xlane.xlu0 %1935
      %v1937 = vsel %vm1737, %v1901, 0.0
      %1938 = vadd.xlane.f32.xlu0 %v1937
      %v1939 = vpop.xlane.xlu0 %1938
      %v1940 = vsel %vm1737, %v1902, 0.0
      %1941 = vadd.xlane.f32.xlu0 %v1940
      %v1942 = vpop.xlane.xlu0 %1941
      %v1943 = vsel %vm1737, %v1903, 0.0
      %1944 = vadd.xlane.f32.xlu0 %v1943
      %v1945 = vpop.xlane.xlu0 %1944
      %v1946 = vsel %vm1737, %v1904, 0.0
      %1947 = vadd.xlane.f32.xlu0 %v1946
      %v1948 = vpop.xlane.xlu0 %1947
      %v1949 = vsel %vm1737, %v1905, 0.0
      %1950 = vadd.xlane.f32.xlu0 %v1949
      %v1951 = vpop.xlane.xlu0 %1950
      %v1952 = vsel %vm1737, %v1906, 0.0
      %1953 = vadd.xlane.f32.xlu0 %v1952
      %v1954 = vpop.xlane.xlu0 %1953
      %v1955 = vsel %vm1737, %v1907, 0.0
      %1956 = vadd.xlane.f32.xlu0 %v1955
      %v1957 = vpop.xlane.xlu0 %1956
      %v1958 = vsel %vm1737, %v1908, 0.0
      %1959 = vadd.xlane.f32.xlu0 %v1958
      %v1960 = vpop.xlane.xlu0 %1959
      %v1961 = vsel %vm1737, %v1909, 0.0
      %1962 = vadd.xlane.f32.xlu0 %v1961
      %v1963 = vpop.xlane.xlu0 %1962
      %v1964 = vsel %vm1737, %v1910, 0.0
      %1965 = vadd.xlane.f32.xlu0 %v1964
      %v1966 = vpop.xlane.xlu0 %1965
      %v1967 = vsel %vm1737, %v1911, 0.0
      %1968 = vadd.xlane.f32.xlu0 %v1967
      %v1969 = vpop.xlane.xlu0 %1968
      %v1970 = vsel %vm1737, %v1912, 0.0
      %1971 = vadd.xlane.f32.xlu0 %v1970
      %v1972 = vpop.xlane.xlu0 %1971
      %v1973 = vsel %vm1737, %v1913, 0.0
      %1974 = vadd.xlane.f32.xlu0 %v1973
      %v1975 = vpop.xlane.xlu0 %1974
      %v1976 = vsel %vm1737, %v1914, 0.0
      %1977 = vadd.xlane.f32.xlu0 %v1976
      %v1978 = vpop.xlane.xlu0 %1977
      %v1979 = vsel %vm1737, %v1915, 0.0
      %1980 = vadd.xlane.f32.xlu0 %v1979
      %v1981 = vpop.xlane.xlu0 %1980
      %v1982 = vsel %vm1737, %v1916, 0.0
      %1983 = vadd.xlane.f32.xlu0 %v1982
      %v1984 = vpop.xlane.xlu0 %1983
      %v1985 = vsel %vm1737, %v1917, 0.0
      %1986 = vadd.xlane.f32.xlu0 %v1985
      %v1987 = vpop.xlane.xlu0 %1986
      %v1988 = vsel %vm1737, %v1918, 0.0
      %1989 = vadd.xlane.f32.xlu0 %v1988
      %v1990 = vpop.xlane.xlu0 %1989
      %v1991 = vsel %vm1737, %v1919, 0.0
      %1992 = vadd.xlane.f32.xlu0 %v1991
      %v1993 = vpop.xlane.xlu0 %1992
      %v1994 = vsel %vm1737, %v1920, 0.0
      %1995 = vadd.xlane.f32.xlu0 %v1994
      %v1996 = vpop.xlane.xlu0 %1995
      %v1997 = vsel %vm1737, %v1921, 0.0
      %1998 = vadd.xlane.f32.xlu0 %v1997
      %v1999 = vpop.xlane.xlu0 %1998
      %v2000 = vsel %vm1737, %v1922, 0.0
      %2001 = vadd.xlane.f32.xlu0 %v2000
      %v2002 = vpop.xlane.xlu0 %2001
      %v2003 = vsel %vm1737, %v1923, 0.0
      %2004 = vadd.xlane.f32.xlu0 %v2003
      %v2005 = vpop.xlane.xlu0 %2004
      %v2006 = vsel %vm1737, %v1924, 0.0
      %2007 = vadd.xlane.f32.xlu0 %v2006
      %v2008 = vpop.xlane.xlu0 %2007
      %v2009 = vsel %vm1737, %v1925, 0.0
      %2010 = vadd.xlane.f32.xlu0 %v2009
      %v2011 = vpop.xlane.xlu0 %2010
      %v2012 = vsel %vm1737, %v1926, 0.0
      %2013 = vadd.xlane.f32.xlu0 %v2012
      %v2014 = vpop.xlane.xlu0 %2013
      %v2015 = vsel %vm1737, %v1927, 0.0
      %2016 = vadd.xlane.f32.xlu0 %v2015
      %v2017 = vpop.xlane.xlu0 %2016
      %v2018 = vsel %vm1737, %v1928, 0.0
      %2019 = vadd.xlane.f32.xlu0 %v2018
      %v2020 = vpop.xlane.xlu0 %2019
      %v2021 = vsel %vm1737, %v1929, 0.0
      %2022 = vadd.xlane.f32.xlu0 %v2021
      %v2023 = vpop.xlane.xlu0 %2022
      %v2024 = vsel %vm1737, %v1930, 0.0
      %2025 = vadd.xlane.f32.xlu0 %v2024
      %v2026 = vpop.xlane.xlu0 %2025
      %v2027 = vmul.f32 %v1933, %v1834
      %v2028 = vmul.f32 %v1936, %v1834
      %v2029 = vmul.f32 %v1939, %v1834
      %v2030 = vmul.f32 %v1942, %v1834
      %v2031 = vmul.f32 %v1945, %v1834
      %v2032 = vmul.f32 %v1948, %v1834
      %v2033 = vmul.f32 %v1951, %v1834
      %v2034 = vmul.f32 %v1954, %v1834
      %v2035 = vmul.f32 %v1957, %v1834
      %v2036 = vmul.f32 %v1960, %v1834
      %v2037 = vmul.f32 %v1963, %v1834
      %v2038 = vmul.f32 %v1966, %v1834
      %v2039 = vmul.f32 %v1969, %v1834
      %v2040 = vmul.f32 %v1972, %v1834
      %v2041 = vmul.f32 %v1975, %v1834
      %v2042 = vmul.f32 %v1978, %v1834
      %v2043 = vmul.f32 %v1981, %v1834
      %v2044 = vmul.f32 %v1984, %v1834
      %v2045 = vmul.f32 %v1987, %v1834
      %v2046 = vmul.f32 %v1990, %v1834
      %v2047 = vmul.f32 %v1993, %v1834
      %v2048 = vmul.f32 %v1996, %v1834
      %v2049 = vmul.f32 %v1999, %v1834
      %v2050 = vmul.f32 %v2002, %v1834
      %v2051 = vmul.f32 %v2005, %v1834
      %v2052 = vmul.f32 %v2008, %v1834
      %v2053 = vmul.f32 %v2011, %v1834
      %v2054 = vmul.f32 %v2014, %v1834
      %v2055 = vmul.f32 %v2017, %v1834
      %v2056 = vmul.f32 %v2020, %v1834
      %v2057 = vmul.f32 %v2023, %v1834
      %v2058 = vmul.f32 %v2026, %v1834
      %v2059 = vadd.f32 %v2027, 1e-05
      %v2060 = vadd.f32 %v2028, 1e-05
      %v2061 = vadd.f32 %v2029, 1e-05
      %v2062 = vadd.f32 %v2030, 1e-05
      %v2063 = vadd.f32 %v2031, 1e-05
      %v2064 = vadd.f32 %v2032, 1e-05
      %v2065 = vadd.f32 %v2033, 1e-05
      %v2066 = vadd.f32 %v2034, 1e-05
      %v2067 = vadd.f32 %v2035, 1e-05
      %v2068 = vadd.f32 %v2036, 1e-05
      %v2069 = vadd.f32 %v2037, 1e-05
      %v2070 = vadd.f32 %v2038, 1e-05
      %v2071 = vadd.f32 %v2039, 1e-05
      %v2072 = vadd.f32 %v2040, 1e-05
      %v2073 = vadd.f32 %v2041, 1e-05
      %v2074 = vadd.f32 %v2042, 1e-05
      %v2075 = vadd.f32 %v2043, 1e-05
      %v2076 = vadd.f32 %v2044, 1e-05
      %v2077 = vadd.f32 %v2045, 1e-05
      %v2078 = vadd.f32 %v2046, 1e-05
      %v2079 = vadd.f32 %v2047, 1e-05
      %v2080 = vadd.f32 %v2048, 1e-05
      %v2081 = vadd.f32 %v2049, 1e-05
      %v2082 = vadd.f32 %v2050, 1e-05
      %v2083 = vadd.f32 %v2051, 1e-05
      %v2084 = vadd.f32 %v2052, 1e-05
      %v2085 = vadd.f32 %v2053, 1e-05
      %v2086 = vadd.f32 %v2054, 1e-05
      %v2087 = vadd.f32 %v2055, 1e-05
      %v2088 = vadd.f32 %v2056, 1e-05
      %v2089 = vadd.f32 %v2057, 1e-05
      %v2090 = vadd.f32 %v2058, 1e-05
      %v2091 = vrsqrt.pop %v2059
      %v2092 = vrsqrt.pop %v2060
      %v2093 = vrsqrt.pop %v2061
      %v2094 = vrsqrt.pop %v2062
      %v2095 = vrsqrt.pop %v2063
      %v2096 = vrsqrt.pop %v2064
      %v2097 = vrsqrt.pop %v2065
      %v2098 = vrsqrt.pop %v2066
      %v2099 = vrsqrt.pop %v2067
      %v2100 = vrsqrt.pop %v2068
      %v2101 = vrsqrt.pop %v2069
      %v2102 = vrsqrt.pop %v2070
      %v2103 = vrsqrt.pop %v2071
      %v2104 = vrsqrt.pop %v2072
      %v2105 = vrsqrt.pop %v2073
      %v2106 = vrsqrt.pop %v2074
      %v2107 = vrsqrt.pop %v2075
      %v2108 = vrsqrt.pop %v2076
      %v2109 = vrsqrt.pop %v2077
      %v2110 = vrsqrt.pop %v2078
      %v2111 = vrsqrt.pop %v2079
      %v2112 = vrsqrt.pop %v2080
      %v2113 = vrsqrt.pop %v2081
      %v2114 = vrsqrt.pop %v2082
      %v2115 = vrsqrt.pop %v2083
      %v2116 = vrsqrt.pop %v2084
      %v2117 = vrsqrt.pop %v2085
      %v2118 = vrsqrt.pop %v2086
      %v2119 = vrsqrt.pop %v2087
      %v2120 = vrsqrt.pop %v2088
      %v2121 = vrsqrt.pop %v2089
      %v2122 = vrsqrt.pop %v2090
      %v2123 = vmul.f32 %v1867, %v2091
      %v2124 = vmul.f32 %v1868, %v2092
      %v2125 = vmul.f32 %v1869, %v2093
      %v2126 = vmul.f32 %v1870, %v2094
      %v2127 = vmul.f32 %v1871, %v2095
      %v2128 = vmul.f32 %v1872, %v2096
      %v2129 = vmul.f32 %v1873, %v2097
      %v2130 = vmul.f32 %v1874, %v2098
      %v2131 = vmul.f32 %v1875, %v2099
      %v2132 = vmul.f32 %v1876, %v2100
      %v2133 = vmul.f32 %v1877, %v2101
      %v2134 = vmul.f32 %v1878, %v2102
      %v2135 = vmul.f32 %v1879, %v2103
      %v2136 = vmul.f32 %v1880, %v2104
      %v2137 = vmul.f32 %v1881, %v2105
      %v2138 = vmul.f32 %v1882, %v2106
      %v2139 = vmul.f32 %v1883, %v2107
      %v2140 = vmul.f32 %v1884, %v2108
      %v2141 = vmul.f32 %v1885, %v2109
      %v2142 = vmul.f32 %v1886, %v2110
      %v2143 = vmul.f32 %v1887, %v2111
      %v2144 = vmul.f32 %v1888, %v2112
      %v2145 = vmul.f32 %v1889, %v2113
      %v2146 = vmul.f32 %v1890, %v2114
      %v2147 = vmul.f32 %v1891, %v2115
      %v2148 = vmul.f32 %v1892, %v2116
      %v2149 = vmul.f32 %v1893, %v2117
      %v2150 = vmul.f32 %v1894, %v2118
      %v2151 = vmul.f32 %v1895, %v2119
      %v2152 = vmul.f32 %v1896, %v2120
      %v2153 = vmul.f32 %v1897, %v2121
      %v2154 = vmul.f32 %v1898, %v2122
      %v2156 = vlaneseq
      %v2157 = vshrl.u32 %v2156, 7
      %v2158 = vsub.s32 0, %v2157
      %v2159 = vrot.slane %v1735, %v2158
      %v2161 = vmul.f32 %v2123, %v2159
      %v2162 = vmul.f32 %v2124, %v2159
      %v2163 = vmul.f32 %v2125, %v2159
      %v2164 = vmul.f32 %v2126, %v2159
      %v2165 = vmul.f32 %v2127, %v2159
      %v2166 = vmul.f32 %v2128, %v2159
      %v2167 = vmul.f32 %v2129, %v2159
      %v2168 = vmul.f32 %v2130, %v2159
      %v2169 = vmul.f32 %v2131, %v2159
      %v2170 = vmul.f32 %v2132, %v2159
      %v2171 = vmul.f32 %v2133, %v2159
      %v2172 = vmul.f32 %v2134, %v2159
      %v2173 = vmul.f32 %v2135, %v2159
      %v2174 = vmul.f32 %v2136, %v2159
      %v2175 = vmul.f32 %v2137, %v2159
      %v2176 = vmul.f32 %v2138, %v2159
      %v2177 = vmul.f32 %v2139, %v2159
      %v2178 = vmul.f32 %v2140, %v2159
      %v2179 = vmul.f32 %v2141, %v2159
      %v2180 = vmul.f32 %v2142, %v2159
      %v2181 = vmul.f32 %v2143, %v2159
      %v2182 = vmul.f32 %v2144, %v2159
      %v2183 = vmul.f32 %v2145, %v2159
      %v2184 = vmul.f32 %v2146, %v2159
      %v2185 = vmul.f32 %v2147, %v2159
      %v2186 = vmul.f32 %v2148, %v2159
      %v2187 = vmul.f32 %v2149, %v2159
      %v2188 = vmul.f32 %v2150, %v2159
      %v2189 = vmul.f32 %v2151, %v2159
      %v2190 = vmul.f32 %v2152, %v2159
      %v2191 = vmul.f32 %v2153, %v2159
      %v2192 = vmul.f32 %v2154, %v2159
      %v2194 = vlaneseq
      %v2195 = vshrl.u32 %v2194, 7
      %v2196 = vsub.s32 0, %v2195
      %v2197 = vrot.slane %v1736, %v2196
      %v2199 = vadd.f32 %v2161, %v2197
      %v2200 = vadd.f32 %v2162, %v2197
      %v2201 = vadd.f32 %v2163, %v2197
      %v2202 = vadd.f32 %v2164, %v2197
      %v2203 = vadd.f32 %v2165, %v2197
      %v2204 = vadd.f32 %v2166, %v2197
      %v2205 = vadd.f32 %v2167, %v2197
      %v2206 = vadd.f32 %v2168, %v2197
      %v2207 = vadd.f32 %v2169, %v2197
      %v2208 = vadd.f32 %v2170, %v2197
      %v2209 = vadd.f32 %v2171, %v2197
      %v2210 = vadd.f32 %v2172, %v2197
      %v2211 = vadd.f32 %v2173, %v2197
      %v2212 = vadd.f32 %v2174, %v2197
      %v2213 = vadd.f32 %v2175, %v2197
      %v2214 = vadd.f32 %v2176, %v2197
      %v2215 = vadd.f32 %v2177, %v2197
      %v2216 = vadd.f32 %v2178, %v2197
      %v2217 = vadd.f32 %v2179, %v2197
      %v2218 = vadd.f32 %v2180, %v2197
      %v2219 = vadd.f32 %v2181, %v2197
      %v2220 = vadd.f32 %v2182, %v2197
      %v2221 = vadd.f32 %v2183, %v2197
      %v2222 = vadd.f32 %v2184, %v2197
      %v2223 = vadd.f32 %v2185, %v2197
      %v2224 = vadd.f32 %v2186, %v2197
      %v2225 = vadd.f32 %v2187, %v2197
      %v2226 = vadd.f32 %v2188, %v2197
      %v2227 = vadd.f32 %v2189, %v2197
      %v2228 = vadd.f32 %v2190, %v2197
      %v2229 = vadd.f32 %v2191, %v2197
      %v2230 = vadd.f32 %v2192, %v2197
      %v2231 = vmax.f32 %v2199, 0.0
      %v2232 = vmax.f32 %v2200, 0.0
      %v2233 = vmax.f32 %v2201, 0.0
      %v2234 = vmax.f32 %v2202, 0.0
      %v2235 = vmax.f32 %v2203, 0.0
      %v2236 = vmax.f32 %v2204, 0.0
      %v2237 = vmax.f32 %v2205, 0.0
      %v2238 = vmax.f32 %v2206, 0.0
      %v2239 = vmax.f32 %v2207, 0.0
      %v2240 = vmax.f32 %v2208, 0.0
      %v2241 = vmax.f32 %v2209, 0.0
      %v2242 = vmax.f32 %v2210, 0.0
      %v2243 = vmax.f32 %v2211, 0.0
      %v2244 = vmax.f32 %v2212, 0.0
      %v2245 = vmax.f32 %v2213, 0.0
      %v2246 = vmax.f32 %v2214, 0.0
      %v2247 = vmax.f32 %v2215, 0.0
      %v2248 = vmax.f32 %v2216, 0.0
      %v2249 = vmax.f32 %v2217, 0.0
      %v2250 = vmax.f32 %v2218, 0.0
      %v2251 = vmax.f32 %v2219, 0.0
      %v2252 = vmax.f32 %v2220, 0.0
      %v2253 = vmax.f32 %v2221, 0.0
      %v2254 = vmax.f32 %v2222, 0.0
      %v2255 = vmax.f32 %v2223, 0.0
      %v2256 = vmax.f32 %v2224, 0.0
      %v2257 = vmax.f32 %v2225, 0.0
      %v2258 = vmax.f32 %v2226, 0.0
      %v2259 = vmax.f32 %v2227, 0.0
      %v2260 = vmax.f32 %v2228, 0.0
      %v2261 = vmax.f32 %v2229, 0.0
      %v2262 = vmax.f32 %v2230, 0.0
      %v2263 = vld [vmem:[%s9] sm:$0xff]
      %v2264 = vld [vmem:[%s9 + $0x8] sm:$0xff]
      %v2265 = vld [vmem:[%s9 + $0x10] sm:$0xff]
      %v2266 = vld [vmem:[%s9 + $0x18] sm:$0xff]
      %v2267 = vld [vmem:[%s9 + $0x20] sm:$0xff]
      %v2268 = vld [vmem:[%s9 + $0x28] sm:$0xff]
      %v2269 = vld [vmem:[%s9 + $0x30] sm:$0xff]
      %v2270 = vld [vmem:[%s9 + $0x38] sm:$0xff]
      %v2271 = vld [vmem:[%s10] sm:$0x1]
      %v2273 = vlaneseq
      %v2274 = vshrl.u32 %v2273, 7
      %v2275 = vsub.s32 0, %v2274
      %v2276 = vrot.slane %v2271, %v2275
      %v2279 = vsel %vm1737, %v2231, 0
      %v2282 = vsel %vm1737, %v2232, 0
      %v2285 = vsel %vm1737, %v2233, 0
      %v2288 = vsel %vm1737, %v2234, 0
      %v2291 = vsel %vm1737, %v2235, 0
      %v2294 = vsel %vm1737, %v2236, 0
      %v2297 = vsel %vm1737, %v2237, 0
      %v2300 = vsel %vm1737, %v2238, 0
      %v2303 = vsel %vm1737, %v2239, 0
      %v2306 = vsel %vm1737, %v2240, 0
      %v2309 = vsel %vm1737, %v2241, 0
      %v2312 = vsel %vm1737, %v2242, 0
      %v2315 = vsel %vm1737, %v2243, 0
      %v2318 = vsel %vm1737, %v2244, 0
      %v2321 = vsel %vm1737, %v2245, 0
      %v2324 = vsel %vm1737, %v2246, 0
      %v2327 = vsel %vm1737, %v2247, 0
      %v2330 = vsel %vm1737, %v2248, 0
      %v2333 = vsel %vm1737, %v2249, 0
      %v2336 = vsel %vm1737, %v2250, 0
      %v2339 = vsel %vm1737, %v2251, 0
      %v2342 = vsel %vm1737, %v2252, 0
      %v2345 = vsel %vm1737, %v2253, 0
      %v2348 = vsel %vm1737, %v2254, 0
      %v2351 = vsel %vm1737, %v2255, 0
      %v2354 = vsel %vm1737, %v2256, 0
      %v2357 = vsel %vm1737, %v2257, 0
      %v2360 = vsel %vm1737, %v2258, 0
      %v2363 = vsel %vm1737, %v2259, 0
      %v2366 = vsel %vm1737, %v2260, 0
      %v2369 = vsel %vm1737, %v2261, 0
      %v2372 = vsel %vm1737, %v2262, 0
      %2374 = vmatprep.subr.mxu0 0.0
      %2375 = vmatpush1.msra.mxu0 %v2263
      %2376 = vmatprep.subr.mxu0 0.0
      %2377 = vmatpush1.msra.mxu0 %v2264
      %2378 = vmatprep.subr.mxu0 0.0
      %2379 = vmatpush1.msra.mxu0 %v2265
      %2380 = vmatprep.subr.mxu0 0.0
      %2381 = vmatpush1.msra.mxu0 %v2266
      %2382 = vmatprep.subr.mxu0 0.0
      %2383 = vmatpush1.msra.mxu0 %v2267
      %2384 = vmatprep.subr.mxu0 0.0
      %2385 = vmatpush1.msra.mxu0 %v2268
      %2386 = vmatprep.subr.mxu0 0.0
      %2387 = vmatpush1.msra.mxu0 %v2269
      %2388 = vmatprep.subr.mxu0 0.0
      %2389 = vmatpush1.msra.mxu0 %v2270
      %2390 = vmatprep.subr.mxu0 0.0
      %2391 = vmatpush1.msra.mxu0 0.0
      %2392 = vmatprep.subr.mxu0 0.0
      %2393 = vmatpush1.msra.mxu0 0.0
      %2394 = vmatprep.subr.mxu0 0.0
      %2395 = vmatpush1.msra.mxu0 0.0
      %2396 = vmatprep.subr.mxu0 0.0
      %2397 = vmatpush1.msra.mxu0 0.0
      %2398 = vmatprep.subr.mxu0 0.0
      %2399 = vmatpush1.msra.mxu0 0.0
      %2400 = vmatprep.subr.mxu0 0.0
      %2401 = vmatpush1.msra.mxu0 0.0
      %2402 = vmatprep.subr.mxu0 0.0
      %2403 = vmatpush1.msra.mxu0 0.0
      %2404 = vmatprep.subr.mxu0 0.0
      %2405 = vmatpush1.msra.mxu0 0.0
      %2406 = vmatprep.subr.mxu0 0.0
      %2407 = vmatpush1.msra.mxu0 0.0
      %2408 = vmatprep.subr.mxu0 0.0
      %2409 = vmatpush1.msra.mxu0 0.0
      %2410 = vmatprep.subr.mxu0 0.0
      %2411 = vmatpush1.msra.mxu0 0.0
      %2412 = vmatprep.subr.mxu0 0.0
      %2413 = vmatpush1.msra.mxu0 0.0
      %2414 = vmatprep.subr.mxu0 0.0
      %2415 = vmatpush1.msra.mxu0 0.0
      %2416 = vmatprep.subr.mxu0 0.0
      %2417 = vmatpush1.msra.mxu0 0.0
      %2418 = vmatprep.subr.mxu0 0.0
      %2419 = vmatpush1.msra.mxu0 0.0
      %2420 = vmatprep.subr.mxu0 0.0
      %2421 = vmatpush1.msra.mxu0 0.0
      %2422 = vmatprep.subr.mxu0 0.0
      %2423 = vmatpush1.msra.mxu0 0.0
      %2424 = vmatprep.subr.mxu0 0.0
      %2425 = vmatpush1.msra.mxu0 0.0
      %2426 = vmatprep.subr.mxu0 0.0
      %2427 = vmatpush1.msra.mxu0 0.0
      %2428 = vmatprep.subr.mxu0 0.0
      %2429 = vmatpush1.msra.mxu0 0.0
      %2430 = vmatprep.subr.mxu0 0.0
      %2431 = vmatpush1.msra.mxu0 0.0
      %2432 = vmatprep.subr.mxu0 0.0
      %2433 = vmatpush1.msra.mxu0 0.0
      %2434 = vmatprep.subr.mxu0 0.0
      %2435 = vmatpush1.msra.mxu0 0.0
      %2436 = vmatprep.subr.mxu0 0.0
      %2437 = vmatpush1.msra.mxu0 0.0
      %2438 = vmatprep.mubr.f32.mxu0 0.0
      %2439 = vmatmul.mubr.f32.gmra.mrb[0].mxu0 %v2279
      %v2440 = vpop.f32.mrb[0].mxu0
      %v2441 = vadd.f32 %v2276, %v2440
      %v2442 = vpop.f32.mrb[0].mxu0
      %2443 = vmatprep.mubr.f32.mxu0 0.0
      %2444 = vmatmul.mubr.f32.gmra.mrb[0].mxu0 %v2282
      %v2445 = vpop.f32.mrb[0].mxu0
      %v2446 = vadd.f32 %v2276, %v2445
      %v2447 = vpop.f32.mrb[0].mxu0
      %2448 = vmatprep.mubr.f32.mxu0 0.0
      %2449 = vmatmul.mubr.f32.gmra.mrb[0].mxu0 %v2285
      %v2450 = vpop.f32.mrb[0].mxu0
      %v2451 = vadd.f32 %v2276, %v2450
      %v2452 = vpop.f32.mrb[0].mxu0
      %2453 = vmatprep.mubr.f32.mxu0 0.0
      %2454 = vmatmul.mubr.f32.gmra.mrb[0].mxu0 %v2288
      %v2455 = vpop.f32.mrb[0].mxu0
      %v2456 = vadd.f32 %v2276, %v2455
      %v2457 = vpop.f32.mrb[0].mxu0
      %2458 = vmatprep.mubr.f32.mxu0 0.0
      %2459 = vmatmul.mubr.f32.gmra.mrb[0].mxu0 %v2291
      %v2460 = vpop.f32.mrb[0].mxu0
      %v2461 = vadd.f32 %v2276, %v2460
      %v2462 = vpop.f32.mrb[0].mxu0
      %2463 = vmatprep.mubr.f32.mxu0 0.0
      %2464 = vmatmul.mubr.f32.gmra.mrb[0].mxu0 %v2294
      %v2465 = vpop.f32.mrb[0].mxu0
      %v2466 = vadd.f32 %v2276, %v2465
      %v2467 = vpop.f32.mrb[0].mxu0
      %2468 = vmatprep.mubr.f32.mxu0 0.0
      %2469 = vmatmul.mubr.f32.gmra.mrb[0].mxu0 %v2297
      %v2470 = vpop.f32.mrb[0].mxu0
      %v2471 = vadd.f32 %v2276, %v2470
      %v2472 = vpop.f32.mrb[0].mxu0
      %2473 = vmatprep.mubr.f32.mxu0 0.0
      %2474 = vmatmul.mubr.f32.gmra.mrb[0].mxu0 %v2300
      %v2475 = vpop.f32.mrb[0].mxu0
      %v2476 = vadd.f32 %v2276, %v2475
      %v2477 = vpop.f32.mrb[0].mxu0
      %2478 = vmatprep.mubr.f32.mxu0 0.0
      %2479 = vmatmul.mubr.f32.gmra.mrb[0].mxu0 %v2303
      %v2480 = vpop.f32.mrb[0].mxu0
      %v2481 = vadd.f32 %v2276, %v2480
      %v2482 = vpop.f32.mrb[0].mxu0
      %2483 = vmatprep.mubr.f32.mxu0 0.0
      %2484 = vmatmul.mubr.f32.gmra.mrb[0].mxu0 %v2306
      %v2485 = vpop.f32.mrb[0].mxu0
      %v2486 = vadd.f32 %v2276, %v2485
      %v2487 = vpop.f32.mrb[0].mxu0
      %2488 = vmatprep.mubr.f32.mxu0 0.0
      %2489 = vmatmul.mubr.f32.gmra.mrb[0].mxu0 %v2309
      %v2490 = vpop.f32.mrb[0].mxu0
      %v2491 = vadd.f32 %v2276, %v2490
      %v2492 = vpop.f32.mrb[0].mxu0
      %2493 = vmatprep.mubr.f32.mxu0 0.0
      %2494 = vmatmul.mubr.f32.gmra.mrb[0].mxu0 %v2312
      %v2495 = vpop.f32.mrb[0].mxu0
      %v2496 = vadd.f32 %v2276, %v2495
      %v2497 = vpop.f32.mrb[0].mxu0
      %2498 = vmatprep.mubr.f32.mxu0 0.0
      %2499 = vmatmul.mubr.f32.gmra.mrb[0].mxu0 %v2315
      %v2500 = vpop.f32.mrb[0].mxu0
      %v2501 = vadd.f32 %v2276, %v2500
      %v2502 = vpop.f32.mrb[0].mxu0
      %2503 = vmatprep.mubr.f32.mxu0 0.0
      %2504 = vmatmul.mubr.f32.gmra.mrb[0].mxu0 %v2318
      %v2505 = vpop.f32.mrb[0].mxu0
      %v2506 = vadd.f32 %v2276, %v2505
      %v2507 = vpop.f32.mrb[0].mxu0
      %2508 = vmatprep.mubr.f32.mxu0 0.0
      %2509 = vmatmul.mubr.f32.gmra.mrb[0].mxu0 %v2321
      %v2510 = vpop.f32.mrb[0].mxu0
      %v2511 = vadd.f32 %v2276, %v2510
      %v2512 = vpop.f32.mrb[0].mxu0
      %2513 = vmatprep.mubr.f32.mxu0 0.0
      %2514 = vmatmul.mubr.f32.gmra.mrb[0].mxu0 %v2324
      %v2515 = vpop.f32.mrb[0].mxu0
      %v2516 = vadd.f32 %v2276, %v2515
      %v2517 = vpop.f32.mrb[0].mxu0
      %2518 = vmatprep.mubr.f32.mxu0 0.0
      %2519 = vmatmul.mubr.f32.gmra.mrb[0].mxu0 %v2327
      %v2520 = vpop.f32.mrb[0].mxu0
      %v2521 = vadd.f32 %v2276, %v2520
      %v2522 = vpop.f32.mrb[0].mxu0
      %2523 = vmatprep.mubr.f32.mxu0 0.0
      %2524 = vmatmul.mubr.f32.gmra.mrb[0].mxu0 %v2330
      %v2525 = vpop.f32.mrb[0].mxu0
      %v2526 = vadd.f32 %v2276, %v2525
      %v2527 = vpop.f32.mrb[0].mxu0
      %2528 = vmatprep.mubr.f32.mxu0 0.0
      %2529 = vmatmul.mubr.f32.gmra.mrb[0].mxu0 %v2333
      %v2530 = vpop.f32.mrb[0].mxu0
      %v2531 = vadd.f32 %v2276, %v2530
      %v2532 = vpop.f32.mrb[0].mxu0
      %2533 = vmatprep.mubr.f32.mxu0 0.0
      %2534 = vmatmul.mubr.f32.gmra.mrb[0].mxu0 %v2336
      %v2535 = vpop.f32.mrb[0].mxu0
      %v2536 = vadd.f32 %v2276, %v2535
      %v2537 = vpop.f32.mrb[0].mxu0
      %2538 = vmatprep.mubr.f32.mxu0 0.0
      %2539 = vmatmul.mubr.f32.gmra.mrb[0].mxu0 %v2339
      %v2540 = vpop.f32.mrb[0].mxu0
      %v2541 = vadd.f32 %v2276, %v2540
      %v2542 = vpop.f32.mrb[0].mxu0
      %2543 = vmatprep.mubr.f32.mxu0 0.0
      %2544 = vmatmul.mubr.f32.gmra.mrb[0].mxu0 %v2342
      %v2545 = vpop.f32.mrb[0].mxu0
      %v2546 = vadd.f32 %v2276, %v2545
      %v2547 = vpop.f32.mrb[0].mxu0
      %2548 = vmatprep.mubr.f32.mxu0 0.0
      %2549 = vmatmul.mubr.f32.gmra.mrb[0].mxu0 %v2345
      %v2550 = vpop.f32.mrb[0].mxu0
      %v2551 = vadd.f32 %v2276, %v2550
      %v2552 = vpop.f32.mrb[0].mxu0
      %2553 = vmatprep.mubr.f32.mxu0 0.0
      %2554 = vmatmul.mubr.f32.gmra.mrb[0].mxu0 %v2348
      %v2555 = vpop.f32.mrb[0].mxu0
      %v2556 = vadd.f32 %v2276, %v2555
      %v2557 = vpop.f32.mrb[0].mxu0
      %2558 = vmatprep.mubr.f32.mxu0 0.0
      %2559 = vmatmul.mubr.f32.gmra.mrb[0].mxu0 %v2351
      %v2560 = vpop.f32.mrb[0].mxu0
      %v2561 = vadd.f32 %v2276, %v2560
      %v2562 = vpop.f32.mrb[0].mxu0
      %2563 = vmatprep.mubr.f32.mxu0 0.0
      %2564 = vmatmul.mubr.f32.gmra.mrb[0].mxu0 %v2354
      %v2565 = vpop.f32.mrb[0].mxu0
      %v2566 = vadd.f32 %v2276, %v2565
      %v2567 = vpop.f32.mrb[0].mxu0
      %2568 = vmatprep.mubr.f32.mxu0 0.0
      %2569 = vmatmul.mubr.f32.gmra.mrb[0].mxu0 %v2357
      %v2570 = vpop.f32.mrb[0].mxu0
      %v2571 = vadd.f32 %v2276, %v2570
      %v2572 = vpop.f32.mrb[0].mxu0
      %2573 = vmatprep.mubr.f32.mxu0 0.0
      %2574 = vmatmul.mubr.f32.gmra.mrb[0].mxu0 %v2360
      %v2575 = vpop.f32.mrb[0].mxu0
      %v2576 = vadd.f32 %v2276, %v2575
      %v2577 = vpop.f32.mrb[0].mxu0
      %2578 = vmatprep.mubr.f32.mxu0 0.0
      %2579 = vmatmul.mubr.f32.gmra.mrb[0].mxu0 %v2363
      %v2580 = vpop.f32.mrb[0].mxu0
      %v2581 = vadd.f32 %v2276, %v2580
      %v2582 = vpop.f32.mrb[0].mxu0
      %2583 = vmatprep.mubr.f32.mxu0 0.0
      %2584 = vmatmul.mubr.f32.gmra.mrb[0].mxu0 %v2366
      %v2585 = vpop.f32.mrb[0].mxu0
      %v2586 = vadd.f32 %v2276, %v2585
      %v2587 = vpop.f32.mrb[0].mxu0
      %2588 = vmatprep.mubr.f32.mxu0 0.0
      %2589 = vmatmul.mubr.f32.gmra.mrb[0].mxu0 %v2369
      %v2590 = vpop.f32.mrb[0].mxu0
      %v2591 = vadd.f32 %v2276, %v2590
      %v2592 = vpop.f32.mrb[0].mxu0
      %2593 = vmatprep.mubr.f32.mxu0 0.0
      %2594 = vmatmul.mubr.f32.gmra.mrb[0].mxu0 %v2372
      %v2595 = vpop.f32.mrb[0].mxu0
      %v2596 = vadd.f32 %v2276, %v2595
      %v2597 = vpop.f32.mrb[0].mxu0
      %2598 = vdwg.mxu0
      %v2599 = vld [vmem:[%s18] sm:$0xff]
      %v2600 = vld [vmem:[%s18 + $0x8] sm:$0xff]
      %v2601 = vld [vmem:[%s18 + $0x10] sm:$0xff]
      %v2602 = vld [vmem:[%s18 + $0x18] sm:$0xff]
      %v2603 = vld [vmem:[%s18 + $0x20] sm:$0xff]
      %v2604 = vld [vmem:[%s18 + $0x28] sm:$0xff]
      %v2605 = vld [vmem:[%s18 + $0x30] sm:$0xff]
      %v2606 = vld [vmem:[%s18 + $0x38] sm:$0xff]
      %v2607 = vld [vmem:[%s18 + $0x40] sm:$0xff]
      %v2608 = vld [vmem:[%s18 + $0x48] sm:$0xff]
      %v2609 = vld [vmem:[%s18 + $0x50] sm:$0xff]
      %v2610 = vld [vmem:[%s18 + $0x58] sm:$0xff]
      %v2611 = vld [vmem:[%s18 + $0x60] sm:$0xff]
      %v2612 = vld [vmem:[%s18 + $0x68] sm:$0xff]
      %v2613 = vld [vmem:[%s18 + $0x70] sm:$0xff]
      %v2614 = vld [vmem:[%s18 + $0x78] sm:$0xff]
      %v2615 = vpack.c.bf16 %v2446, %v2441
      %v2616 = vpack.c.bf16 %v2456, %v2451
      %v2617 = vpack.c.bf16 %v2466, %v2461
      %v2618 = vpack.c.bf16 %v2476, %v2471
      %v2619 = vpack.c.bf16 %v2486, %v2481
      %v2620 = vpack.c.bf16 %v2496, %v2491
      %v2621 = vpack.c.bf16 %v2506, %v2501
      %v2622 = vpack.c.bf16 %v2516, %v2511
      %v2623 = vpack.c.bf16 %v2526, %v2521
      %v2624 = vpack.c.bf16 %v2536, %v2531
      %v2625 = vpack.c.bf16 %v2546, %v2541
      %v2626 = vpack.c.bf16 %v2556, %v2551
      %v2627 = vpack.c.bf16 %v2566, %v2561
      %v2628 = vpack.c.bf16 %v2576, %v2571
      %v2629 = vpack.c.bf16 %v2586, %v2581
      %v2630 = vpack.c.bf16 %v2596, %v2591
      %2631 = vmatprep.subr.bf16.mxu0 0
      %2632 = vmatpush1.bf16.msra.mxu0 %v2615
      %2633 = vmatprep.subr.bf16.mxu0 0
      %2634 = vmatpush1.bf16.msra.mxu0 %v2616
      %2635 = vmatprep.subr.bf16.mxu0 0
      %2636 = vmatpush1.bf16.msra.mxu0 %v2617
      %2637 = vmatprep.subr.bf16.mxu0 0
      %2638 = vmatpush1.bf16.msra.mxu0 %v2618
      %2639 = vmatprep.subr.bf16.mxu0 0
      %2640 = vmatpush1.bf16.msra.mxu0 %v2619
      %2641 = vmatprep.subr.bf16.mxu0 0
      %2642 = vmatpush1.bf16.msra.mxu0 %v2620
      %2643 = vmatprep.subr.bf16.mxu0 0
      %2644 = vmatpush1.bf16.msra.mxu0 %v2621
      %2645 = vmatprep.subr.bf16.mxu0 0
      %2646 = vmatpush1.bf16.msra.mxu0 %v2622
      %2647 = vmatprep.subr.bf16.mxu0 0
      %2648 = vmatpush1.bf16.msra.mxu0 %v2623
      %2649 = vmatprep.subr.bf16.mxu0 0
      %2650 = vmatpush1.bf16.msra.mxu0 %v2624
      %2651 = vmatprep.subr.bf16.mxu0 0
      %2652 = vmatpush1.bf16.msra.mxu0 %v2625
      %2653 = vmatprep.subr.bf16.mxu0 0
      %2654 = vmatpush1.bf16.msra.mxu0 %v2626
      %2655 = vmatprep.subr.bf16.mxu0 0
      %2656 = vmatpush1.bf16.msra.mxu0 %v2627
      %2657 = vmatprep.subr.bf16.mxu0 0
      %2658 = vmatpush1.bf16.msra.mxu0 %v2628
      %2659 = vmatprep.subr.bf16.mxu0 0
      %2660 = vmatpush1.bf16.msra.mxu0 %v2629
      %2661 = vmatprep.subr.bf16.mxu0 0
      %2662 = vmatpush1.bf16.msra.mxu0 %v2630
      %2663 = vmatprep.mubr.bf16.mxu0 %v1318
      %2664 = vmatmul.mubr.bf16.gmra.mrb[0].mxu0 %v1317
      %v2665 = vpop.f32.mrb[0].mxu0
      %v2666 = vadd.f32 0.0, %v2665
      %v2667 = vpop.f32.mrb[0].mxu0
      %v2668 = vpop.f32.mrb[0].mxu0
      %v2669 = vadd.f32 0.0, %v2668
      %v2670 = vpop.f32.mrb[0].mxu0
      %2671 = vmatprep.mubr.bf16.mxu0 %v1320
      %2672 = vmatmul.mubr.bf16.gmra.mrb[0].mxu0 %v1319
      %v2673 = vpop.f32.mrb[0].mxu0
      %v2674 = vadd.f32 0.0, %v2673
      %v2675 = vpop.f32.mrb[0].mxu0
      %v2676 = vpop.f32.mrb[0].mxu0
      %v2677 = vadd.f32 0.0, %v2676
      %v2678 = vpop.f32.mrb[0].mxu0
      %2679 = vmatprep.mubr.bf16.mxu0 %v1322
      %2680 = vmatmul.mubr.bf16.gmra.mrb[0].mxu0 %v1321
      %v2681 = vpop.f32.mrb[0].mxu0
      %v2682 = vadd.f32 0.0, %v2681
      %v2683 = vpop.f32.mrb[0].mxu0
      %v2684 = vpop.f32.mrb[0].mxu0
      %v2685 = vadd.f32 0.0, %v2684
      %v2686 = vpop.f32.mrb[0].mxu0
      %2687 = vmatprep.mubr.bf16.mxu0 %v1324
      %2688 = vmatmul.mubr.bf16.gmra.mrb[0].mxu0 %v1323
      %v2689 = vpop.f32.mrb[0].mxu0
      %v2690 = vadd.f32 0.0, %v2689
      %v2691 = vpop.f32.mrb[0].mxu0
      %v2692 = vpop.f32.mrb[0].mxu0
      %v2693 = vadd.f32 0.0, %v2692
      %v2694 = vpop.f32.mrb[0].mxu0
      %2695 = vmatprep.mubr.bf16.mxu0 %v1326
      %2696 = vmatmul.mubr.bf16.gmra.mrb[0].mxu0 %v1325
      %v2697 = vpop.f32.mrb[0].mxu0
      %v2698 = vadd.f32 0.0, %v2697
      %v2699 = vpop.f32.mrb[0].mxu0
      %v2700 = vpop.f32.mrb[0].mxu0
      %v2701 = vadd.f32 0.0, %v2700
      %v2702 = vpop.f32.mrb[0].mxu0
      %2703 = vmatprep.mubr.bf16.mxu0 %v1328
      %2704 = vmatmul.mubr.bf16.gmra.mrb[0].mxu0 %v1327
      %v2705 = vpop.f32.mrb[0].mxu0
      %v2706 = vadd.f32 0.0, %v2705
      %v2707 = vpop.f32.mrb[0].mxu0
      %v2708 = vpop.f32.mrb[0].mxu0
      %v2709 = vadd.f32 0.0, %v2708
      %v2710 = vpop.f32.mrb[0].mxu0
      %2711 = vmatprep.mubr.bf16.mxu0 %v1330
      %2712 = vmatmul.mubr.bf16.gmra.mrb[0].mxu0 %v1329
      %v2713 = vpop.f32.mrb[0].mxu0
      %v2714 = vadd.f32 0.0, %v2713
      %v2715 = vpop.f32.mrb[0].mxu0
      %v2716 = vpop.f32.mrb[0].mxu0
      %v2717 = vadd.f32 0.0, %v2716
      %v2718 = vpop.f32.mrb[0].mxu0
      %2719 = vmatprep.mubr.bf16.mxu0 %v1332
      %2720 = vmatmul.mubr.bf16.gmra.mrb[0].mxu0 %v1331
      %v2721 = vpop.f32.mrb[0].mxu0
      %v2722 = vadd.f32 0.0, %v2721
      %v2723 = vpop.f32.mrb[0].mxu0
      %v2724 = vpop.f32.mrb[0].mxu0
      %v2725 = vadd.f32 0.0, %v2724
      %v2726 = vpop.f32.mrb[0].mxu0
      %2727 = vdwg.mxu0
      %v2728 = vadd.f32 %v2599, %v2666
      %v2729 = vadd.f32 %v2600, %v2669
      %v2730 = vadd.f32 %v2601, %v2674
      %v2731 = vadd.f32 %v2602, %v2677
      %v2732 = vadd.f32 %v2603, %v2682
      %v2733 = vadd.f32 %v2604, %v2685
      %v2734 = vadd.f32 %v2605, %v2690
      %v2735 = vadd.f32 %v2606, %v2693
      %v2736 = vadd.f32 %v2607, %v2698
      %v2737 = vadd.f32 %v2608, %v2701
      %v2738 = vadd.f32 %v2609, %v2706
      %v2739 = vadd.f32 %v2610, %v2709
      %v2740 = vadd.f32 %v2611, %v2714
      %v2741 = vadd.f32 %v2612, %v2717
      %v2742 = vadd.f32 %v2613, %v2722
      %v2743 = vadd.f32 %v2614, %v2725
      %2744 = vst.msk [vmem:[%s18] sm:$0xff] %vm1737, %v2728
      %2745 = vst.msk [vmem:[%s18 + $0x8] sm:$0xff] %vm1737, %v2729
      %2746 = vst.msk [vmem:[%s18 + $0x10] sm:$0xff] %vm1737, %v2730
      %2747 = vst.msk [vmem:[%s18 + $0x18] sm:$0xff] %vm1737, %v2731
      %2748 = vst.msk [vmem:[%s18 + $0x20] sm:$0xff] %vm1737, %v2732
      %2749 = vst.msk [vmem:[%s18 + $0x28] sm:$0xff] %vm1737, %v2733
      %2750 = vst.msk [vmem:[%s18 + $0x30] sm:$0xff] %vm1737, %v2734
      %2751 = vst.msk [vmem:[%s18 + $0x38] sm:$0xff] %vm1737, %v2735
      %2752 = vst.msk [vmem:[%s18 + $0x40] sm:$0xff] %vm1737, %v2736
      %2753 = vst.msk [vmem:[%s18 + $0x48] sm:$0xff] %vm1737, %v2737
      %2754 = vst.msk [vmem:[%s18 + $0x50] sm:$0xff] %vm1737, %v2738
      %2755 = vst.msk [vmem:[%s18 + $0x58] sm:$0xff] %vm1737, %v2739
      %2756 = vst.msk [vmem:[%s18 + $0x60] sm:$0xff] %vm1737, %v2740
      %2757 = vst.msk [vmem:[%s18 + $0x68] sm:$0xff] %vm1737, %v2741
      %2758 = vst.msk [vmem:[%s18 + $0x70] sm:$0xff] %vm1737, %v2742
      %2759 = vst.msk [vmem:[%s18 + $0x78] sm:$0xff] %vm1737, %v2743
      %p2760 = scmp.eq.s32.totalorder %s29, 2
      // Predicated region
      $region97: #{gnn_policy_forward.8} parent=91 // pred_check
        %p2761 = pneg %p2760
      $region98: #{gnn_policy_forward.8} parent=91 // pred_check_branch
        %2763 = sbr.rel (%p2761) target = $region100
      $region99: #{gnn_policy_forward.8} parent=91 // pred_region
        %v2764 = vld [vmem:[%s18] sm:$0xff]
        %v2765 = vld [vmem:[%s18 + $0x8] sm:$0xff]
        %v2766 = vld [vmem:[%s18 + $0x10] sm:$0xff]
        %v2767 = vld [vmem:[%s18 + $0x18] sm:$0xff]
        %v2768 = vld [vmem:[%s18 + $0x20] sm:$0xff]
        %v2769 = vld [vmem:[%s18 + $0x28] sm:$0xff]
        %v2770 = vld [vmem:[%s18 + $0x30] sm:$0xff]
        %v2771 = vld [vmem:[%s18 + $0x38] sm:$0xff]
        %v2772 = vld [vmem:[%s18 + $0x40] sm:$0xff]
        %v2773 = vld [vmem:[%s18 + $0x48] sm:$0xff]
        %v2774 = vld [vmem:[%s18 + $0x50] sm:$0xff]
        %v2775 = vld [vmem:[%s18 + $0x58] sm:$0xff]
        %v2776 = vld [vmem:[%s18 + $0x60] sm:$0xff]
        %v2777 = vld [vmem:[%s18 + $0x68] sm:$0xff]
        %v2778 = vld [vmem:[%s18 + $0x70] sm:$0xff]
        %v2779 = vld [vmem:[%s18 + $0x78] sm:$0xff]
        %v2780 = vld [vmem:[%s11] sm:$0x1]
        %v2781 = vld [vmem:[%s12] sm:$0x1]
        %v2782 = vsel %vm1737, %v2764, 0.0
        %2783 = vadd.xlane.f32.xlu0 %v2782
        %v2784 = vpop.xlane.xlu0 %2783
        %v2785 = vsel %vm1737, %v2765, 0.0
        %2786 = vadd.xlane.f32.xlu0 %v2785
        %v2787 = vpop.xlane.xlu0 %2786
        %v2788 = vsel %vm1737, %v2766, 0.0
        %2789 = vadd.xlane.f32.xlu0 %v2788
        %v2790 = vpop.xlane.xlu0 %2789
        %v2791 = vsel %vm1737, %v2767, 0.0
        %2792 = vadd.xlane.f32.xlu0 %v2791
        %v2793 = vpop.xlane.xlu0 %2792
        %v2794 = vsel %vm1737, %v2768, 0.0
        %2795 = vadd.xlane.f32.xlu0 %v2794
        %v2796 = vpop.xlane.xlu0 %2795
        %v2797 = vsel %vm1737, %v2769, 0.0
        %2798 = vadd.xlane.f32.xlu0 %v2797
        %v2799 = vpop.xlane.xlu0 %2798
        %v2800 = vsel %vm1737, %v2770, 0.0
        %2801 = vadd.xlane.f32.xlu0 %v2800
        %v2802 = vpop.xlane.xlu0 %2801
        %v2803 = vsel %vm1737, %v2771, 0.0
        %2804 = vadd.xlane.f32.xlu0 %v2803
        %v2805 = vpop.xlane.xlu0 %2804
        %v2806 = vsel %vm1737, %v2772, 0.0
        %2807 = vadd.xlane.f32.xlu0 %v2806
        %v2808 = vpop.xlane.xlu0 %2807
        %v2809 = vsel %vm1737, %v2773, 0.0
        %2810 = vadd.xlane.f32.xlu0 %v2809
        %v2811 = vpop.xlane.xlu0 %2810
        %v2812 = vsel %vm1737, %v2774, 0.0
        %2813 = vadd.xlane.f32.xlu0 %v2812
        %v2814 = vpop.xlane.xlu0 %2813
        %v2815 = vsel %vm1737, %v2775, 0.0
        %2816 = vadd.xlane.f32.xlu0 %v2815
        %v2817 = vpop.xlane.xlu0 %2816
        %v2818 = vsel %vm1737, %v2776, 0.0
        %2819 = vadd.xlane.f32.xlu0 %v2818
        %v2820 = vpop.xlane.xlu0 %2819
        %v2821 = vsel %vm1737, %v2777, 0.0
        %2822 = vadd.xlane.f32.xlu0 %v2821
        %v2823 = vpop.xlane.xlu0 %2822
        %v2824 = vsel %vm1737, %v2778, 0.0
        %2825 = vadd.xlane.f32.xlu0 %v2824
        %v2826 = vpop.xlane.xlu0 %2825
        %v2827 = vsel %vm1737, %v2779, 0.0
        %2828 = vadd.xlane.f32.xlu0 %v2827
        %v2829 = vpop.xlane.xlu0 %2828
        %v2830 = vmul.f32 %v2784, %v1834
        %v2831 = vmul.f32 %v2787, %v1834
        %v2832 = vmul.f32 %v2790, %v1834
        %v2833 = vmul.f32 %v2793, %v1834
        %v2834 = vmul.f32 %v2796, %v1834
        %v2835 = vmul.f32 %v2799, %v1834
        %v2836 = vmul.f32 %v2802, %v1834
        %v2837 = vmul.f32 %v2805, %v1834
        %v2838 = vmul.f32 %v2808, %v1834
        %v2839 = vmul.f32 %v2811, %v1834
        %v2840 = vmul.f32 %v2814, %v1834
        %v2841 = vmul.f32 %v2817, %v1834
        %v2842 = vmul.f32 %v2820, %v1834
        %v2843 = vmul.f32 %v2823, %v1834
        %v2844 = vmul.f32 %v2826, %v1834
        %v2845 = vmul.f32 %v2829, %v1834
        %v2846 = vsub.f32 %v2764, %v2830
        %v2847 = vsub.f32 %v2765, %v2831
        %v2848 = vsub.f32 %v2766, %v2832
        %v2849 = vsub.f32 %v2767, %v2833
        %v2850 = vsub.f32 %v2768, %v2834
        %v2851 = vsub.f32 %v2769, %v2835
        %v2852 = vsub.f32 %v2770, %v2836
        %v2853 = vsub.f32 %v2771, %v2837
        %v2854 = vsub.f32 %v2772, %v2838
        %v2855 = vsub.f32 %v2773, %v2839
        %v2856 = vsub.f32 %v2774, %v2840
        %v2857 = vsub.f32 %v2775, %v2841
        %v2858 = vsub.f32 %v2776, %v2842
        %v2859 = vsub.f32 %v2777, %v2843
        %v2860 = vsub.f32 %v2778, %v2844
        %v2861 = vsub.f32 %v2779, %v2845
        %v2862 = vmul.f32 %v2846, %v2846
        %v2863 = vmul.f32 %v2847, %v2847
        %v2864 = vmul.f32 %v2848, %v2848
        %v2865 = vmul.f32 %v2849, %v2849
        %v2866 = vmul.f32 %v2850, %v2850
        %v2867 = vmul.f32 %v2851, %v2851
        %v2868 = vmul.f32 %v2852, %v2852
        %v2869 = vmul.f32 %v2853, %v2853
        %v2870 = vmul.f32 %v2854, %v2854
        %v2871 = vmul.f32 %v2855, %v2855
        %v2872 = vmul.f32 %v2856, %v2856
        %v2873 = vmul.f32 %v2857, %v2857
        %v2874 = vmul.f32 %v2858, %v2858
        %v2875 = vmul.f32 %v2859, %v2859
        %v2876 = vmul.f32 %v2860, %v2860
        %v2877 = vmul.f32 %v2861, %v2861
        %v2878 = vsel %vm1737, %v2862, 0.0
        %2879 = vadd.xlane.f32.xlu0 %v2878
        %v2880 = vpop.xlane.xlu0 %2879
        %v2881 = vsel %vm1737, %v2863, 0.0
        %2882 = vadd.xlane.f32.xlu0 %v2881
        %v2883 = vpop.xlane.xlu0 %2882
        %v2884 = vsel %vm1737, %v2864, 0.0
        %2885 = vadd.xlane.f32.xlu0 %v2884
        %v2886 = vpop.xlane.xlu0 %2885
        %v2887 = vsel %vm1737, %v2865, 0.0
        %2888 = vadd.xlane.f32.xlu0 %v2887
        %v2889 = vpop.xlane.xlu0 %2888
        %v2890 = vsel %vm1737, %v2866, 0.0
        %2891 = vadd.xlane.f32.xlu0 %v2890
        %v2892 = vpop.xlane.xlu0 %2891
        %v2893 = vsel %vm1737, %v2867, 0.0
        %2894 = vadd.xlane.f32.xlu0 %v2893
        %v2895 = vpop.xlane.xlu0 %2894
        %v2896 = vsel %vm1737, %v2868, 0.0
        %2897 = vadd.xlane.f32.xlu0 %v2896
        %v2898 = vpop.xlane.xlu0 %2897
        %v2899 = vsel %vm1737, %v2869, 0.0
        %2900 = vadd.xlane.f32.xlu0 %v2899
        %v2901 = vpop.xlane.xlu0 %2900
        %v2902 = vsel %vm1737, %v2870, 0.0
        %2903 = vadd.xlane.f32.xlu0 %v2902
        %v2904 = vpop.xlane.xlu0 %2903
        %v2905 = vsel %vm1737, %v2871, 0.0
        %2906 = vadd.xlane.f32.xlu0 %v2905
        %v2907 = vpop.xlane.xlu0 %2906
        %v2908 = vsel %vm1737, %v2872, 0.0
        %2909 = vadd.xlane.f32.xlu0 %v2908
        %v2910 = vpop.xlane.xlu0 %2909
        %v2911 = vsel %vm1737, %v2873, 0.0
        %2912 = vadd.xlane.f32.xlu0 %v2911
        %v2913 = vpop.xlane.xlu0 %2912
        %v2914 = vsel %vm1737, %v2874, 0.0
        %2915 = vadd.xlane.f32.xlu0 %v2914
        %v2916 = vpop.xlane.xlu0 %2915
        %v2917 = vsel %vm1737, %v2875, 0.0
        %2918 = vadd.xlane.f32.xlu0 %v2917
        %v2919 = vpop.xlane.xlu0 %2918
        %v2920 = vsel %vm1737, %v2876, 0.0
        %2921 = vadd.xlane.f32.xlu0 %v2920
        %v2922 = vpop.xlane.xlu0 %2921
        %v2923 = vsel %vm1737, %v2877, 0.0
        %2924 = vadd.xlane.f32.xlu0 %v2923
        %v2925 = vpop.xlane.xlu0 %2924
        %v2926 = vmul.f32 %v2880, %v1834
        %v2927 = vmul.f32 %v2883, %v1834
        %v2928 = vmul.f32 %v2886, %v1834
        %v2929 = vmul.f32 %v2889, %v1834
        %v2930 = vmul.f32 %v2892, %v1834
        %v2931 = vmul.f32 %v2895, %v1834
        %v2932 = vmul.f32 %v2898, %v1834
        %v2933 = vmul.f32 %v2901, %v1834
        %v2934 = vmul.f32 %v2904, %v1834
        %v2935 = vmul.f32 %v2907, %v1834
        %v2936 = vmul.f32 %v2910, %v1834
        %v2937 = vmul.f32 %v2913, %v1834
        %v2938 = vmul.f32 %v2916, %v1834
        %v2939 = vmul.f32 %v2919, %v1834
        %v2940 = vmul.f32 %v2922, %v1834
        %v2941 = vmul.f32 %v2925, %v1834
        %v2942 = vadd.f32 %v2926, 1e-05
        %v2943 = vadd.f32 %v2927, 1e-05
        %v2944 = vadd.f32 %v2928, 1e-05
        %v2945 = vadd.f32 %v2929, 1e-05
        %v2946 = vadd.f32 %v2930, 1e-05
        %v2947 = vadd.f32 %v2931, 1e-05
        %v2948 = vadd.f32 %v2932, 1e-05
        %v2949 = vadd.f32 %v2933, 1e-05
        %v2950 = vadd.f32 %v2934, 1e-05
        %v2951 = vadd.f32 %v2935, 1e-05
        %v2952 = vadd.f32 %v2936, 1e-05
        %v2953 = vadd.f32 %v2937, 1e-05
        %v2954 = vadd.f32 %v2938, 1e-05
        %v2955 = vadd.f32 %v2939, 1e-05
        %v2956 = vadd.f32 %v2940, 1e-05
        %v2957 = vadd.f32 %v2941, 1e-05
        %v2958 = vrsqrt.pop %v2942
        %v2959 = vrsqrt.pop %v2943
        %v2960 = vrsqrt.pop %v2944
        %v2961 = vrsqrt.pop %v2945
        %v2962 = vrsqrt.pop %v2946
        %v2963 = vrsqrt.pop %v2947
        %v2964 = vrsqrt.pop %v2948
        %v2965 = vrsqrt.pop %v2949
        %v2966 = vrsqrt.pop %v2950
        %v2967 = vrsqrt.pop %v2951
        %v2968 = vrsqrt.pop %v2952
        %v2969 = vrsqrt.pop %v2953
        %v2970 = vrsqrt.pop %v2954
        %v2971 = vrsqrt.pop %v2955
        %v2972 = vrsqrt.pop %v2956
        %v2973 = vrsqrt.pop %v2957
        %v2974 = vmul.f32 %v2846, %v2958
        %v2975 = vmul.f32 %v2847, %v2959
        %v2976 = vmul.f32 %v2848, %v2960
        %v2977 = vmul.f32 %v2849, %v2961
        %v2978 = vmul.f32 %v2850, %v2962
        %v2979 = vmul.f32 %v2851, %v2963
        %v2980 = vmul.f32 %v2852, %v2964
        %v2981 = vmul.f32 %v2853, %v2965
        %v2982 = vmul.f32 %v2854, %v2966
        %v2983 = vmul.f32 %v2855, %v2967
        %v2984 = vmul.f32 %v2856, %v2968
        %v2985 = vmul.f32 %v2857, %v2969
        %v2986 = vmul.f32 %v2858, %v2970
        %v2987 = vmul.f32 %v2859, %v2971
        %v2988 = vmul.f32 %v2860, %v2972
        %v2989 = vmul.f32 %v2861, %v2973
        %v2991 = vlaneseq
        %v2992 = vshrl.u32 %v2991, 7
        %v2993 = vsub.s32 0, %v2992
        %v2994 = vrot.slane %v2780, %v2993
        %v2996 = vmul.f32 %v2974, %v2994
        %v2997 = vmul.f32 %v2975, %v2994
        %v2998 = vmul.f32 %v2976, %v2994
        %v2999 = vmul.f32 %v2977, %v2994
        %v3000 = vmul.f32 %v2978, %v2994
        %v3001 = vmul.f32 %v2979, %v2994
        %v3002 = vmul.f32 %v2980, %v2994
        %v3003 = vmul.f32 %v2981, %v2994
        %v3004 = vmul.f32 %v2982, %v2994
        %v3005 = vmul.f32 %v2983, %v2994
        %v3006 = vmul.f32 %v2984, %v2994
        %v3007 = vmul.f32 %v2985, %v2994
        %v3008 = vmul.f32 %v2986, %v2994
        %v3009 = vmul.f32 %v2987, %v2994
        %v3010 = vmul.f32 %v2988, %v2994
        %v3011 = vmul.f32 %v2989, %v2994
        %v3013 = vlaneseq
        %v3014 = vshrl.u32 %v3013, 7
        %v3015 = vsub.s32 0, %v3014
        %v3016 = vrot.slane %v2781, %v3015
        %v3018 = vadd.f32 %v2996, %v3016
        %v3019 = vadd.f32 %v2997, %v3016
        %v3020 = vadd.f32 %v2998, %v3016
        %v3021 = vadd.f32 %v2999, %v3016
        %v3022 = vadd.f32 %v3000, %v3016
        %v3023 = vadd.f32 %v3001, %v3016
        %v3024 = vadd.f32 %v3002, %v3016
        %v3025 = vadd.f32 %v3003, %v3016
        %v3026 = vadd.f32 %v3004, %v3016
        %v3027 = vadd.f32 %v3005, %v3016
        %v3028 = vadd.f32 %v3006, %v3016
        %v3029 = vadd.f32 %v3007, %v3016
        %v3030 = vadd.f32 %v3008, %v3016
        %v3031 = vadd.f32 %v3009, %v3016
        %v3032 = vadd.f32 %v3010, %v3016
        %v3033 = vadd.f32 %v3011, %v3016
        %v3034 = vld [vmem:[%s13] sm:$0xff]
        %v3035 = vld [vmem:[%s13 + $0x8] sm:$0xff]
        %v3036 = vld [vmem:[%s13 + $0x10] sm:$0xff]
        %v3037 = vld [vmem:[%s13 + $0x18] sm:$0xff]
        %v3038 = vld [vmem:[%s13 + $0x20] sm:$0xff]
        %v3039 = vld [vmem:[%s13 + $0x28] sm:$0xff]
        %v3040 = vld [vmem:[%s13 + $0x30] sm:$0xff]
        %v3041 = vld [vmem:[%s13 + $0x38] sm:$0xff]
        %v3042 = vld [vmem:[%s3] sm:$0xff]
        %v3043 = vld [vmem:[%s3 + $0x8] sm:$0xff]
        %v3044 = vld [vmem:[%s3 + $0x10] sm:$0xff]
        %v3045 = vld [vmem:[%s3 + $0x18] sm:$0xff]
        %v3046 = vld [vmem:[%s3 + $0x20] sm:$0xff]
        %v3047 = vld [vmem:[%s3 + $0x28] sm:$0xff]
        %v3048 = vld [vmem:[%s3 + $0x30] sm:$0xff]
        %v3049 = vld [vmem:[%s3 + $0x38] sm:$0xff]
        %v3050 = vld [vmem:[%s3 + $0x40] sm:$0xff]
        %v3051 = vld [vmem:[%s3 + $0x48] sm:$0xff]
        %v3052 = vld [vmem:[%s3 + $0x50] sm:$0xff]
        %v3053 = vld [vmem:[%s3 + $0x58] sm:$0xff]
        %v3054 = vld [vmem:[%s3 + $0x60] sm:$0xff]
        %v3055 = vld [vmem:[%s3 + $0x68] sm:$0xff]
        %v3056 = vld [vmem:[%s3 + $0x70] sm:$0xff]
        %v3057 = vld [vmem:[%s3 + $0x78] sm:$0xff]
        %v3058 = vld [vmem:[%s14] sm:$0xff]
        %v3059 = vld [vmem:[%s14 + $0x8] sm:$0xff]
        %v3060 = vld [vmem:[%s14 + $0x10] sm:$0xff]
        %v3061 = vld [vmem:[%s14 + $0x18] sm:$0xff]
        %v3062 = vld [vmem:[%s14 + $0x20] sm:$0xff]
        %v3063 = vld [vmem:[%s14 + $0x28] sm:$0xff]
        %v3064 = vld [vmem:[%s14 + $0x30] sm:$0xff]
        %v3065 = vld [vmem:[%s14 + $0x38] sm:$0xff]
        %v3067 = vsel %vm1737, %v3042, 0
        %v3070 = vsel %vm1737, %v3043, 0
        %v3073 = vsel %vm1737, %v3044, 0
        %v3076 = vsel %vm1737, %v3045, 0
        %v3079 = vsel %vm1737, %v3046, 0
        %v3082 = vsel %vm1737, %v3047, 0
        %v3085 = vsel %vm1737, %v3048, 0
        %v3088 = vsel %vm1737, %v3049, 0
        %v3091 = vsel %vm1737, %v3050, 0
        %v3094 = vsel %vm1737, %v3051, 0
        %v3097 = vsel %vm1737, %v3052, 0
        %v3100 = vsel %vm1737, %v3053, 0
        %v3103 = vsel %vm1737, %v3054, 0
        %v3106 = vsel %vm1737, %v3055, 0
        %v3109 = vsel %vm1737, %v3056, 0
        %v3112 = vsel %vm1737, %v3057, 0
        %3114 = vmatprep.subr.mxu0 0.0
        %3115 = vmatpush1.msra.mxu0 %v3058
        %3116 = vmatprep.subr.mxu0 0.0
        %3117 = vmatpush1.msra.mxu0 %v3059
        %3118 = vmatprep.subr.mxu0 0.0
        %3119 = vmatpush1.msra.mxu0 %v3060
        %3120 = vmatprep.subr.mxu0 0.0
        %3121 = vmatpush1.msra.mxu0 %v3061
        %3122 = vmatprep.subr.mxu0 0.0
        %3123 = vmatpush1.msra.mxu0 %v3062
        %3124 = vmatprep.subr.mxu0 0.0
        %3125 = vmatpush1.msra.mxu0 %v3063
        %3126 = vmatprep.subr.mxu0 0.0
        %3127 = vmatpush1.msra.mxu0 %v3064
        %3128 = vmatprep.subr.mxu0 0.0
        %3129 = vmatpush1.msra.mxu0 %v3065
        %3130 = vmatprep.subr.mxu0 0.0
        %3131 = vmatpush1.msra.mxu0 0.0
        %3132 = vmatprep.subr.mxu0 0.0
        %3133 = vmatpush1.msra.mxu0 0.0
        %3134 = vmatprep.subr.mxu0 0.0
        %3135 = vmatpush1.msra.mxu0 0.0
        %3136 = vmatprep.subr.mxu0 0.0
        %3137 = vmatpush1.msra.mxu0 0.0
        %3138 = vmatprep.subr.mxu0 0.0
        %3139 = vmatpush1.msra.mxu0 0.0
        %3140 = vmatprep.subr.mxu0 0.0
        %3141 = vmatpush1.msra.mxu0 0.0
        %3142 = vmatprep.subr.mxu0 0.0
        %3143 = vmatpush1.msra.mxu0 0.0
        %3144 = vmatprep.subr.mxu0 0.0
        %3145 = vmatpush1.msra.mxu0 0.0
        %3146 = vmatprep.subr.mxu0 0.0
        %3147 = vmatpush1.msra.mxu0 0.0
        %3148 = vmatprep.subr.mxu0 0.0
        %3149 = vmatpush1.msra.mxu0 0.0
        %3150 = vmatprep.subr.mxu0 0.0
        %3151 = vmatpush1.msra.mxu0 0.0
        %3152 = vmatprep.subr.mxu0 0.0
        %3153 = vmatpush1.msra.mxu0 0.0
        %3154 = vmatprep.subr.mxu0 0.0
        %3155 = vmatpush1.msra.mxu0 0.0
        %3156 = vmatprep.subr.mxu0 0.0
        %3157 = vmatpush1.msra.mxu0 0.0
        %3158 = vmatprep.subr.mxu0 0.0
        %3159 = vmatpush1.msra.mxu0 0.0
        %3160 = vmatprep.subr.mxu0 0.0
        %3161 = vmatpush1.msra.mxu0 0.0
        %3162 = vmatprep.subr.mxu0 0.0
        %3163 = vmatpush1.msra.mxu0 0.0
        %3164 = vmatprep.subr.mxu0 0.0
        %3165 = vmatpush1.msra.mxu0 0.0
        %3166 = vmatprep.subr.mxu0 0.0
        %3167 = vmatpush1.msra.mxu0 0.0
        %3168 = vmatprep.subr.mxu0 0.0
        %3169 = vmatpush1.msra.mxu0 0.0
        %3170 = vmatprep.subr.mxu0 0.0
        %3171 = vmatpush1.msra.mxu0 0.0
        %3172 = vmatprep.subr.mxu0 0.0
        %3173 = vmatpush1.msra.mxu0 0.0
        %3174 = vmatprep.subr.mxu0 0.0
        %3175 = vmatpush1.msra.mxu0 0.0
        %3176 = vmatprep.subr.mxu0 0.0
        %3177 = vmatpush1.msra.mxu0 0.0
        %3178 = vmatprep.mubr.f32.mxu0 0.0
        %3179 = vmatmul.mubr.f32.gmra.mrb[0].mxu0 %v3067
        %v3180 = vpop.f32.mrb[0].mxu0
        %v3181 = vadd.f32 0.0, %v3180
        %v3182 = vpop.f32.mrb[0].mxu0
        %3183 = vmatprep.mubr.f32.mxu0 0.0
        %3184 = vmatmul.mubr.f32.gmra.mrb[0].mxu0 %v3070
        %v3185 = vpop.f32.mrb[0].mxu0
        %v3186 = vadd.f32 0.0, %v3185
        %v3187 = vpop.f32.mrb[0].mxu0
        %3188 = vmatprep.mubr.f32.mxu0 0.0
        %3189 = vmatmul.mubr.f32.gmra.mrb[0].mxu0 %v3073
        %v3190 = vpop.f32.mrb[0].mxu0
        %v3191 = vadd.f32 0.0, %v3190
        %v3192 = vpop.f32.mrb[0].mxu0
        %3193 = vmatprep.mubr.f32.mxu0 0.0
        %3194 = vmatmul.mubr.f32.gmra.mrb[0].mxu0 %v3076
        %v3195 = vpop.f32.mrb[0].mxu0
        %v3196 = vadd.f32 0.0, %v3195
        %v3197 = vpop.f32.mrb[0].mxu0
        %3198 = vmatprep.mubr.f32.mxu0 0.0
        %3199 = vmatmul.mubr.f32.gmra.mrb[0].mxu0 %v3079
        %v3200 = vpop.f32.mrb[0].mxu0
        %v3201 = vadd.f32 0.0, %v3200
        %v3202 = vpop.f32.mrb[0].mxu0
        %3203 = vmatprep.mubr.f32.mxu0 0.0
        %3204 = vmatmul.mubr.f32.gmra.mrb[0].mxu0 %v3082
        %v3205 = vpop.f32.mrb[0].mxu0
        %v3206 = vadd.f32 0.0, %v3205
        %v3207 = vpop.f32.mrb[0].mxu0
        %3208 = vmatprep.mubr.f32.mxu0 0.0
        %3209 = vmatmul.mubr.f32.gmra.mrb[0].mxu0 %v3085
        %v3210 = vpop.f32.mrb[0].mxu0
        %v3211 = vadd.f32 0.0, %v3210
        %v3212 = vpop.f32.mrb[0].mxu0
        %3213 = vmatprep.mubr.f32.mxu0 0.0
        %3214 = vmatmul.mubr.f32.gmra.mrb[0].mxu0 %v3088
        %v3215 = vpop.f32.mrb[0].mxu0
        %v3216 = vadd.f32 0.0, %v3215
        %v3217 = vpop.f32.mrb[0].mxu0
        %3218 = vmatprep.mubr.f32.mxu0 0.0
        %3219 = vmatmul.mubr.f32.gmra.mrb[0].mxu0 %v3091
        %v3220 = vpop.f32.mrb[0].mxu0
        %v3221 = vadd.f32 0.0, %v3220
        %v3222 = vpop.f32.mrb[0].mxu0
        %3223 = vmatprep.mubr.f32.mxu0 0.0
        %3224 = vmatmul.mubr.f32.gmra.mrb[0].mxu0 %v3094
        %v3225 = vpop.f32.mrb[0].mxu0
        %v3226 = vadd.f32 0.0, %v3225
        %v3227 = vpop.f32.mrb[0].mxu0
        %3228 = vmatprep.mubr.f32.mxu0 0.0
        %3229 = vmatmul.mubr.f32.gmra.mrb[0].mxu0 %v3097
        %v3230 = vpop.f32.mrb[0].mxu0
        %v3231 = vadd.f32 0.0, %v3230
        %v3232 = vpop.f32.mrb[0].mxu0
        %3233 = vmatprep.mubr.f32.mxu0 0.0
        %3234 = vmatmul.mubr.f32.gmra.mrb[0].mxu0 %v3100
        %v3235 = vpop.f32.mrb[0].mxu0
        %v3236 = vadd.f32 0.0, %v3235
        %v3237 = vpop.f32.mrb[0].mxu0
        %3238 = vmatprep.mubr.f32.mxu0 0.0
        %3239 = vmatmul.mubr.f32.gmra.mrb[0].mxu0 %v3103
        %v3240 = vpop.f32.mrb[0].mxu0
        %v3241 = vadd.f32 0.0, %v3240
        %v3242 = vpop.f32.mrb[0].mxu0
        %3243 = vmatprep.mubr.f32.mxu0 0.0
        %3244 = vmatmul.mubr.f32.gmra.mrb[0].mxu0 %v3106
        %v3245 = vpop.f32.mrb[0].mxu0
        %v3246 = vadd.f32 0.0, %v3245
        %v3247 = vpop.f32.mrb[0].mxu0
        %3248 = vmatprep.mubr.f32.mxu0 0.0
        %3249 = vmatmul.mubr.f32.gmra.mrb[0].mxu0 %v3109
        %v3250 = vpop.f32.mrb[0].mxu0
        %v3251 = vadd.f32 0.0, %v3250
        %v3252 = vpop.f32.mrb[0].mxu0
        %3253 = vmatprep.mubr.f32.mxu0 0.0
        %3254 = vmatmul.mubr.f32.gmra.mrb[0].mxu0 %v3112
        %v3255 = vpop.f32.mrb[0].mxu0
        %v3256 = vadd.f32 0.0, %v3255
        %v3257 = vpop.f32.mrb[0].mxu0
        %3258 = vdwg.mxu0
        %v3260 = vsel %vm1737, %v3018, 0
        %v3263 = vsel %vm1737, %v3019, 0
        %v3266 = vsel %vm1737, %v3020, 0
        %v3269 = vsel %vm1737, %v3021, 0
        %v3272 = vsel %vm1737, %v3022, 0
        %v3275 = vsel %vm1737, %v3023, 0
        %v3278 = vsel %vm1737, %v3024, 0
        %v3281 = vsel %vm1737, %v3025, 0
        %v3284 = vsel %vm1737, %v3026, 0
        %v3287 = vsel %vm1737, %v3027, 0
        %v3290 = vsel %vm1737, %v3028, 0
        %v3293 = vsel %vm1737, %v3029, 0
        %v3296 = vsel %vm1737, %v3030, 0
        %v3299 = vsel %vm1737, %v3031, 0
        %v3302 = vsel %vm1737, %v3032, 0
        %v3305 = vsel %vm1737, %v3033, 0
        %3307 = vmatprep.subr.mxu0 0.0
        %3308 = vmatpush1.msra.mxu0 %v3034
        %3309 = vmatprep.subr.mxu0 0.0
        %3310 = vmatpush1.msra.mxu0 %v3035
        %3311 = vmatprep.subr.mxu0 0.0
        %3312 = vmatpush1.msra.mxu0 %v3036
        %3313 = vmatprep.subr.mxu0 0.0
        %3314 = vmatpush1.msra.mxu0 %v3037
        %3315 = vmatprep.subr.mxu0 0.0
        %3316 = vmatpush1.msra.mxu0 %v3038
        %3317 = vmatprep.subr.mxu0 0.0
        %3318 = vmatpush1.msra.mxu0 %v3039
        %3319 = vmatprep.subr.mxu0 0.0
        %3320 = vmatpush1.msra.mxu0 %v3040
        %3321 = vmatprep.subr.mxu0 0.0
        %3322 = vmatpush1.msra.mxu0 %v3041
        %3323 = vmatprep.subr.mxu0 0.0
        %3324 = vmatpush1.msra.mxu0 0.0
        %3325 = vmatprep.subr.mxu0 0.0
        %3326 = vmatpush1.msra.mxu0 0.0
        %3327 = vmatprep.subr.mxu0 0.0
        %3328 = vmatpush1.msra.mxu0 0.0
        %3329 = vmatprep.subr.mxu0 0.0
        %3330 = vmatpush1.msra.mxu0 0.0
        %3331 = vmatprep.subr.mxu0 0.0
        %3332 = vmatpush1.msra.mxu0 0.0
        %3333 = vmatprep.subr.mxu0 0.0
        %3334 = vmatpush1.msra.mxu0 0.0
        %3335 = vmatprep.subr.mxu0 0.0
        %3336 = vmatpush1.msra.mxu0 0.0
        %3337 = vmatprep.subr.mxu0 0.0
        %3338 = vmatpush1.msra.mxu0 0.0
        %3339 = vmatprep.subr.mxu0 0.0
        %3340 = vmatpush1.msra.mxu0 0.0
        %3341 = vmatprep.subr.mxu0 0.0
        %3342 = vmatpush1.msra.mxu0 0.0
        %3343 = vmatprep.subr.mxu0 0.0
        %3344 = vmatpush1.msra.mxu0 0.0
        %3345 = vmatprep.subr.mxu0 0.0
        %3346 = vmatpush1.msra.mxu0 0.0
        %3347 = vmatprep.subr.mxu0 0.0
        %3348 = vmatpush1.msra.mxu0 0.0
        %3349 = vmatprep.subr.mxu0 0.0
        %3350 = vmatpush1.msra.mxu0 0.0
        %3351 = vmatprep.subr.mxu0 0.0
        %3352 = vmatpush1.msra.mxu0 0.0
        %3353 = vmatprep.subr.mxu0 0.0
        %3354 = vmatpush1.msra.mxu0 0.0
        %3355 = vmatprep.subr.mxu0 0.0
        %3356 = vmatpush1.msra.mxu0 0.0
        %3357 = vmatprep.subr.mxu0 0.0
        %3358 = vmatpush1.msra.mxu0 0.0
        %3359 = vmatprep.subr.mxu0 0.0
        %3360 = vmatpush1.msra.mxu0 0.0
        %3361 = vmatprep.subr.mxu0 0.0
        %3362 = vmatpush1.msra.mxu0 0.0
        %3363 = vmatprep.subr.mxu0 0.0
        %3364 = vmatpush1.msra.mxu0 0.0
        %3365 = vmatprep.subr.mxu0 0.0
        %3366 = vmatpush1.msra.mxu0 0.0
        %3367 = vmatprep.subr.mxu0 0.0
        %3368 = vmatpush1.msra.mxu0 0.0
        %3369 = vmatprep.subr.mxu0 0.0
        %3370 = vmatpush1.msra.mxu0 0.0
        %3371 = vmatprep.mubr.f32.mxu0 0.0
        %3372 = vmatmul.mubr.f32.gmra.mrb[0].mxu0 %v3260
        %v3373 = vpop.f32.mrb[0].mxu0
        %v3374 = vadd.f32 %v3181, %v3373
        %v3375 = vpop.f32.mrb[0].mxu0
        %3376 = vmatprep.mubr.f32.mxu0 0.0
        %3377 = vmatmul.mubr.f32.gmra.mrb[0].mxu0 %v3263
        %v3378 = vpop.f32.mrb[0].mxu0
        %v3379 = vadd.f32 %v3186, %v3378
        %v3380 = vpop.f32.mrb[0].mxu0
        %3381 = vmatprep.mubr.f32.mxu0 0.0
        %3382 = vmatmul.mubr.f32.gmra.mrb[0].mxu0 %v3266
        %v3383 = vpop.f32.mrb[0].mxu0
        %v3384 = vadd.f32 %v3191, %v3383
        %v3385 = vpop.f32.mrb[0].mxu0
        %3386 = vmatprep.mubr.f32.mxu0 0.0
        %3387 = vmatmul.mubr.f32.gmra.mrb[0].mxu0 %v3269
        %v3388 = vpop.f32.mrb[0].mxu0
        %v3389 = vadd.f32 %v3196, %v3388
        %v3390 = vpop.f32.mrb[0].mxu0
        %3391 = vmatprep.mubr.f32.mxu0 0.0
        %3392 = vmatmul.mubr.f32.gmra.mrb[0].mxu0 %v3272
        %v3393 = vpop.f32.mrb[0].mxu0
        %v3394 = vadd.f32 %v3201, %v3393
        %v3395 = vpop.f32.mrb[0].mxu0
        %3396 = vmatprep.mubr.f32.mxu0 0.0
        %3397 = vmatmul.mubr.f32.gmra.mrb[0].mxu0 %v3275
        %v3398 = vpop.f32.mrb[0].mxu0
        %v3399 = vadd.f32 %v3206, %v3398
        %v3400 = vpop.f32.mrb[0].mxu0
        %3401 = vmatprep.mubr.f32.mxu0 0.0
        %3402 = vmatmul.mubr.f32.gmra.mrb[0].mxu0 %v3278
        %v3403 = vpop.f32.mrb[0].mxu0
        %v3404 = vadd.f32 %v3211, %v3403
        %v3405 = vpop.f32.mrb[0].mxu0
        %3406 = vmatprep.mubr.f32.mxu0 0.0
        %3407 = vmatmul.mubr.f32.gmra.mrb[0].mxu0 %v3281
        %v3408 = vpop.f32.mrb[0].mxu0
        %v3409 = vadd.f32 %v3216, %v3408
        %v3410 = vpop.f32.mrb[0].mxu0
        %3411 = vmatprep.mubr.f32.mxu0 0.0
        %3412 = vmatmul.mubr.f32.gmra.mrb[0].mxu0 %v3284
        %v3413 = vpop.f32.mrb[0].mxu0
        %v3414 = vadd.f32 %v3221, %v3413
        %v3415 = vpop.f32.mrb[0].mxu0
        %3416 = vmatprep.mubr.f32.mxu0 0.0
        %3417 = vmatmul.mubr.f32.gmra.mrb[0].mxu0 %v3287
        %v3418 = vpop.f32.mrb[0].mxu0
        %v3419 = vadd.f32 %v3226, %v3418
        %v3420 = vpop.f32.mrb[0].mxu0
        %3421 = vmatprep.mubr.f32.mxu0 0.0
        %3422 = vmatmul.mubr.f32.gmra.mrb[0].mxu0 %v3290
        %v3423 = vpop.f32.mrb[0].mxu0
        %v3424 = vadd.f32 %v3231, %v3423
        %v3425 = vpop.f32.mrb[0].mxu0
        %3426 = vmatprep.mubr.f32.mxu0 0.0
        %3427 = vmatmul.mubr.f32.gmra.mrb[0].mxu0 %v3293
        %v3428 = vpop.f32.mrb[0].mxu0
        %v3429 = vadd.f32 %v3236, %v3428
        %v3430 = vpop.f32.mrb[0].mxu0
        %3431 = vmatprep.mubr.f32.mxu0 0.0
        %3432 = vmatmul.mubr.f32.gmra.mrb[0].mxu0 %v3296
        %v3433 = vpop.f32.mrb[0].mxu0
        %v3434 = vadd.f32 %v3241, %v3433
        %v3435 = vpop.f32.mrb[0].mxu0
        %3436 = vmatprep.mubr.f32.mxu0 0.0
        %3437 = vmatmul.mubr.f32.gmra.mrb[0].mxu0 %v3299
        %v3438 = vpop.f32.mrb[0].mxu0
        %v3439 = vadd.f32 %v3246, %v3438
        %v3440 = vpop.f32.mrb[0].mxu0
        %3441 = vmatprep.mubr.f32.mxu0 0.0
        %3442 = vmatmul.mubr.f32.gmra.mrb[0].mxu0 %v3302
        %v3443 = vpop.f32.mrb[0].mxu0
        %v3444 = vadd.f32 %v3251, %v3443
        %v3445 = vpop.f32.mrb[0].mxu0
        %3446 = vmatprep.mubr.f32.mxu0 0.0
        %3447 = vmatmul.mubr.f32.gmra.mrb[0].mxu0 %v3305
        %v3448 = vpop.f32.mrb[0].mxu0
        %v3449 = vadd.f32 %v3256, %v3448
        %v3450 = vpop.f32.mrb[0].mxu0
        %3451 = vdwg.mxu0
        %v3452 = vld [vmem:[%s15] sm:$0x1]
        %v3454 = vlaneseq
        %v3455 = vshrl.u32 %v3454, 7
        %v3456 = vsub.s32 0, %v3455
        %v3457 = vrot.slane %v3452, %v3456
        %v3459 = vadd.f32 %v3374, %v3457
        %v3460 = vadd.f32 %v3379, %v3457
        %v3461 = vadd.f32 %v3384, %v3457
        %v3462 = vadd.f32 %v3389, %v3457
        %v3463 = vadd.f32 %v3394, %v3457
        %v3464 = vadd.f32 %v3399, %v3457
        %v3465 = vadd.f32 %v3404, %v3457
        %v3466 = vadd.f32 %v3409, %v3457
        %v3467 = vadd.f32 %v3414, %v3457
        %v3468 = vadd.f32 %v3419, %v3457
        %v3469 = vadd.f32 %v3424, %v3457
        %v3470 = vadd.f32 %v3429, %v3457
        %v3471 = vadd.f32 %v3434, %v3457
        %v3472 = vadd.f32 %v3439, %v3457
        %v3473 = vadd.f32 %v3444, %v3457
        %v3474 = vadd.f32 %v3449, %v3457
        %v3475 = vmax.f32 %v3459, 0.0
        %v3476 = vmax.f32 %v3460, 0.0
        %v3477 = vmax.f32 %v3461, 0.0
        %v3478 = vmax.f32 %v3462, 0.0
        %v3479 = vmax.f32 %v3463, 0.0
        %v3480 = vmax.f32 %v3464, 0.0
        %v3481 = vmax.f32 %v3465, 0.0
        %v3482 = vmax.f32 %v3466, 0.0
        %v3483 = vmax.f32 %v3467, 0.0
        %v3484 = vmax.f32 %v3468, 0.0
        %v3485 = vmax.f32 %v3469, 0.0
        %v3486 = vmax.f32 %v3470, 0.0
        %v3487 = vmax.f32 %v3471, 0.0
        %v3488 = vmax.f32 %v3472, 0.0
        %v3489 = vmax.f32 %v3473, 0.0
        %v3490 = vmax.f32 %v3474, 0.0
        %v3491 = vld [vmem:[%s16] sm:$0xff]
        %v3492 = vld [vmem:[%s16 + $0x8] sm:$0xff]
        %v3493 = vld [vmem:[%s16 + $0x10] sm:$0xff]
        %v3494 = vld [vmem:[%s16 + $0x18] sm:$0xff]
        %v3495 = vld [vmem:[%s16 + $0x20] sm:$0xff]
        %v3496 = vld [vmem:[%s16 + $0x28] sm:$0xff]
        %v3497 = vld [vmem:[%s16 + $0x30] sm:$0xff]
        %v3498 = vld [vmem:[%s16 + $0x38] sm:$0xff]
        %v3499 = vld [vmem:[%s17] sm:$0x1]
        %v3501 = vlaneseq
        %v3502 = vshrl.u32 %v3501, 7
        %v3503 = vsub.s32 0, %v3502
        %v3504 = vrot.slane %v3499, %v3503
        %v3507 = vsel %vm1737, %v3475, 0
        %v3510 = vsel %vm1737, %v3476, 0
        %v3513 = vsel %vm1737, %v3477, 0
        %v3516 = vsel %vm1737, %v3478, 0
        %v3519 = vsel %vm1737, %v3479, 0
        %v3522 = vsel %vm1737, %v3480, 0
        %v3525 = vsel %vm1737, %v3481, 0
        %v3528 = vsel %vm1737, %v3482, 0
        %v3531 = vsel %vm1737, %v3483, 0
        %v3534 = vsel %vm1737, %v3484, 0
        %v3537 = vsel %vm1737, %v3485, 0
        %v3540 = vsel %vm1737, %v3486, 0
        %v3543 = vsel %vm1737, %v3487, 0
        %v3546 = vsel %vm1737, %v3488, 0
        %v3549 = vsel %vm1737, %v3489, 0
        %v3552 = vsel %vm1737, %v3490, 0
        %3554 = vmatprep.subr.mxu0 0.0
        %3555 = vmatpush1.msra.mxu0 %v3491
        %3556 = vmatprep.subr.mxu0 0.0
        %3557 = vmatpush1.msra.mxu0 %v3492
        %3558 = vmatprep.subr.mxu0 0.0
        %3559 = vmatpush1.msra.mxu0 %v3493
        %3560 = vmatprep.subr.mxu0 0.0
        %3561 = vmatpush1.msra.mxu0 %v3494
        %3562 = vmatprep.subr.mxu0 0.0
        %3563 = vmatpush1.msra.mxu0 %v3495
        %3564 = vmatprep.subr.mxu0 0.0
        %3565 = vmatpush1.msra.mxu0 %v3496
        %3566 = vmatprep.subr.mxu0 0.0
        %3567 = vmatpush1.msra.mxu0 %v3497
        %3568 = vmatprep.subr.mxu0 0.0
        %3569 = vmatpush1.msra.mxu0 %v3498
        %3570 = vmatprep.subr.mxu0 0.0
        %3571 = vmatpush1.msra.mxu0 0.0
        %3572 = vmatprep.subr.mxu0 0.0
        %3573 = vmatpush1.msra.mxu0 0.0
        %3574 = vmatprep.subr.mxu0 0.0
        %3575 = vmatpush1.msra.mxu0 0.0
        %3576 = vmatprep.subr.mxu0 0.0
        %3577 = vmatpush1.msra.mxu0 0.0
        %3578 = vmatprep.subr.mxu0 0.0
        %3579 = vmatpush1.msra.mxu0 0.0
        %3580 = vmatprep.subr.mxu0 0.0
        %3581 = vmatpush1.msra.mxu0 0.0
        %3582 = vmatprep.subr.mxu0 0.0
        %3583 = vmatpush1.msra.mxu0 0.0
        %3584 = vmatprep.subr.mxu0 0.0
        %3585 = vmatpush1.msra.mxu0 0.0
        %3586 = vmatprep.subr.mxu0 0.0
        %3587 = vmatpush1.msra.mxu0 0.0
        %3588 = vmatprep.subr.mxu0 0.0
        %3589 = vmatpush1.msra.mxu0 0.0
        %3590 = vmatprep.subr.mxu0 0.0
        %3591 = vmatpush1.msra.mxu0 0.0
        %3592 = vmatprep.subr.mxu0 0.0
        %3593 = vmatpush1.msra.mxu0 0.0
        %3594 = vmatprep.subr.mxu0 0.0
        %3595 = vmatpush1.msra.mxu0 0.0
        %3596 = vmatprep.subr.mxu0 0.0
        %3597 = vmatpush1.msra.mxu0 0.0
        %3598 = vmatprep.subr.mxu0 0.0
        %3599 = vmatpush1.msra.mxu0 0.0
        %3600 = vmatprep.subr.mxu0 0.0
        %3601 = vmatpush1.msra.mxu0 0.0
        %3602 = vmatprep.subr.mxu0 0.0
        %3603 = vmatpush1.msra.mxu0 0.0
        %3604 = vmatprep.subr.mxu0 0.0
        %3605 = vmatpush1.msra.mxu0 0.0
        %3606 = vmatprep.subr.mxu0 0.0
        %3607 = vmatpush1.msra.mxu0 0.0
        %3608 = vmatprep.subr.mxu0 0.0
        %3609 = vmatpush1.msra.mxu0 0.0
        %3610 = vmatprep.subr.mxu0 0.0
        %3611 = vmatpush1.msra.mxu0 0.0
        %3612 = vmatprep.subr.mxu0 0.0
        %3613 = vmatpush1.msra.mxu0 0.0
        %3614 = vmatprep.subr.mxu0 0.0
        %3615 = vmatpush1.msra.mxu0 0.0
        %3616 = vmatprep.subr.mxu0 0.0
        %3617 = vmatpush1.msra.mxu0 0.0
        %3618 = vmatprep.mubr.f32.mxu0 0.0
        %3619 = vmatmul.mubr.f32.gmra.mrb[0].mxu0 %v3507
        %v3620 = vpop.f32.mrb[0].mxu0
        %v3621 = vadd.f32 %v3504, %v3620
        %v3622 = vpop.f32.mrb[0].mxu0
        %3623 = vmatprep.mubr.f32.mxu0 0.0
        %3624 = vmatmul.mubr.f32.gmra.mrb[0].mxu0 %v3510
        %v3625 = vpop.f32.mrb[0].mxu0
        %v3626 = vadd.f32 %v3504, %v3625
        %v3627 = vpop.f32.mrb[0].mxu0
        %3628 = vmatprep.mubr.f32.mxu0 0.0
        %3629 = vmatmul.mubr.f32.gmra.mrb[0].mxu0 %v3513
        %v3630 = vpop.f32.mrb[0].mxu0
        %v3631 = vadd.f32 %v3504, %v3630
        %v3632 = vpop.f32.mrb[0].mxu0
        %3633 = vmatprep.mubr.f32.mxu0 0.0
        %3634 = vmatmul.mubr.f32.gmra.mrb[0].mxu0 %v3516
        %v3635 = vpop.f32.mrb[0].mxu0
        %v3636 = vadd.f32 %v3504, %v3635
        %v3637 = vpop.f32.mrb[0].mxu0
        %3638 = vmatprep.mubr.f32.mxu0 0.0
        %3639 = vmatmul.mubr.f32.gmra.mrb[0].mxu0 %v3519
        %v3640 = vpop.f32.mrb[0].mxu0
        %v3641 = vadd.f32 %v3504, %v3640
        %v3642 = vpop.f32.mrb[0].mxu0
        %3643 = vmatprep.mubr.f32.mxu0 0.0
        %3644 = vmatmul.mubr.f32.gmra.mrb[0].mxu0 %v3522
        %v3645 = vpop.f32.mrb[0].mxu0
        %v3646 = vadd.f32 %v3504, %v3645
        %v3647 = vpop.f32.mrb[0].mxu0
        %3648 = vmatprep.mubr.f32.mxu0 0.0
        %3649 = vmatmul.mubr.f32.gmra.mrb[0].mxu0 %v3525
        %v3650 = vpop.f32.mrb[0].mxu0
        %v3651 = vadd.f32 %v3504, %v3650
        %v3652 = vpop.f32.mrb[0].mxu0
        %3653 = vmatprep.mubr.f32.mxu0 0.0
        %3654 = vmatmul.mubr.f32.gmra.mrb[0].mxu0 %v3528
        %v3655 = vpop.f32.mrb[0].mxu0
        %v3656 = vadd.f32 %v3504, %v3655
        %v3657 = vpop.f32.mrb[0].mxu0
        %3658 = vmatprep.mubr.f32.mxu0 0.0
        %3659 = vmatmul.mubr.f32.gmra.mrb[0].mxu0 %v3531
        %v3660 = vpop.f32.mrb[0].mxu0
        %v3661 = vadd.f32 %v3504, %v3660
        %v3662 = vpop.f32.mrb[0].mxu0
        %3663 = vmatprep.mubr.f32.mxu0 0.0
        %3664 = vmatmul.mubr.f32.gmra.mrb[0].mxu0 %v3534
        %v3665 = vpop.f32.mrb[0].mxu0
        %v3666 = vadd.f32 %v3504, %v3665
        %v3667 = vpop.f32.mrb[0].mxu0
        %3668 = vmatprep.mubr.f32.mxu0 0.0
        %3669 = vmatmul.mubr.f32.gmra.mrb[0].mxu0 %v3537
        %v3670 = vpop.f32.mrb[0].mxu0
        %v3671 = vadd.f32 %v3504, %v3670
        %v3672 = vpop.f32.mrb[0].mxu0
        %3673 = vmatprep.mubr.f32.mxu0 0.0
        %3674 = vmatmul.mubr.f32.gmra.mrb[0].mxu0 %v3540
        %v3675 = vpop.f32.mrb[0].mxu0
        %v3676 = vadd.f32 %v3504, %v3675
        %v3677 = vpop.f32.mrb[0].mxu0
        %3678 = vmatprep.mubr.f32.mxu0 0.0
        %3679 = vmatmul.mubr.f32.gmra.mrb[0].mxu0 %v3543
        %v3680 = vpop.f32.mrb[0].mxu0
        %v3681 = vadd.f32 %v3504, %v3680
        %v3682 = vpop.f32.mrb[0].mxu0
        %3683 = vmatprep.mubr.f32.mxu0 0.0
        %3684 = vmatmul.mubr.f32.gmra.mrb[0].mxu0 %v3546
        %v3685 = vpop.f32.mrb[0].mxu0
        %v3686 = vadd.f32 %v3504, %v3685
        %v3687 = vpop.f32.mrb[0].mxu0
        %3688 = vmatprep.mubr.f32.mxu0 0.0
        %3689 = vmatmul.mubr.f32.gmra.mrb[0].mxu0 %v3549
        %v3690 = vpop.f32.mrb[0].mxu0
        %v3691 = vadd.f32 %v3504, %v3690
        %v3692 = vpop.f32.mrb[0].mxu0
        %3693 = vmatprep.mubr.f32.mxu0 0.0
        %3694 = vmatmul.mubr.f32.gmra.mrb[0].mxu0 %v3552
        %v3695 = vpop.f32.mrb[0].mxu0
        %v3696 = vadd.f32 %v3504, %v3695
        %v3697 = vpop.f32.mrb[0].mxu0
        %3698 = vdwg.mxu0
        %3699 = vst.msk [vmem:[%s18] sm:$0xff] %vm1737, %v3621
        %3700 = vst.msk [vmem:[%s18 + $0x8] sm:$0xff] %vm1737, %v3626
        %3701 = vst.msk [vmem:[%s18 + $0x10] sm:$0xff] %vm1737, %v3631
        %3702 = vst.msk [vmem:[%s18 + $0x18] sm:$0xff] %vm1737, %v3636
        %3703 = vst.msk [vmem:[%s18 + $0x20] sm:$0xff] %vm1737, %v3641
        %3704 = vst.msk [vmem:[%s18 + $0x28] sm:$0xff] %vm1737, %v3646
        %3705 = vst.msk [vmem:[%s18 + $0x30] sm:$0xff] %vm1737, %v3651
        %3706 = vst.msk [vmem:[%s18 + $0x38] sm:$0xff] %vm1737, %v3656
        %3707 = vst.msk [vmem:[%s18 + $0x40] sm:$0xff] %vm1737, %v3661
        %3708 = vst.msk [vmem:[%s18 + $0x48] sm:$0xff] %vm1737, %v3666
        %3709 = vst.msk [vmem:[%s18 + $0x50] sm:$0xff] %vm1737, %v3671
        %3710 = vst.msk [vmem:[%s18 + $0x58] sm:$0xff] %vm1737, %v3676
        %3711 = vst.msk [vmem:[%s18 + $0x60] sm:$0xff] %vm1737, %v3681
        %3712 = vst.msk [vmem:[%s18 + $0x68] sm:$0xff] %vm1737, %v3686
        %3713 = vst.msk [vmem:[%s18 + $0x70] sm:$0xff] %vm1737, %v3691
        %3714 = vst.msk [vmem:[%s18 + $0x78] sm:$0xff] %vm1737, %v3696
      $region100: #{gnn_policy_forward.8} parent=91 // pred_fallthru
        _
      // Predicated region
      $region101: #{gnn_policy_forward.8} parent=91 // pred_check
        %p3715 = pneg %p430
      $region102: #{gnn_policy_forward.8} parent=91 // pred_check_branch
        %3717 = sbr.rel (%p3715) target = $region104
      $region103: #{gnn_policy_forward.8} parent=91 // pred_region
        _
      $region104: #{gnn_policy_forward.8} parent=91 // pred_fallthru
        _
      // Predicated region
      $region105: #{gnn_policy_forward.8} parent=91 // pred_check
        %p3718 = pneg %p430
      $region106: #{gnn_policy_forward.8} parent=91 // pred_check_branch
        %3720 = sbr.rel (%p3718) target = $region108
      $region107: #{gnn_policy_forward.8} parent=91 // pred_region
        _
      $region108: #{gnn_policy_forward.8} parent=91 // pred_fallthru
        _
    $region92: #{gnn_policy_forward.8} parent=5 // pred_fallthru
      _
    %p3721 = scmp.le.s32.totalorder 2, %s24
    // Predicated region
    $region109: #{gnn_policy_forward.8} parent=5 // pred_check
      %p3722 = pneg %p3721
    $region110: #{gnn_policy_forward.8} parent=5 // pred_check_branch
      %3724 = sbr.rel (%p3722) target = $region112
    $region111: #{gnn_policy_forward.8} parent=5 // pred_region
      %s3725 = ssub.s32 %s24, 2
    $region112: #{gnn_policy_forward.8} parent=5 // pred_fallthru
      _
  $region6: #{gnn_policy_forward.8} parent=0 // loop_footer
    %s28 = sadd.s32 1, %s24
  $region7: #{gnn_policy_forward.8} parent=0 // loop_footer_branch
    %23 = sbr.rel target = $region3
  $region8: #{gnn_policy_forward.8} parent=0 // loop_exit
    _

// kernel: gnn_policy_forward.11
$region0: #{gnn_policy_forward.11}
  #allocation0 [shape = 'u32[]', space=smem, size = 0x4, offset = 0x4, fixed_abs, tag = 'smem constant byte address 0x4 - core index']
  #allocation1 [shape = 'u32[144,128]{1,0:T(1,128)}', space=vmem, size = 0x12000, scoped, tag = 'internal scratch']
  #allocation2 [shape = 'bf16[128,64]{1,0:T(16,128)(2,1)}', space=vmem, size = 0x8000, scoped, tag = 'scratch operand']
  #allocation3 [shape = 'bf16[128,64]{1,0:T(16,128)(2,1)}', space=vmem, size = 0x8000, scoped, tag = 'scratch operand']
  %s0 = inlined_call_operand.vmem [shape: s32[1,768], index: 0, kind: input, shape index: {}]
  %s1 = inlined_call_operand.vmem [shape: s32[1,768], index: 1, kind: input, shape index: {}]
  %s2 = inlined_call_operand.vmem [shape: f32[128,64], index: 2, kind: input, shape index: {}]
  %s3 = inlined_call_operand.vmem [shape: f32[128,64], index: 3, kind: input, shape index: {}]
  %s4 = inlined_call_operand.vmem [shape: f32[64,64], index: 4, kind: input, shape index: {}]
  %s5 = inlined_call_operand.vmem [shape: f32[1,64], index: 5, kind: input, shape index: {}]
  %s6 = inlined_call_operand.vmem [shape: f32[64,64], index: 6, kind: input, shape index: {}]
  %s7 = inlined_call_operand.vmem [shape: f32[1,64], index: 7, kind: input, shape index: {}]
  %s8 = inlined_call_operand.vmem [shape: f32[1,64], index: 8, kind: input, shape index: {}]
  %s9 = inlined_call_operand.vmem [shape: f32[64,64], index: 9, kind: input, shape index: {}]
  %s10 = inlined_call_operand.vmem [shape: f32[1,64], index: 10, kind: input, shape index: {}]
  %s11 = inlined_call_operand.vmem [shape: f32[1,64], index: 11, kind: input, shape index: {}]
  %s12 = inlined_call_operand.vmem [shape: f32[1,64], index: 12, kind: input, shape index: {}]
  %s13 = inlined_call_operand.vmem [shape: f32[64,64], index: 13, kind: input, shape index: {}]
  %s14 = inlined_call_operand.vmem [shape: f32[64,64], index: 14, kind: input, shape index: {}]
  %s15 = inlined_call_operand.vmem [shape: f32[1,64], index: 15, kind: input, shape index: {}]
  %s16 = inlined_call_operand.vmem [shape: f32[64,64], index: 16, kind: input, shape index: {}]
  %s17 = inlined_call_operand.vmem [shape: f32[1,64], index: 17, kind: input, shape index: {}]
  %s18 = inlined_call_operand.vmem [shape: f32[64,64], index: 18, kind: input, shape index: {}]
  %s19 = inlined_call_operand.vmem [shape: f32[1,64], index: 19, kind: input, shape index: {}]
  %s20 = inlined_call_operand.vmem [shape: f32[1,64], index: 20, kind: input, shape index: {}]
  %s21 = inlined_call_operand.vmem [shape: f32[128,64], index: 21, kind: output, shape index: {0}]
  %s22 = inlined_call_operand.vmem [shape: f32[1,128], index: 22, kind: output, shape index: {1}]
  %23 = xla_tuple %s21, %s22
  %s24 = sld [smem:[#allocation0]]
  $region133: #{gnn_policy_forward.11} parent=0
    _
  %s26 = ssub.s32 1, %s24
  %s27 = scalar_select 0, %s26, %s24
  loop: start=0, step=1, limit=5
  $region2: #{gnn_policy_forward.11} parent=0 // loop_pre_header
    _
  $region3: #{gnn_policy_forward.11} parent=0 // loop_header
    %s29 = sphi 0, %s33
    %p30 = scmp.ge.s32.totalorder %s29, 5
    %s39 = sphi 0, %s41
    %s42 = sphi 0, %s39
    %s43 = sphi 0, %s42
    %s59 = sphi 0, %s43
    %s65 = sphi 0, %s67
    %s68 = sphi 0, %s65
    %s69 = sphi 0, %s68
    %s85 = sphi 0, %s69
    %s89 = sphi 0, %s89
    %s91 = sphi 0, %s89
    %s92 = sphi 0, %s91
    %s106 = sphi 0, %s92
    %s110 = sphi 0, %s110
    %s112 = sphi 0, %s110
    %s113 = sphi 0, %s112
    %s127 = sphi 0, %s113
    %s131 = sphi 0, %s131
    %s133 = sphi 0, %s131
    %s134 = sphi 0, %s133
    %s148 = sphi 0, %s134
    %s152 = sphi 0, %s152
    %s154 = sphi 0, %s152
    %s155 = sphi 0, %s154
    %s169 = sphi 0, %s155
    %s173 = sphi 0, %s173
    %s175 = sphi 0, %s173
    %s176 = sphi 0, %s175
    %s190 = sphi 0, %s176
    %s194 = sphi 0, %s194
    %s196 = sphi 0, %s194
    %s197 = sphi 0, %s196
    %s211 = sphi 0, %s197
    %s215 = sphi 0, %s215
    %s217 = sphi 0, %s215
    %s218 = sphi 0, %s217
    %s232 = sphi 0, %s218
    %s236 = sphi 0, %s236
    %s238 = sphi 0, %s236
    %s239 = sphi 0, %s238
    %s253 = sphi 0, %s239
    %s257 = sphi 0, %s257
    %s259 = sphi 0, %s257
    %s260 = sphi 0, %s259
    %s274 = sphi 0, %s260
    %s278 = sphi 0, %s278
    %s280 = sphi 0, %s278
    %s281 = sphi 0, %s280
    %s295 = sphi 0, %s281
    %s299 = sphi 0, %s299
    %s301 = sphi 0, %s299
    %s302 = sphi 0, %s301
    %s316 = sphi 0, %s302
    %s320 = sphi 0, %s320
    %s322 = sphi 0, %s320
    %s323 = sphi 0, %s322
    %s337 = sphi 0, %s323
    %s341 = sphi 0, %s341
    %s343 = sphi 0, %s341
    %s344 = sphi 0, %s343
    %s358 = sphi 0, %s344
    %s362 = sphi 0, %s362
    %s364 = sphi 0, %s362
    %s365 = sphi 0, %s364
    %s379 = sphi 0, %s365
    %s383 = sphi 0, %s383
    %s385 = sphi 0, %s383
    %s386 = sphi 0, %s385
    %s400 = sphi 0, %s386
    %s404 = sphi 0, %s404
    %s406 = sphi 0, %s404
    %s407 = sphi 0, %s406
    %s421 = sphi 0, %s407
    %s425 = sphi 0, %s425
    %s427 = sphi 0, %s425
    %s428 = sphi 0, %s427
    %s442 = sphi 0, %s428
    %s446 = sphi 0, %s446
    %s448 = sphi 0, %s446
    %s449 = sphi 0, %s448
    %s463 = sphi 0, %s449
    %s467 = sphi 0, %s467
    %s469 = sphi 0, %s467
    %s470 = sphi 0, %s469
    %s484 = sphi 0, %s470
    %s488 = sphi 0, %s488
    %s490 = sphi 0, %s488
    %s491 = sphi 0, %s490
    %s505 = sphi 0, %s491
    %s509 = sphi 0, %s509
    %s511 = sphi 0, %s509
    %s512 = sphi 0, %s511
    %s526 = sphi 0, %s512
  $region4: #{gnn_policy_forward.11} parent=0 // loop_header_branch
    %32 = sbr.rel (%p30) target = $region8
  $region5: #{gnn_policy_forward.11} parent=0 // loop_body
    %s34 = ssub.s32 %s29, 1
    %s35 = ssub.s32 %s29, 2
    %s36 = sadd.s32 %s29, 1
    %s37 = ssub.s32 %s29, %s36
    %p38 = scmp.eq.s32.totalorder %s37, 0
    %s40 = sadd.s32 %s39, 1
    %s41 = scalar_select %p38, %s39, %s40
    %p44 = pneg %p38
    %p45 = scmp.eq.s32.totalorder %s29, 2
    %p46 = por %p44, %p45
    %p47 = scmp.ne.s32.totalorder %s39, %s42
    %p48 = scmp.eq.s32.totalorder %s29, 0
    %p49 = por %p47, %p48
    %p50 = scmp.ne.s32.totalorder %s39, %s42
    %p51 = scmp.eq.s32.totalorder %s34, 2
    %p52 = por %p50, %p51
    %p53 = scmp.ne.s32.totalorder %s42, %s43
    %p54 = scmp.eq.s32.totalorder %s34, 0
    %p55 = por %p53, %p54
    %p56 = scmp.ne.s32.totalorder %s42, %s43
    %p57 = scmp.eq.s32.totalorder %s35, 2
    %p58 = por %p56, %p57
    %p60 = scmp.ne.s32.totalorder %s43, %s59
    %p61 = scmp.eq.s32.totalorder %s35, 0
    %p62 = por %p60, %p61
    %s63 = ssub.s32 %s29, %s36
    %p64 = scmp.eq.s32.totalorder %s63, 0
    %s66 = sadd.s32 %s65, 1
    %s67 = scalar_select %p64, %s65, %s66
    %p70 = pneg %p64
    %p71 = scmp.eq.s32.totalorder %s29, 2
    %p72 = por %p70, %p71
    %p73 = scmp.ne.s32.totalorder %s65, %s68
    %p74 = scmp.eq.s32.totalorder %s29, 0
    %p75 = por %p73, %p74
    %p76 = scmp.ne.s32.totalorder %s65, %s68
    %p77 = scmp.eq.s32.totalorder %s34, 2
    %p78 = por %p76, %p77
    %p79 = scmp.ne.s32.totalorder %s68, %s69
    %p80 = scmp.eq.s32.totalorder %s34, 0
    %p81 = por %p79, %p80
    %p82 = scmp.ne.s32.totalorder %s68, %s69
    %p83 = scmp.eq.s32.totalorder %s35, 2
    %p84 = por %p82, %p83
    %p86 = scmp.ne.s32.totalorder %s69, %s85
    %p87 = scmp.eq.s32.totalorder %s35, 0
    %p88 = por %p86, %p87
    %s90 = sadd.s32 %s89, 1
    %p93 = scmp.eq.s32.totalorder %s29, 2
    %p94 = scmp.ne.s32.totalorder %s89, %s91
    %p95 = scmp.eq.s32.totalorder %s29, 0
    %p96 = por %p94, %p95
    %p97 = scmp.ne.s32.totalorder %s89, %s91
    %p98 = scmp.eq.s32.totalorder %s34, 2
    %p99 = por %p97, %p98
    %p100 = scmp.ne.s32.totalorder %s91, %s92
    %p101 = scmp.eq.s32.totalorder %s34, 0
    %p102 = por %p100, %p101
    %p103 = scmp.ne.s32.totalorder %s91, %s92
    %p104 = scmp.eq.s32.totalorder %s35, 2
    %p105 = por %p103, %p104
    %p107 = scmp.ne.s32.totalorder %s92, %s106
    %p108 = scmp.eq.s32.totalorder %s35, 0
    %p109 = por %p107, %p108
    %s111 = sadd.s32 %s110, 1
    %p114 = scmp.eq.s32.totalorder %s29, 2
    %p115 = scmp.ne.s32.totalorder %s110, %s112
    %p116 = scmp.eq.s32.totalorder %s29, 0
    %p117 = por %p115, %p116
    %p118 = scmp.ne.s32.totalorder %s110, %s112
    %p119 = scmp.eq.s32.totalorder %s34, 2
    %p120 = por %p118, %p119
    %p121 = scmp.ne.s32.totalorder %s112, %s113
    %p122 = scmp.eq.s32.totalorder %s34, 0
    %p123 = por %p121, %p122
    %p124 = scmp.ne.s32.totalorder %s112, %s113
    %p125 = scmp.eq.s32.totalorder %s35, 2
    %p126 = por %p124, %p125
    %p128 = scmp.ne.s32.totalorder %s113, %s127
    %p129 = scmp.eq.s32.totalorder %s35, 0
    %p130 = por %p128, %p129
    %s132 = sadd.s32 %s131, 1
    %p135 = scmp.eq.s32.totalorder %s29, 2
    %p136 = scmp.ne.s32.totalorder %s131, %s133
    %p137 = scmp.eq.s32.totalorder %s29, 0
    %p138 = por %p136, %p137
    %p139 = scmp.ne.s32.totalorder %s131, %s133
    %p140 = scmp.eq.s32.totalorder %s34, 2
    %p141 = por %p139, %p140
    %p142 = scmp.ne.s32.totalorder %s133, %s134
    %p143 = scmp.eq.s32.totalorder %s34, 0
    %p144 = por %p142, %p143
    %p145 = scmp.ne.s32.totalorder %s133, %s134
    %p146 = scmp.eq.s32.totalorder %s35, 2
    %p147 = por %p145, %p146
    %p149 = scmp.ne.s32.totalorder %s134, %s148
    %p150 = scmp.eq.s32.totalorder %s35, 0
    %p151 = por %p149, %p150
    %s153 = sadd.s32 %s152, 1
    %p156 = scmp.eq.s32.totalorder %s29, 2
    %p157 = scmp.ne.s32.totalorder %s152, %s154
    %p158 = scmp.eq.s32.totalorder %s29, 0
    %p159 = por %p157, %p158
    %p160 = scmp.ne.s32.totalorder %s152, %s154
    %p161 = scmp.eq.s32.totalorder %s34, 2
    %p162 = por %p160, %p161
    %p163 = scmp.ne.s32.totalorder %s154, %s155
    %p164 = scmp.eq.s32.totalorder %s34, 0
    %p165 = por %p163, %p164
    %p166 = scmp.ne.s32.totalorder %s154, %s155
    %p167 = scmp.eq.s32.totalorder %s35, 2
    %p168 = por %p166, %p167
    %p170 = scmp.ne.s32.totalorder %s155, %s169
    %p171 = scmp.eq.s32.totalorder %s35, 0
    %p172 = por %p170, %p171
    %s174 = sadd.s32 %s173, 1
    %p177 = scmp.eq.s32.totalorder %s29, 2
    %p178 = scmp.ne.s32.totalorder %s173, %s175
    %p179 = scmp.eq.s32.totalorder %s29, 0
    %p180 = por %p178, %p179
    %p181 = scmp.ne.s32.totalorder %s173, %s175
    %p182 = scmp.eq.s32.totalorder %s34, 2
    %p183 = por %p181, %p182
    %p184 = scmp.ne.s32.totalorder %s175, %s176
    %p185 = scmp.eq.s32.totalorder %s34, 0
    %p186 = por %p184, %p185
    %p187 = scmp.ne.s32.totalorder %s175, %s176
    %p188 = scmp.eq.s32.totalorder %s35, 2
    %p189 = por %p187, %p188
    %p191 = scmp.ne.s32.totalorder %s176, %s190
    %p192 = scmp.eq.s32.totalorder %s35, 0
    %p193 = por %p191, %p192
    %s195 = sadd.s32 %s194, 1
    %p198 = scmp.eq.s32.totalorder %s29, 2
    %p199 = scmp.ne.s32.totalorder %s194, %s196
    %p200 = scmp.eq.s32.totalorder %s29, 0
    %p201 = por %p199, %p200
    %p202 = scmp.ne.s32.totalorder %s194, %s196
    %p203 = scmp.eq.s32.totalorder %s34, 2
    %p204 = por %p202, %p203
    %p205 = scmp.ne.s32.totalorder %s196, %s197
    %p206 = scmp.eq.s32.totalorder %s34, 0
    %p207 = por %p205, %p206
    %p208 = scmp.ne.s32.totalorder %s196, %s197
    %p209 = scmp.eq.s32.totalorder %s35, 2
    %p210 = por %p208, %p209
    %p212 = scmp.ne.s32.totalorder %s197, %s211
    %p213 = scmp.eq.s32.totalorder %s35, 0
    %p214 = por %p212, %p213
    %s216 = sadd.s32 %s215, 1
    %p219 = scmp.eq.s32.totalorder %s29, 2
    %p220 = scmp.ne.s32.totalorder %s215, %s217
    %p221 = scmp.eq.s32.totalorder %s29, 0
    %p222 = por %p220, %p221
    %p223 = scmp.ne.s32.totalorder %s215, %s217
    %p224 = scmp.eq.s32.totalorder %s34, 2
    %p225 = por %p223, %p224
    %p226 = scmp.ne.s32.totalorder %s217, %s218
    %p227 = scmp.eq.s32.totalorder %s34, 0
    %p228 = por %p226, %p227
    %p229 = scmp.ne.s32.totalorder %s217, %s218
    %p230 = scmp.eq.s32.totalorder %s35, 2
    %p231 = por %p229, %p230
    %p233 = scmp.ne.s32.totalorder %s218, %s232
    %p234 = scmp.eq.s32.totalorder %s35, 0
    %p235 = por %p233, %p234
    %s237 = sadd.s32 %s236, 1
    %p240 = scmp.eq.s32.totalorder %s29, 2
    %p241 = scmp.ne.s32.totalorder %s236, %s238
    %p242 = scmp.eq.s32.totalorder %s29, 0
    %p243 = por %p241, %p242
    %p244 = scmp.ne.s32.totalorder %s236, %s238
    %p245 = scmp.eq.s32.totalorder %s34, 2
    %p246 = por %p244, %p245
    %p247 = scmp.ne.s32.totalorder %s238, %s239
    %p248 = scmp.eq.s32.totalorder %s34, 0
    %p249 = por %p247, %p248
    %p250 = scmp.ne.s32.totalorder %s238, %s239
    %p251 = scmp.eq.s32.totalorder %s35, 2
    %p252 = por %p250, %p251
    %p254 = scmp.ne.s32.totalorder %s239, %s253
    %p255 = scmp.eq.s32.totalorder %s35, 0
    %p256 = por %p254, %p255
    %s258 = sadd.s32 %s257, 1
    %p261 = scmp.eq.s32.totalorder %s29, 2
    %p262 = scmp.ne.s32.totalorder %s257, %s259
    %p263 = scmp.eq.s32.totalorder %s29, 0
    %p264 = por %p262, %p263
    %p265 = scmp.ne.s32.totalorder %s257, %s259
    %p266 = scmp.eq.s32.totalorder %s34, 2
    %p267 = por %p265, %p266
    %p268 = scmp.ne.s32.totalorder %s259, %s260
    %p269 = scmp.eq.s32.totalorder %s34, 0
    %p270 = por %p268, %p269
    %p271 = scmp.ne.s32.totalorder %s259, %s260
    %p272 = scmp.eq.s32.totalorder %s35, 2
    %p273 = por %p271, %p272
    %p275 = scmp.ne.s32.totalorder %s260, %s274
    %p276 = scmp.eq.s32.totalorder %s35, 0
    %p277 = por %p275, %p276
    %s279 = sadd.s32 %s278, 1
    %p282 = scmp.eq.s32.totalorder %s29, 2
    %p283 = scmp.ne.s32.totalorder %s278, %s280
    %p284 = scmp.eq.s32.totalorder %s29, 0
    %p285 = por %p283, %p284
    %p286 = scmp.ne.s32.totalorder %s278, %s280
    %p287 = scmp.eq.s32.totalorder %s34, 2
    %p288 = por %p286, %p287
    %p289 = scmp.ne.s32.totalorder %s280, %s281
    %p290 = scmp.eq.s32.totalorder %s34, 0
    %p291 = por %p289, %p290
    %p292 = scmp.ne.s32.totalorder %s280, %s281
    %p293 = scmp.eq.s32.totalorder %s35, 2
    %p294 = por %p292, %p293
    %p296 = scmp.ne.s32.totalorder %s281, %s295
    %p297 = scmp.eq.s32.totalorder %s35, 0
    %p298 = por %p296, %p297
    %s300 = sadd.s32 %s299, 1
    %p303 = scmp.eq.s32.totalorder %s29, 2
    %p304 = scmp.ne.s32.totalorder %s299, %s301
    %p305 = scmp.eq.s32.totalorder %s29, 0
    %p306 = por %p304, %p305
    %p307 = scmp.ne.s32.totalorder %s299, %s301
    %p308 = scmp.eq.s32.totalorder %s34, 2
    %p309 = por %p307, %p308
    %p310 = scmp.ne.s32.totalorder %s301, %s302
    %p311 = scmp.eq.s32.totalorder %s34, 0
    %p312 = por %p310, %p311
    %p313 = scmp.ne.s32.totalorder %s301, %s302
    %p314 = scmp.eq.s32.totalorder %s35, 2
    %p315 = por %p313, %p314
    %p317 = scmp.ne.s32.totalorder %s302, %s316
    %p318 = scmp.eq.s32.totalorder %s35, 0
    %p319 = por %p317, %p318
    %s321 = sadd.s32 %s320, 1
    %p324 = scmp.eq.s32.totalorder %s29, 2
    %p325 = scmp.ne.s32.totalorder %s320, %s322
    %p326 = scmp.eq.s32.totalorder %s29, 0
    %p327 = por %p325, %p326
    %p328 = scmp.ne.s32.totalorder %s320, %s322
    %p329 = scmp.eq.s32.totalorder %s34, 2
    %p330 = por %p328, %p329
    %p331 = scmp.ne.s32.totalorder %s322, %s323
    %p332 = scmp.eq.s32.totalorder %s34, 0
    %p333 = por %p331, %p332
    %p334 = scmp.ne.s32.totalorder %s322, %s323
    %p335 = scmp.eq.s32.totalorder %s35, 2
    %p336 = por %p334, %p335
    %p338 = scmp.ne.s32.totalorder %s323, %s337
    %p339 = scmp.eq.s32.totalorder %s35, 0
    %p340 = por %p338, %p339
    %s342 = sadd.s32 %s341, 1
    %p345 = scmp.eq.s32.totalorder %s29, 2
    %p346 = scmp.ne.s32.totalorder %s341, %s343
    %p347 = scmp.eq.s32.totalorder %s29, 0
    %p348 = por %p346, %p347
    %p349 = scmp.ne.s32.totalorder %s341, %s343
    %p350 = scmp.eq.s32.totalorder %s34, 2
    %p351 = por %p349, %p350
    %p352 = scmp.ne.s32.totalorder %s343, %s344
    %p353 = scmp.eq.s32.totalorder %s34, 0
    %p354 = por %p352, %p353
    %p355 = scmp.ne.s32.totalorder %s343, %s344
    %p356 = scmp.eq.s32.totalorder %s35, 2
    %p357 = por %p355, %p356
    %p359 = scmp.ne.s32.totalorder %s344, %s358
    %p360 = scmp.eq.s32.totalorder %s35, 0
    %p361 = por %p359, %p360
    %s363 = sadd.s32 %s362, 1
    %p366 = scmp.eq.s32.totalorder %s29, 2
    %p367 = scmp.ne.s32.totalorder %s362, %s364
    %p368 = scmp.eq.s32.totalorder %s29, 0
    %p369 = por %p367, %p368
    %p370 = scmp.ne.s32.totalorder %s362, %s364
    %p371 = scmp.eq.s32.totalorder %s34, 2
    %p372 = por %p370, %p371
    %p373 = scmp.ne.s32.totalorder %s364, %s365
    %p374 = scmp.eq.s32.totalorder %s34, 0
    %p375 = por %p373, %p374
    %p376 = scmp.ne.s32.totalorder %s364, %s365
    %p377 = scmp.eq.s32.totalorder %s35, 2
    %p378 = por %p376, %p377
    %p380 = scmp.ne.s32.totalorder %s365, %s379
    %p381 = scmp.eq.s32.totalorder %s35, 0
    %p382 = por %p380, %p381
    %s384 = sadd.s32 %s383, 1
    %p387 = scmp.eq.s32.totalorder %s29, 2
    %p388 = scmp.ne.s32.totalorder %s383, %s385
    %p389 = scmp.eq.s32.totalorder %s29, 0
    %p390 = por %p388, %p389
    %p391 = scmp.ne.s32.totalorder %s383, %s385
    %p392 = scmp.eq.s32.totalorder %s34, 2
    %p393 = por %p391, %p392
    %p394 = scmp.ne.s32.totalorder %s385, %s386
    %p395 = scmp.eq.s32.totalorder %s34, 0
    %p396 = por %p394, %p395
    %p397 = scmp.ne.s32.totalorder %s385, %s386
    %p398 = scmp.eq.s32.totalorder %s35, 2
    %p399 = por %p397, %p398
    %p401 = scmp.ne.s32.totalorder %s386, %s400
    %p402 = scmp.eq.s32.totalorder %s35, 0
    %p403 = por %p401, %p402
    %s405 = sadd.s32 %s404, 1
    %p408 = scmp.eq.s32.totalorder %s29, 2
    %p409 = scmp.ne.s32.totalorder %s404, %s406
    %p410 = scmp.eq.s32.totalorder %s29, 0
    %p411 = por %p409, %p410
    %p412 = scmp.ne.s32.totalorder %s404, %s406
    %p413 = scmp.eq.s32.totalorder %s34, 2
    %p414 = por %p412, %p413
    %p415 = scmp.ne.s32.totalorder %s406, %s407
    %p416 = scmp.eq.s32.totalorder %s34, 0
    %p417 = por %p415, %p416
    %p418 = scmp.ne.s32.totalorder %s406, %s407
    %p419 = scmp.eq.s32.totalorder %s35, 2
    %p420 = por %p418, %p419
    %p422 = scmp.ne.s32.totalorder %s407, %s421
    %p423 = scmp.eq.s32.totalorder %s35, 0
    %p424 = por %p422, %p423
    %s426 = sadd.s32 %s425, 1
    %p429 = scmp.eq.s32.totalorder %s29, 2
    %p430 = scmp.ne.s32.totalorder %s425, %s427
    %p431 = scmp.eq.s32.totalorder %s29, 0
    %p432 = por %p430, %p431
    %p433 = scmp.ne.s32.totalorder %s425, %s427
    %p434 = scmp.eq.s32.totalorder %s34, 2
    %p435 = por %p433, %p434
    %p436 = scmp.ne.s32.totalorder %s427, %s428
    %p437 = scmp.eq.s32.totalorder %s34, 0
    %p438 = por %p436, %p437
    %p439 = scmp.ne.s32.totalorder %s427, %s428
    %p440 = scmp.eq.s32.totalorder %s35, 2
    %p441 = por %p439, %p440
    %p443 = scmp.ne.s32.totalorder %s428, %s442
    %p444 = scmp.eq.s32.totalorder %s35, 0
    %p445 = por %p443, %p444
    %s447 = sadd.s32 %s446, 1
    %p450 = scmp.eq.s32.totalorder %s29, 2
    %p451 = scmp.ne.s32.totalorder %s446, %s448
    %p452 = scmp.eq.s32.totalorder %s29, 0
    %p453 = por %p451, %p452
    %p454 = scmp.ne.s32.totalorder %s446, %s448
    %p455 = scmp.eq.s32.totalorder %s34, 2
    %p456 = por %p454, %p455
    %p457 = scmp.ne.s32.totalorder %s448, %s449
    %p458 = scmp.eq.s32.totalorder %s34, 0
    %p459 = por %p457, %p458
    %p460 = scmp.ne.s32.totalorder %s448, %s449
    %p461 = scmp.eq.s32.totalorder %s35, 2
    %p462 = por %p460, %p461
    %p464 = scmp.ne.s32.totalorder %s449, %s463
    %p465 = scmp.eq.s32.totalorder %s35, 0
    %p466 = por %p464, %p465
    %s468 = sadd.s32 %s467, 1
    %p471 = scmp.eq.s32.totalorder %s29, 2
    %p472 = scmp.ne.s32.totalorder %s467, %s469
    %p473 = scmp.eq.s32.totalorder %s29, 0
    %p474 = por %p472, %p473
    %p475 = scmp.ne.s32.totalorder %s467, %s469
    %p476 = scmp.eq.s32.totalorder %s34, 2
    %p477 = por %p475, %p476
    %p478 = scmp.ne.s32.totalorder %s469, %s470
    %p479 = scmp.eq.s32.totalorder %s34, 0
    %p480 = por %p478, %p479
    %p481 = scmp.ne.s32.totalorder %s469, %s470
    %p482 = scmp.eq.s32.totalorder %s35, 2
    %p483 = por %p481, %p482
    %p485 = scmp.ne.s32.totalorder %s470, %s484
    %p486 = scmp.eq.s32.totalorder %s35, 0
    %p487 = por %p485, %p486
    %s489 = sadd.s32 %s488, 1
    %p492 = scmp.eq.s32.totalorder %s29, 2
    %p493 = scmp.ne.s32.totalorder %s488, %s490
    %p494 = scmp.eq.s32.totalorder %s29, 0
    %p495 = por %p493, %p494
    %p496 = scmp.ne.s32.totalorder %s488, %s490
    %p497 = scmp.eq.s32.totalorder %s34, 2
    %p498 = por %p496, %p497
    %p499 = scmp.ne.s32.totalorder %s490, %s491
    %p500 = scmp.eq.s32.totalorder %s34, 0
    %p501 = por %p499, %p500
    %p502 = scmp.ne.s32.totalorder %s490, %s491
    %p503 = scmp.eq.s32.totalorder %s35, 2
    %p504 = por %p502, %p503
    %p506 = scmp.ne.s32.totalorder %s491, %s505
    %p507 = scmp.eq.s32.totalorder %s35, 0
    %p508 = por %p506, %p507
    %s510 = sadd.s32 %s509, 1
    %p513 = scmp.eq.s32.totalorder %s29, 2
    %p514 = scmp.ne.s32.totalorder %s509, %s511
    %p515 = scmp.eq.s32.totalorder %s29, 0
    %p516 = por %p514, %p515
    %p517 = scmp.ne.s32.totalorder %s509, %s511
    %p518 = scmp.eq.s32.totalorder %s34, 2
    %p519 = por %p517, %p518
    %p520 = scmp.ne.s32.totalorder %s511, %s512
    %p521 = scmp.eq.s32.totalorder %s34, 0
    %p522 = por %p520, %p521
    %p523 = scmp.ne.s32.totalorder %s511, %s512
    %p524 = scmp.eq.s32.totalorder %s35, 2
    %p525 = por %p523, %p524
    %p527 = scmp.ne.s32.totalorder %s512, %s526
    %p528 = scmp.eq.s32.totalorder %s35, 0
    %p529 = por %p527, %p528
    %p530 = scmp.le.s32.totalorder 1, %s29
    %p531 = scmp.lt.s32.totalorder %s29, 4
    %p532 = pnand %p530, %p531
    %p533 = pneg %p532
    // Predicated region
    $region9: #{gnn_policy_forward.11} parent=5 // pred_check
      _
    $region10: #{gnn_policy_forward.11} parent=5 // pred_check_branch
      %535 = sbr.rel (%p532) target = $region12
    $region11: #{gnn_policy_forward.11} parent=5 // pred_region
      %s536 = ssub.s32 %s29, 1
      // Predicated region
      $region13: #{gnn_policy_forward.11} parent=11 // pred_check
        %p537 = pneg %p102
      $region14: #{gnn_policy_forward.11} parent=11 // pred_check_branch
        %539 = sbr.rel (%p537) target = $region16
      $region15: #{gnn_policy_forward.11} parent=11 // pred_region
        _
      $region16: #{gnn_policy_forward.11} parent=11 // pred_fallthru
        _
      // Predicated region
      $region17: #{gnn_policy_forward.11} parent=11 // pred_check
        %p540 = pneg %p123
      $region18: #{gnn_policy_forward.11} parent=11 // pred_check_branch
        %542 = sbr.rel (%p540) target = $region20
      $region19: #{gnn_policy_forward.11} parent=11 // pred_region
        _
      $region20: #{gnn_policy_forward.11} parent=11 // pred_fallthru
        _
      // Predicated region
      $region21: #{gnn_policy_forward.11} parent=11 // pred_check
        %p543 = pneg %p144
      $region22: #{gnn_policy_forward.11} parent=11 // pred_check_branch
        %545 = sbr.rel (%p543) target = $region24
      $region23: #{gnn_policy_forward.11} parent=11 // pred_region
        _
      $region24: #{gnn_policy_forward.11} parent=11 // pred_fallthru
        _
      // Predicated region
      $region25: #{gnn_policy_forward.11} parent=11 // pred_check
        %p546 = pneg %p165
      $region26: #{gnn_policy_forward.11} parent=11 // pred_check_branch
        %548 = sbr.rel (%p546) target = $region28
      $region27: #{gnn_policy_forward.11} parent=11 // pred_region
        _
      $region28: #{gnn_policy_forward.11} parent=11 // pred_fallthru
        _
      // Predicated region
      $region29: #{gnn_policy_forward.11} parent=11 // pred_check
        %p549 = pneg %p186
      $region30: #{gnn_policy_forward.11} parent=11 // pred_check_branch
        %551 = sbr.rel (%p549) target = $region32
      $region31: #{gnn_policy_forward.11} parent=11 // pred_region
        _
      $region32: #{gnn_policy_forward.11} parent=11 // pred_fallthru
        _
      // Predicated region
      $region33: #{gnn_policy_forward.11} parent=11 // pred_check
        %p552 = pneg %p207
      $region34: #{gnn_policy_forward.11} parent=11 // pred_check_branch
        %554 = sbr.rel (%p552) target = $region36
      $region35: #{gnn_policy_forward.11} parent=11 // pred_region
        _
      $region36: #{gnn_policy_forward.11} parent=11 // pred_fallthru
        _
      // Predicated region
      $region37: #{gnn_policy_forward.11} parent=11 // pred_check
        %p555 = pneg %p228
      $region38: #{gnn_policy_forward.11} parent=11 // pred_check_branch
        %557 = sbr.rel (%p555) target = $region40
      $region39: #{gnn_policy_forward.11} parent=11 // pred_region
        _
      $region40: #{gnn_policy_forward.11} parent=11 // pred_fallthru
        _
      // Predicated region
      $region41: #{gnn_policy_forward.11} parent=11 // pred_check
        %p558 = pneg %p249
      $region42: #{gnn_policy_forward.11} parent=11 // pred_check_branch
        %560 = sbr.rel (%p558) target = $region44
      $region43: #{gnn_policy_forward.11} parent=11 // pred_region
        _
      $region44: #{gnn_policy_forward.11} parent=11 // pred_fallthru
        _
      // Predicated region
      $region45: #{gnn_policy_forward.11} parent=11 // pred_check
        %p561 = pneg %p270
      $region46: #{gnn_policy_forward.11} parent=11 // pred_check_branch
        %563 = sbr.rel (%p561) target = $region48
      $region47: #{gnn_policy_forward.11} parent=11 // pred_region
        _
      $region48: #{gnn_policy_forward.11} parent=11 // pred_fallthru
        _
      // Predicated region
      $region49: #{gnn_policy_forward.11} parent=11 // pred_check
        %p564 = pneg %p291
      $region50: #{gnn_policy_forward.11} parent=11 // pred_check_branch
        %566 = sbr.rel (%p564) target = $region52
      $region51: #{gnn_policy_forward.11} parent=11 // pred_region
        _
      $region52: #{gnn_policy_forward.11} parent=11 // pred_fallthru
        _
      // Predicated region
      $region53: #{gnn_policy_forward.11} parent=11 // pred_check
        %p567 = pneg %p312
      $region54: #{gnn_policy_forward.11} parent=11 // pred_check_branch
        %569 = sbr.rel (%p567) target = $region56
      $region55: #{gnn_policy_forward.11} parent=11 // pred_region
        _
      $region56: #{gnn_policy_forward.11} parent=11 // pred_fallthru
        _
      // Predicated region
      $region57: #{gnn_policy_forward.11} parent=11 // pred_check
        %p570 = pneg %p333
      $region58: #{gnn_policy_forward.11} parent=11 // pred_check_branch
        %572 = sbr.rel (%p570) target = $region60
      $region59: #{gnn_policy_forward.11} parent=11 // pred_region
        _
      $region60: #{gnn_policy_forward.11} parent=11 // pred_fallthru
        _
      // Predicated region
      $region61: #{gnn_policy_forward.11} parent=11 // pred_check
        %p573 = pneg %p354
      $region62: #{gnn_policy_forward.11} parent=11 // pred_check_branch
        %575 = sbr.rel (%p573) target = $region64
      $region63: #{gnn_policy_forward.11} parent=11 // pred_region
        _
      $region64: #{gnn_policy_forward.11} parent=11 // pred_fallthru
        _
      // Predicated region
      $region65: #{gnn_policy_forward.11} parent=11 // pred_check
        %p576 = pneg %p375
      $region66: #{gnn_policy_forward.11} parent=11 // pred_check_branch
        %578 = sbr.rel (%p576) target = $region68
      $region67: #{gnn_policy_forward.11} parent=11 // pred_region
        _
      $region68: #{gnn_policy_forward.11} parent=11 // pred_fallthru
        _
      // Predicated region
      $region69: #{gnn_policy_forward.11} parent=11 // pred_check
        %p579 = pneg %p396
      $region70: #{gnn_policy_forward.11} parent=11 // pred_check_branch
        %581 = sbr.rel (%p579) target = $region72
      $region71: #{gnn_policy_forward.11} parent=11 // pred_region
        _
      $region72: #{gnn_policy_forward.11} parent=11 // pred_fallthru
        _
      // Predicated region
      $region73: #{gnn_policy_forward.11} parent=11 // pred_check
        %p582 = pneg %p417
      $region74: #{gnn_policy_forward.11} parent=11 // pred_check_branch
        %584 = sbr.rel (%p582) target = $region76
      $region75: #{gnn_policy_forward.11} parent=11 // pred_region
        _
      $region76: #{gnn_policy_forward.11} parent=11 // pred_fallthru
        _
      // Predicated region
      $region77: #{gnn_policy_forward.11} parent=11 // pred_check
        %p585 = pneg %p438
      $region78: #{gnn_policy_forward.11} parent=11 // pred_check_branch
        %587 = sbr.rel (%p585) target = $region80
      $region79: #{gnn_policy_forward.11} parent=11 // pred_region
        _
      $region80: #{gnn_policy_forward.11} parent=11 // pred_fallthru
        _
      // Predicated region
      $region81: #{gnn_policy_forward.11} parent=11 // pred_check
        %p588 = pneg %p459
      $region82: #{gnn_policy_forward.11} parent=11 // pred_check_branch
        %590 = sbr.rel (%p588) target = $region84
      $region83: #{gnn_policy_forward.11} parent=11 // pred_region
        _
      $region84: #{gnn_policy_forward.11} parent=11 // pred_fallthru
        _
      // Predicated region
      $region85: #{gnn_policy_forward.11} parent=11 // pred_check
        %p591 = pneg %p480
      $region86: #{gnn_policy_forward.11} parent=11 // pred_check_branch
        %593 = sbr.rel (%p591) target = $region88
      $region87: #{gnn_policy_forward.11} parent=11 // pred_region
        _
      $region88: #{gnn_policy_forward.11} parent=11 // pred_fallthru
        _
    $region12: #{gnn_policy_forward.11} parent=5 // pred_fallthru
      _
    %p594 = scmp.lt.s32.totalorder %s29, 3
    // Predicated region
    $region89: #{gnn_policy_forward.11} parent=5 // pred_check
      %p595 = pneg %p594
    $region90: #{gnn_policy_forward.11} parent=5 // pred_check_branch
      %597 = sbr.rel (%p595) target = $region92
    $region91: #{gnn_policy_forward.11} parent=5 // pred_region
      // Predicated region
      $region93: #{gnn_policy_forward.11} parent=91 // pred_check
        %p598 = pneg %p49
      $region94: #{gnn_policy_forward.11} parent=91 // pred_check_branch
        %600 = sbr.rel (%p598) target = $region96
      $region95: #{gnn_policy_forward.11} parent=91 // pred_region
        %s601 = smul.u32 2, %s29
        %p602 = scmp.lt.s32.totalorder %s601, 5
        %s603 = scalar_select %p602, %s601, 5
        %s604 = scalar_lea.vmem %s0, %s603
        %s605 = smul.u32 2, %s29
      $region96: #{gnn_policy_forward.11} parent=91 // pred_fallthru
        _
      // Predicated region
      $region97: #{gnn_policy_forward.11} parent=91 // pred_check
        %p606 = pneg %p75
      $region98: #{gnn_policy_forward.11} parent=91 // pred_check_branch
        %608 = sbr.rel (%p606) target = $region100
      $region99: #{gnn_policy_forward.11} parent=91 // pred_region
        %s609 = smul.u32 2, %s29
        %p610 = scmp.lt.s32.totalorder %s609, 5
        %s611 = scalar_select %p610, %s609, 5
        %s612 = scalar_lea.vmem %s1, %s611
        %s613 = smul.u32 2, %s29
      $region100: #{gnn_policy_forward.11} parent=91 // pred_fallthru
        _
    $region92: #{gnn_policy_forward.11} parent=5 // pred_fallthru
      _
    %p614 = scmp.le.s32.totalorder 1, %s29
    %p615 = scmp.lt.s32.totalorder %s29, 4
    %p616 = pnand %p614, %p615
    %p617 = pneg %p616
    // Predicated region
    $region101: #{gnn_policy_forward.11} parent=5 // pred_check
      _
    $region102: #{gnn_policy_forward.11} parent=5 // pred_check_branch
      %619 = sbr.rel (%p616) target = $region104
    $region103: #{gnn_policy_forward.11} parent=5 // pred_region
      %s620 = ssub.s32 %s29, 1
      %s621 = smul.u32 2, %s34
      %p622 = scmp.lt.s32.totalorder %s621, 5
      %s623 = scalar_select %p622, %s621, 5
      %s624 = scalar_lea.vmem %s0, %s623
      %p625 = pneg %p55
      %p626 = pneg %p52
      %s627 = smul.u32 2, %s34
      %p628 = scmp.lt.s32.totalorder %s627, 5
      %s629 = scalar_select %p628, %s627, 5
      %s630 = scalar_lea.vmem %s1, %s629
      %p631 = pneg %p81
      %p632 = pneg %p78
      %p633 = pneg %p102
      %p634 = pneg %p99
      %p635 = pneg %p123
      %p636 = pneg %p120
      %p637 = pneg %p144
      %p638 = pneg %p141
      %p639 = pneg %p165
      %p640 = pneg %p162
      %p641 = pneg %p186
      %p642 = pneg %p183
      %p643 = pneg %p207
      %p644 = pneg %p204
      %p645 = pneg %p228
      %p646 = pneg %p225
      %p647 = pneg %p249
      %p648 = pneg %p246
      %p649 = pneg %p270
      %p650 = pneg %p267
      %p651 = pneg %p291
      %p652 = pneg %p288
      %p653 = pneg %p312
      %p654 = pneg %p309
      %p655 = pneg %p333
      %p656 = pneg %p330
      %p657 = pneg %p354
      %p658 = pneg %p351
      %p659 = pneg %p375
      %p660 = pneg %p372
      %p661 = pneg %p396
      %p662 = pneg %p393
      %p663 = pneg %p417
      %p664 = pneg %p414
      %p665 = pneg %p438
      %p666 = pneg %p435
      %p667 = pneg %p459
      %p668 = pneg %p456
      %p669 = pneg %p480
      %p670 = pneg %p477
      %p671 = pneg %p501
      %p672 = pneg %p498
      %p673 = pneg %p522
      %p674 = pneg %p519
      %s675 = smul.u32 2, %s34
      %p676 = scmp.lt.s32.totalorder %s675, 5
      %s677 = scalar_select %p676, %s675, 5
      %s678 = scalar_lea.vmem %s0, %s677
      %s679 = smul.u32 2, %s34
      %s680 = smul.u32 2, %s34
      %p681 = scmp.lt.s32.totalorder %s680, 5
      %s682 = scalar_select %p681, %s680, 5
      %s683 = scalar_lea.vmem %s1, %s682
      %s684 = smul.u32 2, %s34
      %p686 = scmp.eq.s32.totalorder %s34, 0
      // Predicated region
      $region105: #{gnn_policy_forward.11} parent=103 // pred_check
        %p687 = pneg %p686
      $region106: #{gnn_policy_forward.11} parent=103 // pred_check_branch
        %689 = sbr.rel (%p687) target = $region108
      $region107: #{gnn_policy_forward.11} parent=103 // pred_region
        %v690 = vld [vmem:[%s3] sm:$0xff]
        %v691 = vld [vmem:[%s3 + $0x8] sm:$0xff]
        %v692 = vld [vmem:[%s3 + $0x10] sm:$0xff]
        %v693 = vld [vmem:[%s3 + $0x18] sm:$0xff]
        %v694 = vld [vmem:[%s3 + $0x20] sm:$0xff]
        %v695 = vld [vmem:[%s3 + $0x28] sm:$0xff]
        %v696 = vld [vmem:[%s3 + $0x30] sm:$0xff]
        %v697 = vld [vmem:[%s3 + $0x38] sm:$0xff]
        %v698 = vld [vmem:[%s3 + $0x40] sm:$0xff]
        %v699 = vld [vmem:[%s3 + $0x48] sm:$0xff]
        %v700 = vld [vmem:[%s3 + $0x50] sm:$0xff]
        %v701 = vld [vmem:[%s3 + $0x58] sm:$0xff]
        %v702 = vld [vmem:[%s3 + $0x60] sm:$0xff]
        %v703 = vld [vmem:[%s3 + $0x68] sm:$0xff]
        %v704 = vld [vmem:[%s3 + $0x70] sm:$0xff]
        %v705 = vld [vmem:[%s3 + $0x78] sm:$0xff]
        %v706 = vld [vmem:[%s4] sm:$0xff]
        %v707 = vld [vmem:[%s4 + $0x8] sm:$0xff]
        %v708 = vld [vmem:[%s4 + $0x10] sm:$0xff]
        %v709 = vld [vmem:[%s4 + $0x18] sm:$0xff]
        %v710 = vld [vmem:[%s4 + $0x20] sm:$0xff]
        %v711 = vld [vmem:[%s4 + $0x28] sm:$0xff]
        %v712 = vld [vmem:[%s4 + $0x30] sm:$0xff]
        %v713 = vld [vmem:[%s4 + $0x38] sm:$0xff]
        %v714 = vld [vmem:[%s5] sm:$0x1]
        %v716 = vlaneseq
        %v717 = vshrl.u32 %v716, 7
        %v718 = vsub.s32 0, %v717
        %v719 = vrot.slane %v714, %v718
        %vm721 = vcmask 523264
        %v723 = vsel %vm721, %v690, 0
        %v726 = vsel %vm721, %v691, 0
        %v729 = vsel %vm721, %v692, 0
        %v732 = vsel %vm721, %v693, 0
        %v735 = vsel %vm721, %v694, 0
        %v738 = vsel %vm721, %v695, 0
        %v741 = vsel %vm721, %v696, 0
        %v744 = vsel %vm721, %v697, 0
        %v747 = vsel %vm721, %v698, 0
        %v750 = vsel %vm721, %v699, 0
        %v753 = vsel %vm721, %v700, 0
        %v756 = vsel %vm721, %v701, 0
        %v759 = vsel %vm721, %v702, 0
        %v762 = vsel %vm721, %v703, 0
        %v765 = vsel %vm721, %v704, 0
        %v768 = vsel %vm721, %v705, 0
        %770 = vmatprep.subr.mxu0 0.0
        %771 = vmatpush1.msra.mxu0 %v706
        %772 = vmatprep.subr.mxu0 0.0
        %773 = vmatpush1.msra.mxu0 %v707
        %774 = vmatprep.subr.mxu0 0.0
        %775 = vmatpush1.msra.mxu0 %v708
        %776 = vmatprep.subr.mxu0 0.0
        %777 = vmatpush1.msra.mxu0 %v709
        %778 = vmatprep.subr.mxu0 0.0
        %779 = vmatpush1.msra.mxu0 %v710
        %780 = vmatprep.subr.mxu0 0.0
        %781 = vmatpush1.msra.mxu0 %v711
        %782 = vmatprep.subr.mxu0 0.0
        %783 = vmatpush1.msra.mxu0 %v712
        %784 = vmatprep.subr.mxu0 0.0
        %785 = vmatpush1.msra.mxu0 %v713
        %786 = vmatprep.subr.mxu0 0.0
        %787 = vmatpush1.msra.mxu0 0.0
        %788 = vmatprep.subr.mxu0 0.0
        %789 = vmatpush1.msra.mxu0 0.0
        %790 = vmatprep.subr.mxu0 0.0
        %791 = vmatpush1.msra.mxu0 0.0
        %792 = vmatprep.subr.mxu0 0.0
        %793 = vmatpush1.msra.mxu0 0.0
        %794 = vmatprep.subr.mxu0 0.0
        %795 = vmatpush1.msra.mxu0 0.0
        %796 = vmatprep.subr.mxu0 0.0
        %797 = vmatpush1.msra.mxu0 0.0
        %798 = vmatprep.subr.mxu0 0.0
        %799 = vmatpush1.msra.mxu0 0.0
        %800 = vmatprep.subr.mxu0 0.0
        %801 = vmatpush1.msra.mxu0 0.0
        %802 = vmatprep.subr.mxu0 0.0
        %803 = vmatpush1.msra.mxu0 0.0
        %804 = vmatprep.subr.mxu0 0.0
        %805 = vmatpush1.msra.mxu0 0.0
        %806 = vmatprep.subr.mxu0 0.0
        %807 = vmatpush1.msra.mxu0 0.0
        %808 = vmatprep.subr.mxu0 0.0
        %809 = vmatpush1.msra.mxu0 0.0
        %810 = vmatprep.subr.mxu0 0.0
        %811 = vmatpush1.msra.mxu0 0.0
        %812 = vmatprep.subr.mxu0 0.0
        %813 = vmatpush1.msra.mxu0 0.0
        %814 = vmatprep.subr.mxu0 0.0
        %815 = vmatpush1.msra.mxu0 0.0
        %816 = vmatprep.subr.mxu0 0.0
        %817 = vmatpush1.msra.mxu0 0.0
        %818 = vmatprep.subr.mxu0 0.0
        %819 = vmatpush1.msra.mxu0 0.0
        %820 = vmatprep.subr.mxu0 0.0
        %821 = vmatpush1.msra.mxu0 0.0
        %822 = vmatprep.subr.mxu0 0.0
        %823 = vmatpush1.msra.mxu0 0.0
        %824 = vmatprep.subr.mxu0 0.0
        %825 = vmatpush1.msra.mxu0 0.0
        %826 = vmatprep.subr.mxu0 0.0
        %827 = vmatpush1.msra.mxu0 0.0
        %828 = vmatprep.subr.mxu0 0.0
        %829 = vmatpush1.msra.mxu0 0.0
        %830 = vmatprep.subr.mxu0 0.0
        %831 = vmatpush1.msra.mxu0 0.0
        %832 = vmatprep.subr.mxu0 0.0
        %833 = vmatpush1.msra.mxu0 0.0
        %834 = vmatprep.mubr.f32.mxu0 0.0
        %835 = vmatmul.mubr.f32.gmra.mrb[0].mxu0 %v723
        %v836 = vpop.f32.mrb[0].mxu0
        %v837 = vadd.f32 %v719, %v836
        %v838 = vpop.f32.mrb[0].mxu0
        %839 = vmatprep.mubr.f32.mxu0 0.0
        %840 = vmatmul.mubr.f32.gmra.mrb[0].mxu0 %v726
        %v841 = vpop.f32.mrb[0].mxu0
        %v842 = vadd.f32 %v719, %v841
        %v843 = vpop.f32.mrb[0].mxu0
        %844 = vmatprep.mubr.f32.mxu0 0.0
        %845 = vmatmul.mubr.f32.gmra.mrb[0].mxu0 %v729
        %v846 = vpop.f32.mrb[0].mxu0
        %v847 = vadd.f32 %v719, %v846
        %v848 = vpop.f32.mrb[0].mxu0
        %849 = vmatprep.mubr.f32.mxu0 0.0
        %850 = vmatmul.mubr.f32.gmra.mrb[0].mxu0 %v732
        %v851 = vpop.f32.mrb[0].mxu0
        %v852 = vadd.f32 %v719, %v851
        %v853 = vpop.f32.mrb[0].mxu0
        %854 = vmatprep.mubr.f32.mxu0 0.0
        %855 = vmatmul.mubr.f32.gmra.mrb[0].mxu0 %v735
        %v856 = vpop.f32.mrb[0].mxu0
        %v857 = vadd.f32 %v719, %v856
        %v858 = vpop.f32.mrb[0].mxu0
        %859 = vmatprep.mubr.f32.mxu0 0.0
        %860 = vmatmul.mubr.f32.gmra.mrb[0].mxu0 %v738
        %v861 = vpop.f32.mrb[0].mxu0
        %v862 = vadd.f32 %v719, %v861
        %v863 = vpop.f32.mrb[0].mxu0
        %864 = vmatprep.mubr.f32.mxu0 0.0
        %865 = vmatmul.mubr.f32.gmra.mrb[0].mxu0 %v741
        %v866 = vpop.f32.mrb[0].mxu0
        %v867 = vadd.f32 %v719, %v866
        %v868 = vpop.f32.mrb[0].mxu0
        %869 = vmatprep.mubr.f32.mxu0 0.0
        %870 = vmatmul.mubr.f32.gmra.mrb[0].mxu0 %v744
        %v871 = vpop.f32.mrb[0].mxu0
        %v872 = vadd.f32 %v719, %v871
        %v873 = vpop.f32.mrb[0].mxu0
        %874 = vmatprep.mubr.f32.mxu0 0.0
        %875 = vmatmul.mubr.f32.gmra.mrb[0].mxu0 %v747
        %v876 = vpop.f32.mrb[0].mxu0
        %v877 = vadd.f32 %v719, %v876
        %v878 = vpop.f32.mrb[0].mxu0
        %879 = vmatprep.mubr.f32.mxu0 0.0
        %880 = vmatmul.mubr.f32.gmra.mrb[0].mxu0 %v750
        %v881 = vpop.f32.mrb[0].mxu0
        %v882 = vadd.f32 %v719, %v881
        %v883 = vpop.f32.mrb[0].mxu0
        %884 = vmatprep.mubr.f32.mxu0 0.0
        %885 = vmatmul.mubr.f32.gmra.mrb[0].mxu0 %v753
        %v886 = vpop.f32.mrb[0].mxu0
        %v887 = vadd.f32 %v719, %v886
        %v888 = vpop.f32.mrb[0].mxu0
        %889 = vmatprep.mubr.f32.mxu0 0.0
        %890 = vmatmul.mubr.f32.gmra.mrb[0].mxu0 %v756
        %v891 = vpop.f32.mrb[0].mxu0
        %v892 = vadd.f32 %v719, %v891
        %v893 = vpop.f32.mrb[0].mxu0
        %894 = vmatprep.mubr.f32.mxu0 0.0
        %895 = vmatmul.mubr.f32.gmra.mrb[0].mxu0 %v759
        %v896 = vpop.f32.mrb[0].mxu0
        %v897 = vadd.f32 %v719, %v896
        %v898 = vpop.f32.mrb[0].mxu0
        %899 = vmatprep.mubr.f32.mxu0 0.0
        %900 = vmatmul.mubr.f32.gmra.mrb[0].mxu0 %v762
        %v901 = vpop.f32.mrb[0].mxu0
        %v902 = vadd.f32 %v719, %v901
        %v903 = vpop.f32.mrb[0].mxu0
        %904 = vmatprep.mubr.f32.mxu0 0.0
        %905 = vmatmul.mubr.f32.gmra.mrb[0].mxu0 %v765
        %v906 = vpop.f32.mrb[0].mxu0
        %v907 = vadd.f32 %v719, %v906
        %v908 = vpop.f32.mrb[0].mxu0
        %909 = vmatprep.mubr.f32.mxu0 0.0
        %910 = vmatmul.mubr.f32.gmra.mrb[0].mxu0 %v768
        %v911 = vpop.f32.mrb[0].mxu0
        %v912 = vadd.f32 %v719, %v911
        %v913 = vpop.f32.mrb[0].mxu0
        %914 = vdwg.mxu0
        %v915 = vpack.c.bf16 %v842, %v837
        %v916 = vpack.c.bf16 %v852, %v847
        %v917 = vpack.c.bf16 %v862, %v857
        %v918 = vpack.c.bf16 %v872, %v867
        %v919 = vpack.c.bf16 %v882, %v877
        %v920 = vpack.c.bf16 %v892, %v887
        %v921 = vpack.c.bf16 %v902, %v897
        %v922 = vpack.c.bf16 %v912, %v907
        %923 = vst.msk [vmem:[#allocation2] sm:$0xff] %vm721, %v915
        %924 = vst.msk [vmem:[#allocation2 + $0x8] sm:$0xff] %vm721, %v916
        %925 = vst.msk [vmem:[#allocation2 + $0x10] sm:$0xff] %vm721, %v917
        %926 = vst.msk [vmem:[#allocation2 + $0x18] sm:$0xff] %vm721, %v918
        %927 = vst.msk [vmem:[#allocation2 + $0x20] sm:$0xff] %vm721, %v919
        %928 = vst.msk [vmem:[#allocation2 + $0x28] sm:$0xff] %vm721, %v920
        %929 = vst.msk [vmem:[#allocation2 + $0x30] sm:$0xff] %vm721, %v921
        %930 = vst.msk [vmem:[#allocation2 + $0x38] sm:$0xff] %vm721, %v922
        %v931 = vld [vmem:[%s2] sm:$0xff]
        %v932 = vld [vmem:[%s2 + $0x8] sm:$0xff]
        %v933 = vld [vmem:[%s2 + $0x10] sm:$0xff]
        %v934 = vld [vmem:[%s2 + $0x18] sm:$0xff]
        %v935 = vld [vmem:[%s2 + $0x20] sm:$0xff]
        %v936 = vld [vmem:[%s2 + $0x28] sm:$0xff]
        %v937 = vld [vmem:[%s2 + $0x30] sm:$0xff]
        %v938 = vld [vmem:[%s2 + $0x38] sm:$0xff]
        %v939 = vld [vmem:[%s2 + $0x40] sm:$0xff]
        %v940 = vld [vmem:[%s2 + $0x48] sm:$0xff]
        %v941 = vld [vmem:[%s2 + $0x50] sm:$0xff]
        %v942 = vld [vmem:[%s2 + $0x58] sm:$0xff]
        %v943 = vld [vmem:[%s2 + $0x60] sm:$0xff]
        %v944 = vld [vmem:[%s2 + $0x68] sm:$0xff]
        %v945 = vld [vmem:[%s2 + $0x70] sm:$0xff]
        %v946 = vld [vmem:[%s2 + $0x78] sm:$0xff]
        %v947 = vld [vmem:[%s6] sm:$0xff]
        %v948 = vld [vmem:[%s6 + $0x8] sm:$0xff]
        %v949 = vld [vmem:[%s6 + $0x10] sm:$0xff]
        %v950 = vld [vmem:[%s6 + $0x18] sm:$0xff]
        %v951 = vld [vmem:[%s6 + $0x20] sm:$0xff]
        %v952 = vld [vmem:[%s6 + $0x28] sm:$0xff]
        %v953 = vld [vmem:[%s6 + $0x30] sm:$0xff]
        %v954 = vld [vmem:[%s6 + $0x38] sm:$0xff]
        %v956 = vsel %vm721, %v931, 0
        %v959 = vsel %vm721, %v932, 0
        %v962 = vsel %vm721, %v933, 0
        %v965 = vsel %vm721, %v934, 0
        %v968 = vsel %vm721, %v935, 0
        %v971 = vsel %vm721, %v936, 0
        %v974 = vsel %vm721, %v937, 0
        %v977 = vsel %vm721, %v938, 0
        %v980 = vsel %vm721, %v939, 0
        %v983 = vsel %vm721, %v940, 0
        %v986 = vsel %vm721, %v941, 0
        %v989 = vsel %vm721, %v942, 0
        %v992 = vsel %vm721, %v943, 0
        %v995 = vsel %vm721, %v944, 0
        %v998 = vsel %vm721, %v945, 0
        %v1001 = vsel %vm721, %v946, 0
        %1003 = vmatprep.subr.mxu0 0.0
        %1004 = vmatpush1.msra.mxu0 %v947
        %1005 = vmatprep.subr.mxu0 0.0
        %1006 = vmatpush1.msra.mxu0 %v948
        %1007 = vmatprep.subr.mxu0 0.0
        %1008 = vmatpush1.msra.mxu0 %v949
        %1009 = vmatprep.subr.mxu0 0.0
        %1010 = vmatpush1.msra.mxu0 %v950
        %1011 = vmatprep.subr.mxu0 0.0
        %1012 = vmatpush1.msra.mxu0 %v951
        %1013 = vmatprep.subr.mxu0 0.0
        %1014 = vmatpush1.msra.mxu0 %v952
        %1015 = vmatprep.subr.mxu0 0.0
        %1016 = vmatpush1.msra.mxu0 %v953
        %1017 = vmatprep.subr.mxu0 0.0
        %1018 = vmatpush1.msra.mxu0 %v954
        %1019 = vmatprep.subr.mxu0 0.0
        %1020 = vmatpush1.msra.mxu0 0.0
        %1021 = vmatprep.subr.mxu0 0.0
        %1022 = vmatpush1.msra.mxu0 0.0
        %1023 = vmatprep.subr.mxu0 0.0
        %1024 = vmatpush1.msra.mxu0 0.0
        %1025 = vmatprep.subr.mxu0 0.0
        %1026 = vmatpush1.msra.mxu0 0.0
        %1027 = vmatprep.subr.mxu0 0.0
        %1028 = vmatpush1.msra.mxu0 0.0
        %1029 = vmatprep.subr.mxu0 0.0
        %1030 = vmatpush1.msra.mxu0 0.0
        %1031 = vmatprep.subr.mxu0 0.0
        %1032 = vmatpush1.msra.mxu0 0.0
        %1033 = vmatprep.subr.mxu0 0.0
        %1034 = vmatpush1.msra.mxu0 0.0
        %1035 = vmatprep.subr.mxu0 0.0
        %1036 = vmatpush1.msra.mxu0 0.0
        %1037 = vmatprep.subr.mxu0 0.0
        %1038 = vmatpush1.msra.mxu0 0.0
        %1039 = vmatprep.subr.mxu0 0.0
        %1040 = vmatpush1.msra.mxu0 0.0
        %1041 = vmatprep.subr.mxu0 0.0
        %1042 = vmatpush1.msra.mxu0 0.0
        %1043 = vmatprep.subr.mxu0 0.0
        %1044 = vmatpush1.msra.mxu0 0.0
        %1045 = vmatprep.subr.mxu0 0.0
        %1046 = vmatpush1.msra.mxu0 0.0
        %1047 = vmatprep.subr.mxu0 0.0
        %1048 = vmatpush1.msra.mxu0 0.0
        %1049 = vmatprep.subr.mxu0 0.0
        %1050 = vmatpush1.msra.mxu0 0.0
        %1051 = vmatprep.subr.mxu0 0.0
        %1052 = vmatpush1.msra.mxu0 0.0
        %1053 = vmatprep.subr.mxu0 0.0
        %1054 = vmatpush1.msra.mxu0 0.0
        %1055 = vmatprep.subr.mxu0 0.0
        %1056 = vmatpush1.msra.mxu0 0.0
        %1057 = vmatprep.subr.mxu0 0.0
        %1058 = vmatpush1.msra.mxu0 0.0
        %1059 = vmatprep.subr.mxu0 0.0
        %1060 = vmatpush1.msra.mxu0 0.0
        %1061 = vmatprep.subr.mxu0 0.0
        %1062 = vmatpush1.msra.mxu0 0.0
        %1063 = vmatprep.subr.mxu0 0.0
        %1064 = vmatpush1.msra.mxu0 0.0
        %1065 = vmatprep.subr.mxu0 0.0
        %1066 = vmatpush1.msra.mxu0 0.0
        %1067 = vmatprep.mubr.f32.mxu0 0.0
        %1068 = vmatmul.mubr.f32.gmra.mrb[0].mxu0 %v956
        %v1069 = vpop.f32.mrb[0].mxu0
        %v1070 = vadd.f32 0.0, %v1069
        %v1071 = vpop.f32.mrb[0].mxu0
        %1072 = vmatprep.mubr.f32.mxu0 0.0
        %1073 = vmatmul.mubr.f32.gmra.mrb[0].mxu0 %v959
        %v1074 = vpop.f32.mrb[0].mxu0
        %v1075 = vadd.f32 0.0, %v1074
        %v1076 = vpop.f32.mrb[0].mxu0
        %1077 = vmatprep.mubr.f32.mxu0 0.0
        %1078 = vmatmul.mubr.f32.gmra.mrb[0].mxu0 %v962
        %v1079 = vpop.f32.mrb[0].mxu0
        %v1080 = vadd.f32 0.0, %v1079
        %v1081 = vpop.f32.mrb[0].mxu0
        %1082 = vmatprep.mubr.f32.mxu0 0.0
        %1083 = vmatmul.mubr.f32.gmra.mrb[0].mxu0 %v965
        %v1084 = vpop.f32.mrb[0].mxu0
        %v1085 = vadd.f32 0.0, %v1084
        %v1086 = vpop.f32.mrb[0].mxu0
        %1087 = vmatprep.mubr.f32.mxu0 0.0
        %1088 = vmatmul.mubr.f32.gmra.mrb[0].mxu0 %v968
        %v1089 = vpop.f32.mrb[0].mxu0
        %v1090 = vadd.f32 0.0, %v1089
        %v1091 = vpop.f32.mrb[0].mxu0
        %1092 = vmatprep.mubr.f32.mxu0 0.0
        %1093 = vmatmul.mubr.f32.gmra.mrb[0].mxu0 %v971
        %v1094 = vpop.f32.mrb[0].mxu0
        %v1095 = vadd.f32 0.0, %v1094
        %v1096 = vpop.f32.mrb[0].mxu0
        %1097 = vmatprep.mubr.f32.mxu0 0.0
        %1098 = vmatmul.mubr.f32.gmra.mrb[0].mxu0 %v974
        %v1099 = vpop.f32.mrb[0].mxu0
        %v1100 = vadd.f32 0.0, %v1099
        %v1101 = vpop.f32.mrb[0].mxu0
        %1102 = vmatprep.mubr.f32.mxu0 0.0
        %1103 = vmatmul.mubr.f32.gmra.mrb[0].mxu0 %v977
        %v1104 = vpop.f32.mrb[0].mxu0
        %v1105 = vadd.f32 0.0, %v1104
        %v1106 = vpop.f32.mrb[0].mxu0
        %1107 = vmatprep.mubr.f32.mxu0 0.0
        %1108 = vmatmul.mubr.f32.gmra.mrb[0].mxu0 %v980
        %v1109 = vpop.f32.mrb[0].mxu0
        %v1110 = vadd.f32 0.0, %v1109
        %v1111 = vpop.f32.mrb[0].mxu0
        %1112 = vmatprep.mubr.f32.mxu0 0.0
        %1113 = vmatmul.mubr.f32.gmra.mrb[0].mxu0 %v983
        %v1114 = vpop.f32.mrb[0].mxu0
        %v1115 = vadd.f32 0.0, %v1114
        %v1116 = vpop.f32.mrb[0].mxu0
        %1117 = vmatprep.mubr.f32.mxu0 0.0
        %1118 = vmatmul.mubr.f32.gmra.mrb[0].mxu0 %v986
        %v1119 = vpop.f32.mrb[0].mxu0
        %v1120 = vadd.f32 0.0, %v1119
        %v1121 = vpop.f32.mrb[0].mxu0
        %1122 = vmatprep.mubr.f32.mxu0 0.0
        %1123 = vmatmul.mubr.f32.gmra.mrb[0].mxu0 %v989
        %v1124 = vpop.f32.mrb[0].mxu0
        %v1125 = vadd.f32 0.0, %v1124
        %v1126 = vpop.f32.mrb[0].mxu0
        %1127 = vmatprep.mubr.f32.mxu0 0.0
        %1128 = vmatmul.mubr.f32.gmra.mrb[0].mxu0 %v992
        %v1129 = vpop.f32.mrb[0].mxu0
        %v1130 = vadd.f32 0.0, %v1129
        %v1131 = vpop.f32.mrb[0].mxu0
        %1132 = vmatprep.mubr.f32.mxu0 0.0
        %1133 = vmatmul.mubr.f32.gmra.mrb[0].mxu0 %v995
        %v1134 = vpop.f32.mrb[0].mxu0
        %v1135 = vadd.f32 0.0, %v1134
        %v1136 = vpop.f32.mrb[0].mxu0
        %1137 = vmatprep.mubr.f32.mxu0 0.0
        %1138 = vmatmul.mubr.f32.gmra.mrb[0].mxu0 %v998
        %v1139 = vpop.f32.mrb[0].mxu0
        %v1140 = vadd.f32 0.0, %v1139
        %v1141 = vpop.f32.mrb[0].mxu0
        %1142 = vmatprep.mubr.f32.mxu0 0.0
        %1143 = vmatmul.mubr.f32.gmra.mrb[0].mxu0 %v1001
        %v1144 = vpop.f32.mrb[0].mxu0
        %v1145 = vadd.f32 0.0, %v1144
        %v1146 = vpop.f32.mrb[0].mxu0
        %1147 = vdwg.mxu0
        %v1148 = vpack.c.bf16 %v1075, %v1070
        %v1149 = vpack.c.bf16 %v1085, %v1080
        %v1150 = vpack.c.bf16 %v1095, %v1090
        %v1151 = vpack.c.bf16 %v1105, %v1100
        %v1152 = vpack.c.bf16 %v1115, %v1110
        %v1153 = vpack.c.bf16 %v1125, %v1120
        %v1154 = vpack.c.bf16 %v1135, %v1130
        %v1155 = vpack.c.bf16 %v1145, %v1140
        %1156 = vst.msk [vmem:[#allocation3] sm:$0xff] %vm721, %v1148
        %1157 = vst.msk [vmem:[#allocation3 + $0x8] sm:$0xff] %vm721, %v1149
        %1158 = vst.msk [vmem:[#allocation3 + $0x10] sm:$0xff] %vm721, %v1150
        %1159 = vst.msk [vmem:[#allocation3 + $0x18] sm:$0xff] %vm721, %v1151
        %1160 = vst.msk [vmem:[#allocation3 + $0x20] sm:$0xff] %vm721, %v1152
        %1161 = vst.msk [vmem:[#allocation3 + $0x28] sm:$0xff] %vm721, %v1153
        %1162 = vst.msk [vmem:[#allocation3 + $0x30] sm:$0xff] %vm721, %v1154
        %1163 = vst.msk [vmem:[#allocation3 + $0x38] sm:$0xff] %vm721, %v1155
        %1164 = vst.msk [vmem:[%s21] sm:$0xff] %vm721, 0.0
        %1165 = vst.msk [vmem:[%s21 + $0x8] sm:$0xff] %vm721, 0.0
        %1166 = vst.msk [vmem:[%s21 + $0x10] sm:$0xff] %vm721, 0.0
        %1167 = vst.msk [vmem:[%s21 + $0x18] sm:$0xff] %vm721, 0.0
        %1168 = vst.msk [vmem:[%s21 + $0x20] sm:$0xff] %vm721, 0.0
        %1169 = vst.msk [vmem:[%s21 + $0x28] sm:$0xff] %vm721, 0.0
        %1170 = vst.msk [vmem:[%s21 + $0x30] sm:$0xff] %vm721, 0.0
        %1171 = vst.msk [vmem:[%s21 + $0x38] sm:$0xff] %vm721, 0.0
        %1172 = vst.msk [vmem:[%s21 + $0x40] sm:$0xff] %vm721, 0.0
        %1173 = vst.msk [vmem:[%s21 + $0x48] sm:$0xff] %vm721, 0.0
        %1174 = vst.msk [vmem:[%s21 + $0x50] sm:$0xff] %vm721, 0.0
        %1175 = vst.msk [vmem:[%s21 + $0x58] sm:$0xff] %vm721, 0.0
        %1176 = vst.msk [vmem:[%s21 + $0x60] sm:$0xff] %vm721, 0.0
        %1177 = vst.msk [vmem:[%s21 + $0x68] sm:$0xff] %vm721, 0.0
        %1178 = vst.msk [vmem:[%s21 + $0x70] sm:$0xff] %vm721, 0.0
        %1179 = vst.msk [vmem:[%s21 + $0x78] sm:$0xff] %vm721, 0.0
      $region108: #{gnn_policy_forward.11} parent=103 // pred_fallthru
        _
      %v1180 = vlaneseq
      %v1181 = vshrl.u32 %v1180, 7
      %v1182 = vadd.s32 %v1181, 8
      %v1183 = vadd.s32 %v1181, 16
      %v1184 = vadd.s32 %v1181, 24
      %v1185 = vadd.s32 %v1181, 32
      %v1186 = vadd.s32 %v1181, 40
      %v1187 = vadd.s32 %v1181, 48
      %v1188 = vadd.s32 %v1181, 56
      %v1189 = vadd.s32 %v1181, 64
      %v1190 = vadd.s32 %v1181, 72
      %v1191 = vadd.s32 %v1181, 80
      %v1192 = vadd.s32 %v1181, 88
      %v1193 = vadd.s32 %v1181, 96
      %v1194 = vadd.s32 %v1181, 104
      %v1195 = vadd.s32 %v1181, 112
      %v1196 = vadd.s32 %v1181, 120
      %v1197 = vld [vmem:[%s678] sm:$0x3]
      %v1198 = vlaneseq
      %v1199 = vshrl.u32 %v1198, 7
      %v1200 = vsub.s32 0, %v1199
      %v1201 = vrot.slane %v1197, %v1200
      %v1202 = vlaneseq
      %v1203 = vshrl.u32 %v1202, 7
      %v1204 = vsub.s32 1, %v1203
      %v1205 = vrot.slane %v1197, %v1204
      %vm1206 = vcmp.eq.s32.totalorder %v1181, %v1201
      %vm1207 = vcmp.eq.s32.totalorder %v1181, %v1205
      %vm1208 = vcmp.eq.s32.totalorder %v1182, %v1201
      %vm1209 = vcmp.eq.s32.totalorder %v1182, %v1205
      %vm1210 = vcmp.eq.s32.totalorder %v1183, %v1201
      %vm1211 = vcmp.eq.s32.totalorder %v1183, %v1205
      %vm1212 = vcmp.eq.s32.totalorder %v1184, %v1201
      %vm1213 = vcmp.eq.s32.totalorder %v1184, %v1205
      %vm1214 = vcmp.eq.s32.totalorder %v1185, %v1201
      %vm1215 = vcmp.eq.s32.totalorder %v1185, %v1205
      %vm1216 = vcmp.eq.s32.totalorder %v1186, %v1201
      %vm1217 = vcmp.eq.s32.totalorder %v1186, %v1205
      %vm1218 = vcmp.eq.s32.totalorder %v1187, %v1201
      %vm1219 = vcmp.eq.s32.totalorder %v1187, %v1205
      %vm1220 = vcmp.eq.s32.totalorder %v1188, %v1201
      %vm1221 = vcmp.eq.s32.totalorder %v1188, %v1205
      %vm1222 = vcmp.eq.s32.totalorder %v1189, %v1201
      %vm1223 = vcmp.eq.s32.totalorder %v1189, %v1205
      %vm1224 = vcmp.eq.s32.totalorder %v1190, %v1201
      %vm1225 = vcmp.eq.s32.totalorder %v1190, %v1205
      %vm1226 = vcmp.eq.s32.totalorder %v1191, %v1201
      %vm1227 = vcmp.eq.s32.totalorder %v1191, %v1205
      %vm1228 = vcmp.eq.s32.totalorder %v1192, %v1201
      %vm1229 = vcmp.eq.s32.totalorder %v1192, %v1205
      %vm1230 = vcmp.eq.s32.totalorder %v1193, %v1201
      %vm1231 = vcmp.eq.s32.totalorder %v1193, %v1205
      %vm1232 = vcmp.eq.s32.totalorder %v1194, %v1201
      %vm1233 = vcmp.eq.s32.totalorder %v1194, %v1205
      %vm1234 = vcmp.eq.s32.totalorder %v1195, %v1201
      %vm1235 = vcmp.eq.s32.totalorder %v1195, %v1205
      %vm1236 = vcmp.eq.s32.totalorder %v1196, %v1201
      %vm1237 = vcmp.eq.s32.totalorder %v1196, %v1205
      %v1238 = vsel %vm1206, 1, 0
      %v1239 = vsel %vm1207, 1, 0
      %v1240 = vsel %vm1208, 1, 0
      %v1241 = vsel %vm1209, 1, 0
      %v1242 = vsel %vm1210, 1, 0
      %v1243 = vsel %vm1211, 1, 0
      %v1244 = vsel %vm1212, 1, 0
      %v1245 = vsel %vm1213, 1, 0
      %v1246 = vsel %vm1214, 1, 0
      %v1247 = vsel %vm1215, 1, 0
      %v1248 = vsel %vm1216, 1, 0
      %v1249 = vsel %vm1217, 1, 0
      %v1250 = vsel %vm1218, 1, 0
      %v1251 = vsel %vm1219, 1, 0
      %v1252 = vsel %vm1220, 1, 0
      %v1253 = vsel %vm1221, 1, 0
      %v1254 = vsel %vm1222, 1, 0
      %v1255 = vsel %vm1223, 1, 0
      %v1256 = vsel %vm1224, 1, 0
      %v1257 = vsel %vm1225, 1, 0
      %v1258 = vsel %vm1226, 1, 0
      %v1259 = vsel %vm1227, 1, 0
      %v1260 = vsel %vm1228, 1, 0
      %v1261 = vsel %vm1229, 1, 0
      %v1262 = vsel %vm1230, 1, 0
      %v1263 = vsel %vm1231, 1, 0
      %v1264 = vsel %vm1232, 1, 0
      %v1265 = vsel %vm1233, 1, 0
      %v1266 = vsel %vm1234, 1, 0
      %v1267 = vsel %vm1235, 1, 0
      %v1268 = vsel %vm1236, 1, 0
      %v1269 = vsel %vm1237, 1, 0
      %v1270 = vcvt.s32.f32 %v1238
      %v1271 = vcvt.s32.f32 %v1239
      %v1272 = vcvt.s32.f32 %v1240
      %v1273 = vcvt.s32.f32 %v1241
      %v1274 = vcvt.s32.f32 %v1242
      %v1275 = vcvt.s32.f32 %v1243
      %v1276 = vcvt.s32.f32 %v1244
      %v1277 = vcvt.s32.f32 %v1245
      %v1278 = vcvt.s32.f32 %v1246
      %v1279 = vcvt.s32.f32 %v1247
      %v1280 = vcvt.s32.f32 %v1248
      %v1281 = vcvt.s32.f32 %v1249
      %v1282 = vcvt.s32.f32 %v1250
      %v1283 = vcvt.s32.f32 %v1251
      %v1284 = vcvt.s32.f32 %v1252
      %v1285 = vcvt.s32.f32 %v1253
      %v1286 = vcvt.s32.f32 %v1254
      %v1287 = vcvt.s32.f32 %v1255
      %v1288 = vcvt.s32.f32 %v1256
      %v1289 = vcvt.s32.f32 %v1257
      %v1290 = vcvt.s32.f32 %v1258
      %v1291 = vcvt.s32.f32 %v1259
      %v1292 = vcvt.s32.f32 %v1260
      %v1293 = vcvt.s32.f32 %v1261
      %v1294 = vcvt.s32.f32 %v1262
      %v1295 = vcvt.s32.f32 %v1263
      %v1296 = vcvt.s32.f32 %v1264
      %v1297 = vcvt.s32.f32 %v1265
      %v1298 = vcvt.s32.f32 %v1266
      %v1299 = vcvt.s32.f32 %v1267
      %v1300 = vcvt.s32.f32 %v1268
      %v1301 = vcvt.s32.f32 %v1269
      %v1302 = vpack.c.bf16 %v1272, %v1270
      %v1303 = vpack.c.bf16 %v1273, %v1271
      %v1304 = vpack.c.bf16 %v1276, %v1274
      %v1305 = vpack.c.bf16 %v1277, %v1275
      %v1306 = vpack.c.bf16 %v1280, %v1278
      %v1307 = vpack.c.bf16 %v1281, %v1279
      %v1308 = vpack.c.bf16 %v1284, %v1282
      %v1309 = vpack.c.bf16 %v1285, %v1283
      %v1310 = vpack.c.bf16 %v1288, %v1286
      %v1311 = vpack.c.bf16 %v1289, %v1287
      %v1312 = vpack.c.bf16 %v1292, %v1290
      %v1313 = vpack.c.bf16 %v1293, %v1291
      %v1314 = vpack.c.bf16 %v1296, %v1294
      %v1315 = vpack.c.bf16 %v1297, %v1295
      %v1316 = vpack.c.bf16 %v1300, %v1298
      %v1317 = vpack.c.bf16 %v1301, %v1299
      %v1318 = vld [vmem:[%s683] sm:$0x3]
      %v1319 = vlaneseq
      %v1320 = vshrl.u32 %v1319, 7
      %v1321 = vsub.s32 0, %v1320
      %v1322 = vrot.slane %v1318, %v1321
      %v1323 = vlaneseq
      %v1324 = vshrl.u32 %v1323, 7
      %v1325 = vsub.s32 1, %v1324
      %v1326 = vrot.slane %v1318, %v1325
      %vm1327 = vcmp.eq.s32.totalorder %v1181, %v1322
      %vm1328 = vcmp.eq.s32.totalorder %v1181, %v1326
      %vm1329 = vcmp.eq.s32.totalorder %v1182, %v1322
      %vm1330 = vcmp.eq.s32.totalorder %v1182, %v1326
      %vm1331 = vcmp.eq.s32.totalorder %v1183, %v1322
      %vm1332 = vcmp.eq.s32.totalorder %v1183, %v1326
      %vm1333 = vcmp.eq.s32.totalorder %v1184, %v1322
      %vm1334 = vcmp.eq.s32.totalorder %v1184, %v1326
      %vm1335 = vcmp.eq.s32.totalorder %v1185, %v1322
      %vm1336 = vcmp.eq.s32.totalorder %v1185, %v1326
      %vm1337 = vcmp.eq.s32.totalorder %v1186, %v1322
      %vm1338 = vcmp.eq.s32.totalorder %v1186, %v1326
      %vm1339 = vcmp.eq.s32.totalorder %v1187, %v1322
      %vm1340 = vcmp.eq.s32.totalorder %v1187, %v1326
      %vm1341 = vcmp.eq.s32.totalorder %v1188, %v1322
      %vm1342 = vcmp.eq.s32.totalorder %v1188, %v1326
      %vm1343 = vcmp.eq.s32.totalorder %v1189, %v1322
      %vm1344 = vcmp.eq.s32.totalorder %v1189, %v1326
      %vm1345 = vcmp.eq.s32.totalorder %v1190, %v1322
      %vm1346 = vcmp.eq.s32.totalorder %v1190, %v1326
      %vm1347 = vcmp.eq.s32.totalorder %v1191, %v1322
      %vm1348 = vcmp.eq.s32.totalorder %v1191, %v1326
      %vm1349 = vcmp.eq.s32.totalorder %v1192, %v1322
      %vm1350 = vcmp.eq.s32.totalorder %v1192, %v1326
      %vm1351 = vcmp.eq.s32.totalorder %v1193, %v1322
      %vm1352 = vcmp.eq.s32.totalorder %v1193, %v1326
      %vm1353 = vcmp.eq.s32.totalorder %v1194, %v1322
      %vm1354 = vcmp.eq.s32.totalorder %v1194, %v1326
      %vm1355 = vcmp.eq.s32.totalorder %v1195, %v1322
      %vm1356 = vcmp.eq.s32.totalorder %v1195, %v1326
      %vm1357 = vcmp.eq.s32.totalorder %v1196, %v1322
      %vm1358 = vcmp.eq.s32.totalorder %v1196, %v1326
      %v1359 = vsel %vm1327, 1, 0
      %v1360 = vsel %vm1328, 1, 0
      %v1361 = vsel %vm1329, 1, 0
      %v1362 = vsel %vm1330, 1, 0
      %v1363 = vsel %vm1331, 1, 0
      %v1364 = vsel %vm1332, 1, 0
      %v1365 = vsel %vm1333, 1, 0
      %v1366 = vsel %vm1334, 1, 0
      %v1367 = vsel %vm1335, 1, 0
      %v1368 = vsel %vm1336, 1, 0
      %v1369 = vsel %vm1337, 1, 0
      %v1370 = vsel %vm1338, 1, 0
      %v1371 = vsel %vm1339, 1, 0
      %v1372 = vsel %vm1340, 1, 0
      %v1373 = vsel %vm1341, 1, 0
      %v1374 = vsel %vm1342, 1, 0
      %v1375 = vsel %vm1343, 1, 0
      %v1376 = vsel %vm1344, 1, 0
      %v1377 = vsel %vm1345, 1, 0
      %v1378 = vsel %vm1346, 1, 0
      %v1379 = vsel %vm1347, 1, 0
      %v1380 = vsel %vm1348, 1, 0
      %v1381 = vsel %vm1349, 1, 0
      %v1382 = vsel %vm1350, 1, 0
      %v1383 = vsel %vm1351, 1, 0
      %v1384 = vsel %vm1352, 1, 0
      %v1385 = vsel %vm1353, 1, 0
      %v1386 = vsel %vm1354, 1, 0
      %v1387 = vsel %vm1355, 1, 0
      %v1388 = vsel %vm1356, 1, 0
      %v1389 = vsel %vm1357, 1, 0
      %v1390 = vsel %vm1358, 1, 0
      %v1391 = vcvt.s32.f32 %v1359
      %v1392 = vcvt.s32.f32 %v1360
      %v1393 = vcvt.s32.f32 %v1361
      %v1394 = vcvt.s32.f32 %v1362
      %v1395 = vcvt.s32.f32 %v1363
      %v1396 = vcvt.s32.f32 %v1364
      %v1397 = vcvt.s32.f32 %v1365
      %v1398 = vcvt.s32.f32 %v1366
      %v1399 = vcvt.s32.f32 %v1367
      %v1400 = vcvt.s32.f32 %v1368
      %v1401 = vcvt.s32.f32 %v1369
      %v1402 = vcvt.s32.f32 %v1370
      %v1403 = vcvt.s32.f32 %v1371
      %v1404 = vcvt.s32.f32 %v1372
      %v1405 = vcvt.s32.f32 %v1373
      %v1406 = vcvt.s32.f32 %v1374
      %v1407 = vcvt.s32.f32 %v1375
      %v1408 = vcvt.s32.f32 %v1376
      %v1409 = vcvt.s32.f32 %v1377
      %v1410 = vcvt.s32.f32 %v1378
      %v1411 = vcvt.s32.f32 %v1379
      %v1412 = vcvt.s32.f32 %v1380
      %v1413 = vcvt.s32.f32 %v1381
      %v1414 = vcvt.s32.f32 %v1382
      %v1415 = vcvt.s32.f32 %v1383
      %v1416 = vcvt.s32.f32 %v1384
      %v1417 = vcvt.s32.f32 %v1385
      %v1418 = vcvt.s32.f32 %v1386
      %v1419 = vcvt.s32.f32 %v1387
      %v1420 = vcvt.s32.f32 %v1388
      %v1421 = vcvt.s32.f32 %v1389
      %v1422 = vcvt.s32.f32 %v1390
      %v1423 = vpack.c.bf16 %v1393, %v1391
      %v1424 = vpack.c.bf16 %v1394, %v1392
      %v1425 = vpack.c.bf16 %v1397, %v1395
      %v1426 = vpack.c.bf16 %v1398, %v1396
      %v1427 = vpack.c.bf16 %v1401, %v1399
      %v1428 = vpack.c.bf16 %v1402, %v1400
      %v1429 = vpack.c.bf16 %v1405, %v1403
      %v1430 = vpack.c.bf16 %v1406, %v1404
      %v1431 = vpack.c.bf16 %v1409, %v1407
      %v1432 = vpack.c.bf16 %v1410, %v1408
      %v1433 = vpack.c.bf16 %v1413, %v1411
      %v1434 = vpack.c.bf16 %v1414, %v1412
      %v1435 = vpack.c.bf16 %v1417, %v1415
      %v1436 = vpack.c.bf16 %v1418, %v1416
      %v1437 = vpack.c.bf16 %v1421, %v1419
      %v1438 = vpack.c.bf16 %v1422, %v1420
      %v1439 = vld [vmem:[#allocation2] sm:$0xff]
      %v1440 = vld [vmem:[#allocation2 + $0x8] sm:$0xff]
      %v1441 = vld [vmem:[#allocation2 + $0x10] sm:$0xff]
      %v1442 = vld [vmem:[#allocation2 + $0x18] sm:$0xff]
      %v1443 = vld [vmem:[#allocation2 + $0x20] sm:$0xff]
      %v1444 = vld [vmem:[#allocation2 + $0x28] sm:$0xff]
      %v1445 = vld [vmem:[#allocation2 + $0x30] sm:$0xff]
      %v1446 = vld [vmem:[#allocation2 + $0x38] sm:$0xff]
      %v1447 = vld [vmem:[#allocation3] sm:$0xff]
      %v1448 = vld [vmem:[#allocation3 + $0x8] sm:$0xff]
      %v1449 = vld [vmem:[#allocation3 + $0x10] sm:$0xff]
      %v1450 = vld [vmem:[#allocation3 + $0x18] sm:$0xff]
      %v1451 = vld [vmem:[#allocation3 + $0x20] sm:$0xff]
      %v1452 = vld [vmem:[#allocation3 + $0x28] sm:$0xff]
      %v1453 = vld [vmem:[#allocation3 + $0x30] sm:$0xff]
      %v1454 = vld [vmem:[#allocation3 + $0x38] sm:$0xff]
      %1455 = vxpose.xlu0.c.b16.start [1/8] %v1302, 128
      %1456 = vxpose.xlu0.c.b16.cont [2/8] %v1304, 128
      %1457 = vxpose.xlu0.c.b16.cont [3/8] %v1306, 128
      %1458 = vxpose.xlu0.c.b16.cont [4/8] %v1308, 128
      %1459 = vxpose.xlu0.c.b16.cont [5/8] %v1310, 128
      %1460 = vxpose.xlu0.c.b16.cont [6/8] %v1312, 128
      %1461 = vxpose.xlu0.c.b16.cont [7/8] %v1314, 128
      %1462 = vxpose.xlu0.c.b16.end [8/8] %v1316, 128
      %v1463 = vpop.trf.xlu0
      %v1464 = vpop.trf.xlu0
      %v1465 = vpop.trf.xlu0
      %v1466 = vpop.trf.xlu0
      %v1467 = vpop.trf.xlu0
      %v1468 = vpop.trf.xlu0
      %v1469 = vpop.trf.xlu0
      %v1470 = vpop.trf.xlu0
      %1471 = vxpose.xlu0.c.b16.start [1/8] %v1303, 128
      %1472 = vxpose.xlu0.c.b16.cont [2/8] %v1305, 128
      %1473 = vxpose.xlu0.c.b16.cont [3/8] %v1307, 128
      %1474 = vxpose.xlu0.c.b16.cont [4/8] %v1309, 128
      %1475 = vxpose.xlu0.c.b16.cont [5/8] %v1311, 128
      %1476 = vxpose.xlu0.c.b16.cont [6/8] %v1313, 128
      %1477 = vxpose.xlu0.c.b16.cont [7/8] %v1315, 128
      %1478 = vxpose.xlu0.c.b16.end [8/8] %v1317, 128
      %v1479 = vpop.trf.xlu0
      %v1480 = vpop.trf.xlu0
      %v1481 = vpop.trf.xlu0
      %v1482 = vpop.trf.xlu0
      %v1483 = vpop.trf.xlu0
      %v1484 = vpop.trf.xlu0
      %v1485 = vpop.trf.xlu0
      %v1486 = vpop.trf.xlu0
      %1487 = vmatprep.subr.bf16.mxu0 0
      %1488 = vmatpush1.bf16.msra.mxu0 %v1447
      %1489 = vmatprep.subr.bf16.mxu0 0
      %1490 = vmatpush1.bf16.msra.mxu0 %v1448
      %1491 = vmatprep.subr.bf16.mxu0 0
      %1492 = vmatpush1.bf16.msra.mxu0 %v1449
      %1493 = vmatprep.subr.bf16.mxu0 0
      %1494 = vmatpush1.bf16.msra.mxu0 %v1450
      %1495 = vmatprep.subr.bf16.mxu0 0
      %1496 = vmatpush1.bf16.msra.mxu0 %v1451
      %1497 = vmatprep.subr.bf16.mxu0 0
      %1498 = vmatpush1.bf16.msra.mxu0 %v1452
      %1499 = vmatprep.subr.bf16.mxu0 0
      %1500 = vmatpush1.bf16.msra.mxu0 %v1453
      %1501 = vmatprep.subr.bf16.mxu0 0
      %1502 = vmatpush1.bf16.msra.mxu0 %v1454
      %1503 = vmatprep.subr.bf16.mxu0 0
      %1504 = vmatpush1.bf16.msra.mxu0 0
      %1505 = vmatprep.subr.bf16.mxu0 0
      %1506 = vmatpush1.bf16.msra.mxu0 0
      %1507 = vmatprep.subr.bf16.mxu0 0
      %1508 = vmatpush1.bf16.msra.mxu0 0
      %1509 = vmatprep.subr.bf16.mxu0 0
      %1510 = vmatpush1.bf16.msra.mxu0 0
      %1511 = vmatprep.subr.bf16.mxu0 0
      %1512 = vmatpush1.bf16.msra.mxu0 0
      %1513 = vmatprep.subr.bf16.mxu0 0
      %1514 = vmatpush1.bf16.msra.mxu0 0
      %1515 = vmatprep.subr.bf16.mxu0 0
      %1516 = vmatpush1.bf16.msra.mxu0 0
      %1517 = vmatprep.subr.bf16.mxu0 0
      %1518 = vmatpush1.bf16.msra.mxu0 0
      %1519 = vmatprep.mubr.bf16.mxu0 0
      %1520 = vmatmul.mubr.bf16.gmra.mrb[0].mxu0 %v1463
      %v1521 = vpop.f32.mrb[0].mxu0
      %v1522 = vadd.f32 0.0, %v1521
      %v1523 = vpop.f32.mrb[0].mxu0
      %v1524 = vpop.f32.mrb[0].mxu0
      %v1525 = vadd.f32 0.0, %v1524
      %v1526 = vpop.f32.mrb[0].mxu0
      %1527 = vmatprep.mubr.bf16.mxu0 0
      %1528 = vmatmul.mubr.bf16.gmra.mrb[0].mxu0 %v1464
      %v1529 = vpop.f32.mrb[0].mxu0
      %v1530 = vadd.f32 0.0, %v1529
      %v1531 = vpop.f32.mrb[0].mxu0
      %v1532 = vpop.f32.mrb[0].mxu0
      %v1533 = vadd.f32 0.0, %v1532
      %v1534 = vpop.f32.mrb[0].mxu0
      %1535 = vmatprep.mubr.bf16.mxu0 0
      %1536 = vmatmul.mubr.bf16.gmra.mrb[0].mxu0 %v1465
      %v1537 = vpop.f32.mrb[0].mxu0
      %v1538 = vadd.f32 0.0, %v1537
      %v1539 = vpop.f32.mrb[0].mxu0
      %v1540 = vpop.f32.mrb[0].mxu0
      %v1541 = vadd.f32 0.0, %v1540
      %v1542 = vpop.f32.mrb[0].mxu0
      %1543 = vmatprep.mubr.bf16.mxu0 0
      %1544 = vmatmul.mubr.bf16.gmra.mrb[0].mxu0 %v1466
      %v1545 = vpop.f32.mrb[0].mxu0
      %v1546 = vadd.f32 0.0, %v1545
      %v1547 = vpop.f32.mrb[0].mxu0
      %v1548 = vpop.f32.mrb[0].mxu0
      %v1549 = vadd.f32 0.0, %v1548
      %v1550 = vpop.f32.mrb[0].mxu0
      %1551 = vmatprep.mubr.bf16.mxu0 0
      %1552 = vmatmul.mubr.bf16.gmra.mrb[0].mxu0 %v1467
      %v1553 = vpop.f32.mrb[0].mxu0
      %v1554 = vadd.f32 0.0, %v1553
      %v1555 = vpop.f32.mrb[0].mxu0
      %v1556 = vpop.f32.mrb[0].mxu0
      %v1557 = vadd.f32 0.0, %v1556
      %v1558 = vpop.f32.mrb[0].mxu0
      %1559 = vmatprep.mubr.bf16.mxu0 0
      %1560 = vmatmul.mubr.bf16.gmra.mrb[0].mxu0 %v1468
      %v1561 = vpop.f32.mrb[0].mxu0
      %v1562 = vadd.f32 0.0, %v1561
      %v1563 = vpop.f32.mrb[0].mxu0
      %v1564 = vpop.f32.mrb[0].mxu0
      %v1565 = vadd.f32 0.0, %v1564
      %v1566 = vpop.f32.mrb[0].mxu0
      %1567 = vmatprep.mubr.bf16.mxu0 0
      %1568 = vmatmul.mubr.bf16.gmra.mrb[0].mxu0 %v1469
      %v1569 = vpop.f32.mrb[0].mxu0
      %v1570 = vadd.f32 0.0, %v1569
      %v1571 = vpop.f32.mrb[0].mxu0
      %v1572 = vpop.f32.mrb[0].mxu0
      %v1573 = vadd.f32 0.0, %v1572
      %v1574 = vpop.f32.mrb[0].mxu0
      %1575 = vmatprep.mubr.bf16.mxu0 0
      %1576 = vmatmul.mubr.bf16.gmra.mrb[0].mxu0 %v1470
      %v1577 = vpop.f32.mrb[0].mxu0
      %v1578 = vadd.f32 0.0, %v1577
      %v1579 = vpop.f32.mrb[0].mxu0
      %v1580 = vpop.f32.mrb[0].mxu0
      %v1581 = vadd.f32 0.0, %v1580
      %v1582 = vpop.f32.mrb[0].mxu0
      %1583 = vmatprep.mubr.bf16.mxu0 0
      %1584 = vmatmul.mubr.bf16.gmra.mrb[0].mxu0 %v1479
      %v1585 = vpop.f32.mrb[0].mxu0
      %v1586 = vadd.f32 0.0, %v1585
      %v1587 = vpop.f32.mrb[0].mxu0
      %v1588 = vpop.f32.mrb[0].mxu0
      %v1589 = vadd.f32 0.0, %v1588
      %v1590 = vpop.f32.mrb[0].mxu0
      %1591 = vmatprep.mubr.bf16.mxu0 0
      %1592 = vmatmul.mubr.bf16.gmra.mrb[0].mxu0 %v1480
      %v1593 = vpop.f32.mrb[0].mxu0
      %v1594 = vadd.f32 0.0, %v1593
      %v1595 = vpop.f32.mrb[0].mxu0
      %v1596 = vpop.f32.mrb[0].mxu0
      %v1597 = vadd.f32 0.0, %v1596
      %v1598 = vpop.f32.mrb[0].mxu0
      %1599 = vmatprep.mubr.bf16.mxu0 0
      %1600 = vmatmul.mubr.bf16.gmra.mrb[0].mxu0 %v1481
      %v1601 = vpop.f32.mrb[0].mxu0
      %v1602 = vadd.f32 0.0, %v1601
      %v1603 = vpop.f32.mrb[0].mxu0
      %v1604 = vpop.f32.mrb[0].mxu0
      %v1605 = vadd.f32 0.0, %v1604
      %v1606 = vpop.f32.mrb[0].mxu0
      %1607 = vmatprep.mubr.bf16.mxu0 0
      %1608 = vmatmul.mubr.bf16.gmra.mrb[0].mxu0 %v1482
      %v1609 = vpop.f32.mrb[0].mxu0
      %v1610 = vadd.f32 0.0, %v1609
      %v1611 = vpop.f32.mrb[0].mxu0
      %v1612 = vpop.f32.mrb[0].mxu0
      %v1613 = vadd.f32 0.0, %v1612
      %v1614 = vpop.f32.mrb[0].mxu0
      %1615 = vmatprep.mubr.bf16.mxu0 0
      %1616 = vmatmul.mubr.bf16.gmra.mrb[0].mxu0 %v1483
      %v1617 = vpop.f32.mrb[0].mxu0
      %v1618 = vadd.f32 0.0, %v1617
      %v1619 = vpop.f32.mrb[0].mxu0
      %v1620 = vpop.f32.mrb[0].mxu0
      %v1621 = vadd.f32 0.0, %v1620
      %v1622 = vpop.f32.mrb[0].mxu0
      %1623 = vmatprep.mubr.bf16.mxu0 0
      %1624 = vmatmul.mubr.bf16.gmra.mrb[0].mxu0 %v1484
      %v1625 = vpop.f32.mrb[0].mxu0
      %v1626 = vadd.f32 0.0, %v1625
      %v1627 = vpop.f32.mrb[0].mxu0
      %v1628 = vpop.f32.mrb[0].mxu0
      %v1629 = vadd.f32 0.0, %v1628
      %v1630 = vpop.f32.mrb[0].mxu0
      %1631 = vmatprep.mubr.bf16.mxu0 0
      %1632 = vmatmul.mubr.bf16.gmra.mrb[0].mxu0 %v1485
      %v1633 = vpop.f32.mrb[0].mxu0
      %v1634 = vadd.f32 0.0, %v1633
      %v1635 = vpop.f32.mrb[0].mxu0
      %v1636 = vpop.f32.mrb[0].mxu0
      %v1637 = vadd.f32 0.0, %v1636
      %v1638 = vpop.f32.mrb[0].mxu0
      %1639 = vmatprep.mubr.bf16.mxu0 0
      %1640 = vmatmul.mubr.bf16.gmra.mrb[0].mxu0 %v1486
      %v1641 = vpop.f32.mrb[0].mxu0
      %v1642 = vadd.f32 0.0, %v1641
      %v1643 = vpop.f32.mrb[0].mxu0
      %v1644 = vpop.f32.mrb[0].mxu0
      %v1645 = vadd.f32 0.0, %v1644
      %v1646 = vpop.f32.mrb[0].mxu0
      %1647 = vdwg.mxu0
      %1648 = vxpose.xlu0.c.b16.start [1/8] %v1423, 128
      %1649 = vxpose.xlu0.c.b16.cont [2/8] %v1425, 128
      %1650 = vxpose.xlu0.c.b16.cont [3/8] %v1427, 128
      %1651 = vxpose.xlu0.c.b16.cont [4/8] %v1429, 128
      %1652 = vxpose.xlu0.c.b16.cont [5/8] %v1431, 128
      %1653 = vxpose.xlu0.c.b16.cont [6/8] %v1433, 128
      %1654 = vxpose.xlu0.c.b16.cont [7/8] %v1435, 128
      %1655 = vxpose.xlu0.c.b16.end [8/8] %v1437, 128
      %v1656 = vpop.trf.xlu0
      %v1657 = vpop.trf.xlu0
      %v1658 = vpop.trf.xlu0
      %v1659 = vpop.trf.xlu0
      %v1660 = vpop.trf.xlu0
      %v1661 = vpop.trf.xlu0
      %v1662 = vpop.trf.xlu0
      %v1663 = vpop.trf.xlu0
      %1664 = vxpose.xlu0.c.b16.start [1/8] %v1424, 128
      %1665 = vxpose.xlu0.c.b16.cont [2/8] %v1426, 128
      %1666 = vxpose.xlu0.c.b16.cont [3/8] %v1428, 128
      %1667 = vxpose.xlu0.c.b16.cont [4/8] %v1430, 128
      %1668 = vxpose.xlu0.c.b16.cont [5/8] %v1432, 128
      %1669 = vxpose.xlu0.c.b16.cont [6/8] %v1434, 128
      %1670 = vxpose.xlu0.c.b16.cont [7/8] %v1436, 128
      %1671 = vxpose.xlu0.c.b16.end [8/8] %v1438, 128
      %v1672 = vpop.trf.xlu0
      %v1673 = vpop.trf.xlu0
      %v1674 = vpop.trf.xlu0
      %v1675 = vpop.trf.xlu0
      %v1676 = vpop.trf.xlu0
      %v1677 = vpop.trf.xlu0
      %v1678 = vpop.trf.xlu0
      %v1679 = vpop.trf.xlu0
      %1680 = vmatprep.subr.bf16.mxu0 0
      %1681 = vmatpush1.bf16.msra.mxu0 %v1439
      %1682 = vmatprep.subr.bf16.mxu0 0
      %1683 = vmatpush1.bf16.msra.mxu0 %v1440
      %1684 = vmatprep.subr.bf16.mxu0 0
      %1685 = vmatpush1.bf16.msra.mxu0 %v1441
      %1686 = vmatprep.subr.bf16.mxu0 0
      %1687 = vmatpush1.bf16.msra.mxu0 %v1442
      %1688 = vmatprep.subr.bf16.mxu0 0
      %1689 = vmatpush1.bf16.msra.mxu0 %v1443
      %1690 = vmatprep.subr.bf16.mxu0 0
      %1691 = vmatpush1.bf16.msra.mxu0 %v1444
      %1692 = vmatprep.subr.bf16.mxu0 0
      %1693 = vmatpush1.bf16.msra.mxu0 %v1445
      %1694 = vmatprep.subr.bf16.mxu0 0
      %1695 = vmatpush1.bf16.msra.mxu0 %v1446
      %1696 = vmatprep.subr.bf16.mxu0 0
      %1697 = vmatpush1.bf16.msra.mxu0 0
      %1698 = vmatprep.subr.bf16.mxu0 0
      %1699 = vmatpush1.bf16.msra.mxu0 0
      %1700 = vmatprep.subr.bf16.mxu0 0
      %1701 = vmatpush1.bf16.msra.mxu0 0
      %1702 = vmatprep.subr.bf16.mxu0 0
      %1703 = vmatpush1.bf16.msra.mxu0 0
      %1704 = vmatprep.subr.bf16.mxu0 0
      %1705 = vmatpush1.bf16.msra.mxu0 0
      %1706 = vmatprep.subr.bf16.mxu0 0
      %1707 = vmatpush1.bf16.msra.mxu0 0
      %1708 = vmatprep.subr.bf16.mxu0 0
      %1709 = vmatpush1.bf16.msra.mxu0 0
      %1710 = vmatprep.subr.bf16.mxu0 0
      %1711 = vmatpush1.bf16.msra.mxu0 0
      %1712 = vmatprep.mubr.bf16.mxu0 0
      %1713 = vmatmul.mubr.bf16.gmra.mrb[0].mxu0 %v1656
      %v1714 = vpop.f32.mrb[0].mxu0
      %v1715 = vadd.f32 %v1522, %v1714
      %v1716 = vpop.f32.mrb[0].mxu0
      %v1717 = vpop.f32.mrb[0].mxu0
      %v1718 = vadd.f32 %v1525, %v1717
      %v1719 = vpop.f32.mrb[0].mxu0
      %1720 = vmatprep.mubr.bf16.mxu0 0
      %1721 = vmatmul.mubr.bf16.gmra.mrb[0].mxu0 %v1657
      %v1722 = vpop.f32.mrb[0].mxu0
      %v1723 = vadd.f32 %v1530, %v1722
      %v1724 = vpop.f32.mrb[0].mxu0
      %v1725 = vpop.f32.mrb[0].mxu0
      %v1726 = vadd.f32 %v1533, %v1725
      %v1727 = vpop.f32.mrb[0].mxu0
      %1728 = vmatprep.mubr.bf16.mxu0 0
      %1729 = vmatmul.mubr.bf16.gmra.mrb[0].mxu0 %v1658
      %v1730 = vpop.f32.mrb[0].mxu0
      %v1731 = vadd.f32 %v1538, %v1730
      %v1732 = vpop.f32.mrb[0].mxu0
      %v1733 = vpop.f32.mrb[0].mxu0
      %v1734 = vadd.f32 %v1541, %v1733
      %v1735 = vpop.f32.mrb[0].mxu0
      %1736 = vmatprep.mubr.bf16.mxu0 0
      %1737 = vmatmul.mubr.bf16.gmra.mrb[0].mxu0 %v1659
      %v1738 = vpop.f32.mrb[0].mxu0
      %v1739 = vadd.f32 %v1546, %v1738
      %v1740 = vpop.f32.mrb[0].mxu0
      %v1741 = vpop.f32.mrb[0].mxu0
      %v1742 = vadd.f32 %v1549, %v1741
      %v1743 = vpop.f32.mrb[0].mxu0
      %1744 = vmatprep.mubr.bf16.mxu0 0
      %1745 = vmatmul.mubr.bf16.gmra.mrb[0].mxu0 %v1660
      %v1746 = vpop.f32.mrb[0].mxu0
      %v1747 = vadd.f32 %v1554, %v1746
      %v1748 = vpop.f32.mrb[0].mxu0
      %v1749 = vpop.f32.mrb[0].mxu0
      %v1750 = vadd.f32 %v1557, %v1749
      %v1751 = vpop.f32.mrb[0].mxu0
      %1752 = vmatprep.mubr.bf16.mxu0 0
      %1753 = vmatmul.mubr.bf16.gmra.mrb[0].mxu0 %v1661
      %v1754 = vpop.f32.mrb[0].mxu0
      %v1755 = vadd.f32 %v1562, %v1754
      %v1756 = vpop.f32.mrb[0].mxu0
      %v1757 = vpop.f32.mrb[0].mxu0
      %v1758 = vadd.f32 %v1565, %v1757
      %v1759 = vpop.f32.mrb[0].mxu0
      %1760 = vmatprep.mubr.bf16.mxu0 0
      %1761 = vmatmul.mubr.bf16.gmra.mrb[0].mxu0 %v1662
      %v1762 = vpop.f32.mrb[0].mxu0
      %v1763 = vadd.f32 %v1570, %v1762
      %v1764 = vpop.f32.mrb[0].mxu0
      %v1765 = vpop.f32.mrb[0].mxu0
      %v1766 = vadd.f32 %v1573, %v1765
      %v1767 = vpop.f32.mrb[0].mxu0
      %1768 = vmatprep.mubr.bf16.mxu0 0
      %1769 = vmatmul.mubr.bf16.gmra.mrb[0].mxu0 %v1663
      %v1770 = vpop.f32.mrb[0].mxu0
      %v1771 = vadd.f32 %v1578, %v1770
      %v1772 = vpop.f32.mrb[0].mxu0
      %v1773 = vpop.f32.mrb[0].mxu0
      %v1774 = vadd.f32 %v1581, %v1773
      %v1775 = vpop.f32.mrb[0].mxu0
      %1776 = vmatprep.mubr.bf16.mxu0 0
      %1777 = vmatmul.mubr.bf16.gmra.mrb[0].mxu0 %v1672
      %v1778 = vpop.f32.mrb[0].mxu0
      %v1779 = vadd.f32 %v1586, %v1778
      %v1780 = vpop.f32.mrb[0].mxu0
      %v1781 = vpop.f32.mrb[0].mxu0
      %v1782 = vadd.f32 %v1589, %v1781
      %v1783 = vpop.f32.mrb[0].mxu0
      %1784 = vmatprep.mubr.bf16.mxu0 0
      %1785 = vmatmul.mubr.bf16.gmra.mrb[0].mxu0 %v1673
      %v1786 = vpop.f32.mrb[0].mxu0
      %v1787 = vadd.f32 %v1594, %v1786
      %v1788 = vpop.f32.mrb[0].mxu0
      %v1789 = vpop.f32.mrb[0].mxu0
      %v1790 = vadd.f32 %v1597, %v1789
      %v1791 = vpop.f32.mrb[0].mxu0
      %1792 = vmatprep.mubr.bf16.mxu0 0
      %1793 = vmatmul.mubr.bf16.gmra.mrb[0].mxu0 %v1674
      %v1794 = vpop.f32.mrb[0].mxu0
      %v1795 = vadd.f32 %v1602, %v1794
      %v1796 = vpop.f32.mrb[0].mxu0
      %v1797 = vpop.f32.mrb[0].mxu0
      %v1798 = vadd.f32 %v1605, %v1797
      %v1799 = vpop.f32.mrb[0].mxu0
      %1800 = vmatprep.mubr.bf16.mxu0 0
      %1801 = vmatmul.mubr.bf16.gmra.mrb[0].mxu0 %v1675
      %v1802 = vpop.f32.mrb[0].mxu0
      %v1803 = vadd.f32 %v1610, %v1802
      %v1804 = vpop.f32.mrb[0].mxu0
      %v1805 = vpop.f32.mrb[0].mxu0
      %v1806 = vadd.f32 %v1613, %v1805
      %v1807 = vpop.f32.mrb[0].mxu0
      %1808 = vmatprep.mubr.bf16.mxu0 0
      %1809 = vmatmul.mubr.bf16.gmra.mrb[0].mxu0 %v1676
      %v1810 = vpop.f32.mrb[0].mxu0
      %v1811 = vadd.f32 %v1618, %v1810
      %v1812 = vpop.f32.mrb[0].mxu0
      %v1813 = vpop.f32.mrb[0].mxu0
      %v1814 = vadd.f32 %v1621, %v1813
      %v1815 = vpop.f32.mrb[0].mxu0
      %1816 = vmatprep.mubr.bf16.mxu0 0
      %1817 = vmatmul.mubr.bf16.gmra.mrb[0].mxu0 %v1677
      %v1818 = vpop.f32.mrb[0].mxu0
      %v1819 = vadd.f32 %v1626, %v1818
      %v1820 = vpop.f32.mrb[0].mxu0
      %v1821 = vpop.f32.mrb[0].mxu0
      %v1822 = vadd.f32 %v1629, %v1821
      %v1823 = vpop.f32.mrb[0].mxu0
      %1824 = vmatprep.mubr.bf16.mxu0 0
      %1825 = vmatmul.mubr.bf16.gmra.mrb[0].mxu0 %v1678
      %v1826 = vpop.f32.mrb[0].mxu0
      %v1827 = vadd.f32 %v1634, %v1826
      %v1828 = vpop.f32.mrb[0].mxu0
      %v1829 = vpop.f32.mrb[0].mxu0
      %v1830 = vadd.f32 %v1637, %v1829
      %v1831 = vpop.f32.mrb[0].mxu0
      %1832 = vmatprep.mubr.bf16.mxu0 0
      %1833 = vmatmul.mubr.bf16.gmra.mrb[0].mxu0 %v1679
      %v1834 = vpop.f32.mrb[0].mxu0
      %v1835 = vadd.f32 %v1642, %v1834
      %v1836 = vpop.f32.mrb[0].mxu0
      %v1837 = vpop.f32.mrb[0].mxu0
      %v1838 = vadd.f32 %v1645, %v1837
      %v1839 = vpop.f32.mrb[0].mxu0
      %1840 = vdwg.mxu0
      %v1841 = vld [vmem:[%s7] sm:$0x1]
      %v1842 = vld [vmem:[%s8] sm:$0x1]
      %vm1843 = vcmask 523264
      %v1844 = vsel %vm1843, %v1715, 0.0
      %1845 = vadd.xlane.f32.xlu0 %v1844
      %v1846 = vpop.xlane.xlu0 %1845
      %v1847 = vsel %vm1843, %v1718, 0.0
      %1848 = vadd.xlane.f32.xlu0 %v1847
      %v1849 = vpop.xlane.xlu0 %1848
      %v1850 = vsel %vm1843, %v1723, 0.0
      %1851 = vadd.xlane.f32.xlu0 %v1850
      %v1852 = vpop.xlane.xlu0 %1851
      %v1853 = vsel %vm1843, %v1726, 0.0
      %1854 = vadd.xlane.f32.xlu0 %v1853
      %v1855 = vpop.xlane.xlu0 %1854
      %v1856 = vsel %vm1843, %v1731, 0.0
      %1857 = vadd.xlane.f32.xlu0 %v1856
      %v1858 = vpop.xlane.xlu0 %1857
      %v1859 = vsel %vm1843, %v1734, 0.0
      %1860 = vadd.xlane.f32.xlu0 %v1859
      %v1861 = vpop.xlane.xlu0 %1860
      %v1862 = vsel %vm1843, %v1739, 0.0
      %1863 = vadd.xlane.f32.xlu0 %v1862
      %v1864 = vpop.xlane.xlu0 %1863
      %v1865 = vsel %vm1843, %v1742, 0.0
      %1866 = vadd.xlane.f32.xlu0 %v1865
      %v1867 = vpop.xlane.xlu0 %1866
      %v1868 = vsel %vm1843, %v1747, 0.0
      %1869 = vadd.xlane.f32.xlu0 %v1868
      %v1870 = vpop.xlane.xlu0 %1869
      %v1871 = vsel %vm1843, %v1750, 0.0
      %1872 = vadd.xlane.f32.xlu0 %v1871
      %v1873 = vpop.xlane.xlu0 %1872
      %v1874 = vsel %vm1843, %v1755, 0.0
      %1875 = vadd.xlane.f32.xlu0 %v1874
      %v1876 = vpop.xlane.xlu0 %1875
      %v1877 = vsel %vm1843, %v1758, 0.0
      %1878 = vadd.xlane.f32.xlu0 %v1877
      %v1879 = vpop.xlane.xlu0 %1878
      %v1880 = vsel %vm1843, %v1763, 0.0
      %1881 = vadd.xlane.f32.xlu0 %v1880
      %v1882 = vpop.xlane.xlu0 %1881
      %v1883 = vsel %vm1843, %v1766, 0.0
      %1884 = vadd.xlane.f32.xlu0 %v1883
      %v1885 = vpop.xlane.xlu0 %1884
      %v1886 = vsel %vm1843, %v1771, 0.0
      %1887 = vadd.xlane.f32.xlu0 %v1886
      %v1888 = vpop.xlane.xlu0 %1887
      %v1889 = vsel %vm1843, %v1774, 0.0
      %1890 = vadd.xlane.f32.xlu0 %v1889
      %v1891 = vpop.xlane.xlu0 %1890
      %v1892 = vsel %vm1843, %v1779, 0.0
      %1893 = vadd.xlane.f32.xlu0 %v1892
      %v1894 = vpop.xlane.xlu0 %1893
      %v1895 = vsel %vm1843, %v1782, 0.0
      %1896 = vadd.xlane.f32.xlu0 %v1895
      %v1897 = vpop.xlane.xlu0 %1896
      %v1898 = vsel %vm1843, %v1787, 0.0
      %1899 = vadd.xlane.f32.xlu0 %v1898
      %v1900 = vpop.xlane.xlu0 %1899
      %v1901 = vsel %vm1843, %v1790, 0.0
      %1902 = vadd.xlane.f32.xlu0 %v1901
      %v1903 = vpop.xlane.xlu0 %1902
      %v1904 = vsel %vm1843, %v1795, 0.0
      %1905 = vadd.xlane.f32.xlu0 %v1904
      %v1906 = vpop.xlane.xlu0 %1905
      %v1907 = vsel %vm1843, %v1798, 0.0
      %1908 = vadd.xlane.f32.xlu0 %v1907
      %v1909 = vpop.xlane.xlu0 %1908
      %v1910 = vsel %vm1843, %v1803, 0.0
      %1911 = vadd.xlane.f32.xlu0 %v1910
      %v1912 = vpop.xlane.xlu0 %1911
      %v1913 = vsel %vm1843, %v1806, 0.0
      %1914 = vadd.xlane.f32.xlu0 %v1913
      %v1915 = vpop.xlane.xlu0 %1914
      %v1916 = vsel %vm1843, %v1811, 0.0
      %1917 = vadd.xlane.f32.xlu0 %v1916
      %v1918 = vpop.xlane.xlu0 %1917
      %v1919 = vsel %vm1843, %v1814, 0.0
      %1920 = vadd.xlane.f32.xlu0 %v1919
      %v1921 = vpop.xlane.xlu0 %1920
      %v1922 = vsel %vm1843, %v1819, 0.0
      %1923 = vadd.xlane.f32.xlu0 %v1922
      %v1924 = vpop.xlane.xlu0 %1923
      %v1925 = vsel %vm1843, %v1822, 0.0
      %1926 = vadd.xlane.f32.xlu0 %v1925
      %v1927 = vpop.xlane.xlu0 %1926
      %v1928 = vsel %vm1843, %v1827, 0.0
      %1929 = vadd.xlane.f32.xlu0 %v1928
      %v1930 = vpop.xlane.xlu0 %1929
      %v1931 = vsel %vm1843, %v1830, 0.0
      %1932 = vadd.xlane.f32.xlu0 %v1931
      %v1933 = vpop.xlane.xlu0 %1932
      %v1934 = vsel %vm1843, %v1835, 0.0
      %1935 = vadd.xlane.f32.xlu0 %v1934
      %v1936 = vpop.xlane.xlu0 %1935
      %v1937 = vsel %vm1843, %v1838, 0.0
      %1938 = vadd.xlane.f32.xlu0 %v1937
      %v1939 = vpop.xlane.xlu0 %1938
      %v1940 = vrcp.pop 64.0
      %v1941 = vmul.f32 %v1846, %v1940
      %v1942 = vmul.f32 %v1849, %v1940
      %v1943 = vmul.f32 %v1852, %v1940
      %v1944 = vmul.f32 %v1855, %v1940
      %v1945 = vmul.f32 %v1858, %v1940
      %v1946 = vmul.f32 %v1861, %v1940
      %v1947 = vmul.f32 %v1864, %v1940
      %v1948 = vmul.f32 %v1867, %v1940
      %v1949 = vmul.f32 %v1870, %v1940
      %v1950 = vmul.f32 %v1873, %v1940
      %v1951 = vmul.f32 %v1876, %v1940
      %v1952 = vmul.f32 %v1879, %v1940
      %v1953 = vmul.f32 %v1882, %v1940
      %v1954 = vmul.f32 %v1885, %v1940
      %v1955 = vmul.f32 %v1888, %v1940
      %v1956 = vmul.f32 %v1891, %v1940
      %v1957 = vmul.f32 %v1894, %v1940
      %v1958 = vmul.f32 %v1897, %v1940
      %v1959 = vmul.f32 %v1900, %v1940
      %v1960 = vmul.f32 %v1903, %v1940
      %v1961 = vmul.f32 %v1906, %v1940
      %v1962 = vmul.f32 %v1909, %v1940
      %v1963 = vmul.f32 %v1912, %v1940
      %v1964 = vmul.f32 %v1915, %v1940
      %v1965 = vmul.f32 %v1918, %v1940
      %v1966 = vmul.f32 %v1921, %v1940
      %v1967 = vmul.f32 %v1924, %v1940
      %v1968 = vmul.f32 %v1927, %v1940
      %v1969 = vmul.f32 %v1930, %v1940
      %v1970 = vmul.f32 %v1933, %v1940
      %v1971 = vmul.f32 %v1936, %v1940
      %v1972 = vmul.f32 %v1939, %v1940
      %v1973 = vsub.f32 %v1715, %v1941
      %v1974 = vsub.f32 %v1718, %v1942
      %v1975 = vsub.f32 %v1723, %v1943
      %v1976 = vsub.f32 %v1726, %v1944
      %v1977 = vsub.f32 %v1731, %v1945
      %v1978 = vsub.f32 %v1734, %v1946
      %v1979 = vsub.f32 %v1739, %v1947
      %v1980 = vsub.f32 %v1742, %v1948
      %v1981 = vsub.f32 %v1747, %v1949
      %v1982 = vsub.f32 %v1750, %v1950
      %v1983 = vsub.f32 %v1755, %v1951
      %v1984 = vsub.f32 %v1758, %v1952
      %v1985 = vsub.f32 %v1763, %v1953
      %v1986 = vsub.f32 %v1766, %v1954
      %v1987 = vsub.f32 %v1771, %v1955
      %v1988 = vsub.f32 %v1774, %v1956
      %v1989 = vsub.f32 %v1779, %v1957
      %v1990 = vsub.f32 %v1782, %v1958
      %v1991 = vsub.f32 %v1787, %v1959
      %v1992 = vsub.f32 %v1790, %v1960
      %v1993 = vsub.f32 %v1795, %v1961
      %v1994 = vsub.f32 %v1798, %v1962
      %v1995 = vsub.f32 %v1803, %v1963
      %v1996 = vsub.f32 %v1806, %v1964
      %v1997 = vsub.f32 %v1811, %v1965
      %v1998 = vsub.f32 %v1814, %v1966
      %v1999 = vsub.f32 %v1819, %v1967
      %v2000 = vsub.f32 %v1822, %v1968
      %v2001 = vsub.f32 %v1827, %v1969
      %v2002 = vsub.f32 %v1830, %v1970
      %v2003 = vsub.f32 %v1835, %v1971
      %v2004 = vsub.f32 %v1838, %v1972
      %v2005 = vmul.f32 %v1973, %v1973
      %v2006 = vmul.f32 %v1974, %v1974
      %v2007 = vmul.f32 %v1975, %v1975
      %v2008 = vmul.f32 %v1976, %v1976
      %v2009 = vmul.f32 %v1977, %v1977
      %v2010 = vmul.f32 %v1978, %v1978
      %v2011 = vmul.f32 %v1979, %v1979
      %v2012 = vmul.f32 %v1980, %v1980
      %v2013 = vmul.f32 %v1981, %v1981
      %v2014 = vmul.f32 %v1982, %v1982
      %v2015 = vmul.f32 %v1983, %v1983
      %v2016 = vmul.f32 %v1984, %v1984
      %v2017 = vmul.f32 %v1985, %v1985
      %v2018 = vmul.f32 %v1986, %v1986
      %v2019 = vmul.f32 %v1987, %v1987
      %v2020 = vmul.f32 %v1988, %v1988
      %v2021 = vmul.f32 %v1989, %v1989
      %v2022 = vmul.f32 %v1990, %v1990
      %v2023 = vmul.f32 %v1991, %v1991
      %v2024 = vmul.f32 %v1992, %v1992
      %v2025 = vmul.f32 %v1993, %v1993
      %v2026 = vmul.f32 %v1994, %v1994
      %v2027 = vmul.f32 %v1995, %v1995
      %v2028 = vmul.f32 %v1996, %v1996
      %v2029 = vmul.f32 %v1997, %v1997
      %v2030 = vmul.f32 %v1998, %v1998
      %v2031 = vmul.f32 %v1999, %v1999
      %v2032 = vmul.f32 %v2000, %v2000
      %v2033 = vmul.f32 %v2001, %v2001
      %v2034 = vmul.f32 %v2002, %v2002
      %v2035 = vmul.f32 %v2003, %v2003
      %v2036 = vmul.f32 %v2004, %v2004
      %v2037 = vsel %vm1843, %v2005, 0.0
      %2038 = vadd.xlane.f32.xlu0 %v2037
      %v2039 = vpop.xlane.xlu0 %2038
      %v2040 = vsel %vm1843, %v2006, 0.0
      %2041 = vadd.xlane.f32.xlu0 %v2040
      %v2042 = vpop.xlane.xlu0 %2041
      %v2043 = vsel %vm1843, %v2007, 0.0
      %2044 = vadd.xlane.f32.xlu0 %v2043
      %v2045 = vpop.xlane.xlu0 %2044
      %v2046 = vsel %vm1843, %v2008, 0.0
      %2047 = vadd.xlane.f32.xlu0 %v2046
      %v2048 = vpop.xlane.xlu0 %2047
      %v2049 = vsel %vm1843, %v2009, 0.0
      %2050 = vadd.xlane.f32.xlu0 %v2049
      %v2051 = vpop.xlane.xlu0 %2050
      %v2052 = vsel %vm1843, %v2010, 0.0
      %2053 = vadd.xlane.f32.xlu0 %v2052
      %v2054 = vpop.xlane.xlu0 %2053
      %v2055 = vsel %vm1843, %v2011, 0.0
      %2056 = vadd.xlane.f32.xlu0 %v2055
      %v2057 = vpop.xlane.xlu0 %2056
      %v2058 = vsel %vm1843, %v2012, 0.0
      %2059 = vadd.xlane.f32.xlu0 %v2058
      %v2060 = vpop.xlane.xlu0 %2059
      %v2061 = vsel %vm1843, %v2013, 0.0
      %2062 = vadd.xlane.f32.xlu0 %v2061
      %v2063 = vpop.xlane.xlu0 %2062
      %v2064 = vsel %vm1843, %v2014, 0.0
      %2065 = vadd.xlane.f32.xlu0 %v2064
      %v2066 = vpop.xlane.xlu0 %2065
      %v2067 = vsel %vm1843, %v2015, 0.0
      %2068 = vadd.xlane.f32.xlu0 %v2067
      %v2069 = vpop.xlane.xlu0 %2068
      %v2070 = vsel %vm1843, %v2016, 0.0
      %2071 = vadd.xlane.f32.xlu0 %v2070
      %v2072 = vpop.xlane.xlu0 %2071
      %v2073 = vsel %vm1843, %v2017, 0.0
      %2074 = vadd.xlane.f32.xlu0 %v2073
      %v2075 = vpop.xlane.xlu0 %2074
      %v2076 = vsel %vm1843, %v2018, 0.0
      %2077 = vadd.xlane.f32.xlu0 %v2076
      %v2078 = vpop.xlane.xlu0 %2077
      %v2079 = vsel %vm1843, %v2019, 0.0
      %2080 = vadd.xlane.f32.xlu0 %v2079
      %v2081 = vpop.xlane.xlu0 %2080
      %v2082 = vsel %vm1843, %v2020, 0.0
      %2083 = vadd.xlane.f32.xlu0 %v2082
      %v2084 = vpop.xlane.xlu0 %2083
      %v2085 = vsel %vm1843, %v2021, 0.0
      %2086 = vadd.xlane.f32.xlu0 %v2085
      %v2087 = vpop.xlane.xlu0 %2086
      %v2088 = vsel %vm1843, %v2022, 0.0
      %2089 = vadd.xlane.f32.xlu0 %v2088
      %v2090 = vpop.xlane.xlu0 %2089
      %v2091 = vsel %vm1843, %v2023, 0.0
      %2092 = vadd.xlane.f32.xlu0 %v2091
      %v2093 = vpop.xlane.xlu0 %2092
      %v2094 = vsel %vm1843, %v2024, 0.0
      %2095 = vadd.xlane.f32.xlu0 %v2094
      %v2096 = vpop.xlane.xlu0 %2095
      %v2097 = vsel %vm1843, %v2025, 0.0
      %2098 = vadd.xlane.f32.xlu0 %v2097
      %v2099 = vpop.xlane.xlu0 %2098
      %v2100 = vsel %vm1843, %v2026, 0.0
      %2101 = vadd.xlane.f32.xlu0 %v2100
      %v2102 = vpop.xlane.xlu0 %2101
      %v2103 = vsel %vm1843, %v2027, 0.0
      %2104 = vadd.xlane.f32.xlu0 %v2103
      %v2105 = vpop.xlane.xlu0 %2104
      %v2106 = vsel %vm1843, %v2028, 0.0
      %2107 = vadd.xlane.f32.xlu0 %v2106
      %v2108 = vpop.xlane.xlu0 %2107
      %v2109 = vsel %vm1843, %v2029, 0.0
      %2110 = vadd.xlane.f32.xlu0 %v2109
      %v2111 = vpop.xlane.xlu0 %2110
      %v2112 = vsel %vm1843, %v2030, 0.0
      %2113 = vadd.xlane.f32.xlu0 %v2112
      %v2114 = vpop.xlane.xlu0 %2113
      %v2115 = vsel %vm1843, %v2031, 0.0
      %2116 = vadd.xlane.f32.xlu0 %v2115
      %v2117 = vpop.xlane.xlu0 %2116
      %v2118 = vsel %vm1843, %v2032, 0.0
      %2119 = vadd.xlane.f32.xlu0 %v2118
      %v2120 = vpop.xlane.xlu0 %2119
      %v2121 = vsel %vm1843, %v2033, 0.0
      %2122 = vadd.xlane.f32.xlu0 %v2121
      %v2123 = vpop.xlane.xlu0 %2122
      %v2124 = vsel %vm1843, %v2034, 0.0
      %2125 = vadd.xlane.f32.xlu0 %v2124
      %v2126 = vpop.xlane.xlu0 %2125
      %v2127 = vsel %vm1843, %v2035, 0.0
      %2128 = vadd.xlane.f32.xlu0 %v2127
      %v2129 = vpop.xlane.xlu0 %2128
      %v2130 = vsel %vm1843, %v2036, 0.0
      %2131 = vadd.xlane.f32.xlu0 %v2130
      %v2132 = vpop.xlane.xlu0 %2131
      %v2133 = vmul.f32 %v2039, %v1940
      %v2134 = vmul.f32 %v2042, %v1940
      %v2135 = vmul.f32 %v2045, %v1940
      %v2136 = vmul.f32 %v2048, %v1940
      %v2137 = vmul.f32 %v2051, %v1940
      %v2138 = vmul.f32 %v2054, %v1940
      %v2139 = vmul.f32 %v2057, %v1940
      %v2140 = vmul.f32 %v2060, %v1940
      %v2141 = vmul.f32 %v2063, %v1940
      %v2142 = vmul.f32 %v2066, %v1940
      %v2143 = vmul.f32 %v2069, %v1940
      %v2144 = vmul.f32 %v2072, %v1940
      %v2145 = vmul.f32 %v2075, %v1940
      %v2146 = vmul.f32 %v2078, %v1940
      %v2147 = vmul.f32 %v2081, %v1940
      %v2148 = vmul.f32 %v2084, %v1940
      %v2149 = vmul.f32 %v2087, %v1940
      %v2150 = vmul.f32 %v2090, %v1940
      %v2151 = vmul.f32 %v2093, %v1940
      %v2152 = vmul.f32 %v2096, %v1940
      %v2153 = vmul.f32 %v2099, %v1940
      %v2154 = vmul.f32 %v2102, %v1940
      %v2155 = vmul.f32 %v2105, %v1940
      %v2156 = vmul.f32 %v2108, %v1940
      %v2157 = vmul.f32 %v2111, %v1940
      %v2158 = vmul.f32 %v2114, %v1940
      %v2159 = vmul.f32 %v2117, %v1940
      %v2160 = vmul.f32 %v2120, %v1940
      %v2161 = vmul.f32 %v2123, %v1940
      %v2162 = vmul.f32 %v2126, %v1940
      %v2163 = vmul.f32 %v2129, %v1940
      %v2164 = vmul.f32 %v2132, %v1940
      %v2165 = vadd.f32 %v2133, 1e-05
      %v2166 = vadd.f32 %v2134, 1e-05
      %v2167 = vadd.f32 %v2135, 1e-05
      %v2168 = vadd.f32 %v2136, 1e-05
      %v2169 = vadd.f32 %v2137, 1e-05
      %v2170 = vadd.f32 %v2138, 1e-05
      %v2171 = vadd.f32 %v2139, 1e-05
      %v2172 = vadd.f32 %v2140, 1e-05
      %v2173 = vadd.f32 %v2141, 1e-05
      %v2174 = vadd.f32 %v2142, 1e-05
      %v2175 = vadd.f32 %v2143, 1e-05
      %v2176 = vadd.f32 %v2144, 1e-05
      %v2177 = vadd.f32 %v2145, 1e-05
      %v2178 = vadd.f32 %v2146, 1e-05
      %v2179 = vadd.f32 %v2147, 1e-05
      %v2180 = vadd.f32 %v2148, 1e-05
      %v2181 = vadd.f32 %v2149, 1e-05
      %v2182 = vadd.f32 %v2150, 1e-05
      %v2183 = vadd.f32 %v2151, 1e-05
      %v2184 = vadd.f32 %v2152, 1e-05
      %v2185 = vadd.f32 %v2153, 1e-05
      %v2186 = vadd.f32 %v2154, 1e-05
      %v2187 = vadd.f32 %v2155, 1e-05
      %v2188 = vadd.f32 %v2156, 1e-05
      %v2189 = vadd.f32 %v2157, 1e-05
      %v2190 = vadd.f32 %v2158, 1e-05
      %v2191 = vadd.f32 %v2159, 1e-05
      %v2192 = vadd.f32 %v2160, 1e-05
      %v2193 = vadd.f32 %v2161, 1e-05
      %v2194 = vadd.f32 %v2162, 1e-05
      %v2195 = vadd.f32 %v2163, 1e-05
      %v2196 = vadd.f32 %v2164, 1e-05
      %v2197 = vrsqrt.pop %v2165
      %v2198 = vrsqrt.pop %v2166
      %v2199 = vrsqrt.pop %v2167
      %v2200 = vrsqrt.pop %v2168
      %v2201 = vrsqrt.pop %v2169
      %v2202 = vrsqrt.pop %v2170
      %v2203 = vrsqrt.pop %v2171
      %v2204 = vrsqrt.pop %v2172
      %v2205 = vrsqrt.pop %v2173
      %v2206 = vrsqrt.pop %v2174
      %v2207 = vrsqrt.pop %v2175
      %v2208 = vrsqrt.pop %v2176
      %v2209 = vrsqrt.pop %v2177
      %v2210 = vrsqrt.pop %v2178
      %v2211 = vrsqrt.pop %v2179
      %v2212 = vrsqrt.pop %v2180
      %v2213 = vrsqrt.pop %v2181
      %v2214 = vrsqrt.pop %v2182
      %v2215 = vrsqrt.pop %v2183
      %v2216 = vrsqrt.pop %v2184
      %v2217 = vrsqrt.pop %v2185
      %v2218 = vrsqrt.pop %v2186
      %v2219 = vrsqrt.pop %v2187
      %v2220 = vrsqrt.pop %v2188
      %v2221 = vrsqrt.pop %v2189
      %v2222 = vrsqrt.pop %v2190
      %v2223 = vrsqrt.pop %v2191
      %v2224 = vrsqrt.pop %v2192
      %v2225 = vrsqrt.pop %v2193
      %v2226 = vrsqrt.pop %v2194
      %v2227 = vrsqrt.pop %v2195
      %v2228 = vrsqrt.pop %v2196
      %v2229 = vmul.f32 %v1973, %v2197
      %v2230 = vmul.f32 %v1974, %v2198
      %v2231 = vmul.f32 %v1975, %v2199
      %v2232 = vmul.f32 %v1976, %v2200
      %v2233 = vmul.f32 %v1977, %v2201
      %v2234 = vmul.f32 %v1978, %v2202
      %v2235 = vmul.f32 %v1979, %v2203
      %v2236 = vmul.f32 %v1980, %v2204
      %v2237 = vmul.f32 %v1981, %v2205
      %v2238 = vmul.f32 %v1982, %v2206
      %v2239 = vmul.f32 %v1983, %v2207
      %v2240 = vmul.f32 %v1984, %v2208
      %v2241 = vmul.f32 %v1985, %v2209
      %v2242 = vmul.f32 %v1986, %v2210
      %v2243 = vmul.f32 %v1987, %v2211
      %v2244 = vmul.f32 %v1988, %v2212
      %v2245 = vmul.f32 %v1989, %v2213
      %v2246 = vmul.f32 %v1990, %v2214
      %v2247 = vmul.f32 %v1991, %v2215
      %v2248 = vmul.f32 %v1992, %v2216
      %v2249 = vmul.f32 %v1993, %v2217
      %v2250 = vmul.f32 %v1994, %v2218
      %v2251 = vmul.f32 %v1995, %v2219
      %v2252 = vmul.f32 %v1996, %v2220
      %v2253 = vmul.f32 %v1997, %v2221
      %v2254 = vmul.f32 %v1998, %v2222
      %v2255 = vmul.f32 %v1999, %v2223
      %v2256 = vmul.f32 %v2000, %v2224
      %v2257 = vmul.f32 %v2001, %v2225
      %v2258 = vmul.f32 %v2002, %v2226
      %v2259 = vmul.f32 %v2003, %v2227
      %v2260 = vmul.f32 %v2004, %v2228
      %v2262 = vlaneseq
      %v2263 = vshrl.u32 %v2262, 7
      %v2264 = vsub.s32 0, %v2263
      %v2265 = vrot.slane %v1841, %v2264
      %v2267 = vmul.f32 %v2229, %v2265
      %v2268 = vmul.f32 %v2230, %v2265
      %v2269 = vmul.f32 %v2231, %v2265
      %v2270 = vmul.f32 %v2232, %v2265
      %v2271 = vmul.f32 %v2233, %v2265
      %v2272 = vmul.f32 %v2234, %v2265
      %v2273 = vmul.f32 %v2235, %v2265
      %v2274 = vmul.f32 %v2236, %v2265
      %v2275 = vmul.f32 %v2237, %v2265
      %v2276 = vmul.f32 %v2238, %v2265
      %v2277 = vmul.f32 %v2239, %v2265
      %v2278 = vmul.f32 %v2240, %v2265
      %v2279 = vmul.f32 %v2241, %v2265
      %v2280 = vmul.f32 %v2242, %v2265
      %v2281 = vmul.f32 %v2243, %v2265
      %v2282 = vmul.f32 %v2244, %v2265
      %v2283 = vmul.f32 %v2245, %v2265
      %v2284 = vmul.f32 %v2246, %v2265
      %v2285 = vmul.f32 %v2247, %v2265
      %v2286 = vmul.f32 %v2248, %v2265
      %v2287 = vmul.f32 %v2249, %v2265
      %v2288 = vmul.f32 %v2250, %v2265
      %v2289 = vmul.f32 %v2251, %v2265
      %v2290 = vmul.f32 %v2252, %v2265
      %v2291 = vmul.f32 %v2253, %v2265
      %v2292 = vmul.f32 %v2254, %v2265
      %v2293 = vmul.f32 %v2255, %v2265
      %v2294 = vmul.f32 %v2256, %v2265
      %v2295 = vmul.f32 %v2257, %v2265
      %v2296 = vmul.f32 %v2258, %v2265
      %v2297 = vmul.f32 %v2259, %v2265
      %v2298 = vmul.f32 %v2260, %v2265
      %v2300 = vlaneseq
      %v2301 = vshrl.u32 %v2300, 7
      %v2302 = vsub.s32 0, %v2301
      %v2303 = vrot.slane %v1842, %v2302
      %v2305 = vadd.f32 %v2267, %v2303
      %v2306 = vadd.f32 %v2268, %v2303
      %v2307 = vadd.f32 %v2269, %v2303
      %v2308 = vadd.f32 %v2270, %v2303
      %v2309 = vadd.f32 %v2271, %v2303
      %v2310 = vadd.f32 %v2272, %v2303
      %v2311 = vadd.f32 %v2273, %v2303
      %v2312 = vadd.f32 %v2274, %v2303
      %v2313 = vadd.f32 %v2275, %v2303
      %v2314 = vadd.f32 %v2276, %v2303
      %v2315 = vadd.f32 %v2277, %v2303
      %v2316 = vadd.f32 %v2278, %v2303
      %v2317 = vadd.f32 %v2279, %v2303
      %v2318 = vadd.f32 %v2280, %v2303
      %v2319 = vadd.f32 %v2281, %v2303
      %v2320 = vadd.f32 %v2282, %v2303
      %v2321 = vadd.f32 %v2283, %v2303
      %v2322 = vadd.f32 %v2284, %v2303
      %v2323 = vadd.f32 %v2285, %v2303
      %v2324 = vadd.f32 %v2286, %v2303
      %v2325 = vadd.f32 %v2287, %v2303
      %v2326 = vadd.f32 %v2288, %v2303
      %v2327 = vadd.f32 %v2289, %v2303
      %v2328 = vadd.f32 %v2290, %v2303
      %v2329 = vadd.f32 %v2291, %v2303
      %v2330 = vadd.f32 %v2292, %v2303
      %v2331 = vadd.f32 %v2293, %v2303
      %v2332 = vadd.f32 %v2294, %v2303
      %v2333 = vadd.f32 %v2295, %v2303
      %v2334 = vadd.f32 %v2296, %v2303
      %v2335 = vadd.f32 %v2297, %v2303
      %v2336 = vadd.f32 %v2298, %v2303
      %v2337 = vmax.f32 %v2305, 0.0
      %v2338 = vmax.f32 %v2306, 0.0
      %v2339 = vmax.f32 %v2307, 0.0
      %v2340 = vmax.f32 %v2308, 0.0
      %v2341 = vmax.f32 %v2309, 0.0
      %v2342 = vmax.f32 %v2310, 0.0
      %v2343 = vmax.f32 %v2311, 0.0
      %v2344 = vmax.f32 %v2312, 0.0
      %v2345 = vmax.f32 %v2313, 0.0
      %v2346 = vmax.f32 %v2314, 0.0
      %v2347 = vmax.f32 %v2315, 0.0
      %v2348 = vmax.f32 %v2316, 0.0
      %v2349 = vmax.f32 %v2317, 0.0
      %v2350 = vmax.f32 %v2318, 0.0
      %v2351 = vmax.f32 %v2319, 0.0
      %v2352 = vmax.f32 %v2320, 0.0
      %v2353 = vmax.f32 %v2321, 0.0
      %v2354 = vmax.f32 %v2322, 0.0
      %v2355 = vmax.f32 %v2323, 0.0
      %v2356 = vmax.f32 %v2324, 0.0
      %v2357 = vmax.f32 %v2325, 0.0
      %v2358 = vmax.f32 %v2326, 0.0
      %v2359 = vmax.f32 %v2327, 0.0
      %v2360 = vmax.f32 %v2328, 0.0
      %v2361 = vmax.f32 %v2329, 0.0
      %v2362 = vmax.f32 %v2330, 0.0
      %v2363 = vmax.f32 %v2331, 0.0
      %v2364 = vmax.f32 %v2332, 0.0
      %v2365 = vmax.f32 %v2333, 0.0
      %v2366 = vmax.f32 %v2334, 0.0
      %v2367 = vmax.f32 %v2335, 0.0
      %v2368 = vmax.f32 %v2336, 0.0
      %v2369 = vld [vmem:[%s9] sm:$0xff]
      %v2370 = vld [vmem:[%s9 + $0x8] sm:$0xff]
      %v2371 = vld [vmem:[%s9 + $0x10] sm:$0xff]
      %v2372 = vld [vmem:[%s9 + $0x18] sm:$0xff]
      %v2373 = vld [vmem:[%s9 + $0x20] sm:$0xff]
      %v2374 = vld [vmem:[%s9 + $0x28] sm:$0xff]
      %v2375 = vld [vmem:[%s9 + $0x30] sm:$0xff]
      %v2376 = vld [vmem:[%s9 + $0x38] sm:$0xff]
      %v2377 = vld [vmem:[%s10] sm:$0x1]
      %v2379 = vlaneseq
      %v2380 = vshrl.u32 %v2379, 7
      %v2381 = vsub.s32 0, %v2380
      %v2382 = vrot.slane %v2377, %v2381
      %v2385 = vsel %vm1843, %v2337, 0
      %v2388 = vsel %vm1843, %v2338, 0
      %v2391 = vsel %vm1843, %v2339, 0
      %v2394 = vsel %vm1843, %v2340, 0
      %v2397 = vsel %vm1843, %v2341, 0
      %v2400 = vsel %vm1843, %v2342, 0
      %v2403 = vsel %vm1843, %v2343, 0
      %v2406 = vsel %vm1843, %v2344, 0
      %v2409 = vsel %vm1843, %v2345, 0
      %v2412 = vsel %vm1843, %v2346, 0
      %v2415 = vsel %vm1843, %v2347, 0
      %v2418 = vsel %vm1843, %v2348, 0
      %v2421 = vsel %vm1843, %v2349, 0
      %v2424 = vsel %vm1843, %v2350, 0
      %v2427 = vsel %vm1843, %v2351, 0
      %v2430 = vsel %vm1843, %v2352, 0
      %v2433 = vsel %vm1843, %v2353, 0
      %v2436 = vsel %vm1843, %v2354, 0
      %v2439 = vsel %vm1843, %v2355, 0
      %v2442 = vsel %vm1843, %v2356, 0
      %v2445 = vsel %vm1843, %v2357, 0
      %v2448 = vsel %vm1843, %v2358, 0
      %v2451 = vsel %vm1843, %v2359, 0
      %v2454 = vsel %vm1843, %v2360, 0
      %v2457 = vsel %vm1843, %v2361, 0
      %v2460 = vsel %vm1843, %v2362, 0
      %v2463 = vsel %vm1843, %v2363, 0
      %v2466 = vsel %vm1843, %v2364, 0
      %v2469 = vsel %vm1843, %v2365, 0
      %v2472 = vsel %vm1843, %v2366, 0
      %v2475 = vsel %vm1843, %v2367, 0
      %v2478 = vsel %vm1843, %v2368, 0
      %2480 = vmatprep.subr.mxu0 0.0
      %2481 = vmatpush1.msra.mxu0 %v2369
      %2482 = vmatprep.subr.mxu0 0.0
      %2483 = vmatpush1.msra.mxu0 %v2370
      %2484 = vmatprep.subr.mxu0 0.0
      %2485 = vmatpush1.msra.mxu0 %v2371
      %2486 = vmatprep.subr.mxu0 0.0
      %2487 = vmatpush1.msra.mxu0 %v2372
      %2488 = vmatprep.subr.mxu0 0.0
      %2489 = vmatpush1.msra.mxu0 %v2373
      %2490 = vmatprep.subr.mxu0 0.0
      %2491 = vmatpush1.msra.mxu0 %v2374
      %2492 = vmatprep.subr.mxu0 0.0
      %2493 = vmatpush1.msra.mxu0 %v2375
      %2494 = vmatprep.subr.mxu0 0.0
      %2495 = vmatpush1.msra.mxu0 %v2376
      %2496 = vmatprep.subr.mxu0 0.0
      %2497 = vmatpush1.msra.mxu0 0.0
      %2498 = vmatprep.subr.mxu0 0.0
      %2499 = vmatpush1.msra.mxu0 0.0
      %2500 = vmatprep.subr.mxu0 0.0
      %2501 = vmatpush1.msra.mxu0 0.0
      %2502 = vmatprep.subr.mxu0 0.0
      %2503 = vmatpush1.msra.mxu0 0.0
      %2504 = vmatprep.subr.mxu0 0.0
      %2505 = vmatpush1.msra.mxu0 0.0
      %2506 = vmatprep.subr.mxu0 0.0
      %2507 = vmatpush1.msra.mxu0 0.0
      %2508 = vmatprep.subr.mxu0 0.0
      %2509 = vmatpush1.msra.mxu0 0.0
      %2510 = vmatprep.subr.mxu0 0.0
      %2511 = vmatpush1.msra.mxu0 0.0
      %2512 = vmatprep.subr.mxu0 0.0
      %2513 = vmatpush1.msra.mxu0 0.0
      %2514 = vmatprep.subr.mxu0 0.0
      %2515 = vmatpush1.msra.mxu0 0.0
      %2516 = vmatprep.subr.mxu0 0.0
      %2517 = vmatpush1.msra.mxu0 0.0
      %2518 = vmatprep.subr.mxu0 0.0
      %2519 = vmatpush1.msra.mxu0 0.0
      %2520 = vmatprep.subr.mxu0 0.0
      %2521 = vmatpush1.msra.mxu0 0.0
      %2522 = vmatprep.subr.mxu0 0.0
      %2523 = vmatpush1.msra.mxu0 0.0
      %2524 = vmatprep.subr.mxu0 0.0
      %2525 = vmatpush1.msra.mxu0 0.0
      %2526 = vmatprep.subr.mxu0 0.0
      %2527 = vmatpush1.msra.mxu0 0.0
      %2528 = vmatprep.subr.mxu0 0.0
      %2529 = vmatpush1.msra.mxu0 0.0
      %2530 = vmatprep.subr.mxu0 0.0
      %2531 = vmatpush1.msra.mxu0 0.0
      %2532 = vmatprep.subr.mxu0 0.0
      %2533 = vmatpush1.msra.mxu0 0.0
      %2534 = vmatprep.subr.mxu0 0.0
      %2535 = vmatpush1.msra.mxu0 0.0
      %2536 = vmatprep.subr.mxu0 0.0
      %2537 = vmatpush1.msra.mxu0 0.0
      %2538 = vmatprep.subr.mxu0 0.0
      %2539 = vmatpush1.msra.mxu0 0.0
      %2540 = vmatprep.subr.mxu0 0.0
      %2541 = vmatpush1.msra.mxu0 0.0
      %2542 = vmatprep.subr.mxu0 0.0
      %2543 = vmatpush1.msra.mxu0 0.0
      %2544 = vmatprep.mubr.f32.mxu0 0.0
      %2545 = vmatmul.mubr.f32.gmra.mrb[0].mxu0 %v2385
      %v2546 = vpop.f32.mrb[0].mxu0
      %v2547 = vadd.f32 %v2382, %v2546
      %v2548 = vpop.f32.mrb[0].mxu0
      %2549 = vmatprep.mubr.f32.mxu0 0.0
      %2550 = vmatmul.mubr.f32.gmra.mrb[0].mxu0 %v2388
      %v2551 = vpop.f32.mrb[0].mxu0
      %v2552 = vadd.f32 %v2382, %v2551
      %v2553 = vpop.f32.mrb[0].mxu0
      %2554 = vmatprep.mubr.f32.mxu0 0.0
      %2555 = vmatmul.mubr.f32.gmra.mrb[0].mxu0 %v2391
      %v2556 = vpop.f32.mrb[0].mxu0
      %v2557 = vadd.f32 %v2382, %v2556
      %v2558 = vpop.f32.mrb[0].mxu0
      %2559 = vmatprep.mubr.f32.mxu0 0.0
      %2560 = vmatmul.mubr.f32.gmra.mrb[0].mxu0 %v2394
      %v2561 = vpop.f32.mrb[0].mxu0
      %v2562 = vadd.f32 %v2382, %v2561
      %v2563 = vpop.f32.mrb[0].mxu0
      %2564 = vmatprep.mubr.f32.mxu0 0.0
      %2565 = vmatmul.mubr.f32.gmra.mrb[0].mxu0 %v2397
      %v2566 = vpop.f32.mrb[0].mxu0
      %v2567 = vadd.f32 %v2382, %v2566
      %v2568 = vpop.f32.mrb[0].mxu0
      %2569 = vmatprep.mubr.f32.mxu0 0.0
      %2570 = vmatmul.mubr.f32.gmra.mrb[0].mxu0 %v2400
      %v2571 = vpop.f32.mrb[0].mxu0
      %v2572 = vadd.f32 %v2382, %v2571
      %v2573 = vpop.f32.mrb[0].mxu0
      %2574 = vmatprep.mubr.f32.mxu0 0.0
      %2575 = vmatmul.mubr.f32.gmra.mrb[0].mxu0 %v2403
      %v2576 = vpop.f32.mrb[0].mxu0
      %v2577 = vadd.f32 %v2382, %v2576
      %v2578 = vpop.f32.mrb[0].mxu0
      %2579 = vmatprep.mubr.f32.mxu0 0.0
      %2580 = vmatmul.mubr.f32.gmra.mrb[0].mxu0 %v2406
      %v2581 = vpop.f32.mrb[0].mxu0
      %v2582 = vadd.f32 %v2382, %v2581
      %v2583 = vpop.f32.mrb[0].mxu0
      %2584 = vmatprep.mubr.f32.mxu0 0.0
      %2585 = vmatmul.mubr.f32.gmra.mrb[0].mxu0 %v2409
      %v2586 = vpop.f32.mrb[0].mxu0
      %v2587 = vadd.f32 %v2382, %v2586
      %v2588 = vpop.f32.mrb[0].mxu0
      %2589 = vmatprep.mubr.f32.mxu0 0.0
      %2590 = vmatmul.mubr.f32.gmra.mrb[0].mxu0 %v2412
      %v2591 = vpop.f32.mrb[0].mxu0
      %v2592 = vadd.f32 %v2382, %v2591
      %v2593 = vpop.f32.mrb[0].mxu0
      %2594 = vmatprep.mubr.f32.mxu0 0.0
      %2595 = vmatmul.mubr.f32.gmra.mrb[0].mxu0 %v2415
      %v2596 = vpop.f32.mrb[0].mxu0
      %v2597 = vadd.f32 %v2382, %v2596
      %v2598 = vpop.f32.mrb[0].mxu0
      %2599 = vmatprep.mubr.f32.mxu0 0.0
      %2600 = vmatmul.mubr.f32.gmra.mrb[0].mxu0 %v2418
      %v2601 = vpop.f32.mrb[0].mxu0
      %v2602 = vadd.f32 %v2382, %v2601
      %v2603 = vpop.f32.mrb[0].mxu0
      %2604 = vmatprep.mubr.f32.mxu0 0.0
      %2605 = vmatmul.mubr.f32.gmra.mrb[0].mxu0 %v2421
      %v2606 = vpop.f32.mrb[0].mxu0
      %v2607 = vadd.f32 %v2382, %v2606
      %v2608 = vpop.f32.mrb[0].mxu0
      %2609 = vmatprep.mubr.f32.mxu0 0.0
      %2610 = vmatmul.mubr.f32.gmra.mrb[0].mxu0 %v2424
      %v2611 = vpop.f32.mrb[0].mxu0
      %v2612 = vadd.f32 %v2382, %v2611
      %v2613 = vpop.f32.mrb[0].mxu0
      %2614 = vmatprep.mubr.f32.mxu0 0.0
      %2615 = vmatmul.mubr.f32.gmra.mrb[0].mxu0 %v2427
      %v2616 = vpop.f32.mrb[0].mxu0
      %v2617 = vadd.f32 %v2382, %v2616
      %v2618 = vpop.f32.mrb[0].mxu0
      %2619 = vmatprep.mubr.f32.mxu0 0.0
      %2620 = vmatmul.mubr.f32.gmra.mrb[0].mxu0 %v2430
      %v2621 = vpop.f32.mrb[0].mxu0
      %v2622 = vadd.f32 %v2382, %v2621
      %v2623 = vpop.f32.mrb[0].mxu0
      %2624 = vmatprep.mubr.f32.mxu0 0.0
      %2625 = vmatmul.mubr.f32.gmra.mrb[0].mxu0 %v2433
      %v2626 = vpop.f32.mrb[0].mxu0
      %v2627 = vadd.f32 %v2382, %v2626
      %v2628 = vpop.f32.mrb[0].mxu0
      %2629 = vmatprep.mubr.f32.mxu0 0.0
      %2630 = vmatmul.mubr.f32.gmra.mrb[0].mxu0 %v2436
      %v2631 = vpop.f32.mrb[0].mxu0
      %v2632 = vadd.f32 %v2382, %v2631
      %v2633 = vpop.f32.mrb[0].mxu0
      %2634 = vmatprep.mubr.f32.mxu0 0.0
      %2635 = vmatmul.mubr.f32.gmra.mrb[0].mxu0 %v2439
      %v2636 = vpop.f32.mrb[0].mxu0
      %v2637 = vadd.f32 %v2382, %v2636
      %v2638 = vpop.f32.mrb[0].mxu0
      %2639 = vmatprep.mubr.f32.mxu0 0.0
      %2640 = vmatmul.mubr.f32.gmra.mrb[0].mxu0 %v2442
      %v2641 = vpop.f32.mrb[0].mxu0
      %v2642 = vadd.f32 %v2382, %v2641
      %v2643 = vpop.f32.mrb[0].mxu0
      %2644 = vmatprep.mubr.f32.mxu0 0.0
      %2645 = vmatmul.mubr.f32.gmra.mrb[0].mxu0 %v2445
      %v2646 = vpop.f32.mrb[0].mxu0
      %v2647 = vadd.f32 %v2382, %v2646
      %v2648 = vpop.f32.mrb[0].mxu0
      %2649 = vmatprep.mubr.f32.mxu0 0.0
      %2650 = vmatmul.mubr.f32.gmra.mrb[0].mxu0 %v2448
      %v2651 = vpop.f32.mrb[0].mxu0
      %v2652 = vadd.f32 %v2382, %v2651
      %v2653 = vpop.f32.mrb[0].mxu0
      %2654 = vmatprep.mubr.f32.mxu0 0.0
      %2655 = vmatmul.mubr.f32.gmra.mrb[0].mxu0 %v2451
      %v2656 = vpop.f32.mrb[0].mxu0
      %v2657 = vadd.f32 %v2382, %v2656
      %v2658 = vpop.f32.mrb[0].mxu0
      %2659 = vmatprep.mubr.f32.mxu0 0.0
      %2660 = vmatmul.mubr.f32.gmra.mrb[0].mxu0 %v2454
      %v2661 = vpop.f32.mrb[0].mxu0
      %v2662 = vadd.f32 %v2382, %v2661
      %v2663 = vpop.f32.mrb[0].mxu0
      %2664 = vmatprep.mubr.f32.mxu0 0.0
      %2665 = vmatmul.mubr.f32.gmra.mrb[0].mxu0 %v2457
      %v2666 = vpop.f32.mrb[0].mxu0
      %v2667 = vadd.f32 %v2382, %v2666
      %v2668 = vpop.f32.mrb[0].mxu0
      %2669 = vmatprep.mubr.f32.mxu0 0.0
      %2670 = vmatmul.mubr.f32.gmra.mrb[0].mxu0 %v2460
      %v2671 = vpop.f32.mrb[0].mxu0
      %v2672 = vadd.f32 %v2382, %v2671
      %v2673 = vpop.f32.mrb[0].mxu0
      %2674 = vmatprep.mubr.f32.mxu0 0.0
      %2675 = vmatmul.mubr.f32.gmra.mrb[0].mxu0 %v2463
      %v2676 = vpop.f32.mrb[0].mxu0
      %v2677 = vadd.f32 %v2382, %v2676
      %v2678 = vpop.f32.mrb[0].mxu0
      %2679 = vmatprep.mubr.f32.mxu0 0.0
      %2680 = vmatmul.mubr.f32.gmra.mrb[0].mxu0 %v2466
      %v2681 = vpop.f32.mrb[0].mxu0
      %v2682 = vadd.f32 %v2382, %v2681
      %v2683 = vpop.f32.mrb[0].mxu0
      %2684 = vmatprep.mubr.f32.mxu0 0.0
      %2685 = vmatmul.mubr.f32.gmra.mrb[0].mxu0 %v2469
      %v2686 = vpop.f32.mrb[0].mxu0
      %v2687 = vadd.f32 %v2382, %v2686
      %v2688 = vpop.f32.mrb[0].mxu0
      %2689 = vmatprep.mubr.f32.mxu0 0.0
      %2690 = vmatmul.mubr.f32.gmra.mrb[0].mxu0 %v2472
      %v2691 = vpop.f32.mrb[0].mxu0
      %v2692 = vadd.f32 %v2382, %v2691
      %v2693 = vpop.f32.mrb[0].mxu0
      %2694 = vmatprep.mubr.f32.mxu0 0.0
      %2695 = vmatmul.mubr.f32.gmra.mrb[0].mxu0 %v2475
      %v2696 = vpop.f32.mrb[0].mxu0
      %v2697 = vadd.f32 %v2382, %v2696
      %v2698 = vpop.f32.mrb[0].mxu0
      %2699 = vmatprep.mubr.f32.mxu0 0.0
      %2700 = vmatmul.mubr.f32.gmra.mrb[0].mxu0 %v2478
      %v2701 = vpop.f32.mrb[0].mxu0
      %v2702 = vadd.f32 %v2382, %v2701
      %v2703 = vpop.f32.mrb[0].mxu0
      %2704 = vdwg.mxu0
      %v2705 = vld [vmem:[%s21] sm:$0xff]
      %v2706 = vld [vmem:[%s21 + $0x8] sm:$0xff]
      %v2707 = vld [vmem:[%s21 + $0x10] sm:$0xff]
      %v2708 = vld [vmem:[%s21 + $0x18] sm:$0xff]
      %v2709 = vld [vmem:[%s21 + $0x20] sm:$0xff]
      %v2710 = vld [vmem:[%s21 + $0x28] sm:$0xff]
      %v2711 = vld [vmem:[%s21 + $0x30] sm:$0xff]
      %v2712 = vld [vmem:[%s21 + $0x38] sm:$0xff]
      %v2713 = vld [vmem:[%s21 + $0x40] sm:$0xff]
      %v2714 = vld [vmem:[%s21 + $0x48] sm:$0xff]
      %v2715 = vld [vmem:[%s21 + $0x50] sm:$0xff]
      %v2716 = vld [vmem:[%s21 + $0x58] sm:$0xff]
      %v2717 = vld [vmem:[%s21 + $0x60] sm:$0xff]
      %v2718 = vld [vmem:[%s21 + $0x68] sm:$0xff]
      %v2719 = vld [vmem:[%s21 + $0x70] sm:$0xff]
      %v2720 = vld [vmem:[%s21 + $0x78] sm:$0xff]
      %v2721 = vpack.c.bf16 %v2552, %v2547
      %v2722 = vpack.c.bf16 %v2562, %v2557
      %v2723 = vpack.c.bf16 %v2572, %v2567
      %v2724 = vpack.c.bf16 %v2582, %v2577
      %v2725 = vpack.c.bf16 %v2592, %v2587
      %v2726 = vpack.c.bf16 %v2602, %v2597
      %v2727 = vpack.c.bf16 %v2612, %v2607
      %v2728 = vpack.c.bf16 %v2622, %v2617
      %v2729 = vpack.c.bf16 %v2632, %v2627
      %v2730 = vpack.c.bf16 %v2642, %v2637
      %v2731 = vpack.c.bf16 %v2652, %v2647
      %v2732 = vpack.c.bf16 %v2662, %v2657
      %v2733 = vpack.c.bf16 %v2672, %v2667
      %v2734 = vpack.c.bf16 %v2682, %v2677
      %v2735 = vpack.c.bf16 %v2692, %v2687
      %v2736 = vpack.c.bf16 %v2702, %v2697
      %2737 = vmatprep.subr.bf16.mxu0 0
      %2738 = vmatpush1.bf16.msra.mxu0 %v2721
      %2739 = vmatprep.subr.bf16.mxu0 0
      %2740 = vmatpush1.bf16.msra.mxu0 %v2722
      %2741 = vmatprep.subr.bf16.mxu0 0
      %2742 = vmatpush1.bf16.msra.mxu0 %v2723
      %2743 = vmatprep.subr.bf16.mxu0 0
      %2744 = vmatpush1.bf16.msra.mxu0 %v2724
      %2745 = vmatprep.subr.bf16.mxu0 0
      %2746 = vmatpush1.bf16.msra.mxu0 %v2725
      %2747 = vmatprep.subr.bf16.mxu0 0
      %2748 = vmatpush1.bf16.msra.mxu0 %v2726
      %2749 = vmatprep.subr.bf16.mxu0 0
      %2750 = vmatpush1.bf16.msra.mxu0 %v2727
      %2751 = vmatprep.subr.bf16.mxu0 0
      %2752 = vmatpush1.bf16.msra.mxu0 %v2728
      %2753 = vmatprep.subr.bf16.mxu0 0
      %2754 = vmatpush1.bf16.msra.mxu0 %v2729
      %2755 = vmatprep.subr.bf16.mxu0 0
      %2756 = vmatpush1.bf16.msra.mxu0 %v2730
      %2757 = vmatprep.subr.bf16.mxu0 0
      %2758 = vmatpush1.bf16.msra.mxu0 %v2731
      %2759 = vmatprep.subr.bf16.mxu0 0
      %2760 = vmatpush1.bf16.msra.mxu0 %v2732
      %2761 = vmatprep.subr.bf16.mxu0 0
      %2762 = vmatpush1.bf16.msra.mxu0 %v2733
      %2763 = vmatprep.subr.bf16.mxu0 0
      %2764 = vmatpush1.bf16.msra.mxu0 %v2734
      %2765 = vmatprep.subr.bf16.mxu0 0
      %2766 = vmatpush1.bf16.msra.mxu0 %v2735
      %2767 = vmatprep.subr.bf16.mxu0 0
      %2768 = vmatpush1.bf16.msra.mxu0 %v2736
      %2769 = vmatprep.mubr.bf16.mxu0 %v1424
      %2770 = vmatmul.mubr.bf16.gmra.mrb[0].mxu0 %v1423
      %v2771 = vpop.f32.mrb[0].mxu0
      %v2772 = vadd.f32 0.0, %v2771
      %v2773 = vpop.f32.mrb[0].mxu0
      %v2774 = vpop.f32.mrb[0].mxu0
      %v2775 = vadd.f32 0.0, %v2774
      %v2776 = vpop.f32.mrb[0].mxu0
      %2777 = vmatprep.mubr.bf16.mxu0 %v1426
      %2778 = vmatmul.mubr.bf16.gmra.mrb[0].mxu0 %v1425
      %v2779 = vpop.f32.mrb[0].mxu0
      %v2780 = vadd.f32 0.0, %v2779
      %v2781 = vpop.f32.mrb[0].mxu0
      %v2782 = vpop.f32.mrb[0].mxu0
      %v2783 = vadd.f32 0.0, %v2782
      %v2784 = vpop.f32.mrb[0].mxu0
      %2785 = vmatprep.mubr.bf16.mxu0 %v1428
      %2786 = vmatmul.mubr.bf16.gmra.mrb[0].mxu0 %v1427
      %v2787 = vpop.f32.mrb[0].mxu0
      %v2788 = vadd.f32 0.0, %v2787
      %v2789 = vpop.f32.mrb[0].mxu0
      %v2790 = vpop.f32.mrb[0].mxu0
      %v2791 = vadd.f32 0.0, %v2790
      %v2792 = vpop.f32.mrb[0].mxu0
      %2793 = vmatprep.mubr.bf16.mxu0 %v1430
      %2794 = vmatmul.mubr.bf16.gmra.mrb[0].mxu0 %v1429
      %v2795 = vpop.f32.mrb[0].mxu0
      %v2796 = vadd.f32 0.0, %v2795
      %v2797 = vpop.f32.mrb[0].mxu0
      %v2798 = vpop.f32.mrb[0].mxu0
      %v2799 = vadd.f32 0.0, %v2798
      %v2800 = vpop.f32.mrb[0].mxu0
      %2801 = vmatprep.mubr.bf16.mxu0 %v1432
      %2802 = vmatmul.mubr.bf16.gmra.mrb[0].mxu0 %v1431
      %v2803 = vpop.f32.mrb[0].mxu0
      %v2804 = vadd.f32 0.0, %v2803
      %v2805 = vpop.f32.mrb[0].mxu0
      %v2806 = vpop.f32.mrb[0].mxu0
      %v2807 = vadd.f32 0.0, %v2806
      %v2808 = vpop.f32.mrb[0].mxu0
      %2809 = vmatprep.mubr.bf16.mxu0 %v1434
      %2810 = vmatmul.mubr.bf16.gmra.mrb[0].mxu0 %v1433
      %v2811 = vpop.f32.mrb[0].mxu0
      %v2812 = vadd.f32 0.0, %v2811
      %v2813 = vpop.f32.mrb[0].mxu0
      %v2814 = vpop.f32.mrb[0].mxu0
      %v2815 = vadd.f32 0.0, %v2814
      %v2816 = vpop.f32.mrb[0].mxu0
      %2817 = vmatprep.mubr.bf16.mxu0 %v1436
      %2818 = vmatmul.mubr.bf16.gmra.mrb[0].mxu0 %v1435
      %v2819 = vpop.f32.mrb[0].mxu0
      %v2820 = vadd.f32 0.0, %v2819
      %v2821 = vpop.f32.mrb[0].mxu0
      %v2822 = vpop.f32.mrb[0].mxu0
      %v2823 = vadd.f32 0.0, %v2822
      %v2824 = vpop.f32.mrb[0].mxu0
      %2825 = vmatprep.mubr.bf16.mxu0 %v1438
      %2826 = vmatmul.mubr.bf16.gmra.mrb[0].mxu0 %v1437
      %v2827 = vpop.f32.mrb[0].mxu0
      %v2828 = vadd.f32 0.0, %v2827
      %v2829 = vpop.f32.mrb[0].mxu0
      %v2830 = vpop.f32.mrb[0].mxu0
      %v2831 = vadd.f32 0.0, %v2830
      %v2832 = vpop.f32.mrb[0].mxu0
      %2833 = vdwg.mxu0
      %v2834 = vadd.f32 %v2705, %v2772
      %v2835 = vadd.f32 %v2706, %v2775
      %v2836 = vadd.f32 %v2707, %v2780
      %v2837 = vadd.f32 %v2708, %v2783
      %v2838 = vadd.f32 %v2709, %v2788
      %v2839 = vadd.f32 %v2710, %v2791
      %v2840 = vadd.f32 %v2711, %v2796
      %v2841 = vadd.f32 %v2712, %v2799
      %v2842 = vadd.f32 %v2713, %v2804
      %v2843 = vadd.f32 %v2714, %v2807
      %v2844 = vadd.f32 %v2715, %v2812
      %v2845 = vadd.f32 %v2716, %v2815
      %v2846 = vadd.f32 %v2717, %v2820
      %v2847 = vadd.f32 %v2718, %v2823
      %v2848 = vadd.f32 %v2719, %v2828
      %v2849 = vadd.f32 %v2720, %v2831
      %2850 = vst.msk [vmem:[%s21] sm:$0xff] %vm1843, %v2834
      %2851 = vst.msk [vmem:[%s21 + $0x8] sm:$0xff] %vm1843, %v2835
      %2852 = vst.msk [vmem:[%s21 + $0x10] sm:$0xff] %vm1843, %v2836
      %2853 = vst.msk [vmem:[%s21 + $0x18] sm:$0xff] %vm1843, %v2837
      %2854 = vst.msk [vmem:[%s21 + $0x20] sm:$0xff] %vm1843, %v2838
      %2855 = vst.msk [vmem:[%s21 + $0x28] sm:$0xff] %vm1843, %v2839
      %2856 = vst.msk [vmem:[%s21 + $0x30] sm:$0xff] %vm1843, %v2840
      %2857 = vst.msk [vmem:[%s21 + $0x38] sm:$0xff] %vm1843, %v2841
      %2858 = vst.msk [vmem:[%s21 + $0x40] sm:$0xff] %vm1843, %v2842
      %2859 = vst.msk [vmem:[%s21 + $0x48] sm:$0xff] %vm1843, %v2843
      %2860 = vst.msk [vmem:[%s21 + $0x50] sm:$0xff] %vm1843, %v2844
      %2861 = vst.msk [vmem:[%s21 + $0x58] sm:$0xff] %vm1843, %v2845
      %2862 = vst.msk [vmem:[%s21 + $0x60] sm:$0xff] %vm1843, %v2846
      %2863 = vst.msk [vmem:[%s21 + $0x68] sm:$0xff] %vm1843, %v2847
      %2864 = vst.msk [vmem:[%s21 + $0x70] sm:$0xff] %vm1843, %v2848
      %2865 = vst.msk [vmem:[%s21 + $0x78] sm:$0xff] %vm1843, %v2849
      %p2866 = scmp.eq.s32.totalorder %s34, 2
      // Predicated region
      $region109: #{gnn_policy_forward.11} parent=103 // pred_check
        %p2867 = pneg %p2866
      $region110: #{gnn_policy_forward.11} parent=103 // pred_check_branch
        %2869 = sbr.rel (%p2867) target = $region112
      $region111: #{gnn_policy_forward.11} parent=103 // pred_region
        %v2870 = vld [vmem:[%s21] sm:$0xff]
        %v2871 = vld [vmem:[%s21 + $0x8] sm:$0xff]
        %v2872 = vld [vmem:[%s21 + $0x10] sm:$0xff]
        %v2873 = vld [vmem:[%s21 + $0x18] sm:$0xff]
        %v2874 = vld [vmem:[%s21 + $0x20] sm:$0xff]
        %v2875 = vld [vmem:[%s21 + $0x28] sm:$0xff]
        %v2876 = vld [vmem:[%s21 + $0x30] sm:$0xff]
        %v2877 = vld [vmem:[%s21 + $0x38] sm:$0xff]
        %v2878 = vld [vmem:[%s21 + $0x40] sm:$0xff]
        %v2879 = vld [vmem:[%s21 + $0x48] sm:$0xff]
        %v2880 = vld [vmem:[%s21 + $0x50] sm:$0xff]
        %v2881 = vld [vmem:[%s21 + $0x58] sm:$0xff]
        %v2882 = vld [vmem:[%s21 + $0x60] sm:$0xff]
        %v2883 = vld [vmem:[%s21 + $0x68] sm:$0xff]
        %v2884 = vld [vmem:[%s21 + $0x70] sm:$0xff]
        %v2885 = vld [vmem:[%s21 + $0x78] sm:$0xff]
        %v2886 = vld [vmem:[%s11] sm:$0x1]
        %v2887 = vld [vmem:[%s12] sm:$0x1]
        %v2888 = vsel %vm1843, %v2870, 0.0
        %2889 = vadd.xlane.f32.xlu0 %v2888
        %v2890 = vpop.xlane.xlu0 %2889
        %v2891 = vsel %vm1843, %v2871, 0.0
        %2892 = vadd.xlane.f32.xlu0 %v2891
        %v2893 = vpop.xlane.xlu0 %2892
        %v2894 = vsel %vm1843, %v2872, 0.0
        %2895 = vadd.xlane.f32.xlu0 %v2894
        %v2896 = vpop.xlane.xlu0 %2895
        %v2897 = vsel %vm1843, %v2873, 0.0
        %2898 = vadd.xlane.f32.xlu0 %v2897
        %v2899 = vpop.xlane.xlu0 %2898
        %v2900 = vsel %vm1843, %v2874, 0.0
        %2901 = vadd.xlane.f32.xlu0 %v2900
        %v2902 = vpop.xlane.xlu0 %2901
        %v2903 = vsel %vm1843, %v2875, 0.0
        %2904 = vadd.xlane.f32.xlu0 %v2903
        %v2905 = vpop.xlane.xlu0 %2904
        %v2906 = vsel %vm1843, %v2876, 0.0
        %2907 = vadd.xlane.f32.xlu0 %v2906
        %v2908 = vpop.xlane.xlu0 %2907
        %v2909 = vsel %vm1843, %v2877, 0.0
        %2910 = vadd.xlane.f32.xlu0 %v2909
        %v2911 = vpop.xlane.xlu0 %2910
        %v2912 = vsel %vm1843, %v2878, 0.0
        %2913 = vadd.xlane.f32.xlu0 %v2912
        %v2914 = vpop.xlane.xlu0 %2913
        %v2915 = vsel %vm1843, %v2879, 0.0
        %2916 = vadd.xlane.f32.xlu0 %v2915
        %v2917 = vpop.xlane.xlu0 %2916
        %v2918 = vsel %vm1843, %v2880, 0.0
        %2919 = vadd.xlane.f32.xlu0 %v2918
        %v2920 = vpop.xlane.xlu0 %2919
        %v2921 = vsel %vm1843, %v2881, 0.0
        %2922 = vadd.xlane.f32.xlu0 %v2921
        %v2923 = vpop.xlane.xlu0 %2922
        %v2924 = vsel %vm1843, %v2882, 0.0
        %2925 = vadd.xlane.f32.xlu0 %v2924
        %v2926 = vpop.xlane.xlu0 %2925
        %v2927 = vsel %vm1843, %v2883, 0.0
        %2928 = vadd.xlane.f32.xlu0 %v2927
        %v2929 = vpop.xlane.xlu0 %2928
        %v2930 = vsel %vm1843, %v2884, 0.0
        %2931 = vadd.xlane.f32.xlu0 %v2930
        %v2932 = vpop.xlane.xlu0 %2931
        %v2933 = vsel %vm1843, %v2885, 0.0
        %2934 = vadd.xlane.f32.xlu0 %v2933
        %v2935 = vpop.xlane.xlu0 %2934
        %v2936 = vmul.f32 %v2890, %v1940
        %v2937 = vmul.f32 %v2893, %v1940
        %v2938 = vmul.f32 %v2896, %v1940
        %v2939 = vmul.f32 %v2899, %v1940
        %v2940 = vmul.f32 %v2902, %v1940
        %v2941 = vmul.f32 %v2905, %v1940
        %v2942 = vmul.f32 %v2908, %v1940
        %v2943 = vmul.f32 %v2911, %v1940
        %v2944 = vmul.f32 %v2914, %v1940
        %v2945 = vmul.f32 %v2917, %v1940
        %v2946 = vmul.f32 %v2920, %v1940
        %v2947 = vmul.f32 %v2923, %v1940
        %v2948 = vmul.f32 %v2926, %v1940
        %v2949 = vmul.f32 %v2929, %v1940
        %v2950 = vmul.f32 %v2932, %v1940
        %v2951 = vmul.f32 %v2935, %v1940
        %v2952 = vsub.f32 %v2870, %v2936
        %v2953 = vsub.f32 %v2871, %v2937
        %v2954 = vsub.f32 %v2872, %v2938
        %v2955 = vsub.f32 %v2873, %v2939
        %v2956 = vsub.f32 %v2874, %v2940
        %v2957 = vsub.f32 %v2875, %v2941
        %v2958 = vsub.f32 %v2876, %v2942
        %v2959 = vsub.f32 %v2877, %v2943
        %v2960 = vsub.f32 %v2878, %v2944
        %v2961 = vsub.f32 %v2879, %v2945
        %v2962 = vsub.f32 %v2880, %v2946
        %v2963 = vsub.f32 %v2881, %v2947
        %v2964 = vsub.f32 %v2882, %v2948
        %v2965 = vsub.f32 %v2883, %v2949
        %v2966 = vsub.f32 %v2884, %v2950
        %v2967 = vsub.f32 %v2885, %v2951
        %v2968 = vmul.f32 %v2952, %v2952
        %v2969 = vmul.f32 %v2953, %v2953
        %v2970 = vmul.f32 %v2954, %v2954
        %v2971 = vmul.f32 %v2955, %v2955
        %v2972 = vmul.f32 %v2956, %v2956
        %v2973 = vmul.f32 %v2957, %v2957
        %v2974 = vmul.f32 %v2958, %v2958
        %v2975 = vmul.f32 %v2959, %v2959
        %v2976 = vmul.f32 %v2960, %v2960
        %v2977 = vmul.f32 %v2961, %v2961
        %v2978 = vmul.f32 %v2962, %v2962
        %v2979 = vmul.f32 %v2963, %v2963
        %v2980 = vmul.f32 %v2964, %v2964
        %v2981 = vmul.f32 %v2965, %v2965
        %v2982 = vmul.f32 %v2966, %v2966
        %v2983 = vmul.f32 %v2967, %v2967
        %v2984 = vsel %vm1843, %v2968, 0.0
        %2985 = vadd.xlane.f32.xlu0 %v2984
        %v2986 = vpop.xlane.xlu0 %2985
        %v2987 = vsel %vm1843, %v2969, 0.0
        %2988 = vadd.xlane.f32.xlu0 %v2987
        %v2989 = vpop.xlane.xlu0 %2988
        %v2990 = vsel %vm1843, %v2970, 0.0
        %2991 = vadd.xlane.f32.xlu0 %v2990
        %v2992 = vpop.xlane.xlu0 %2991
        %v2993 = vsel %vm1843, %v2971, 0.0
        %2994 = vadd.xlane.f32.xlu0 %v2993
        %v2995 = vpop.xlane.xlu0 %2994
        %v2996 = vsel %vm1843, %v2972, 0.0
        %2997 = vadd.xlane.f32.xlu0 %v2996
        %v2998 = vpop.xlane.xlu0 %2997
        %v2999 = vsel %vm1843, %v2973, 0.0
        %3000 = vadd.xlane.f32.xlu0 %v2999
        %v3001 = vpop.xlane.xlu0 %3000
        %v3002 = vsel %vm1843, %v2974, 0.0
        %3003 = vadd.xlane.f32.xlu0 %v3002
        %v3004 = vpop.xlane.xlu0 %3003
        %v3005 = vsel %vm1843, %v2975, 0.0
        %3006 = vadd.xlane.f32.xlu0 %v3005
        %v3007 = vpop.xlane.xlu0 %3006
        %v3008 = vsel %vm1843, %v2976, 0.0
        %3009 = vadd.xlane.f32.xlu0 %v3008
        %v3010 = vpop.xlane.xlu0 %3009
        %v3011 = vsel %vm1843, %v2977, 0.0
        %3012 = vadd.xlane.f32.xlu0 %v3011
        %v3013 = vpop.xlane.xlu0 %3012
        %v3014 = vsel %vm1843, %v2978, 0.0
        %3015 = vadd.xlane.f32.xlu0 %v3014
        %v3016 = vpop.xlane.xlu0 %3015
        %v3017 = vsel %vm1843, %v2979, 0.0
        %3018 = vadd.xlane.f32.xlu0 %v3017
        %v3019 = vpop.xlane.xlu0 %3018
        %v3020 = vsel %vm1843, %v2980, 0.0
        %3021 = vadd.xlane.f32.xlu0 %v3020
        %v3022 = vpop.xlane.xlu0 %3021
        %v3023 = vsel %vm1843, %v2981, 0.0
        %3024 = vadd.xlane.f32.xlu0 %v3023
        %v3025 = vpop.xlane.xlu0 %3024
        %v3026 = vsel %vm1843, %v2982, 0.0
        %3027 = vadd.xlane.f32.xlu0 %v3026
        %v3028 = vpop.xlane.xlu0 %3027
        %v3029 = vsel %vm1843, %v2983, 0.0
        %3030 = vadd.xlane.f32.xlu0 %v3029
        %v3031 = vpop.xlane.xlu0 %3030
        %v3032 = vmul.f32 %v2986, %v1940
        %v3033 = vmul.f32 %v2989, %v1940
        %v3034 = vmul.f32 %v2992, %v1940
        %v3035 = vmul.f32 %v2995, %v1940
        %v3036 = vmul.f32 %v2998, %v1940
        %v3037 = vmul.f32 %v3001, %v1940
        %v3038 = vmul.f32 %v3004, %v1940
        %v3039 = vmul.f32 %v3007, %v1940
        %v3040 = vmul.f32 %v3010, %v1940
        %v3041 = vmul.f32 %v3013, %v1940
        %v3042 = vmul.f32 %v3016, %v1940
        %v3043 = vmul.f32 %v3019, %v1940
        %v3044 = vmul.f32 %v3022, %v1940
        %v3045 = vmul.f32 %v3025, %v1940
        %v3046 = vmul.f32 %v3028, %v1940
        %v3047 = vmul.f32 %v3031, %v1940
        %v3048 = vadd.f32 %v3032, 1e-05
        %v3049 = vadd.f32 %v3033, 1e-05
        %v3050 = vadd.f32 %v3034, 1e-05
        %v3051 = vadd.f32 %v3035, 1e-05
        %v3052 = vadd.f32 %v3036, 1e-05
        %v3053 = vadd.f32 %v3037, 1e-05
        %v3054 = vadd.f32 %v3038, 1e-05
        %v3055 = vadd.f32 %v3039, 1e-05
        %v3056 = vadd.f32 %v3040, 1e-05
        %v3057 = vadd.f32 %v3041, 1e-05
        %v3058 = vadd.f32 %v3042, 1e-05
        %v3059 = vadd.f32 %v3043, 1e-05
        %v3060 = vadd.f32 %v3044, 1e-05
        %v3061 = vadd.f32 %v3045, 1e-05
        %v3062 = vadd.f32 %v3046, 1e-05
        %v3063 = vadd.f32 %v3047, 1e-05
        %v3064 = vrsqrt.pop %v3048
        %v3065 = vrsqrt.pop %v3049
        %v3066 = vrsqrt.pop %v3050
        %v3067 = vrsqrt.pop %v3051
        %v3068 = vrsqrt.pop %v3052
        %v3069 = vrsqrt.pop %v3053
        %v3070 = vrsqrt.pop %v3054
        %v3071 = vrsqrt.pop %v3055
        %v3072 = vrsqrt.pop %v3056
        %v3073 = vrsqrt.pop %v3057
        %v3074 = vrsqrt.pop %v3058
        %v3075 = vrsqrt.pop %v3059
        %v3076 = vrsqrt.pop %v3060
        %v3077 = vrsqrt.pop %v3061
        %v3078 = vrsqrt.pop %v3062
        %v3079 = vrsqrt.pop %v3063
        %v3080 = vmul.f32 %v2952, %v3064
        %v3081 = vmul.f32 %v2953, %v3065
        %v3082 = vmul.f32 %v2954, %v3066
        %v3083 = vmul.f32 %v2955, %v3067
        %v3084 = vmul.f32 %v2956, %v3068
        %v3085 = vmul.f32 %v2957, %v3069
        %v3086 = vmul.f32 %v2958, %v3070
        %v3087 = vmul.f32 %v2959, %v3071
        %v3088 = vmul.f32 %v2960, %v3072
        %v3089 = vmul.f32 %v2961, %v3073
        %v3090 = vmul.f32 %v2962, %v3074
        %v3091 = vmul.f32 %v2963, %v3075
        %v3092 = vmul.f32 %v2964, %v3076
        %v3093 = vmul.f32 %v2965, %v3077
        %v3094 = vmul.f32 %v2966, %v3078
        %v3095 = vmul.f32 %v2967, %v3079
        %v3097 = vlaneseq
        %v3098 = vshrl.u32 %v3097, 7
        %v3099 = vsub.s32 0, %v3098
        %v3100 = vrot.slane %v2886, %v3099
        %v3102 = vmul.f32 %v3080, %v3100
        %v3103 = vmul.f32 %v3081, %v3100
        %v3104 = vmul.f32 %v3082, %v3100
        %v3105 = vmul.f32 %v3083, %v3100
        %v3106 = vmul.f32 %v3084, %v3100
        %v3107 = vmul.f32 %v3085, %v3100
        %v3108 = vmul.f32 %v3086, %v3100
        %v3109 = vmul.f32 %v3087, %v3100
        %v3110 = vmul.f32 %v3088, %v3100
        %v3111 = vmul.f32 %v3089, %v3100
        %v3112 = vmul.f32 %v3090, %v3100
        %v3113 = vmul.f32 %v3091, %v3100
        %v3114 = vmul.f32 %v3092, %v3100
        %v3115 = vmul.f32 %v3093, %v3100
        %v3116 = vmul.f32 %v3094, %v3100
        %v3117 = vmul.f32 %v3095, %v3100
        %v3119 = vlaneseq
        %v3120 = vshrl.u32 %v3119, 7
        %v3121 = vsub.s32 0, %v3120
        %v3122 = vrot.slane %v2887, %v3121
        %v3124 = vadd.f32 %v3102, %v3122
        %v3125 = vadd.f32 %v3103, %v3122
        %v3126 = vadd.f32 %v3104, %v3122
        %v3127 = vadd.f32 %v3105, %v3122
        %v3128 = vadd.f32 %v3106, %v3122
        %v3129 = vadd.f32 %v3107, %v3122
        %v3130 = vadd.f32 %v3108, %v3122
        %v3131 = vadd.f32 %v3109, %v3122
        %v3132 = vadd.f32 %v3110, %v3122
        %v3133 = vadd.f32 %v3111, %v3122
        %v3134 = vadd.f32 %v3112, %v3122
        %v3135 = vadd.f32 %v3113, %v3122
        %v3136 = vadd.f32 %v3114, %v3122
        %v3137 = vadd.f32 %v3115, %v3122
        %v3138 = vadd.f32 %v3116, %v3122
        %v3139 = vadd.f32 %v3117, %v3122
        %v3140 = vld [vmem:[%s13] sm:$0xff]
        %v3141 = vld [vmem:[%s13 + $0x8] sm:$0xff]
        %v3142 = vld [vmem:[%s13 + $0x10] sm:$0xff]
        %v3143 = vld [vmem:[%s13 + $0x18] sm:$0xff]
        %v3144 = vld [vmem:[%s13 + $0x20] sm:$0xff]
        %v3145 = vld [vmem:[%s13 + $0x28] sm:$0xff]
        %v3146 = vld [vmem:[%s13 + $0x30] sm:$0xff]
        %v3147 = vld [vmem:[%s13 + $0x38] sm:$0xff]
        %v3148 = vld [vmem:[%s3] sm:$0xff]
        %v3149 = vld [vmem:[%s3 + $0x8] sm:$0xff]
        %v3150 = vld [vmem:[%s3 + $0x10] sm:$0xff]
        %v3151 = vld [vmem:[%s3 + $0x18] sm:$0xff]
        %v3152 = vld [vmem:[%s3 + $0x20] sm:$0xff]
        %v3153 = vld [vmem:[%s3 + $0x28] sm:$0xff]
        %v3154 = vld [vmem:[%s3 + $0x30] sm:$0xff]
        %v3155 = vld [vmem:[%s3 + $0x38] sm:$0xff]
        %v3156 = vld [vmem:[%s3 + $0x40] sm:$0xff]
        %v3157 = vld [vmem:[%s3 + $0x48] sm:$0xff]
        %v3158 = vld [vmem:[%s3 + $0x50] sm:$0xff]
        %v3159 = vld [vmem:[%s3 + $0x58] sm:$0xff]
        %v3160 = vld [vmem:[%s3 + $0x60] sm:$0xff]
        %v3161 = vld [vmem:[%s3 + $0x68] sm:$0xff]
        %v3162 = vld [vmem:[%s3 + $0x70] sm:$0xff]
        %v3163 = vld [vmem:[%s3 + $0x78] sm:$0xff]
        %v3164 = vld [vmem:[%s14] sm:$0xff]
        %v3165 = vld [vmem:[%s14 + $0x8] sm:$0xff]
        %v3166 = vld [vmem:[%s14 + $0x10] sm:$0xff]
        %v3167 = vld [vmem:[%s14 + $0x18] sm:$0xff]
        %v3168 = vld [vmem:[%s14 + $0x20] sm:$0xff]
        %v3169 = vld [vmem:[%s14 + $0x28] sm:$0xff]
        %v3170 = vld [vmem:[%s14 + $0x30] sm:$0xff]
        %v3171 = vld [vmem:[%s14 + $0x38] sm:$0xff]
        %v3173 = vsel %vm1843, %v3148, 0
        %v3176 = vsel %vm1843, %v3149, 0
        %v3179 = vsel %vm1843, %v3150, 0
        %v3182 = vsel %vm1843, %v3151, 0
        %v3185 = vsel %vm1843, %v3152, 0
        %v3188 = vsel %vm1843, %v3153, 0
        %v3191 = vsel %vm1843, %v3154, 0
        %v3194 = vsel %vm1843, %v3155, 0
        %v3197 = vsel %vm1843, %v3156, 0
        %v3200 = vsel %vm1843, %v3157, 0
        %v3203 = vsel %vm1843, %v3158, 0
        %v3206 = vsel %vm1843, %v3159, 0
        %v3209 = vsel %vm1843, %v3160, 0
        %v3212 = vsel %vm1843, %v3161, 0
        %v3215 = vsel %vm1843, %v3162, 0
        %v3218 = vsel %vm1843, %v3163, 0
        %3220 = vmatprep.subr.mxu0 0.0
        %3221 = vmatpush1.msra.mxu0 %v3164
        %3222 = vmatprep.subr.mxu0 0.0
        %3223 = vmatpush1.msra.mxu0 %v3165
        %3224 = vmatprep.subr.mxu0 0.0
        %3225 = vmatpush1.msra.mxu0 %v3166
        %3226 = vmatprep.subr.mxu0 0.0
        %3227 = vmatpush1.msra.mxu0 %v3167
        %3228 = vmatprep.subr.mxu0 0.0
        %3229 = vmatpush1.msra.mxu0 %v3168
        %3230 = vmatprep.subr.mxu0 0.0
        %3231 = vmatpush1.msra.mxu0 %v3169
        %3232 = vmatprep.subr.mxu0 0.0
        %3233 = vmatpush1.msra.mxu0 %v3170
        %3234 = vmatprep.subr.mxu0 0.0
        %3235 = vmatpush1.msra.mxu0 %v3171
        %3236 = vmatprep.subr.mxu0 0.0
        %3237 = vmatpush1.msra.mxu0 0.0
        %3238 = vmatprep.subr.mxu0 0.0
        %3239 = vmatpush1.msra.mxu0 0.0
        %3240 = vmatprep.subr.mxu0 0.0
        %3241 = vmatpush1.msra.mxu0 0.0
        %3242 = vmatprep.subr.mxu0 0.0
        %3243 = vmatpush1.msra.mxu0 0.0
        %3244 = vmatprep.subr.mxu0 0.0
        %3245 = vmatpush1.msra.mxu0 0.0
        %3246 = vmatprep.subr.mxu0 0.0
        %3247 = vmatpush1.msra.mxu0 0.0
        %3248 = vmatprep.subr.mxu0 0.0
        %3249 = vmatpush1.msra.mxu0 0.0
        %3250 = vmatprep.subr.mxu0 0.0
        %3251 = vmatpush1.msra.mxu0 0.0
        %3252 = vmatprep.subr.mxu0 0.0
        %3253 = vmatpush1.msra.mxu0 0.0
        %3254 = vmatprep.subr.mxu0 0.0
        %3255 = vmatpush1.msra.mxu0 0.0
        %3256 = vmatprep.subr.mxu0 0.0
        %3257 = vmatpush1.msra.mxu0 0.0
        %3258 = vmatprep.subr.mxu0 0.0
        %3259 = vmatpush1.msra.mxu0 0.0
        %3260 = vmatprep.subr.mxu0 0.0
        %3261 = vmatpush1.msra.mxu0 0.0
        %3262 = vmatprep.subr.mxu0 0.0
        %3263 = vmatpush1.msra.mxu0 0.0
        %3264 = vmatprep.subr.mxu0 0.0
        %3265 = vmatpush1.msra.mxu0 0.0
        %3266 = vmatprep.subr.mxu0 0.0
        %3267 = vmatpush1.msra.mxu0 0.0
        %3268 = vmatprep.subr.mxu0 0.0
        %3269 = vmatpush1.msra.mxu0 0.0
        %3270 = vmatprep.subr.mxu0 0.0
        %3271 = vmatpush1.msra.mxu0 0.0
        %3272 = vmatprep.subr.mxu0 0.0
        %3273 = vmatpush1.msra.mxu0 0.0
        %3274 = vmatprep.subr.mxu0 0.0
        %3275 = vmatpush1.msra.mxu0 0.0
        %3276 = vmatprep.subr.mxu0 0.0
        %3277 = vmatpush1.msra.mxu0 0.0
        %3278 = vmatprep.subr.mxu0 0.0
        %3279 = vmatpush1.msra.mxu0 0.0
        %3280 = vmatprep.subr.mxu0 0.0
        %3281 = vmatpush1.msra.mxu0 0.0
        %3282 = vmatprep.subr.mxu0 0.0
        %3283 = vmatpush1.msra.mxu0 0.0
        %3284 = vmatprep.mubr.f32.mxu0 0.0
        %3285 = vmatmul.mubr.f32.gmra.mrb[0].mxu0 %v3173
        %v3286 = vpop.f32.mrb[0].mxu0
        %v3287 = vadd.f32 0.0, %v3286
        %v3288 = vpop.f32.mrb[0].mxu0
        %3289 = vmatprep.mubr.f32.mxu0 0.0
        %3290 = vmatmul.mubr.f32.gmra.mrb[0].mxu0 %v3176
        %v3291 = vpop.f32.mrb[0].mxu0
        %v3292 = vadd.f32 0.0, %v3291
        %v3293 = vpop.f32.mrb[0].mxu0
        %3294 = vmatprep.mubr.f32.mxu0 0.0
        %3295 = vmatmul.mubr.f32.gmra.mrb[0].mxu0 %v3179
        %v3296 = vpop.f32.mrb[0].mxu0
        %v3297 = vadd.f32 0.0, %v3296
        %v3298 = vpop.f32.mrb[0].mxu0
        %3299 = vmatprep.mubr.f32.mxu0 0.0
        %3300 = vmatmul.mubr.f32.gmra.mrb[0].mxu0 %v3182
        %v3301 = vpop.f32.mrb[0].mxu0
        %v3302 = vadd.f32 0.0, %v3301
        %v3303 = vpop.f32.mrb[0].mxu0
        %3304 = vmatprep.mubr.f32.mxu0 0.0
        %3305 = vmatmul.mubr.f32.gmra.mrb[0].mxu0 %v3185
        %v3306 = vpop.f32.mrb[0].mxu0
        %v3307 = vadd.f32 0.0, %v3306
        %v3308 = vpop.f32.mrb[0].mxu0
        %3309 = vmatprep.mubr.f32.mxu0 0.0
        %3310 = vmatmul.mubr.f32.gmra.mrb[0].mxu0 %v3188
        %v3311 = vpop.f32.mrb[0].mxu0
        %v3312 = vadd.f32 0.0, %v3311
        %v3313 = vpop.f32.mrb[0].mxu0
        %3314 = vmatprep.mubr.f32.mxu0 0.0
        %3315 = vmatmul.mubr.f32.gmra.mrb[0].mxu0 %v3191
        %v3316 = vpop.f32.mrb[0].mxu0
        %v3317 = vadd.f32 0.0, %v3316
        %v3318 = vpop.f32.mrb[0].mxu0
        %3319 = vmatprep.mubr.f32.mxu0 0.0
        %3320 = vmatmul.mubr.f32.gmra.mrb[0].mxu0 %v3194
        %v3321 = vpop.f32.mrb[0].mxu0
        %v3322 = vadd.f32 0.0, %v3321
        %v3323 = vpop.f32.mrb[0].mxu0
        %3324 = vmatprep.mubr.f32.mxu0 0.0
        %3325 = vmatmul.mubr.f32.gmra.mrb[0].mxu0 %v3197
        %v3326 = vpop.f32.mrb[0].mxu0
        %v3327 = vadd.f32 0.0, %v3326
        %v3328 = vpop.f32.mrb[0].mxu0
        %3329 = vmatprep.mubr.f32.mxu0 0.0
        %3330 = vmatmul.mubr.f32.gmra.mrb[0].mxu0 %v3200
        %v3331 = vpop.f32.mrb[0].mxu0
        %v3332 = vadd.f32 0.0, %v3331
        %v3333 = vpop.f32.mrb[0].mxu0
        %3334 = vmatprep.mubr.f32.mxu0 0.0
        %3335 = vmatmul.mubr.f32.gmra.mrb[0].mxu0 %v3203
        %v3336 = vpop.f32.mrb[0].mxu0
        %v3337 = vadd.f32 0.0, %v3336
        %v3338 = vpop.f32.mrb[0].mxu0
        %3339 = vmatprep.mubr.f32.mxu0 0.0
        %3340 = vmatmul.mubr.f32.gmra.mrb[0].mxu0 %v3206
        %v3341 = vpop.f32.mrb[0].mxu0
        %v3342 = vadd.f32 0.0, %v3341
        %v3343 = vpop.f32.mrb[0].mxu0
        %3344 = vmatprep.mubr.f32.mxu0 0.0
        %3345 = vmatmul.mubr.f32.gmra.mrb[0].mxu0 %v3209
        %v3346 = vpop.f32.mrb[0].mxu0
        %v3347 = vadd.f32 0.0, %v3346
        %v3348 = vpop.f32.mrb[0].mxu0
        %3349 = vmatprep.mubr.f32.mxu0 0.0
        %3350 = vmatmul.mubr.f32.gmra.mrb[0].mxu0 %v3212
        %v3351 = vpop.f32.mrb[0].mxu0
        %v3352 = vadd.f32 0.0, %v3351
        %v3353 = vpop.f32.mrb[0].mxu0
        %3354 = vmatprep.mubr.f32.mxu0 0.0
        %3355 = vmatmul.mubr.f32.gmra.mrb[0].mxu0 %v3215
        %v3356 = vpop.f32.mrb[0].mxu0
        %v3357 = vadd.f32 0.0, %v3356
        %v3358 = vpop.f32.mrb[0].mxu0
        %3359 = vmatprep.mubr.f32.mxu0 0.0
        %3360 = vmatmul.mubr.f32.gmra.mrb[0].mxu0 %v3218
        %v3361 = vpop.f32.mrb[0].mxu0
        %v3362 = vadd.f32 0.0, %v3361
        %v3363 = vpop.f32.mrb[0].mxu0
        %3364 = vdwg.mxu0
        %v3366 = vsel %vm1843, %v3124, 0
        %v3369 = vsel %vm1843, %v3125, 0
        %v3372 = vsel %vm1843, %v3126, 0
        %v3375 = vsel %vm1843, %v3127, 0
        %v3378 = vsel %vm1843, %v3128, 0
        %v3381 = vsel %vm1843, %v3129, 0
        %v3384 = vsel %vm1843, %v3130, 0
        %v3387 = vsel %vm1843, %v3131, 0
        %v3390 = vsel %vm1843, %v3132, 0
        %v3393 = vsel %vm1843, %v3133, 0
        %v3396 = vsel %vm1843, %v3134, 0
        %v3399 = vsel %vm1843, %v3135, 0
        %v3402 = vsel %vm1843, %v3136, 0
        %v3405 = vsel %vm1843, %v3137, 0
        %v3408 = vsel %vm1843, %v3138, 0
        %v3411 = vsel %vm1843, %v3139, 0
        %3413 = vmatprep.subr.mxu0 0.0
        %3414 = vmatpush1.msra.mxu0 %v3140
        %3415 = vmatprep.subr.mxu0 0.0
        %3416 = vmatpush1.msra.mxu0 %v3141
        %3417 = vmatprep.subr.mxu0 0.0
        %3418 = vmatpush1.msra.mxu0 %v3142
        %3419 = vmatprep.subr.mxu0 0.0
        %3420 = vmatpush1.msra.mxu0 %v3143
        %3421 = vmatprep.subr.mxu0 0.0
        %3422 = vmatpush1.msra.mxu0 %v3144
        %3423 = vmatprep.subr.mxu0 0.0
        %3424 = vmatpush1.msra.mxu0 %v3145
        %3425 = vmatprep.subr.mxu0 0.0
        %3426 = vmatpush1.msra.mxu0 %v3146
        %3427 = vmatprep.subr.mxu0 0.0
        %3428 = vmatpush1.msra.mxu0 %v3147
        %3429 = vmatprep.subr.mxu0 0.0
        %3430 = vmatpush1.msra.mxu0 0.0
        %3431 = vmatprep.subr.mxu0 0.0
        %3432 = vmatpush1.msra.mxu0 0.0
        %3433 = vmatprep.subr.mxu0 0.0
        %3434 = vmatpush1.msra.mxu0 0.0
        %3435 = vmatprep.subr.mxu0 0.0
        %3436 = vmatpush1.msra.mxu0 0.0
        %3437 = vmatprep.subr.mxu0 0.0
        %3438 = vmatpush1.msra.mxu0 0.0
        %3439 = vmatprep.subr.mxu0 0.0
        %3440 = vmatpush1.msra.mxu0 0.0
        %3441 = vmatprep.subr.mxu0 0.0
        %3442 = vmatpush1.msra.mxu0 0.0
        %3443 = vmatprep.subr.mxu0 0.0
        %3444 = vmatpush1.msra.mxu0 0.0
        %3445 = vmatprep.subr.mxu0 0.0
        %3446 = vmatpush1.msra.mxu0 0.0
        %3447 = vmatprep.subr.mxu0 0.0
        %3448 = vmatpush1.msra.mxu0 0.0
        %3449 = vmatprep.subr.mxu0 0.0
        %3450 = vmatpush1.msra.mxu0 0.0
        %3451 = vmatprep.subr.mxu0 0.0
        %3452 = vmatpush1.msra.mxu0 0.0
        %3453 = vmatprep.subr.mxu0 0.0
        %3454 = vmatpush1.msra.mxu0 0.0
        %3455 = vmatprep.subr.mxu0 0.0
        %3456 = vmatpush1.msra.mxu0 0.0
        %3457 = vmatprep.subr.mxu0 0.0
        %3458 = vmatpush1.msra.mxu0 0.0
        %3459 = vmatprep.subr.mxu0 0.0
        %3460 = vmatpush1.msra.mxu0 0.0
        %3461 = vmatprep.subr.mxu0 0.0
        %3462 = vmatpush1.msra.mxu0 0.0
        %3463 = vmatprep.subr.mxu0 0.0
        %3464 = vmatpush1.msra.mxu0 0.0
        %3465 = vmatprep.subr.mxu0 0.0
        %3466 = vmatpush1.msra.mxu0 0.0
        %3467 = vmatprep.subr.mxu0 0.0
        %3468 = vmatpush1.msra.mxu0 0.0
        %3469 = vmatprep.subr.mxu0 0.0
        %3470 = vmatpush1.msra.mxu0 0.0
        %3471 = vmatprep.subr.mxu0 0.0
        %3472 = vmatpush1.msra.mxu0 0.0
        %3473 = vmatprep.subr.mxu0 0.0
        %3474 = vmatpush1.msra.mxu0 0.0
        %3475 = vmatprep.subr.mxu0 0.0
        %3476 = vmatpush1.msra.mxu0 0.0
        %3477 = vmatprep.mubr.f32.mxu0 0.0
        %3478 = vmatmul.mubr.f32.gmra.mrb[0].mxu0 %v3366
        %v3479 = vpop.f32.mrb[0].mxu0
        %v3480 = vadd.f32 %v3287, %v3479
        %v3481 = vpop.f32.mrb[0].mxu0
        %3482 = vmatprep.mubr.f32.mxu0 0.0
        %3483 = vmatmul.mubr.f32.gmra.mrb[0].mxu0 %v3369
        %v3484 = vpop.f32.mrb[0].mxu0
        %v3485 = vadd.f32 %v3292, %v3484
        %v3486 = vpop.f32.mrb[0].mxu0
        %3487 = vmatprep.mubr.f32.mxu0 0.0
        %3488 = vmatmul.mubr.f32.gmra.mrb[0].mxu0 %v3372
        %v3489 = vpop.f32.mrb[0].mxu0
        %v3490 = vadd.f32 %v3297, %v3489
        %v3491 = vpop.f32.mrb[0].mxu0
        %3492 = vmatprep.mubr.f32.mxu0 0.0
        %3493 = vmatmul.mubr.f32.gmra.mrb[0].mxu0 %v3375
        %v3494 = vpop.f32.mrb[0].mxu0
        %v3495 = vadd.f32 %v3302, %v3494
        %v3496 = vpop.f32.mrb[0].mxu0
        %3497 = vmatprep.mubr.f32.mxu0 0.0
        %3498 = vmatmul.mubr.f32.gmra.mrb[0].mxu0 %v3378
        %v3499 = vpop.f32.mrb[0].mxu0
        %v3500 = vadd.f32 %v3307, %v3499
        %v3501 = vpop.f32.mrb[0].mxu0
        %3502 = vmatprep.mubr.f32.mxu0 0.0
        %3503 = vmatmul.mubr.f32.gmra.mrb[0].mxu0 %v3381
        %v3504 = vpop.f32.mrb[0].mxu0
        %v3505 = vadd.f32 %v3312, %v3504
        %v3506 = vpop.f32.mrb[0].mxu0
        %3507 = vmatprep.mubr.f32.mxu0 0.0
        %3508 = vmatmul.mubr.f32.gmra.mrb[0].mxu0 %v3384
        %v3509 = vpop.f32.mrb[0].mxu0
        %v3510 = vadd.f32 %v3317, %v3509
        %v3511 = vpop.f32.mrb[0].mxu0
        %3512 = vmatprep.mubr.f32.mxu0 0.0
        %3513 = vmatmul.mubr.f32.gmra.mrb[0].mxu0 %v3387
        %v3514 = vpop.f32.mrb[0].mxu0
        %v3515 = vadd.f32 %v3322, %v3514
        %v3516 = vpop.f32.mrb[0].mxu0
        %3517 = vmatprep.mubr.f32.mxu0 0.0
        %3518 = vmatmul.mubr.f32.gmra.mrb[0].mxu0 %v3390
        %v3519 = vpop.f32.mrb[0].mxu0
        %v3520 = vadd.f32 %v3327, %v3519
        %v3521 = vpop.f32.mrb[0].mxu0
        %3522 = vmatprep.mubr.f32.mxu0 0.0
        %3523 = vmatmul.mubr.f32.gmra.mrb[0].mxu0 %v3393
        %v3524 = vpop.f32.mrb[0].mxu0
        %v3525 = vadd.f32 %v3332, %v3524
        %v3526 = vpop.f32.mrb[0].mxu0
        %3527 = vmatprep.mubr.f32.mxu0 0.0
        %3528 = vmatmul.mubr.f32.gmra.mrb[0].mxu0 %v3396
        %v3529 = vpop.f32.mrb[0].mxu0
        %v3530 = vadd.f32 %v3337, %v3529
        %v3531 = vpop.f32.mrb[0].mxu0
        %3532 = vmatprep.mubr.f32.mxu0 0.0
        %3533 = vmatmul.mubr.f32.gmra.mrb[0].mxu0 %v3399
        %v3534 = vpop.f32.mrb[0].mxu0
        %v3535 = vadd.f32 %v3342, %v3534
        %v3536 = vpop.f32.mrb[0].mxu0
        %3537 = vmatprep.mubr.f32.mxu0 0.0
        %3538 = vmatmul.mubr.f32.gmra.mrb[0].mxu0 %v3402
        %v3539 = vpop.f32.mrb[0].mxu0
        %v3540 = vadd.f32 %v3347, %v3539
        %v3541 = vpop.f32.mrb[0].mxu0
        %3542 = vmatprep.mubr.f32.mxu0 0.0
        %3543 = vmatmul.mubr.f32.gmra.mrb[0].mxu0 %v3405
        %v3544 = vpop.f32.mrb[0].mxu0
        %v3545 = vadd.f32 %v3352, %v3544
        %v3546 = vpop.f32.mrb[0].mxu0
        %3547 = vmatprep.mubr.f32.mxu0 0.0
        %3548 = vmatmul.mubr.f32.gmra.mrb[0].mxu0 %v3408
        %v3549 = vpop.f32.mrb[0].mxu0
        %v3550 = vadd.f32 %v3357, %v3549
        %v3551 = vpop.f32.mrb[0].mxu0
        %3552 = vmatprep.mubr.f32.mxu0 0.0
        %3553 = vmatmul.mubr.f32.gmra.mrb[0].mxu0 %v3411
        %v3554 = vpop.f32.mrb[0].mxu0
        %v3555 = vadd.f32 %v3362, %v3554
        %v3556 = vpop.f32.mrb[0].mxu0
        %3557 = vdwg.mxu0
        %v3558 = vld [vmem:[%s15] sm:$0x1]
        %v3560 = vlaneseq
        %v3561 = vshrl.u32 %v3560, 7
        %v3562 = vsub.s32 0, %v3561
        %v3563 = vrot.slane %v3558, %v3562
        %v3565 = vadd.f32 %v3480, %v3563
        %v3566 = vadd.f32 %v3485, %v3563
        %v3567 = vadd.f32 %v3490, %v3563
        %v3568 = vadd.f32 %v3495, %v3563
        %v3569 = vadd.f32 %v3500, %v3563
        %v3570 = vadd.f32 %v3505, %v3563
        %v3571 = vadd.f32 %v3510, %v3563
        %v3572 = vadd.f32 %v3515, %v3563
        %v3573 = vadd.f32 %v3520, %v3563
        %v3574 = vadd.f32 %v3525, %v3563
        %v3575 = vadd.f32 %v3530, %v3563
        %v3576 = vadd.f32 %v3535, %v3563
        %v3577 = vadd.f32 %v3540, %v3563
        %v3578 = vadd.f32 %v3545, %v3563
        %v3579 = vadd.f32 %v3550, %v3563
        %v3580 = vadd.f32 %v3555, %v3563
        %v3581 = vmax.f32 %v3565, 0.0
        %v3582 = vmax.f32 %v3566, 0.0
        %v3583 = vmax.f32 %v3567, 0.0
        %v3584 = vmax.f32 %v3568, 0.0
        %v3585 = vmax.f32 %v3569, 0.0
        %v3586 = vmax.f32 %v3570, 0.0
        %v3587 = vmax.f32 %v3571, 0.0
        %v3588 = vmax.f32 %v3572, 0.0
        %v3589 = vmax.f32 %v3573, 0.0
        %v3590 = vmax.f32 %v3574, 0.0
        %v3591 = vmax.f32 %v3575, 0.0
        %v3592 = vmax.f32 %v3576, 0.0
        %v3593 = vmax.f32 %v3577, 0.0
        %v3594 = vmax.f32 %v3578, 0.0
        %v3595 = vmax.f32 %v3579, 0.0
        %v3596 = vmax.f32 %v3580, 0.0
        %v3597 = vld [vmem:[%s16] sm:$0xff]
        %v3598 = vld [vmem:[%s16 + $0x8] sm:$0xff]
        %v3599 = vld [vmem:[%s16 + $0x10] sm:$0xff]
        %v3600 = vld [vmem:[%s16 + $0x18] sm:$0xff]
        %v3601 = vld [vmem:[%s16 + $0x20] sm:$0xff]
        %v3602 = vld [vmem:[%s16 + $0x28] sm:$0xff]
        %v3603 = vld [vmem:[%s16 + $0x30] sm:$0xff]
        %v3604 = vld [vmem:[%s16 + $0x38] sm:$0xff]
        %v3605 = vld [vmem:[%s17] sm:$0x1]
        %v3607 = vlaneseq
        %v3608 = vshrl.u32 %v3607, 7
        %v3609 = vsub.s32 0, %v3608
        %v3610 = vrot.slane %v3605, %v3609
        %v3613 = vsel %vm1843, %v3581, 0
        %v3616 = vsel %vm1843, %v3582, 0
        %v3619 = vsel %vm1843, %v3583, 0
        %v3622 = vsel %vm1843, %v3584, 0
        %v3625 = vsel %vm1843, %v3585, 0
        %v3628 = vsel %vm1843, %v3586, 0
        %v3631 = vsel %vm1843, %v3587, 0
        %v3634 = vsel %vm1843, %v3588, 0
        %v3637 = vsel %vm1843, %v3589, 0
        %v3640 = vsel %vm1843, %v3590, 0
        %v3643 = vsel %vm1843, %v3591, 0
        %v3646 = vsel %vm1843, %v3592, 0
        %v3649 = vsel %vm1843, %v3593, 0
        %v3652 = vsel %vm1843, %v3594, 0
        %v3655 = vsel %vm1843, %v3595, 0
        %v3658 = vsel %vm1843, %v3596, 0
        %3660 = vmatprep.subr.mxu0 0.0
        %3661 = vmatpush1.msra.mxu0 %v3597
        %3662 = vmatprep.subr.mxu0 0.0
        %3663 = vmatpush1.msra.mxu0 %v3598
        %3664 = vmatprep.subr.mxu0 0.0
        %3665 = vmatpush1.msra.mxu0 %v3599
        %3666 = vmatprep.subr.mxu0 0.0
        %3667 = vmatpush1.msra.mxu0 %v3600
        %3668 = vmatprep.subr.mxu0 0.0
        %3669 = vmatpush1.msra.mxu0 %v3601
        %3670 = vmatprep.subr.mxu0 0.0
        %3671 = vmatpush1.msra.mxu0 %v3602
        %3672 = vmatprep.subr.mxu0 0.0
        %3673 = vmatpush1.msra.mxu0 %v3603
        %3674 = vmatprep.subr.mxu0 0.0
        %3675 = vmatpush1.msra.mxu0 %v3604
        %3676 = vmatprep.subr.mxu0 0.0
        %3677 = vmatpush1.msra.mxu0 0.0
        %3678 = vmatprep.subr.mxu0 0.0
        %3679 = vmatpush1.msra.mxu0 0.0
        %3680 = vmatprep.subr.mxu0 0.0
        %3681 = vmatpush1.msra.mxu0 0.0
        %3682 = vmatprep.subr.mxu0 0.0
        %3683 = vmatpush1.msra.mxu0 0.0
        %3684 = vmatprep.subr.mxu0 0.0
        %3685 = vmatpush1.msra.mxu0 0.0
        %3686 = vmatprep.subr.mxu0 0.0
        %3687 = vmatpush1.msra.mxu0 0.0
        %3688 = vmatprep.subr.mxu0 0.0
        %3689 = vmatpush1.msra.mxu0 0.0
        %3690 = vmatprep.subr.mxu0 0.0
        %3691 = vmatpush1.msra.mxu0 0.0
        %3692 = vmatprep.subr.mxu0 0.0
        %3693 = vmatpush1.msra.mxu0 0.0
        %3694 = vmatprep.subr.mxu0 0.0
        %3695 = vmatpush1.msra.mxu0 0.0
        %3696 = vmatprep.subr.mxu0 0.0
        %3697 = vmatpush1.msra.mxu0 0.0
        %3698 = vmatprep.subr.mxu0 0.0
        %3699 = vmatpush1.msra.mxu0 0.0
        %3700 = vmatprep.subr.mxu0 0.0
        %3701 = vmatpush1.msra.mxu0 0.0
        %3702 = vmatprep.subr.mxu0 0.0
        %3703 = vmatpush1.msra.mxu0 0.0
        %3704 = vmatprep.subr.mxu0 0.0
        %3705 = vmatpush1.msra.mxu0 0.0
        %3706 = vmatprep.subr.mxu0 0.0
        %3707 = vmatpush1.msra.mxu0 0.0
        %3708 = vmatprep.subr.mxu0 0.0
        %3709 = vmatpush1.msra.mxu0 0.0
        %3710 = vmatprep.subr.mxu0 0.0
        %3711 = vmatpush1.msra.mxu0 0.0
        %3712 = vmatprep.subr.mxu0 0.0
        %3713 = vmatpush1.msra.mxu0 0.0
        %3714 = vmatprep.subr.mxu0 0.0
        %3715 = vmatpush1.msra.mxu0 0.0
        %3716 = vmatprep.subr.mxu0 0.0
        %3717 = vmatpush1.msra.mxu0 0.0
        %3718 = vmatprep.subr.mxu0 0.0
        %3719 = vmatpush1.msra.mxu0 0.0
        %3720 = vmatprep.subr.mxu0 0.0
        %3721 = vmatpush1.msra.mxu0 0.0
        %3722 = vmatprep.subr.mxu0 0.0
        %3723 = vmatpush1.msra.mxu0 0.0
        %3724 = vmatprep.mubr.f32.mxu0 0.0
        %3725 = vmatmul.mubr.f32.gmra.mrb[0].mxu0 %v3613
        %v3726 = vpop.f32.mrb[0].mxu0
        %v3727 = vadd.f32 %v3610, %v3726
        %v3728 = vpop.f32.mrb[0].mxu0
        %3729 = vmatprep.mubr.f32.mxu0 0.0
        %3730 = vmatmul.mubr.f32.gmra.mrb[0].mxu0 %v3616
        %v3731 = vpop.f32.mrb[0].mxu0
        %v3732 = vadd.f32 %v3610, %v3731
        %v3733 = vpop.f32.mrb[0].mxu0
        %3734 = vmatprep.mubr.f32.mxu0 0.0
        %3735 = vmatmul.mubr.f32.gmra.mrb[0].mxu0 %v3619
        %v3736 = vpop.f32.mrb[0].mxu0
        %v3737 = vadd.f32 %v3610, %v3736
        %v3738 = vpop.f32.mrb[0].mxu0
        %3739 = vmatprep.mubr.f32.mxu0 0.0
        %3740 = vmatmul.mubr.f32.gmra.mrb[0].mxu0 %v3622
        %v3741 = vpop.f32.mrb[0].mxu0
        %v3742 = vadd.f32 %v3610, %v3741
        %v3743 = vpop.f32.mrb[0].mxu0
        %3744 = vmatprep.mubr.f32.mxu0 0.0
        %3745 = vmatmul.mubr.f32.gmra.mrb[0].mxu0 %v3625
        %v3746 = vpop.f32.mrb[0].mxu0
        %v3747 = vadd.f32 %v3610, %v3746
        %v3748 = vpop.f32.mrb[0].mxu0
        %3749 = vmatprep.mubr.f32.mxu0 0.0
        %3750 = vmatmul.mubr.f32.gmra.mrb[0].mxu0 %v3628
        %v3751 = vpop.f32.mrb[0].mxu0
        %v3752 = vadd.f32 %v3610, %v3751
        %v3753 = vpop.f32.mrb[0].mxu0
        %3754 = vmatprep.mubr.f32.mxu0 0.0
        %3755 = vmatmul.mubr.f32.gmra.mrb[0].mxu0 %v3631
        %v3756 = vpop.f32.mrb[0].mxu0
        %v3757 = vadd.f32 %v3610, %v3756
        %v3758 = vpop.f32.mrb[0].mxu0
        %3759 = vmatprep.mubr.f32.mxu0 0.0
        %3760 = vmatmul.mubr.f32.gmra.mrb[0].mxu0 %v3634
        %v3761 = vpop.f32.mrb[0].mxu0
        %v3762 = vadd.f32 %v3610, %v3761
        %v3763 = vpop.f32.mrb[0].mxu0
        %3764 = vmatprep.mubr.f32.mxu0 0.0
        %3765 = vmatmul.mubr.f32.gmra.mrb[0].mxu0 %v3637
        %v3766 = vpop.f32.mrb[0].mxu0
        %v3767 = vadd.f32 %v3610, %v3766
        %v3768 = vpop.f32.mrb[0].mxu0
        %3769 = vmatprep.mubr.f32.mxu0 0.0
        %3770 = vmatmul.mubr.f32.gmra.mrb[0].mxu0 %v3640
        %v3771 = vpop.f32.mrb[0].mxu0
        %v3772 = vadd.f32 %v3610, %v3771
        %v3773 = vpop.f32.mrb[0].mxu0
        %3774 = vmatprep.mubr.f32.mxu0 0.0
        %3775 = vmatmul.mubr.f32.gmra.mrb[0].mxu0 %v3643
        %v3776 = vpop.f32.mrb[0].mxu0
        %v3777 = vadd.f32 %v3610, %v3776
        %v3778 = vpop.f32.mrb[0].mxu0
        %3779 = vmatprep.mubr.f32.mxu0 0.0
        %3780 = vmatmul.mubr.f32.gmra.mrb[0].mxu0 %v3646
        %v3781 = vpop.f32.mrb[0].mxu0
        %v3782 = vadd.f32 %v3610, %v3781
        %v3783 = vpop.f32.mrb[0].mxu0
        %3784 = vmatprep.mubr.f32.mxu0 0.0
        %3785 = vmatmul.mubr.f32.gmra.mrb[0].mxu0 %v3649
        %v3786 = vpop.f32.mrb[0].mxu0
        %v3787 = vadd.f32 %v3610, %v3786
        %v3788 = vpop.f32.mrb[0].mxu0
        %3789 = vmatprep.mubr.f32.mxu0 0.0
        %3790 = vmatmul.mubr.f32.gmra.mrb[0].mxu0 %v3652
        %v3791 = vpop.f32.mrb[0].mxu0
        %v3792 = vadd.f32 %v3610, %v3791
        %v3793 = vpop.f32.mrb[0].mxu0
        %3794 = vmatprep.mubr.f32.mxu0 0.0
        %3795 = vmatmul.mubr.f32.gmra.mrb[0].mxu0 %v3655
        %v3796 = vpop.f32.mrb[0].mxu0
        %v3797 = vadd.f32 %v3610, %v3796
        %v3798 = vpop.f32.mrb[0].mxu0
        %3799 = vmatprep.mubr.f32.mxu0 0.0
        %3800 = vmatmul.mubr.f32.gmra.mrb[0].mxu0 %v3658
        %v3801 = vpop.f32.mrb[0].mxu0
        %v3802 = vadd.f32 %v3610, %v3801
        %v3803 = vpop.f32.mrb[0].mxu0
        %3804 = vdwg.mxu0
        %3805 = vst.msk [vmem:[%s21] sm:$0xff] %vm1843, %v3727
        %3806 = vst.msk [vmem:[%s21 + $0x8] sm:$0xff] %vm1843, %v3732
        %3807 = vst.msk [vmem:[%s21 + $0x10] sm:$0xff] %vm1843, %v3737
        %3808 = vst.msk [vmem:[%s21 + $0x18] sm:$0xff] %vm1843, %v3742
        %3809 = vst.msk [vmem:[%s21 + $0x20] sm:$0xff] %vm1843, %v3747
        %3810 = vst.msk [vmem:[%s21 + $0x28] sm:$0xff] %vm1843, %v3752
        %3811 = vst.msk [vmem:[%s21 + $0x30] sm:$0xff] %vm1843, %v3757
        %3812 = vst.msk [vmem:[%s21 + $0x38] sm:$0xff] %vm1843, %v3762
        %3813 = vst.msk [vmem:[%s21 + $0x40] sm:$0xff] %vm1843, %v3767
        %3814 = vst.msk [vmem:[%s21 + $0x48] sm:$0xff] %vm1843, %v3772
        %3815 = vst.msk [vmem:[%s21 + $0x50] sm:$0xff] %vm1843, %v3777
        %3816 = vst.msk [vmem:[%s21 + $0x58] sm:$0xff] %vm1843, %v3782
        %3817 = vst.msk [vmem:[%s21 + $0x60] sm:$0xff] %vm1843, %v3787
        %3818 = vst.msk [vmem:[%s21 + $0x68] sm:$0xff] %vm1843, %v3792
        %3819 = vst.msk [vmem:[%s21 + $0x70] sm:$0xff] %vm1843, %v3797
        %3820 = vst.msk [vmem:[%s21 + $0x78] sm:$0xff] %vm1843, %v3802
        %v3821 = vld [vmem:[%s18] sm:$0xff]
        %v3822 = vld [vmem:[%s18 + $0x8] sm:$0xff]
        %v3823 = vld [vmem:[%s18 + $0x10] sm:$0xff]
        %v3824 = vld [vmem:[%s18 + $0x18] sm:$0xff]
        %v3825 = vld [vmem:[%s18 + $0x20] sm:$0xff]
        %v3826 = vld [vmem:[%s18 + $0x28] sm:$0xff]
        %v3827 = vld [vmem:[%s18 + $0x30] sm:$0xff]
        %v3828 = vld [vmem:[%s18 + $0x38] sm:$0xff]
        %v3829 = vld [vmem:[%s19] sm:$0x1]
        %v3831 = vlaneseq
        %v3832 = vshrl.u32 %v3831, 7
        %v3833 = vsub.s32 0, %v3832
        %v3834 = vrot.slane %v3829, %v3833
        %v3837 = vsel %vm1843, %v3727, 0
        %v3840 = vsel %vm1843, %v3732, 0
        %v3843 = vsel %vm1843, %v3737, 0
        %v3846 = vsel %vm1843, %v3742, 0
        %v3849 = vsel %vm1843, %v3747, 0
        %v3852 = vsel %vm1843, %v3752, 0
        %v3855 = vsel %vm1843, %v3757, 0
        %v3858 = vsel %vm1843, %v3762, 0
        %v3861 = vsel %vm1843, %v3767, 0
        %v3864 = vsel %vm1843, %v3772, 0
        %v3867 = vsel %vm1843, %v3777, 0
        %v3870 = vsel %vm1843, %v3782, 0
        %v3873 = vsel %vm1843, %v3787, 0
        %v3876 = vsel %vm1843, %v3792, 0
        %v3879 = vsel %vm1843, %v3797, 0
        %v3882 = vsel %vm1843, %v3802, 0
        %3884 = vmatprep.subr.mxu0 0.0
        %3885 = vmatpush1.msra.mxu0 %v3821
        %3886 = vmatprep.subr.mxu0 0.0
        %3887 = vmatpush1.msra.mxu0 %v3822
        %3888 = vmatprep.subr.mxu0 0.0
        %3889 = vmatpush1.msra.mxu0 %v3823
        %3890 = vmatprep.subr.mxu0 0.0
        %3891 = vmatpush1.msra.mxu0 %v3824
        %3892 = vmatprep.subr.mxu0 0.0
        %3893 = vmatpush1.msra.mxu0 %v3825
        %3894 = vmatprep.subr.mxu0 0.0
        %3895 = vmatpush1.msra.mxu0 %v3826
        %3896 = vmatprep.subr.mxu0 0.0
        %3897 = vmatpush1.msra.mxu0 %v3827
        %3898 = vmatprep.subr.mxu0 0.0
        %3899 = vmatpush1.msra.mxu0 %v3828
        %3900 = vmatprep.subr.mxu0 0.0
        %3901 = vmatpush1.msra.mxu0 0.0
        %3902 = vmatprep.subr.mxu0 0.0
        %3903 = vmatpush1.msra.mxu0 0.0
        %3904 = vmatprep.subr.mxu0 0.0
        %3905 = vmatpush1.msra.mxu0 0.0
        %3906 = vmatprep.subr.mxu0 0.0
        %3907 = vmatpush1.msra.mxu0 0.0
        %3908 = vmatprep.subr.mxu0 0.0
        %3909 = vmatpush1.msra.mxu0 0.0
        %3910 = vmatprep.subr.mxu0 0.0
        %3911 = vmatpush1.msra.mxu0 0.0
        %3912 = vmatprep.subr.mxu0 0.0
        %3913 = vmatpush1.msra.mxu0 0.0
        %3914 = vmatprep.subr.mxu0 0.0
        %3915 = vmatpush1.msra.mxu0 0.0
        %3916 = vmatprep.subr.mxu0 0.0
        %3917 = vmatpush1.msra.mxu0 0.0
        %3918 = vmatprep.subr.mxu0 0.0
        %3919 = vmatpush1.msra.mxu0 0.0
        %3920 = vmatprep.subr.mxu0 0.0
        %3921 = vmatpush1.msra.mxu0 0.0
        %3922 = vmatprep.subr.mxu0 0.0
        %3923 = vmatpush1.msra.mxu0 0.0
        %3924 = vmatprep.subr.mxu0 0.0
        %3925 = vmatpush1.msra.mxu0 0.0
        %3926 = vmatprep.subr.mxu0 0.0
        %3927 = vmatpush1.msra.mxu0 0.0
        %3928 = vmatprep.subr.mxu0 0.0
        %3929 = vmatpush1.msra.mxu0 0.0
        %3930 = vmatprep.subr.mxu0 0.0
        %3931 = vmatpush1.msra.mxu0 0.0
        %3932 = vmatprep.subr.mxu0 0.0
        %3933 = vmatpush1.msra.mxu0 0.0
        %3934 = vmatprep.subr.mxu0 0.0
        %3935 = vmatpush1.msra.mxu0 0.0
        %3936 = vmatprep.subr.mxu0 0.0
        %3937 = vmatpush1.msra.mxu0 0.0
        %3938 = vmatprep.subr.mxu0 0.0
        %3939 = vmatpush1.msra.mxu0 0.0
        %3940 = vmatprep.subr.mxu0 0.0
        %3941 = vmatpush1.msra.mxu0 0.0
        %3942 = vmatprep.subr.mxu0 0.0
        %3943 = vmatpush1.msra.mxu0 0.0
        %3944 = vmatprep.subr.mxu0 0.0
        %3945 = vmatpush1.msra.mxu0 0.0
        %3946 = vmatprep.subr.mxu0 0.0
        %3947 = vmatpush1.msra.mxu0 0.0
        %3948 = vmatprep.mubr.f32.mxu0 0.0
        %3949 = vmatmul.mubr.f32.gmra.mrb[0].mxu0 %v3837
        %v3950 = vpop.f32.mrb[0].mxu0
        %v3951 = vadd.f32 %v3834, %v3950
        %v3952 = vpop.f32.mrb[0].mxu0
        %3953 = vmatprep.mubr.f32.mxu0 0.0
        %3954 = vmatmul.mubr.f32.gmra.mrb[0].mxu0 %v3840
        %v3955 = vpop.f32.mrb[0].mxu0
        %v3956 = vadd.f32 %v3834, %v3955
        %v3957 = vpop.f32.mrb[0].mxu0
        %3958 = vmatprep.mubr.f32.mxu0 0.0
        %3959 = vmatmul.mubr.f32.gmra.mrb[0].mxu0 %v3843
        %v3960 = vpop.f32.mrb[0].mxu0
        %v3961 = vadd.f32 %v3834, %v3960
        %v3962 = vpop.f32.mrb[0].mxu0
        %3963 = vmatprep.mubr.f32.mxu0 0.0
        %3964 = vmatmul.mubr.f32.gmra.mrb[0].mxu0 %v3846
        %v3965 = vpop.f32.mrb[0].mxu0
        %v3966 = vadd.f32 %v3834, %v3965
        %v3967 = vpop.f32.mrb[0].mxu0
        %3968 = vmatprep.mubr.f32.mxu0 0.0
        %3969 = vmatmul.mubr.f32.gmra.mrb[0].mxu0 %v3849
        %v3970 = vpop.f32.mrb[0].mxu0
        %v3971 = vadd.f32 %v3834, %v3970
        %v3972 = vpop.f32.mrb[0].mxu0
        %3973 = vmatprep.mubr.f32.mxu0 0.0
        %3974 = vmatmul.mubr.f32.gmra.mrb[0].mxu0 %v3852
        %v3975 = vpop.f32.mrb[0].mxu0
        %v3976 = vadd.f32 %v3834, %v3975
        %v3977 = vpop.f32.mrb[0].mxu0
        %3978 = vmatprep.mubr.f32.mxu0 0.0
        %3979 = vmatmul.mubr.f32.gmra.mrb[0].mxu0 %v3855
        %v3980 = vpop.f32.mrb[0].mxu0
        %v3981 = vadd.f32 %v3834, %v3980
        %v3982 = vpop.f32.mrb[0].mxu0
        %3983 = vmatprep.mubr.f32.mxu0 0.0
        %3984 = vmatmul.mubr.f32.gmra.mrb[0].mxu0 %v3858
        %v3985 = vpop.f32.mrb[0].mxu0
        %v3986 = vadd.f32 %v3834, %v3985
        %v3987 = vpop.f32.mrb[0].mxu0
        %3988 = vmatprep.mubr.f32.mxu0 0.0
        %3989 = vmatmul.mubr.f32.gmra.mrb[0].mxu0 %v3861
        %v3990 = vpop.f32.mrb[0].mxu0
        %v3991 = vadd.f32 %v3834, %v3990
        %v3992 = vpop.f32.mrb[0].mxu0
        %3993 = vmatprep.mubr.f32.mxu0 0.0
        %3994 = vmatmul.mubr.f32.gmra.mrb[0].mxu0 %v3864
        %v3995 = vpop.f32.mrb[0].mxu0
        %v3996 = vadd.f32 %v3834, %v3995
        %v3997 = vpop.f32.mrb[0].mxu0
        %3998 = vmatprep.mubr.f32.mxu0 0.0
        %3999 = vmatmul.mubr.f32.gmra.mrb[0].mxu0 %v3867
        %v4000 = vpop.f32.mrb[0].mxu0
        %v4001 = vadd.f32 %v3834, %v4000
        %v4002 = vpop.f32.mrb[0].mxu0
        %4003 = vmatprep.mubr.f32.mxu0 0.0
        %4004 = vmatmul.mubr.f32.gmra.mrb[0].mxu0 %v3870
        %v4005 = vpop.f32.mrb[0].mxu0
        %v4006 = vadd.f32 %v3834, %v4005
        %v4007 = vpop.f32.mrb[0].mxu0
        %4008 = vmatprep.mubr.f32.mxu0 0.0
        %4009 = vmatmul.mubr.f32.gmra.mrb[0].mxu0 %v3873
        %v4010 = vpop.f32.mrb[0].mxu0
        %v4011 = vadd.f32 %v3834, %v4010
        %v4012 = vpop.f32.mrb[0].mxu0
        %4013 = vmatprep.mubr.f32.mxu0 0.0
        %4014 = vmatmul.mubr.f32.gmra.mrb[0].mxu0 %v3876
        %v4015 = vpop.f32.mrb[0].mxu0
        %v4016 = vadd.f32 %v3834, %v4015
        %v4017 = vpop.f32.mrb[0].mxu0
        %4018 = vmatprep.mubr.f32.mxu0 0.0
        %4019 = vmatmul.mubr.f32.gmra.mrb[0].mxu0 %v3879
        %v4020 = vpop.f32.mrb[0].mxu0
        %v4021 = vadd.f32 %v3834, %v4020
        %v4022 = vpop.f32.mrb[0].mxu0
        %4023 = vmatprep.mubr.f32.mxu0 0.0
        %4024 = vmatmul.mubr.f32.gmra.mrb[0].mxu0 %v3882
        %v4025 = vpop.f32.mrb[0].mxu0
        %v4026 = vadd.f32 %v3834, %v4025
        %v4027 = vpop.f32.mrb[0].mxu0
        %4028 = vdwg.mxu0
        %v4029 = vmax.f32 %v3951, 0.0
        %v4030 = vmax.f32 %v3956, 0.0
        %v4031 = vmax.f32 %v3961, 0.0
        %v4032 = vmax.f32 %v3966, 0.0
        %v4033 = vmax.f32 %v3971, 0.0
        %v4034 = vmax.f32 %v3976, 0.0
        %v4035 = vmax.f32 %v3981, 0.0
        %v4036 = vmax.f32 %v3986, 0.0
        %v4037 = vmax.f32 %v3991, 0.0
        %v4038 = vmax.f32 %v3996, 0.0
        %v4039 = vmax.f32 %v4001, 0.0
        %v4040 = vmax.f32 %v4006, 0.0
        %v4041 = vmax.f32 %v4011, 0.0
        %v4042 = vmax.f32 %v4016, 0.0
        %v4043 = vmax.f32 %v4021, 0.0
        %v4044 = vmax.f32 %v4026, 0.0
        %v4045 = vld [vmem:[%s20] sm:$0x1]
        %v4047 = vsel %vm1843, %v4045, 0
        %v4050 = vsel %vm1843, %v4029, 0
        %v4053 = vsel %vm1843, %v4030, 0
        %v4056 = vsel %vm1843, %v4031, 0
        %v4059 = vsel %vm1843, %v4032, 0
        %v4062 = vsel %vm1843, %v4033, 0
        %v4065 = vsel %vm1843, %v4034, 0
        %v4068 = vsel %vm1843, %v4035, 0
        %v4071 = vsel %vm1843, %v4036, 0
        %v4074 = vsel %vm1843, %v4037, 0
        %v4077 = vsel %vm1843, %v4038, 0
        %v4080 = vsel %vm1843, %v4039, 0
        %v4083 = vsel %vm1843, %v4040, 0
        %v4086 = vsel %vm1843, %v4041, 0
        %v4089 = vsel %vm1843, %v4042, 0
        %v4092 = vsel %vm1843, %v4043, 0
        %v4095 = vsel %vm1843, %v4044, 0
        %4097 = vmatprep.subr.mxu0 0.0
        %4098 = vmatpush1.xpose.msra.mxu0 %v4050
        %4099 = vmatprep.subr.mxu0 0.0
        %4100 = vmatpush1.xpose.msra.mxu0 %v4053
        %4101 = vmatprep.subr.mxu0 0.0
        %4102 = vmatpush1.xpose.msra.mxu0 %v4056
        %4103 = vmatprep.subr.mxu0 0.0
        %4104 = vmatpush1.xpose.msra.mxu0 %v4059
        %4105 = vmatprep.subr.mxu0 0.0
        %4106 = vmatpush1.xpose.msra.mxu0 %v4062
        %4107 = vmatprep.subr.mxu0 0.0
        %4108 = vmatpush1.xpose.msra.mxu0 %v4065
        %4109 = vmatprep.subr.mxu0 0.0
        %4110 = vmatpush1.xpose.msra.mxu0 %v4068
        %4111 = vmatprep.subr.mxu0 0.0
        %4112 = vmatpush1.xpose.msra.mxu0 %v4071
        %4113 = vmatprep.subr.mxu0 0.0
        %4114 = vmatpush1.xpose.msra.mxu0 %v4074
        %4115 = vmatprep.subr.mxu0 0.0
        %4116 = vmatpush1.xpose.msra.mxu0 %v4077
        %4117 = vmatprep.subr.mxu0 0.0
        %4118 = vmatpush1.xpose.msra.mxu0 %v4080
        %4119 = vmatprep.subr.mxu0 0.0
        %4120 = vmatpush1.xpose.msra.mxu0 %v4083
        %4121 = vmatprep.subr.mxu0 0.0
        %4122 = vmatpush1.xpose.msra.mxu0 %v4086
        %4123 = vmatprep.subr.mxu0 0.0
        %4124 = vmatpush1.xpose.msra.mxu0 %v4089
        %4125 = vmatprep.subr.mxu0 0.0
        %4126 = vmatpush1.xpose.msra.mxu0 %v4092
        %4127 = vmatprep.subr.mxu0 0.0
        %4128 = vmatpush1.xpose.msra.mxu0 %v4095
        %4129 = vmatprep.subr.mxu0 0.0
        %4130 = vmatpush1.xpose.msra.mxu0 0.0
        %4131 = vmatprep.subr.mxu0 0.0
        %4132 = vmatpush1.xpose.msra.mxu0 0.0
        %4133 = vmatprep.subr.mxu0 0.0
        %4134 = vmatpush1.xpose.msra.mxu0 0.0
        %4135 = vmatprep.subr.mxu0 0.0
        %4136 = vmatpush1.xpose.msra.mxu0 0.0
        %4137 = vmatprep.subr.mxu0 0.0
        %4138 = vmatpush1.xpose.msra.mxu0 0.0
        %4139 = vmatprep.subr.mxu0 0.0
        %4140 = vmatpush1.xpose.msra.mxu0 0.0
        %4141 = vmatprep.subr.mxu0 0.0
        %4142 = vmatpush1.xpose.msra.mxu0 0.0
        %4143 = vmatprep.subr.mxu0 0.0
        %4144 = vmatpush1.xpose.msra.mxu0 0.0
        %4145 = vmatprep.subr.mxu0 0.0
        %4146 = vmatpush1.xpose.msra.mxu0 0.0
        %4147 = vmatprep.subr.mxu0 0.0
        %4148 = vmatpush1.xpose.msra.mxu0 0.0
        %4149 = vmatprep.subr.mxu0 0.0
        %4150 = vmatpush1.xpose.msra.mxu0 0.0
        %4151 = vmatprep.subr.mxu0 0.0
        %4152 = vmatpush1.xpose.msra.mxu0 0.0
        %4153 = vmatprep.subr.mxu0 0.0
        %4154 = vmatpush1.xpose.msra.mxu0 0.0
        %4155 = vmatprep.subr.mxu0 0.0
        %4156 = vmatpush1.xpose.msra.mxu0 0.0
        %4157 = vmatprep.subr.mxu0 0.0
        %4158 = vmatpush1.xpose.msra.mxu0 0.0
        %4159 = vmatprep.subr.mxu0 0.0
        %4160 = vmatpush1.xpose.msra.mxu0 0.0
        %4161 = vmatprep.mubr.f32.mxu0 0.0
        %4162 = vmatmul.mubr.f32.gmra.mrb[0].mxu0 %v4047
        %v4163 = vpop.f32.mrb[0].mxu0
        %v4164 = vadd.f32 0.0, %v4163
        %v4165 = vpop.f32.mrb[0].mxu0
        %4166 = vdwg.mxu0
        %4167 = vst [vmem:[%s22] sm:$0x1] %v4164
      $region112: #{gnn_policy_forward.11} parent=103 // pred_fallthru
        _
      // Predicated region
      $region113: #{gnn_policy_forward.11} parent=103 // pred_check
        %p4168 = pneg %p498
      $region114: #{gnn_policy_forward.11} parent=103 // pred_check_branch
        %4170 = sbr.rel (%p4168) target = $region116
      $region115: #{gnn_policy_forward.11} parent=103 // pred_region
        _
      $region116: #{gnn_policy_forward.11} parent=103 // pred_fallthru
        _
      // Predicated region
      $region117: #{gnn_policy_forward.11} parent=103 // pred_check
        %p4171 = pneg %p519
      $region118: #{gnn_policy_forward.11} parent=103 // pred_check_branch
        %4173 = sbr.rel (%p4171) target = $region120
      $region119: #{gnn_policy_forward.11} parent=103 // pred_region
        _
      $region120: #{gnn_policy_forward.11} parent=103 // pred_fallthru
        _
      // Predicated region
      $region121: #{gnn_policy_forward.11} parent=103 // pred_check
        %p4174 = pneg %p498
      $region122: #{gnn_policy_forward.11} parent=103 // pred_check_branch
        %4176 = sbr.rel (%p4174) target = $region124
      $region123: #{gnn_policy_forward.11} parent=103 // pred_region
        _
      $region124: #{gnn_policy_forward.11} parent=103 // pred_fallthru
        _
      // Predicated region
      $region125: #{gnn_policy_forward.11} parent=103 // pred_check
        %p4177 = pneg %p519
      $region126: #{gnn_policy_forward.11} parent=103 // pred_check_branch
        %4179 = sbr.rel (%p4177) target = $region128
      $region127: #{gnn_policy_forward.11} parent=103 // pred_region
        _
      $region128: #{gnn_policy_forward.11} parent=103 // pred_fallthru
        _
    $region104: #{gnn_policy_forward.11} parent=5 // pred_fallthru
      _
    %p4180 = scmp.le.s32.totalorder 2, %s29
    // Predicated region
    $region129: #{gnn_policy_forward.11} parent=5 // pred_check
      %p4181 = pneg %p4180
    $region130: #{gnn_policy_forward.11} parent=5 // pred_check_branch
      %4183 = sbr.rel (%p4181) target = $region132
    $region131: #{gnn_policy_forward.11} parent=5 // pred_region
      %s4184 = ssub.s32 %s29, 2
    $region132: #{gnn_policy_forward.11} parent=5 // pred_fallthru
      _
  $region6: #{gnn_policy_forward.11} parent=0 // loop_footer
    %s33 = sadd.s32 1, %s29
  $region7: #{gnn_policy_forward.11} parent=0 // loop_footer_branch
    %28 = sbr.rel target = $region3
  $region8: #{gnn_policy_forward.11} parent=0 // loop_exit
    _

</llo_original>
